<compile_context>
chip_gen: v6e
topology: v6e:2x2x1
jax: 0.10.0
libtpu: 0.0.40
codegen_flags: <defaults>
</compile_context>

<pallas_src>
import math
import functools
import numpy as np

import jax
import jax.numpy as jnp
from jax.experimental import pallas as pl
from jax.experimental.pallas import tpu as pltpu


# ----------------------------- configuration ---------------------------------
D_FEATS = 16
D_IMU = 16
D_MODEL = 32
N_HEAD = 2
D_K = 16
D_V = 16
N_DEC_LAYERS = 2
MAX_TIMESTEPS = 9            # seq_len = max_timesteps - 1 = 8
SEQ_LEN = MAX_TIMESTEPS - 1
NUM_TIMESTEPS = 1000         # diffusion steps
TIME_EMB_DIM = 64            # sinusoidal embedding dim
TIME_HIDDEN = TIME_EMB_DIM * 4
D_INNER = D_MODEL * 2        # transformer FFN hidden
D_IN = D_FEATS + D_IMU       # decoder input feature dim
D_QKV = N_HEAD * (2 * D_K + D_V)   # fused QKV projection width (96)
LN_EPS = 1e-5                # match torch.nn.LayerNorm default
NEG_INF = -1e9               # additive mask value (finite -> no inf-inf NaN risk)


# --------------------------- positional constants ------------------------------
def _sinusoid_position_table(n_position, d_model):
    position = np.arange(n_position)[:, None].astype(np.float64)
    div = np.power(10000.0, 2.0 * (np.arange(d_model) // 2) / d_model)
    table = position / div
    table[:, 0::2] = np.sin(table[:, 0::2])
    table[:, 1::2] = np.cos(table[:, 1::2])
    return table.astype(np.float32)


# pos_vec = arange(num_steps)+1 -> time token uses row 1, data token i uses row i+2
_POS_TABLE = _sinusoid_position_table(MAX_TIMESTEPS + 1, D_MODEL)
POS_TIME = jnp.asarray(_POS_TABLE[1:2])                  # (1, d_model)  positional row for time token
POS_TOKENS = jnp.asarray(_POS_TABLE[2:2 + SEQ_LEN])      # (S, d_model)  positional rows for data tokens


# ------------------------------ fused Pallas kernel ----------------------------
def _fused_denoise_loss_kernel(
        x0_ref, noise_ref, cond_ref, scal_ref, te_ref,
        pos_ref, bias_ref, embed_w_ref, embed_b_ref,
        wqkv_ref, bqkv_ref, wo_ref, ffn_w1_ref, ffn_b1_ref, ffn_w2_ref,
        vec_ref, out_w_ref, out_b_ref,
        loss_ref,
        seq_scr,
        *, n_head, d_k, d_v, d_feats, d_imu, n_layers, eps):
    ns = x0_ref.shape[0]                  # Bblk * S  (data rows, 8-aligned)
    bt = ns + te_ref.shape[0]             # Bblk * (S + 1)

    def layer_norm(x, g, beta):
        mu = jnp.mean(x, axis=-1, keepdims=True)
        var = jnp.mean((x - mu) ** 2, axis=-1, keepdims=True)
        return (x - mu) * jax.lax.rsqrt(var + eps) * g + beta

    def bdot(a, b):
        # bf16 operands for the MXU fast path; f32 accumulation.
        return jnp.dot(a.astype(jnp.bfloat16), b.astype(jnp.bfloat16),
                       preferred_element_type=jnp.float32)

    # per-row diffusion scalars (already expanded to one row per data token)
    sa = scal_ref[:, 0:1]
    s1 = scal_ref[:, 1:2]
    p2w = scal_ref[:, 2:3]

    # ---- q_sample fused in-kernel ----
    noise = noise_ref[...]                                            # (NS, d_feats)
    x_noised = sa * x0_ref[...] + s1 * noise                          # (NS, d_feats)

    # ---- input embedding: concat([x, cond], -1) @ W as two partial matmuls (layout friendly) ----
    emb = (bdot(x_noised, embed_w_ref[0:d_feats, :])
           + bdot(cond_ref[...], embed_w_ref[d_feats:d_feats + d_imu, :])
           + embed_b_ref[...])                                        # (NS, d_model)

    # assemble the flat decoder sequence: all data tokens first, then the Bblk time tokens.
    # Full attention restricted to same-batch tokens by the additive block-diagonal mask, and
    # all other ops are token-wise, so this is equivalent to per-batch [time; data] sequences.
    seq_scr[0:ns, :] = emb + pos_ref[...]
    seq_scr[ns:bt, :] = te_ref[...]                                   # time tokens (pos already added)
    h = seq_scr[...]                                                  # (BT, d_model) -> vregs
    bias = bias_ref[...]                                              # (BT, BT) additive segment mask

    scale = 1.0 / math.sqrt(d_k)
    for l in range(n_layers):                                         # static unroll (2 layers)
        residual = h
        # fused QKV projection on the flat sequence; per-head Q/K/V sliced directly in vregs.
        qkv = bdot(h, wqkv_ref[l]) + bqkv_ref[l]                      # (BT, 96) f32
        attn = vec_ref[l, 0:1, :]                                     # bo (1, d_model) broadcast
        for hd in range(n_head):                                      # static unroll (2 heads)
            q = qkv[:, hd * d_k:(hd + 1) * d_k]
            k = qkv[:, n_head * d_k + hd * d_k: n_head * d_k + (hd + 1) * d_k]
            v = qkv[:, 2 * n_head * d_k + hd * d_v: 2 * n_head * d_k + (hd + 1) * d_v]
            # contract on the last dim of both operands: MXU consumes K^T natively (no transpose)
            s = jax.lax.dot_general(q.astype(jnp.bfloat16), k.astype(jnp.bfloat16),
                                    (((1,), (1,)), ((), ())),
                                    preferred_element_type=jnp.float32)
            s = s * scale + bias                                      # block-diagonal masking
            s = s - jnp.max(s, axis=-1, keepdims=True)
            p = jnp.exp(s)
            p = p / jnp.sum(p, axis=-1, keepdims=True)                # exact softmax normalize
            o = bdot(p, v)                                            # (BT, d_v)
            # output projection folded per head: concat over heads == sum of partial matmuls
            attn = attn + bdot(o, wo_ref[l, hd * d_v:(hd + 1) * d_v, :])
        h = layer_norm(attn + residual, vec_ref[l, 1:2, :], vec_ref[l, 2:3, :])
        residual = h
        f = bdot(h, ffn_w1_ref[l]) + ffn_b1_ref[l]
        f = jnp.maximum(f, 0.0)
        f = bdot(f, ffn_w2_ref[l]) + vec_ref[l, 3:4, :]
        h = layer_norm(f + residual, vec_ref[l, 4:5, :], vec_ref[l, 5:6, :])

    # ---- drop time tokens (rows ns:bt), project, weighted L1 partial sum for this block ----
    pred = bdot(h[0:ns, :], out_w_ref[...]) + out_b_ref[...]          # (NS, d_feats)
    contrib = jnp.abs(pred - noise) * p2w                             # (NS, d_feats)
    loss_ref[0] = jnp.sum(contrib, axis=0, keepdims=True)             # (1, d_feats) partial


def _data_spec(block_shape):
    n_rest = len(block_shape) - 1
    return pl.BlockSpec(block_shape, lambda blk, _n=n_rest: (blk,) + (0,) * _n)


def _const_spec(arr):
    zeros = (0,) * arr.ndim
    return pl.BlockSpec(arr.shape, lambda blk, _z=zeros: _z)


def fused_denoise_loss(params, x_start, noise, cond_mask, te, sa_t, s1_t, p2w_t):
    """q_sample + denoise_fn (transformer decoder) + weighted L1, fully fused in one pallas_call.

    Returns the scalar training loss."""
    bs, S, F = x_start.shape

    # batch-block the grid: keep >= 2 grid steps when possible so ("parallel",) uses both
    # TensorCores on v7x; Bblk*T >= 128 makes every position-wise matmul MXU-sized.
    if bs % 2 == 0 and (bs // 2) % 8 == 0:
        n_blocks = 2
    else:
        n_blocks = 1
    bblk = bs // n_blocks
    ns = bblk * S
    bt = ns + bblk

    # flat (batch*time)-major layouts (pure host-side reshapes; identical memory order)
    x_flat = x_start.reshape(bs * S, F).astype(jnp.float32)
    noise_flat = noise.reshape(bs * S, F).astype(jnp.float32)
    cond_flat = cond_mask.reshape(bs * S, D_IMU).astype(jnp.float32)
    scal_cols = jnp.repeat(jnp.stack([sa_t, s1_t, p2w_t], axis=-1).astype(jnp.float32),
                           S, axis=0)                                  # (bs*S, 3) per-row scalars

    # constants shared by every grid step
    pos_flat = jnp.tile(POS_TOKENS, (bblk, 1))                         # (bblk*S, d_model)
    seg = np.concatenate([np.repeat(np.arange(bblk), S), np.arange(bblk)])
    attn_bias = jnp.asarray(
        np.where(seg[:, None] == seg[None, :], 0.0, NEG_INF).astype(np.float32))  # (BT, BT)

    weights = [params["embed_w"], params["embed_b"],
               params["wqkv"], params["bqkv"], params["wo"],
               params["ffn_w1"], params["ffn_b1"], params["ffn_w2"],
               params["vec_pack"], params["out_w"], params["out_b"]]

    in_specs = ([_data_spec((ns, F)),          # x_start (flat)
                 _data_spec((ns, F)),          # noise   (flat)
                 _data_spec((ns, D_IMU)),      # cond    (flat)
                 _data_spec((ns, 3)),          # packed per-row diffusion scalars
                 _data_spec((bblk, D_MODEL))]  # time-embedding tokens
                + [_const_spec(pos_flat), _const_spec(attn_bias)]
                + [_const_spec(w) for w in weights])

    kernel = functools.partial(
        _fused_denoise_loss_kernel,
        n_head=N_HEAD, d_k=D_K, d_v=D_V,
        d_feats=D_FEATS, d_imu=D_IMU, n_layers=N_DEC_LAYERS, eps=LN_EPS)

    grid_spec = pltpu.PrefetchScalarGridSpec(
        num_scalar_prefetch=0,
        grid=(n_blocks,),
        in_specs=in_specs,
        out_specs=pl.BlockSpec((1, 1, D_FEATS), lambda blk: (blk, 0, 0)),
        scratch_shapes=[pltpu.VMEM((bt, D_MODEL), jnp.float32)])       # one-shot sequence assembly

    partials = pl.pallas_call(
        kernel,
        grid_spec=grid_spec,
        out_shape=jax.ShapeDtypeStruct((n_blocks, 1, D_FEATS), jnp.float32),
        compiler_params=pltpu.CompilerParams(dimension_semantics=("parallel",)),
    )(x_flat, noise_flat, cond_flat, scal_cols, te.astype(jnp.float32),
      pos_flat, attn_bias, *weights)

    # loss = mean_{b,s,f} [ p2_w_b * |pred - noise| ]   (p2 weight already folded per row)
    return jnp.sum(partials) / float(bs * S * F)


# --------------------------- diffusion buffers --------------------------------
def cosine_beta_schedule(timesteps, s=0.008):
    steps = timesteps + 1
    x = np.linspace(0, timesteps, steps, dtype=np.float64)
    alphas_cumprod = np.cos((x / timesteps + s) / (1 + s) * math.pi * 0.5) ** 2
    alphas_cumprod = alphas_cumprod / alphas_cumprod[0]
    betas = 1 - alphas_cumprod[1:] / alphas_cumprod[:-1]
    return np.clip(betas, 0, 0.999)


def make_diffusion_buffers(timesteps, p2_loss_weight_gamma=0.0, p2_loss_weight_k=1):
    betas = cosine_beta_schedule(timesteps)
    alphas = 1.0 - betas
    alphas_cumprod = np.cumprod(alphas, axis=0)
    return {
        "sqrt_alphas_cumprod": jnp.asarray(np.sqrt(alphas_cumprod), dtype=jnp.float32),
        "sqrt_one_minus_alphas_cumprod": jnp.asarray(np.sqrt(1.0 - alphas_cumprod), dtype=jnp.float32),
        "p2_loss_weight": jnp.asarray(
            (p2_loss_weight_k + alphas_cumprod / (1 - alphas_cumprod)) ** (-p2_loss_weight_gamma),
            dtype=jnp.float32),
    }


# ------------------------------ parameters ------------------------------------
def init_params(key):
    def w(k, shape, scale=0.02):
        return scale * jax.random.normal(k, shape, dtype=jnp.float32)

    ks = jax.random.split(key, 8)
    L = N_DEC_LAYERS
    # packed per-layer (1, d_model) vectors: [bo, ln1_g, ln1_b, ffn_b2, ln2_g, ln2_b]
    vec_pack = jnp.stack([
        jnp.zeros((L, D_MODEL), jnp.float32),   # bo
        jnp.ones((L, D_MODEL), jnp.float32),    # ln1_g
        jnp.zeros((L, D_MODEL), jnp.float32),   # ln1_b
        jnp.zeros((L, D_MODEL), jnp.float32),   # ffn_b2
        jnp.ones((L, D_MODEL), jnp.float32),    # ln2_g
        jnp.zeros((L, D_MODEL), jnp.float32),   # ln2_b
    ], axis=1)                                  # (L, 6, d_model)
    return {
        # time MLP stays f32 (runs in XLA with exact erf-GELU)
        "time_w1": w(ks[0], (TIME_EMB_DIM, TIME_HIDDEN)),
        "time_b1": jnp.zeros((TIME_HIDDEN,), jnp.float32),
        "time_w2": w(ks[1], (TIME_HIDDEN, D_MODEL)),
        "time_b2": jnp.zeros((D_MODEL,), jnp.float32),
        # transformer matmul weights stored bf16 (MXU fast path, half the DMA bytes)
        "embed_w": w(ks[2], (D_IN, D_MODEL)).astype(jnp.bfloat16),
        "embed_b": jnp.zeros((1, D_MODEL), jnp.float32),
        "out_w": w(ks[3], (D_MODEL, D_FEATS)).astype(jnp.bfloat16),
        "out_b": jnp.zeros((1, D_FEATS), jnp.float32),
        "wqkv": w(ks[4], (L, D_MODEL, D_QKV)).astype(jnp.bfloat16),
        "bqkv": jnp.zeros((L, 1, D_QKV), jnp.float32),
        "wo": w(ks[5], (L, N_HEAD * D_V, D_MODEL)).astype(jnp.bfloat16),
        "ffn_w1": w(ks[6], (L, D_MODEL, D_INNER)).astype(jnp.bfloat16),
        "ffn_b1": jnp.zeros((L, 1, D_INNER), jnp.float32),
        "ffn_w2": w(ks[7], (L, D_INNER, D_MODEL)).astype(jnp.bfloat16),
        "vec_pack": vec_pack,
    }


# ----------------------------- model wrapper -----------------------------------
def sinusoidal_pos_emb(t, dim):
    """SinusoidalPosEmb.forward: t (bs,) float -> (bs, dim)."""
    half_dim = dim // 2
    emb = math.log(10000) / (half_dim - 1)
    freqs = jnp.exp(jnp.arange(half_dim, dtype=jnp.float32) * -emb)
    e = t[:, None].astype(jnp.float32) * freqs[None, :]
    return jnp.concatenate([jnp.sin(e), jnp.cos(e)], axis=-1)


def cond_gaussian_diffusion_forward(params, buffers, x_start, cond_mask, rng):
    """CondGaussianDiffusion.forward -> scalar training loss (objective='pred_noise', l1)."""
    bs = x_start.shape[0]
    k_t, k_noise = jax.random.split(rng)
    t = jax.random.randint(k_t, (bs,), 0, NUM_TIMESTEPS)
    noise = jax.random.normal(k_noise, x_start.shape, dtype=jnp.float32)

    sa_t = buffers["sqrt_alphas_cumprod"][t]
    s1_t = buffers["sqrt_one_minus_alphas_cumprod"][t]
    p2w_t = buffers["p2_loss_weight"][t]

    # Time MLP kept in plain XLA (bs x 64 -> 256 -> 32) so the exact erf-based nn.GELU semantics
    # are preserved; everything downstream runs inside the single fused kernel.
    te = sinusoidal_pos_emb(t.astype(jnp.float32), TIME_EMB_DIM)
    te = te @ params["time_w1"] + params["time_b1"]
    te = jax.nn.gelu(te, approximate=False)
    te = te @ params["time_w2"] + params["time_b2"]                    # (bs, d_model)
    te = te + POS_TIME                                                 # fold in time-token positional row

    # TODO(synk): the original `Decoder` class source is not provided; a standard post-LN decoder
    # (input linear embed, time token, sinusoidal positional encoding, full self-attention,
    # dropout omitted) is used instead — same substitution as the reference-free baseline.
    return fused_denoise_loss(params, x_start, noise, cond_mask, te, sa_t, s1_t, p2w_t)


# ----------------------------------- main --------------------------------------
if __name__ == "__main__":
    key = jax.random.PRNGKey(0)
    k_params, k_x, k_cond, k_fwd = jax.random.split(key, 4)

    params = init_params(k_params)
    buffers = make_diffusion_buffers(NUM_TIMESTEPS)

    # batch 32 -> 2 grid steps x 16 batch elements: 144-row flat matmuls, both TCs busy on v7x.
    bs = 32
    x_start = jax.random.normal(k_x, (bs, SEQ_LEN, D_FEATS), dtype=jnp.float32)
    cond_mask = (jax.random.uniform(k_cond, (bs, SEQ_LEN, D_IMU)) > 0.5).astype(jnp.float32)

    fwd = jax.jit(functools.partial(cond_gaussian_diffusion_forward, params, buffers))
    loss = jax.block_until_ready(fwd(x_start, cond_mask, k_fwd))
    assert jnp.isfinite(loss), "loss is not finite"
    print("KERNEL_OK")
</pallas_src>

<mosaic_0001>
module attributes {stable_mosaic.version = 11 : i64} {
  func.func @_fused_denoise_loss_kernel(%arg0: i32, %arg1: memref<128x16xf32, #tpu.memory_space<vmem>>, %arg2: memref<128x16xf32, #tpu.memory_space<vmem>>, %arg3: memref<128x16xf32, #tpu.memory_space<vmem>>, %arg4: memref<128x3xf32, #tpu.memory_space<vmem>>, %arg5: memref<16x32xf32, #tpu.memory_space<vmem>>, %arg6: memref<128x32xf32, #tpu.memory_space<vmem>>, %arg7: memref<144x144xf32, #tpu.memory_space<vmem>>, %arg8: memref<32x32xbf16, #tpu.memory_space<vmem>>, %arg9: memref<1x32xf32, #tpu.memory_space<vmem>>, %arg10: memref<2x32x96xbf16, #tpu.memory_space<vmem>>, %arg11: memref<2x1x96xf32, #tpu.memory_space<vmem>>, %arg12: memref<2x32x32xbf16, #tpu.memory_space<vmem>>, %arg13: memref<2x32x64xbf16, #tpu.memory_space<vmem>>, %arg14: memref<2x1x64xf32, #tpu.memory_space<vmem>>, %arg15: memref<2x64x32xbf16, #tpu.memory_space<vmem>>, %arg16: memref<2x6x32xf32, #tpu.memory_space<vmem>>, %arg17: memref<32x16xbf16, #tpu.memory_space<vmem>>, %arg18: memref<1x16xf32, #tpu.memory_space<vmem>>, %arg19: memref<1x1x16xf32, #tpu.memory_space<vmem>>, %arg20: memref<144x32xf32, #tpu.memory_space<vmem>>) attributes {dimension_semantics = [#tpu.dimension_semantics<parallel>], iteration_bounds = array<i64: 2>, scalar_prefetch = 0 : i64, scratch_operands = 1 : i64, tpu.core_type = #tpu.core_type<tc>, window_params = [{transform_indices = @transform_0, window_bounds = array<i64: 128, 16>}, {transform_indices = @transform_1, window_bounds = array<i64: 128, 16>}, {transform_indices = @transform_2, window_bounds = array<i64: 128, 16>}, {transform_indices = @transform_3, window_bounds = array<i64: 128, 3>}, {transform_indices = @transform_4, window_bounds = array<i64: 16, 32>}, {pipeline_mode = #tpu.pipeline_mode<synchronous>, transform_indices = @transform_5, window_bounds = array<i64: 128, 32>}, {pipeline_mode = #tpu.pipeline_mode<synchronous>, transform_indices = @transform_6, window_bounds = array<i64: 144, 144>}, {pipeline_mode = #tpu.pipeline_mode<synchronous>, transform_indices = @transform_7, window_bounds = array<i64: 32, 32>}, {pipeline_mode = #tpu.pipeline_mode<synchronous>, transform_indices = @transform_8, window_bounds = array<i64: 1, 32>}, {pipeline_mode = #tpu.pipeline_mode<synchronous>, transform_indices = @transform_9, window_bounds = array<i64: 2, 32, 96>}, {pipeline_mode = #tpu.pipeline_mode<synchronous>, transform_indices = @transform_10, window_bounds = array<i64: 2, 1, 96>}, {pipeline_mode = #tpu.pipeline_mode<synchronous>, transform_indices = @transform_11, window_bounds = array<i64: 2, 32, 32>}, {pipeline_mode = #tpu.pipeline_mode<synchronous>, transform_indices = @transform_12, window_bounds = array<i64: 2, 32, 64>}, {pipeline_mode = #tpu.pipeline_mode<synchronous>, transform_indices = @transform_13, window_bounds = array<i64: 2, 1, 64>}, {pipeline_mode = #tpu.pipeline_mode<synchronous>, transform_indices = @transform_14, window_bounds = array<i64: 2, 64, 32>}, {pipeline_mode = #tpu.pipeline_mode<synchronous>, transform_indices = @transform_15, window_bounds = array<i64: 2, 6, 32>}, {pipeline_mode = #tpu.pipeline_mode<synchronous>, transform_indices = @transform_16, window_bounds = array<i64: 32, 16>}, {pipeline_mode = #tpu.pipeline_mode<synchronous>, transform_indices = @transform_17, window_bounds = array<i64: 1, 16>}, {transform_indices = @transform_18, window_bounds = array<i64: 1, 1, 16>}]} {
    %c0 = arith.constant 0 : index
    %c0_0 = arith.constant 0 : index
    %0 = vector.load %arg4[%c0, %c0_0] : memref<128x3xf32, #tpu.memory_space<vmem>>, vector<128x1xf32>
    %c0_1 = arith.constant 0 : index
    %c1 = arith.constant 1 : index
    %1 = vector.load %arg4[%c0_1, %c1] : memref<128x3xf32, #tpu.memory_space<vmem>>, vector<128x1xf32>
    %c0_2 = arith.constant 0 : index
    %c2 = arith.constant 2 : index
    %2 = vector.load %arg4[%c0_2, %c2] : memref<128x3xf32, #tpu.memory_space<vmem>>, vector<128x1xf32>
    %c0_3 = arith.constant 0 : index
    %c0_4 = arith.constant 0 : index
    %3 = vector.load %arg2[%c0_3, %c0_4] : memref<128x16xf32, #tpu.memory_space<vmem>>, vector<128x16xf32>
    %c0_5 = arith.constant 0 : index
    %c0_6 = arith.constant 0 : index
    %4 = vector.load %arg1[%c0_5, %c0_6] : memref<128x16xf32, #tpu.memory_space<vmem>>, vector<128x16xf32>
    %5 = vector.broadcast %0 : vector<128x1xf32> to vector<128x16xf32>
    %6 = arith.mulf %5, %4 : vector<128x16xf32>
    %7 = vector.broadcast %1 : vector<128x1xf32> to vector<128x16xf32>
    %8 = arith.mulf %7, %3 : vector<128x16xf32>
    %9 = arith.addf %6, %8 : vector<128x16xf32>
    %c0_7 = arith.constant 0 : index
    %c0_8 = arith.constant 0 : index
    %10 = vector.load %arg8[%c0_7, %c0_8] : memref<32x32xbf16, #tpu.memory_space<vmem>>, vector<16x32xbf16>
    %11 = arith.truncf %9 : vector<128x16xf32> to vector<128x16xbf16>
    %cst = arith.constant dense<0.000000e+00> : vector<128x32xf32>
    %12 = tpu.matmul %11, %10, %cst {dimension_numbers = #tpu.dot_dimension_numbers<[1], [0], [0], [1], [0, 0, 1, 1], [], []>} : vector<128x16xbf16>, vector<16x32xbf16>, vector<128x32xf32> -> vector<128x32xf32>
    %c0_9 = arith.constant 0 : index
    %c0_10 = arith.constant 0 : index
    %13 = vector.load %arg3[%c0_9, %c0_10] : memref<128x16xf32, #tpu.memory_space<vmem>>, vector<128x16xf32>
    %c16 = arith.constant 16 : index
    %c0_11 = arith.constant 0 : index
    %14 = vector.load %arg8[%c16, %c0_11] : memref<32x32xbf16, #tpu.memory_space<vmem>>, vector<16x32xbf16>
    %15 = arith.truncf %13 : vector<128x16xf32> to vector<128x16xbf16>
    %cst_12 = arith.constant dense<0.000000e+00> : vector<128x32xf32>
    %16 = tpu.matmul %15, %14, %cst_12 {dimension_numbers = #tpu.dot_dimension_numbers<[1], [0], [0], [1], [0, 0, 1, 1], [], []>} : vector<128x16xbf16>, vector<16x32xbf16>, vector<128x32xf32> -> vector<128x32xf32>
    %17 = arith.addf %12, %16 : vector<128x32xf32>
    %c0_13 = arith.constant 0 : index
    %c0_14 = arith.constant 0 : index
    %18 = vector.load %arg9[%c0_13, %c0_14] : memref<1x32xf32, #tpu.memory_space<vmem>>, vector<1x32xf32>
    %19 = vector.broadcast %18 : vector<1x32xf32> to vector<128x32xf32>
    %20 = arith.addf %17, %19 : vector<128x32xf32>
    %c0_15 = arith.constant 0 : index
    %c0_16 = arith.constant 0 : index
    %21 = vector.load %arg6[%c0_15, %c0_16] : memref<128x32xf32, #tpu.memory_space<vmem>>, vector<128x32xf32>
    %22 = arith.addf %20, %21 : vector<128x32xf32>
    %c0_17 = arith.constant 0 : index
    %c0_18 = arith.constant 0 : index
    %23 = vector.load %arg20[%c0_17, %c0_18] : memref<144x32xf32, #tpu.memory_space<vmem>>, vector<128x32xf32>
    tpu.vector_store %arg20[%c0_17, %c0_18], %22 {strides = array<i32>} : memref<144x32xf32, #tpu.memory_space<vmem>>, vector<128x32xf32>,
    %c0_19 = arith.constant 0 : index
    %c0_20 = arith.constant 0 : index
    %24 = vector.load %arg5[%c0_19, %c0_20] : memref<16x32xf32, #tpu.memory_space<vmem>>, vector<16x32xf32>
    %c128 = arith.constant 128 : index
    %c0_21 = arith.constant 0 : index
    %25 = vector.load %arg20[%c128, %c0_21] : memref<144x32xf32, #tpu.memory_space<vmem>>, vector<16x32xf32>
    tpu.vector_store %arg20[%c128, %c0_21], %24 {strides = array<i32>} : memref<144x32xf32, #tpu.memory_space<vmem>>, vector<16x32xf32>,
    %c0_22 = arith.constant 0 : index
    %c0_23 = arith.constant 0 : index
    %26 = vector.load %arg20[%c0_22, %c0_23] : memref<144x32xf32, #tpu.memory_space<vmem>>, vector<144x32xf32>
    %c0_24 = arith.constant 0 : index
    %c0_25 = arith.constant 0 : index
    %27 = vector.load %arg7[%c0_24, %c0_25] : memref<144x144xf32, #tpu.memory_space<vmem>>, vector<144x144xf32>
    %c0_26 = arith.constant 0 : index
    %c0_27 = arith.constant 0 : index
    %c0_28 = arith.constant 0 : index
    %28 = vector.load %arg10[%c0_26, %c0_27, %c0_28] : memref<2x32x96xbf16, #tpu.memory_space<vmem>>, vector<1x32x96xbf16>
    %29 = vector.shape_cast %28 : vector<1x32x96xbf16> to vector<32x96xbf16>
    %30 = arith.truncf %26 : vector<144x32xf32> to vector<144x32xbf16>
    %cst_29 = arith.constant dense<0.000000e+00> : vector<144x96xf32>
    %31 = tpu.matmul %30, %29, %cst_29 {dimension_numbers = #tpu.dot_dimension_numbers<[1], [0], [0], [1], [0, 0, 1, 1], [], []>} : vector<144x32xbf16>, vector<32x96xbf16>, vector<144x96xf32> -> vector<144x96xf32>
    %c0_30 = arith.constant 0 : index
    %c0_31 = arith.constant 0 : index
    %c0_32 = arith.constant 0 : index
    %32 = vector.load %arg11[%c0_30, %c0_31, %c0_32] : memref<2x1x96xf32, #tpu.memory_space<vmem>>, vector<1x1x96xf32>
    %33 = vector.shape_cast %32 : vector<1x1x96xf32> to vector<1x96xf32>
    %34 = vector.broadcast %33 : vector<1x96xf32> to vector<144x96xf32>
    %35 = arith.addf %31, %34 : vector<144x96xf32>
    %c0_33 = arith.constant 0 : index
    %c0_34 = arith.constant 0 : index
    %c0_35 = arith.constant 0 : index
    %36 = vector.load %arg16[%c0_33, %c0_34, %c0_35] : memref<2x6x32xf32, #tpu.memory_space<vmem>>, vector<1x1x32xf32>
    %37 = vector.shape_cast %36 : vector<1x1x32xf32> to vector<1x32xf32>
    %38 = vector.extract_strided_slice %35 {offsets = [0, 0], sizes = [144, 16], strides = [1, 1]} : vector<144x96xf32> to vector<144x16xf32>
    %39 = vector.extract_strided_slice %35 {offsets = [0, 32], sizes = [144, 16], strides = [1, 1]} : vector<144x96xf32> to vector<144x16xf32>
    %40 = vector.extract_strided_slice %35 {offsets = [0, 64], sizes = [144, 16], strides = [1, 1]} : vector<144x96xf32> to vector<144x16xf32>
    %41 = arith.truncf %38 : vector<144x16xf32> to vector<144x16xbf16>
    %42 = arith.truncf %39 : vector<144x16xf32> to vector<144x16xbf16>
    %cst_36 = arith.constant dense<0.000000e+00> : vector<144x144xf32>
    %43 = tpu.matmul %41, %42, %cst_36 {dimension_numbers = #tpu.dot_dimension_numbers<[1], [1], [0], [0], [0, 0, 1, 0], [], []>} : vector<144x16xbf16>, vector<144x16xbf16>, vector<144x144xf32> -> vector<144x144xf32>
    %cst_37 = arith.constant 2.500000e-01 : f32
    %44 = vector.broadcast %cst_37 : f32 to vector<144x144xf32>
    %45 = arith.mulf %43, %44 : vector<144x144xf32>
    %46 = arith.addf %45, %27 : vector<144x144xf32>
    %cst_38 = arith.constant dense<0xFF800000> : vector<144xf32>
    %47 = vector.multi_reduction <maximumf>, %46, %cst_38 [1] : vector<144x144xf32> to vector<144xf32>
    %48 = vector.shape_cast %47 : vector<144xf32> to vector<144x1xf32>
    %49 = vector.broadcast %48 : vector<144x1xf32> to vector<144x144xf32>
    %50 = arith.subf %46, %49 : vector<144x144xf32>
    %51 = math.exp %50 : vector<144x144xf32>
    %cst_39 = arith.constant dense<0.000000e+00> : vector<144xf32>
    %52 = vector.multi_reduction <add>, %51, %cst_39 [1] : vector<144x144xf32> to vector<144xf32>
    %53 = vector.shape_cast %52 : vector<144xf32> to vector<144x1xf32>
    %54 = vector.broadcast %53 : vector<144x1xf32> to vector<144x144xf32>
    %55 = arith.divf %51, %54 : vector<144x144xf32>
    %56 = arith.truncf %55 : vector<144x144xf32> to vector<144x144xbf16>
    %57 = arith.truncf %40 : vector<144x16xf32> to vector<144x16xbf16>
    %cst_40 = arith.constant dense<0.000000e+00> : vector<144x16xf32>
    %58 = tpu.matmul %56, %57, %cst_40 {dimension_numbers = #tpu.dot_dimension_numbers<[1], [0], [0], [1], [0, 0, 1, 1], [], []>} : vector<144x144xbf16>, vector<144x16xbf16>, vector<144x16xf32> -> vector<144x16xf32>
    %c0_41 = arith.constant 0 : index
    %c0_42 = arith.constant 0 : index
    %c0_43 = arith.constant 0 : index
    %59 = vector.load %arg12[%c0_41, %c0_42, %c0_43] : memref<2x32x32xbf16, #tpu.memory_space<vmem>>, vector<1x16x32xbf16>
    %60 = vector.shape_cast %59 : vector<1x16x32xbf16> to vector<16x32xbf16>
    %61 = arith.truncf %58 : vector<144x16xf32> to vector<144x16xbf16>
    %cst_44 = arith.constant dense<0.000000e+00> : vector<144x32xf32>
    %62 = tpu.matmul %61, %60, %cst_44 {dimension_numbers = #tpu.dot_dimension_numbers<[1], [0], [0], [1], [0, 0, 1, 1], [], []>} : vector<144x16xbf16>, vector<16x32xbf16>, vector<144x32xf32> -> vector<144x32xf32>
    %63 = vector.broadcast %37 : vector<1x32xf32> to vector<144x32xf32>
    %64 = arith.addf %63, %62 : vector<144x32xf32>
    %65 = vector.extract_strided_slice %35 {offsets = [0, 16], sizes = [144, 16], strides = [1, 1]} : vector<144x96xf32> to vector<144x16xf32>
    %66 = vector.extract_strided_slice %35 {offsets = [0, 48], sizes = [144, 16], strides = [1, 1]} : vector<144x96xf32> to vector<144x16xf32>
    %67 = vector.extract_strided_slice %35 {offsets = [0, 80], sizes = [144, 16], strides = [1, 1]} : vector<144x96xf32> to vector<144x16xf32>
    %68 = arith.truncf %65 : vector<144x16xf32> to vector<144x16xbf16>
    %69 = arith.truncf %66 : vector<144x16xf32> to vector<144x16xbf16>
    %cst_45 = arith.constant dense<0.000000e+00> : vector<144x144xf32>
    %70 = tpu.matmul %68, %69, %cst_45 {dimension_numbers = #tpu.dot_dimension_numbers<[1], [1], [0], [0], [0, 0, 1, 0], [], []>} : vector<144x16xbf16>, vector<144x16xbf16>, vector<144x144xf32> -> vector<144x144xf32>
    %cst_46 = arith.constant 2.500000e-01 : f32
    %71 = vector.broadcast %cst_46 : f32 to vector<144x144xf32>
    %72 = arith.mulf %70, %71 : vector<144x144xf32>
    %73 = arith.addf %72, %27 : vector<144x144xf32>
    %cst_47 = arith.constant dense<0xFF800000> : vector<144xf32>
    %74 = vector.multi_reduction <maximumf>, %73, %cst_47 [1] : vector<144x144xf32> to vector<144xf32>
    %75 = vector.shape_cast %74 : vector<144xf32> to vector<144x1xf32>
    %76 = vector.broadcast %75 : vector<144x1xf32> to vector<144x144xf32>
    %77 = arith.subf %73, %76 : vector<144x144xf32>
    %78 = math.exp %77 : vector<144x144xf32>
    %cst_48 = arith.constant dense<0.000000e+00> : vector<144xf32>
    %79 = vector.multi_reduction <add>, %78, %cst_48 [1] : vector<144x144xf32> to vector<144xf32>
    %80 = vector.shape_cast %79 : vector<144xf32> to vector<144x1xf32>
    %81 = vector.broadcast %80 : vector<144x1xf32> to vector<144x144xf32>
    %82 = arith.divf %78, %81 : vector<144x144xf32>
    %83 = arith.truncf %82 : vector<144x144xf32> to vector<144x144xbf16>
    %84 = arith.truncf %67 : vector<144x16xf32> to vector<144x16xbf16>
    %cst_49 = arith.constant dense<0.000000e+00> : vector<144x16xf32>
    %85 = tpu.matmul %83, %84, %cst_49 {dimension_numbers = #tpu.dot_dimension_numbers<[1], [0], [0], [1], [0, 0, 1, 1], [], []>} : vector<144x144xbf16>, vector<144x16xbf16>, vector<144x16xf32> -> vector<144x16xf32>
    %c0_50 = arith.constant 0 : index
    %c16_51 = arith.constant 16 : index
    %c0_52 = arith.constant 0 : index
    %86 = vector.load %arg12[%c0_50, %c16_51, %c0_52] : memref<2x32x32xbf16, #tpu.memory_space<vmem>>, vector<1x16x32xbf16>
    %87 = vector.shape_cast %86 : vector<1x16x32xbf16> to vector<16x32xbf16>
    %88 = arith.truncf %85 : vector<144x16xf32> to vector<144x16xbf16>
    %cst_53 = arith.constant dense<0.000000e+00> : vector<144x32xf32>
    %89 = tpu.matmul %88, %87, %cst_53 {dimension_numbers = #tpu.dot_dimension_numbers<[1], [0], [0], [1], [0, 0, 1, 1], [], []>} : vector<144x16xbf16>, vector<16x32xbf16>, vector<144x32xf32> -> vector<144x32xf32>
    %90 = arith.addf %64, %89 : vector<144x32xf32>
    %91 = arith.addf %90, %26 : vector<144x32xf32>
    %c0_54 = arith.constant 0 : index
    %c1_55 = arith.constant 1 : index
    %c0_56 = arith.constant 0 : index
    %92 = vector.load %arg16[%c0_54, %c1_55, %c0_56] : memref<2x6x32xf32, #tpu.memory_space<vmem>>, vector<1x1x32xf32>
    %93 = vector.shape_cast %92 : vector<1x1x32xf32> to vector<1x32xf32>
    %c0_57 = arith.constant 0 : index
    %c2_58 = arith.constant 2 : index
    %c0_59 = arith.constant 0 : index
    %94 = vector.load %arg16[%c0_57, %c2_58, %c0_59] : memref<2x6x32xf32, #tpu.memory_space<vmem>>, vector<1x1x32xf32>
    %95 = vector.shape_cast %94 : vector<1x1x32xf32> to vector<1x32xf32>
    %cst_60 = arith.constant dense<0.000000e+00> : vector<144xf32>
    %96 = vector.multi_reduction <add>, %91, %cst_60 [1] : vector<144x32xf32> to vector<144xf32>
    %97 = vector.shape_cast %96 : vector<144xf32> to vector<144x1xf32>
    %cst_61 = arith.constant 3.200000e+01 : f32
    %98 = vector.broadcast %cst_61 : f32 to vector<144x1xf32>
    %99 = arith.divf %97, %98 : vector<144x1xf32>
    %100 = vector.broadcast %99 : vector<144x1xf32> to vector<144x32xf32>
    %101 = arith.subf %91, %100 : vector<144x32xf32>
    %102 = arith.mulf %101, %101 : vector<144x32xf32>
    %cst_62 = arith.constant dense<0.000000e+00> : vector<144xf32>
    %103 = vector.multi_reduction <add>, %102, %cst_62 [1] : vector<144x32xf32> to vector<144xf32>
    %104 = vector.shape_cast %103 : vector<144xf32> to vector<144x1xf32>
    %cst_63 = arith.constant 3.200000e+01 : f32
    %105 = vector.broadcast %cst_63 : f32 to vector<144x1xf32>
    %106 = arith.divf %104, %105 : vector<144x1xf32>
    %107 = vector.broadcast %99 : vector<144x1xf32> to vector<144x32xf32>
    %108 = arith.subf %91, %107 : vector<144x32xf32>
    %cst_64 = arith.constant 9.99999974E-6 : f32
    %109 = vector.broadcast %cst_64 : f32 to vector<144x1xf32>
    %110 = arith.addf %106, %109 : vector<144x1xf32>
    %111 = math.rsqrt %110 : vector<144x1xf32>
    %112 = vector.broadcast %111 : vector<144x1xf32> to vector<144x32xf32>
    %113 = arith.mulf %108, %112 : vector<144x32xf32>
    %114 = vector.broadcast %93 : vector<1x32xf32> to vector<144x32xf32>
    %115 = arith.mulf %113, %114 : vector<144x32xf32>
    %116 = vector.broadcast %95 : vector<1x32xf32> to vector<144x32xf32>
    %117 = arith.addf %115, %116 : vector<144x32xf32>
    %c0_65 = arith.constant 0 : index
    %c0_66 = arith.constant 0 : index
    %c0_67 = arith.constant 0 : index
    %118 = vector.load %arg13[%c0_65, %c0_66, %c0_67] : memref<2x32x64xbf16, #tpu.memory_space<vmem>>, vector<1x32x64xbf16>
    %119 = vector.shape_cast %118 : vector<1x32x64xbf16> to vector<32x64xbf16>
    %120 = arith.truncf %117 : vector<144x32xf32> to vector<144x32xbf16>
    %cst_68 = arith.constant dense<0.000000e+00> : vector<144x64xf32>
    %121 = tpu.matmul %120, %119, %cst_68 {dimension_numbers = #tpu.dot_dimension_numbers<[1], [0], [0], [1], [0, 0, 1, 1], [], []>} : vector<144x32xbf16>, vector<32x64xbf16>, vector<144x64xf32> -> vector<144x64xf32>
    %c0_69 = arith.constant 0 : index
    %c0_70 = arith.constant 0 : index
    %c0_71 = arith.constant 0 : index
    %122 = vector.load %arg14[%c0_69, %c0_70, %c0_71] : memref<2x1x64xf32, #tpu.memory_space<vmem>>, vector<1x1x64xf32>
    %123 = vector.shape_cast %122 : vector<1x1x64xf32> to vector<1x64xf32>
    %124 = vector.broadcast %123 : vector<1x64xf32> to vector<144x64xf32>
    %125 = arith.addf %121, %124 : vector<144x64xf32>
    %cst_72 = arith.constant 0.000000e+00 : f32
    %126 = vector.broadcast %cst_72 : f32 to vector<144x64xf32>
    %127 = arith.maximumf %125, %126 : vector<144x64xf32>
    %c0_73 = arith.constant 0 : index
    %c0_74 = arith.constant 0 : index
    %c0_75 = arith.constant 0 : index
    %128 = vector.load %arg15[%c0_73, %c0_74, %c0_75] : memref<2x64x32xbf16, #tpu.memory_space<vmem>>, vector<1x64x32xbf16>
    %129 = vector.shape_cast %128 : vector<1x64x32xbf16> to vector<64x32xbf16>
    %130 = arith.truncf %127 : vector<144x64xf32> to vector<144x64xbf16>
    %cst_76 = arith.constant dense<0.000000e+00> : vector<144x32xf32>
    %131 = tpu.matmul %130, %129, %cst_76 {dimension_numbers = #tpu.dot_dimension_numbers<[1], [0], [0], [1], [0, 0, 1, 1], [], []>} : vector<144x64xbf16>, vector<64x32xbf16>, vector<144x32xf32> -> vector<144x32xf32>
    %c0_77 = arith.constant 0 : index
    %c3 = arith.constant 3 : index
    %c0_78 = arith.constant 0 : index
    %132 = vector.load %arg16[%c0_77, %c3, %c0_78] : memref<2x6x32xf32, #tpu.memory_space<vmem>>, vector<1x1x32xf32>
    %133 = vector.shape_cast %132 : vector<1x1x32xf32> to vector<1x32xf32>
    %134 = vector.broadcast %133 : vector<1x32xf32> to vector<144x32xf32>
    %135 = arith.addf %131, %134 : vector<144x32xf32>
    %136 = arith.addf %135, %117 : vector<144x32xf32>
    %c0_79 = arith.constant 0 : index
    %c4 = arith.constant 4 : index
    %c0_80 = arith.constant 0 : index
    %137 = vector.load %arg16[%c0_79, %c4, %c0_80] : memref<2x6x32xf32, #tpu.memory_space<vmem>>, vector<1x1x32xf32>
    %138 = vector.shape_cast %137 : vector<1x1x32xf32> to vector<1x32xf32>
    %c0_81 = arith.constant 0 : index
    %c5 = arith.constant 5 : index
    %c0_82 = arith.constant 0 : index
    %139 = vector.load %arg16[%c0_81, %c5, %c0_82] : memref<2x6x32xf32, #tpu.memory_space<vmem>>, vector<1x1x32xf32>
    %140 = vector.shape_cast %139 : vector<1x1x32xf32> to vector<1x32xf32>
    %cst_83 = arith.constant dense<0.000000e+00> : vector<144xf32>
    %141 = vector.multi_reduction <add>, %136, %cst_83 [1] : vector<144x32xf32> to vector<144xf32>
    %142 = vector.shape_cast %141 : vector<144xf32> to vector<144x1xf32>
    %cst_84 = arith.constant 3.200000e+01 : f32
    %143 = vector.broadcast %cst_84 : f32 to vector<144x1xf32>
    %144 = arith.divf %142, %143 : vector<144x1xf32>
    %145 = vector.broadcast %144 : vector<144x1xf32> to vector<144x32xf32>
    %146 = arith.subf %136, %145 : vector<144x32xf32>
    %147 = arith.mulf %146, %146 : vector<144x32xf32>
    %cst_85 = arith.constant dense<0.000000e+00> : vector<144xf32>
    %148 = vector.multi_reduction <add>, %147, %cst_85 [1] : vector<144x32xf32> to vector<144xf32>
    %149 = vector.shape_cast %148 : vector<144xf32> to vector<144x1xf32>
    %cst_86 = arith.constant 3.200000e+01 : f32
    %150 = vector.broadcast %cst_86 : f32 to vector<144x1xf32>
    %151 = arith.divf %149, %150 : vector<144x1xf32>
    %152 = vector.broadcast %144 : vector<144x1xf32> to vector<144x32xf32>
    %153 = arith.subf %136, %152 : vector<144x32xf32>
    %cst_87 = arith.constant 9.99999974E-6 : f32
    %154 = vector.broadcast %cst_87 : f32 to vector<144x1xf32>
    %155 = arith.addf %151, %154 : vector<144x1xf32>
    %156 = math.rsqrt %155 : vector<144x1xf32>
    %157 = vector.broadcast %156 : vector<144x1xf32> to vector<144x32xf32>
    %158 = arith.mulf %153, %157 : vector<144x32xf32>
    %159 = vector.broadcast %138 : vector<1x32xf32> to vector<144x32xf32>
    %160 = arith.mulf %158, %159 : vector<144x32xf32>
    %161 = vector.broadcast %140 : vector<1x32xf32> to vector<144x32xf32>
    %162 = arith.addf %160, %161 : vector<144x32xf32>
    %c1_88 = arith.constant 1 : index
    %c0_89 = arith.constant 0 : index
    %c0_90 = arith.constant 0 : index
    %163 = vector.load %arg10[%c1_88, %c0_89, %c0_90] : memref<2x32x96xbf16, #tpu.memory_space<vmem>>, vector<1x32x96xbf16>
    %164 = vector.shape_cast %163 : vector<1x32x96xbf16> to vector<32x96xbf16>
    %165 = arith.truncf %162 : vector<144x32xf32> to vector<144x32xbf16>
    %cst_91 = arith.constant dense<0.000000e+00> : vector<144x96xf32>
    %166 = tpu.matmul %165, %164, %cst_91 {dimension_numbers = #tpu.dot_dimension_numbers<[1], [0], [0], [1], [0, 0, 1, 1], [], []>} : vector<144x32xbf16>, vector<32x96xbf16>, vector<144x96xf32> -> vector<144x96xf32>
    %c1_92 = arith.constant 1 : index
    %c0_93 = arith.constant 0 : index
    %c0_94 = arith.constant 0 : index
    %167 = vector.load %arg11[%c1_92, %c0_93, %c0_94] : memref<2x1x96xf32, #tpu.memory_space<vmem>>, vector<1x1x96xf32>
    %168 = vector.shape_cast %167 : vector<1x1x96xf32> to vector<1x96xf32>
    %169 = vector.broadcast %168 : vector<1x96xf32> to vector<144x96xf32>
    %170 = arith.addf %166, %169 : vector<144x96xf32>
    %c1_95 = arith.constant 1 : index
    %c0_96 = arith.constant 0 : index
    %c0_97 = arith.constant 0 : index
    %171 = vector.load %arg16[%c1_95, %c0_96, %c0_97] : memref<2x6x32xf32, #tpu.memory_space<vmem>>, vector<1x1x32xf32>
    %172 = vector.shape_cast %171 : vector<1x1x32xf32> to vector<1x32xf32>
    %173 = vector.extract_strided_slice %170 {offsets = [0, 0], sizes = [144, 16], strides = [1, 1]} : vector<144x96xf32> to vector<144x16xf32>
    %174 = vector.extract_strided_slice %170 {offsets = [0, 32], sizes = [144, 16], strides = [1, 1]} : vector<144x96xf32> to vector<144x16xf32>
    %175 = vector.extract_strided_slice %170 {offsets = [0, 64], sizes = [144, 16], strides = [1, 1]} : vector<144x96xf32> to vector<144x16xf32>
    %176 = arith.truncf %173 : vector<144x16xf32> to vector<144x16xbf16>
    %177 = arith.truncf %174 : vector<144x16xf32> to vector<144x16xbf16>
    %cst_98 = arith.constant dense<0.000000e+00> : vector<144x144xf32>
    %178 = tpu.matmul %176, %177, %cst_98 {dimension_numbers = #tpu.dot_dimension_numbers<[1], [1], [0], [0], [0, 0, 1, 0], [], []>} : vector<144x16xbf16>, vector<144x16xbf16>, vector<144x144xf32> -> vector<144x144xf32>
    %cst_99 = arith.constant 2.500000e-01 : f32
    %179 = vector.broadcast %cst_99 : f32 to vector<144x144xf32>
    %180 = arith.mulf %178, %179 : vector<144x144xf32>
    %181 = arith.addf %180, %27 : vector<144x144xf32>
    %cst_100 = arith.constant dense<0xFF800000> : vector<144xf32>
    %182 = vector.multi_reduction <maximumf>, %181, %cst_100 [1] : vector<144x144xf32> to vector<144xf32>
    %183 = vector.shape_cast %182 : vector<144xf32> to vector<144x1xf32>
    %184 = vector.broadcast %183 : vector<144x1xf32> to vector<144x144xf32>
    %185 = arith.subf %181, %184 : vector<144x144xf32>
    %186 = math.exp %185 : vector<144x144xf32>
    %cst_101 = arith.constant dense<0.000000e+00> : vector<144xf32>
    %187 = vector.multi_reduction <add>, %186, %cst_101 [1] : vector<144x144xf32> to vector<144xf32>
    %188 = vector.shape_cast %187 : vector<144xf32> to vector<144x1xf32>
    %189 = vector.broadcast %188 : vector<144x1xf32> to vector<144x144xf32>
    %190 = arith.divf %186, %189 : vector<144x144xf32>
    %191 = arith.truncf %190 : vector<144x144xf32> to vector<144x144xbf16>
    %192 = arith.truncf %175 : vector<144x16xf32> to vector<144x16xbf16>
    %cst_102 = arith.constant dense<0.000000e+00> : vector<144x16xf32>
    %193 = tpu.matmul %191, %192, %cst_102 {dimension_numbers = #tpu.dot_dimension_numbers<[1], [0], [0], [1], [0, 0, 1, 1], [], []>} : vector<144x144xbf16>, vector<144x16xbf16>, vector<144x16xf32> -> vector<144x16xf32>
    %c1_103 = arith.constant 1 : index
    %c0_104 = arith.constant 0 : index
    %c0_105 = arith.constant 0 : index
    %194 = vector.load %arg12[%c1_103, %c0_104, %c0_105] : memref<2x32x32xbf16, #tpu.memory_space<vmem>>, vector<1x16x32xbf16>
    %195 = vector.shape_cast %194 : vector<1x16x32xbf16> to vector<16x32xbf16>
    %196 = arith.truncf %193 : vector<144x16xf32> to vector<144x16xbf16>
    %cst_106 = arith.constant dense<0.000000e+00> : vector<144x32xf32>
    %197 = tpu.matmul %196, %195, %cst_106 {dimension_numbers = #tpu.dot_dimension_numbers<[1], [0], [0], [1], [0, 0, 1, 1], [], []>} : vector<144x16xbf16>, vector<16x32xbf16>, vector<144x32xf32> -> vector<144x32xf32>
    %198 = vector.broadcast %172 : vector<1x32xf32> to vector<144x32xf32>
    %199 = arith.addf %198, %197 : vector<144x32xf32>
    %200 = vector.extract_strided_slice %170 {offsets = [0, 16], sizes = [144, 16], strides = [1, 1]} : vector<144x96xf32> to vector<144x16xf32>
    %201 = vector.extract_strided_slice %170 {offsets = [0, 48], sizes = [144, 16], strides = [1, 1]} : vector<144x96xf32> to vector<144x16xf32>
    %202 = vector.extract_strided_slice %170 {offsets = [0, 80], sizes = [144, 16], strides = [1, 1]} : vector<144x96xf32> to vector<144x16xf32>
    %203 = arith.truncf %200 : vector<144x16xf32> to vector<144x16xbf16>
    %204 = arith.truncf %201 : vector<144x16xf32> to vector<144x16xbf16>
    %cst_107 = arith.constant dense<0.000000e+00> : vector<144x144xf32>
    %205 = tpu.matmul %203, %204, %cst_107 {dimension_numbers = #tpu.dot_dimension_numbers<[1], [1], [0], [0], [0, 0, 1, 0], [], []>} : vector<144x16xbf16>, vector<144x16xbf16>, vector<144x144xf32> -> vector<144x144xf32>
    %cst_108 = arith.constant 2.500000e-01 : f32
    %206 = vector.broadcast %cst_108 : f32 to vector<144x144xf32>
    %207 = arith.mulf %205, %206 : vector<144x144xf32>
    %208 = arith.addf %207, %27 : vector<144x144xf32>
    %cst_109 = arith.constant dense<0xFF800000> : vector<144xf32>
    %209 = vector.multi_reduction <maximumf>, %208, %cst_109 [1] : vector<144x144xf32> to vector<144xf32>
    %210 = vector.shape_cast %209 : vector<144xf32> to vector<144x1xf32>
    %211 = vector.broadcast %210 : vector<144x1xf32> to vector<144x144xf32>
    %212 = arith.subf %208, %211 : vector<144x144xf32>
    %213 = math.exp %212 : vector<144x144xf32>
    %cst_110 = arith.constant dense<0.000000e+00> : vector<144xf32>
    %214 = vector.multi_reduction <add>, %213, %cst_110 [1] : vector<144x144xf32> to vector<144xf32>
    %215 = vector.shape_cast %214 : vector<144xf32> to vector<144x1xf32>
    %216 = vector.broadcast %215 : vector<144x1xf32> to vector<144x144xf32>
    %217 = arith.divf %213, %216 : vector<144x144xf32>
    %218 = arith.truncf %217 : vector<144x144xf32> to vector<144x144xbf16>
    %219 = arith.truncf %202 : vector<144x16xf32> to vector<144x16xbf16>
    %cst_111 = arith.constant dense<0.000000e+00> : vector<144x16xf32>
    %220 = tpu.matmul %218, %219, %cst_111 {dimension_numbers = #tpu.dot_dimension_numbers<[1], [0], [0], [1], [0, 0, 1, 1], [], []>} : vector<144x144xbf16>, vector<144x16xbf16>, vector<144x16xf32> -> vector<144x16xf32>
    %c1_112 = arith.constant 1 : index
    %c16_113 = arith.constant 16 : index
    %c0_114 = arith.constant 0 : index
    %221 = vector.load %arg12[%c1_112, %c16_113, %c0_114] : memref<2x32x32xbf16, #tpu.memory_space<vmem>>, vector<1x16x32xbf16>
    %222 = vector.shape_cast %221 : vector<1x16x32xbf16> to vector<16x32xbf16>
    %223 = arith.truncf %220 : vector<144x16xf32> to vector<144x16xbf16>
    %cst_115 = arith.constant dense<0.000000e+00> : vector<144x32xf32>
    %224 = tpu.matmul %223, %222, %cst_115 {dimension_numbers = #tpu.dot_dimension_numbers<[1], [0], [0], [1], [0, 0, 1, 1], [], []>} : vector<144x16xbf16>, vector<16x32xbf16>, vector<144x32xf32> -> vector<144x32xf32>
    %225 = arith.addf %199, %224 : vector<144x32xf32>
    %226 = arith.addf %225, %162 : vector<144x32xf32>
    %c1_116 = arith.constant 1 : index
    %c1_117 = arith.constant 1 : index
    %c0_118 = arith.constant 0 : index
    %227 = vector.load %arg16[%c1_116, %c1_117, %c0_118] : memref<2x6x32xf32, #tpu.memory_space<vmem>>, vector<1x1x32xf32>
    %228 = vector.shape_cast %227 : vector<1x1x32xf32> to vector<1x32xf32>
    %c1_119 = arith.constant 1 : index
    %c2_120 = arith.constant 2 : index
    %c0_121 = arith.constant 0 : index
    %229 = vector.load %arg16[%c1_119, %c2_120, %c0_121] : memref<2x6x32xf32, #tpu.memory_space<vmem>>, vector<1x1x32xf32>
    %230 = vector.shape_cast %229 : vector<1x1x32xf32> to vector<1x32xf32>
    %cst_122 = arith.constant dense<0.000000e+00> : vector<144xf32>
    %231 = vector.multi_reduction <add>, %226, %cst_122 [1] : vector<144x32xf32> to vector<144xf32>
    %232 = vector.shape_cast %231 : vector<144xf32> to vector<144x1xf32>
    %cst_123 = arith.constant 3.200000e+01 : f32
    %233 = vector.broadcast %cst_123 : f32 to vector<144x1xf32>
    %234 = arith.divf %232, %233 : vector<144x1xf32>
    %235 = vector.broadcast %234 : vector<144x1xf32> to vector<144x32xf32>
    %236 = arith.subf %226, %235 : vector<144x32xf32>
    %237 = arith.mulf %236, %236 : vector<144x32xf32>
    %cst_124 = arith.constant dense<0.000000e+00> : vector<144xf32>
    %238 = vector.multi_reduction <add>, %237, %cst_124 [1] : vector<144x32xf32> to vector<144xf32>
    %239 = vector.shape_cast %238 : vector<144xf32> to vector<144x1xf32>
    %cst_125 = arith.constant 3.200000e+01 : f32
    %240 = vector.broadcast %cst_125 : f32 to vector<144x1xf32>
    %241 = arith.divf %239, %240 : vector<144x1xf32>
    %242 = vector.broadcast %234 : vector<144x1xf32> to vector<144x32xf32>
    %243 = arith.subf %226, %242 : vector<144x32xf32>
    %cst_126 = arith.constant 9.99999974E-6 : f32
    %244 = vector.broadcast %cst_126 : f32 to vector<144x1xf32>
    %245 = arith.addf %241, %244 : vector<144x1xf32>
    %246 = math.rsqrt %245 : vector<144x1xf32>
    %247 = vector.broadcast %246 : vector<144x1xf32> to vector<144x32xf32>
    %248 = arith.mulf %243, %247 : vector<144x32xf32>
    %249 = vector.broadcast %228 : vector<1x32xf32> to vector<144x32xf32>
    %250 = arith.mulf %248, %249 : vector<144x32xf32>
    %251 = vector.broadcast %230 : vector<1x32xf32> to vector<144x32xf32>
    %252 = arith.addf %250, %251 : vector<144x32xf32>
    %c1_127 = arith.constant 1 : index
    %c0_128 = arith.constant 0 : index
    %c0_129 = arith.constant 0 : index
    %253 = vector.load %arg13[%c1_127, %c0_128, %c0_129] : memref<2x32x64xbf16, #tpu.memory_space<vmem>>, vector<1x32x64xbf16>
    %254 = vector.shape_cast %253 : vector<1x32x64xbf16> to vector<32x64xbf16>
    %255 = arith.truncf %252 : vector<144x32xf32> to vector<144x32xbf16>
    %cst_130 = arith.constant dense<0.000000e+00> : vector<144x64xf32>
    %256 = tpu.matmul %255, %254, %cst_130 {dimension_numbers = #tpu.dot_dimension_numbers<[1], [0], [0], [1], [0, 0, 1, 1], [], []>} : vector<144x32xbf16>, vector<32x64xbf16>, vector<144x64xf32> -> vector<144x64xf32>
    %c1_131 = arith.constant 1 : index
    %c0_132 = arith.constant 0 : index
    %c0_133 = arith.constant 0 : index
    %257 = vector.load %arg14[%c1_131, %c0_132, %c0_133] : memref<2x1x64xf32, #tpu.memory_space<vmem>>, vector<1x1x64xf32>
    %258 = vector.shape_cast %257 : vector<1x1x64xf32> to vector<1x64xf32>
    %259 = vector.broadcast %258 : vector<1x64xf32> to vector<144x64xf32>
    %260 = arith.addf %256, %259 : vector<144x64xf32>
    %cst_134 = arith.constant 0.000000e+00 : f32
    %261 = vector.broadcast %cst_134 : f32 to vector<144x64xf32>
    %262 = arith.maximumf %260, %261 : vector<144x64xf32>
    %c1_135 = arith.constant 1 : index
    %c0_136 = arith.constant 0 : index
    %c0_137 = arith.constant 0 : index
    %263 = vector.load %arg15[%c1_135, %c0_136, %c0_137] : memref<2x64x32xbf16, #tpu.memory_space<vmem>>, vector<1x64x32xbf16>
    %264 = vector.shape_cast %263 : vector<1x64x32xbf16> to vector<64x32xbf16>
    %265 = arith.truncf %262 : vector<144x64xf32> to vector<144x64xbf16>
    %cst_138 = arith.constant dense<0.000000e+00> : vector<144x32xf32>
    %266 = tpu.matmul %265, %264, %cst_138 {dimension_numbers = #tpu.dot_dimension_numbers<[1], [0], [0], [1], [0, 0, 1, 1], [], []>} : vector<144x64xbf16>, vector<64x32xbf16>, vector<144x32xf32> -> vector<144x32xf32>
    %c1_139 = arith.constant 1 : index
    %c3_140 = arith.constant 3 : index
    %c0_141 = arith.constant 0 : index
    %267 = vector.load %arg16[%c1_139, %c3_140, %c0_141] : memref<2x6x32xf32, #tpu.memory_space<vmem>>, vector<1x1x32xf32>
    %268 = vector.shape_cast %267 : vector<1x1x32xf32> to vector<1x32xf32>
    %269 = vector.broadcast %268 : vector<1x32xf32> to vector<144x32xf32>
    %270 = arith.addf %266, %269 : vector<144x32xf32>
    %271 = arith.addf %270, %252 : vector<144x32xf32>
    %c1_142 = arith.constant 1 : index
    %c4_143 = arith.constant 4 : index
    %c0_144 = arith.constant 0 : index
    %272 = vector.load %arg16[%c1_142, %c4_143, %c0_144] : memref<2x6x32xf32, #tpu.memory_space<vmem>>, vector<1x1x32xf32>
    %273 = vector.shape_cast %272 : vector<1x1x32xf32> to vector<1x32xf32>
    %c1_145 = arith.constant 1 : index
    %c5_146 = arith.constant 5 : index
    %c0_147 = arith.constant 0 : index
    %274 = vector.load %arg16[%c1_145, %c5_146, %c0_147] : memref<2x6x32xf32, #tpu.memory_space<vmem>>, vector<1x1x32xf32>
    %275 = vector.shape_cast %274 : vector<1x1x32xf32> to vector<1x32xf32>
    %cst_148 = arith.constant dense<0.000000e+00> : vector<144xf32>
    %276 = vector.multi_reduction <add>, %271, %cst_148 [1] : vector<144x32xf32> to vector<144xf32>
    %277 = vector.shape_cast %276 : vector<144xf32> to vector<144x1xf32>
    %cst_149 = arith.constant 3.200000e+01 : f32
    %278 = vector.broadcast %cst_149 : f32 to vector<144x1xf32>
    %279 = arith.divf %277, %278 : vector<144x1xf32>
    %280 = vector.broadcast %279 : vector<144x1xf32> to vector<144x32xf32>
    %281 = arith.subf %271, %280 : vector<144x32xf32>
    %282 = arith.mulf %281, %281 : vector<144x32xf32>
    %cst_150 = arith.constant dense<0.000000e+00> : vector<144xf32>
    %283 = vector.multi_reduction <add>, %282, %cst_150 [1] : vector<144x32xf32> to vector<144xf32>
    %284 = vector.shape_cast %283 : vector<144xf32> to vector<144x1xf32>
    %cst_151 = arith.constant 3.200000e+01 : f32
    %285 = vector.broadcast %cst_151 : f32 to vector<144x1xf32>
    %286 = arith.divf %284, %285 : vector<144x1xf32>
    %287 = vector.broadcast %279 : vector<144x1xf32> to vector<144x32xf32>
    %288 = arith.subf %271, %287 : vector<144x32xf32>
    %cst_152 = arith.constant 9.99999974E-6 : f32
    %289 = vector.broadcast %cst_152 : f32 to vector<144x1xf32>
    %290 = arith.addf %286, %289 : vector<144x1xf32>
    %291 = math.rsqrt %290 : vector<144x1xf32>
    %292 = vector.broadcast %291 : vector<144x1xf32> to vector<144x32xf32>
    %293 = arith.mulf %288, %292 : vector<144x32xf32>
    %294 = vector.broadcast %273 : vector<1x32xf32> to vector<144x32xf32>
    %295 = arith.mulf %293, %294 : vector<144x32xf32>
    %296 = vector.broadcast %275 : vector<1x32xf32> to vector<144x32xf32>
    %297 = arith.addf %295, %296 : vector<144x32xf32>
    %298 = vector.extract_strided_slice %297 {offsets = [0, 0], sizes = [128, 32], strides = [1, 1]} : vector<144x32xf32> to vector<128x32xf32>
    %c0_153 = arith.constant 0 : index
    %c0_154 = arith.constant 0 : index
    %299 = vector.load %arg17[%c0_153, %c0_154] : memref<32x16xbf16, #tpu.memory_space<vmem>>, vector<32x16xbf16>
    %300 = arith.truncf %298 : vector<128x32xf32> to vector<128x32xbf16>
    %cst_155 = arith.constant dense<0.000000e+00> : vector<128x16xf32>
    %301 = tpu.matmul %300, %299, %cst_155 {dimension_numbers = #tpu.dot_dimension_numbers<[1], [0], [0], [1], [0, 0, 1, 1], [], []>} : vector<128x32xbf16>, vector<32x16xbf16>, vector<128x16xf32> -> vector<128x16xf32>
    %c0_156 = arith.constant 0 : index
    %c0_157 = arith.constant 0 : index
    %302 = vector.load %arg18[%c0_156, %c0_157] : memref<1x16xf32, #tpu.memory_space<vmem>>, vector<1x16xf32>
    %303 = vector.broadcast %302 : vector<1x16xf32> to vector<128x16xf32>
    %304 = arith.addf %301, %303 : vector<128x16xf32>
    %305 = arith.subf %304, %3 : vector<128x16xf32>
    %306 = math.absf %305 : vector<128x16xf32>
    %307 = vector.broadcast %2 : vector<128x1xf32> to vector<128x16xf32>
    %308 = arith.mulf %306, %307 : vector<128x16xf32>
    %cst_158 = arith.constant dense<0.000000e+00> : vector<16xf32>
    %309 = vector.multi_reduction <add>, %308, %cst_158 [0] : vector<128x16xf32> to vector<16xf32>
    %310 = vector.shape_cast %309 : vector<16xf32> to vector<1x16xf32>
    %c0_159 = arith.constant 0 : index
    %c0_160 = arith.constant 0 : index
    %c0_161 = arith.constant 0 : index
    %311 = vector.load %arg19[%c0_159, %c0_160, %c0_161] : memref<1x1x16xf32, #tpu.memory_space<vmem>>, vector<1x1x16xf32>
    %312 = vector.shape_cast %311 : vector<1x1x16xf32> to vector<1x16xf32>
    %313 = vector.shape_cast %310 : vector<1x16xf32> to vector<1x1x16xf32>
    tpu.vector_store %arg19[%c0_159, %c0_160, %c0_161], %313 {strides = array<i32>} : memref<1x1x16xf32, #tpu.memory_space<vmem>>, vector<1x1x16xf32>,
    return
  }
  func.func @transform_0(%arg0: i32) -> (i32, i32) {
    %c0_i32 = arith.constant 0 : i32
    %c0_i32_0 = arith.constant 0 : i32
    return %arg0, %c0_i32 : i32, i32
  }
  func.func @transform_1(%arg0: i32) -> (i32, i32) {
    %c0_i32 = arith.constant 0 : i32
    %c0_i32_0 = arith.constant 0 : i32
    return %arg0, %c0_i32 : i32, i32
  }
  func.func @transform_2(%arg0: i32) -> (i32, i32) {
    %c0_i32 = arith.constant 0 : i32
    %c0_i32_0 = arith.constant 0 : i32
    return %arg0, %c0_i32 : i32, i32
  }
  func.func @transform_3(%arg0: i32) -> (i32, i32) {
    %c0_i32 = arith.constant 0 : i32
    %c0_i32_0 = arith.constant 0 : i32
    return %arg0, %c0_i32 : i32, i32
  }
  func.func @transform_4(%arg0: i32) -> (i32, i32) {
    %c0_i32 = arith.constant 0 : i32
    %c0_i32_0 = arith.constant 0 : i32
    return %arg0, %c0_i32 : i32, i32
  }
  func.func @transform_5(%arg0: i32) -> (i32, i32) {
    %c0_i32 = arith.constant 0 : i32
    %c0_i32_0 = arith.constant 0 : i32
    %c0_i32_1 = arith.constant 0 : i32
    return %c0_i32, %c0_i32_0 : i32, i32
  }
  func.func @transform_6(%arg0: i32) -> (i32, i32) {
    %c0_i32 = arith.constant 0 : i32
    %c0_i32_0 = arith.constant 0 : i32
    %c0_i32_1 = arith.constant 0 : i32
    return %c0_i32, %c0_i32_0 : i32, i32
  }
  func.func @transform_7(%arg0: i32) -> (i32, i32) {
    %c0_i32 = arith.constant 0 : i32
    %c0_i32_0 = arith.constant 0 : i32
    %c0_i32_1 = arith.constant 0 : i32
    return %c0_i32, %c0_i32_0 : i32, i32
  }
  func.func @transform_8(%arg0: i32) -> (i32, i32) {
    %c0_i32 = arith.constant 0 : i32
    %c0_i32_0 = arith.constant 0 : i32
    %c0_i32_1 = arith.constant 0 : i32
    return %c0_i32, %c0_i32_0 : i32, i32
  }
  func.func @transform_9(%arg0: i32) -> (i32, i32, i32) {
    %c0_i32 = arith.constant 0 : i32
    %c0_i32_0 = arith.constant 0 : i32
    %c0_i32_1 = arith.constant 0 : i32
    %c0_i32_2 = arith.constant 0 : i32
    return %c0_i32, %c0_i32_0, %c0_i32_1 : i32, i32, i32
  }
  func.func @transform_10(%arg0: i32) -> (i32, i32, i32) {
    %c0_i32 = arith.constant 0 : i32
    %c0_i32_0 = arith.constant 0 : i32
    %c0_i32_1 = arith.constant 0 : i32
    %c0_i32_2 = arith.constant 0 : i32
    return %c0_i32, %c0_i32_0, %c0_i32_1 : i32, i32, i32
  }
  func.func @transform_11(%arg0: i32) -> (i32, i32, i32) {
    %c0_i32 = arith.constant 0 : i32
    %c0_i32_0 = arith.constant 0 : i32
    %c0_i32_1 = arith.constant 0 : i32
    %c0_i32_2 = arith.constant 0 : i32
    return %c0_i32, %c0_i32_0, %c0_i32_1 : i32, i32, i32
  }
  func.func @transform_12(%arg0: i32) -> (i32, i32, i32) {
    %c0_i32 = arith.constant 0 : i32
    %c0_i32_0 = arith.constant 0 : i32
    %c0_i32_1 = arith.constant 0 : i32
    %c0_i32_2 = arith.constant 0 : i32
    return %c0_i32, %c0_i32_0, %c0_i32_1 : i32, i32, i32
  }
  func.func @transform_13(%arg0: i32) -> (i32, i32, i32) {
    %c0_i32 = arith.constant 0 : i32
    %c0_i32_0 = arith.constant 0 : i32
    %c0_i32_1 = arith.constant 0 : i32
    %c0_i32_2 = arith.constant 0 : i32
    return %c0_i32, %c0_i32_0, %c0_i32_1 : i32, i32, i32
  }
  func.func @transform_14(%arg0: i32) -> (i32, i32, i32) {
    %c0_i32 = arith.constant 0 : i32
    %c0_i32_0 = arith.constant 0 : i32
    %c0_i32_1 = arith.constant 0 : i32
    %c0_i32_2 = arith.constant 0 : i32
    return %c0_i32, %c0_i32_0, %c0_i32_1 : i32, i32, i32
  }
  func.func @transform_15(%arg0: i32) -> (i32, i32, i32) {
    %c0_i32 = arith.constant 0 : i32
    %c0_i32_0 = arith.constant 0 : i32
    %c0_i32_1 = arith.constant 0 : i32
    %c0_i32_2 = arith.constant 0 : i32
    return %c0_i32, %c0_i32_0, %c0_i32_1 : i32, i32, i32
  }
  func.func @transform_16(%arg0: i32) -> (i32, i32) {
    %c0_i32 = arith.constant 0 : i32
    %c0_i32_0 = arith.constant 0 : i32
    %c0_i32_1 = arith.constant 0 : i32
    return %c0_i32, %c0_i32_0 : i32, i32
  }
  func.func @transform_17(%arg0: i32) -> (i32, i32) {
    %c0_i32 = arith.constant 0 : i32
    %c0_i32_0 = arith.constant 0 : i32
    %c0_i32_1 = arith.constant 0 : i32
    return %c0_i32, %c0_i32_0 : i32, i32
  }
  func.func @transform_18(%arg0: i32) -> (i32, i32, i32) {
    %c0_i32 = arith.constant 0 : i32
    %c0_i32_0 = arith.constant 0 : i32
    %c0_i32_1 = arith.constant 0 : i32
    return %arg0, %c0_i32, %c0_i32_0 : i32, i32, i32
  }
}

</mosaic_0001>

<llo_original>
// kernel: cond_gaussian_diffusion_forward.1
$region0: #{cond_gaussian_diffusion_forward.1}
  #allocation0 [shape = 'u32[]', space=smem, size = 0x4, offset = 0x4, fixed_abs, tag = 'smem constant byte address 0x4 - core index']
  #allocation1 [shape = 'u32[144,128]{1,0:T(1,128)}', space=vmem, size = 0x12000, scoped, tag = 'internal scratch']
  #allocation2 [shape = 'f32[144,32]{1,0:T(8,128)}', space=vmem, size = 0x12000, scoped, tag = 'scratch operand']
  %s0 = inlined_call_operand.vmem [shape: f32[256,16], index: 0, kind: input, shape index: {}]
  %s1 = inlined_call_operand.vmem [shape: f32[256,16], index: 1, kind: input, shape index: {}]
  %s2 = inlined_call_operand.vmem [shape: f32[256,16], index: 2, kind: input, shape index: {}]
  %s3 = inlined_call_operand.vmem [shape: f32[256,3], index: 3, kind: input, shape index: {}]
  %s4 = inlined_call_operand.vmem [shape: f32[32,32], index: 4, kind: input, shape index: {}]
  %s5 = inlined_call_operand.vmem [shape: f32[128,32], index: 5, kind: input, shape index: {}]
  %s6 = inlined_call_operand.vmem [shape: f32[144,144], index: 6, kind: input, shape index: {}]
  %s7 = inlined_call_operand.vmem [shape: bf16[32,32], index: 7, kind: input, shape index: {}]
  %s8 = inlined_call_operand.vmem [shape: f32[1,32], index: 8, kind: input, shape index: {}]
  %s9 = inlined_call_operand.vmem [shape: bf16[2,32,96], index: 9, kind: input, shape index: {}]
  %s10 = inlined_call_operand.vmem [shape: f32[2,1,96], index: 10, kind: input, shape index: {}]
  %s11 = inlined_call_operand.vmem [shape: bf16[2,32,32], index: 11, kind: input, shape index: {}]
  %s12 = inlined_call_operand.vmem [shape: bf16[2,32,64], index: 12, kind: input, shape index: {}]
  %s13 = inlined_call_operand.vmem [shape: f32[2,1,64], index: 13, kind: input, shape index: {}]
  %s14 = inlined_call_operand.vmem [shape: bf16[2,64,32], index: 14, kind: input, shape index: {}]
  %s15 = inlined_call_operand.vmem [shape: f32[2,6,32], index: 15, kind: input, shape index: {}]
  %s16 = inlined_call_operand.vmem [shape: bf16[32,16], index: 16, kind: input, shape index: {}]
  %s17 = inlined_call_operand.vmem [shape: f32[1,16], index: 17, kind: input, shape index: {}]
  %s18 = inlined_call_operand.vmem [shape: f32[2,1,16], index: 18, kind: output, shape index: {}]
  %s19 = sld [smem:[#allocation0]]
  $region105: #{cond_gaussian_diffusion_forward.1} parent=0
    _
  %s21 = ssub.s32 1, %s19
  %s22 = scalar_select 0, %s21, %s19
  loop: start=0, step=1, limit=4
  $region2: #{cond_gaussian_diffusion_forward.1} parent=0 // loop_pre_header
    _
  $region3: #{cond_gaussian_diffusion_forward.1} parent=0 // loop_header
    %s24 = sphi 0, %s28
    %p25 = scmp.ge.s32.totalorder %s24, 4
    %s34 = sphi 0, %s36
    %s37 = sphi 0, %s34
    %s38 = sphi 0, %s37
    %s54 = sphi 0, %s38
    %s60 = sphi 0, %s62
    %s63 = sphi 0, %s60
    %s64 = sphi 0, %s63
    %s80 = sphi 0, %s64
    %s86 = sphi 0, %s88
    %s89 = sphi 0, %s86
    %s90 = sphi 0, %s89
    %s106 = sphi 0, %s90
    %s112 = sphi 0, %s114
    %s115 = sphi 0, %s112
    %s116 = sphi 0, %s115
    %s132 = sphi 0, %s116
    %s138 = sphi 0, %s140
    %s141 = sphi 0, %s138
    %s142 = sphi 0, %s141
    %s158 = sphi 0, %s142
    %s162 = sphi 0, %s162
    %s164 = sphi 0, %s162
    %s165 = sphi 0, %s164
    %s179 = sphi 0, %s165
    %s183 = sphi 0, %s183
    %s185 = sphi 0, %s183
    %s186 = sphi 0, %s185
    %s200 = sphi 0, %s186
    %s204 = sphi 0, %s204
    %s206 = sphi 0, %s204
    %s207 = sphi 0, %s206
    %s221 = sphi 0, %s207
    %s225 = sphi 0, %s225
    %s227 = sphi 0, %s225
    %s228 = sphi 0, %s227
    %s242 = sphi 0, %s228
    %s246 = sphi 0, %s246
    %s248 = sphi 0, %s246
    %s249 = sphi 0, %s248
    %s263 = sphi 0, %s249
    %s267 = sphi 0, %s267
    %s269 = sphi 0, %s267
    %s270 = sphi 0, %s269
    %s284 = sphi 0, %s270
    %s288 = sphi 0, %s288
    %s290 = sphi 0, %s288
    %s291 = sphi 0, %s290
    %s305 = sphi 0, %s291
    %s309 = sphi 0, %s309
    %s311 = sphi 0, %s309
    %s312 = sphi 0, %s311
    %s326 = sphi 0, %s312
    %s330 = sphi 0, %s330
    %s332 = sphi 0, %s330
    %s333 = sphi 0, %s332
    %s347 = sphi 0, %s333
    %s351 = sphi 0, %s351
    %s353 = sphi 0, %s351
    %s354 = sphi 0, %s353
    %s368 = sphi 0, %s354
    %s372 = sphi 0, %s372
    %s374 = sphi 0, %s372
    %s375 = sphi 0, %s374
    %s389 = sphi 0, %s375
    %s393 = sphi 0, %s393
    %s395 = sphi 0, %s393
    %s396 = sphi 0, %s395
    %s410 = sphi 0, %s396
    %s414 = sphi 0, %s414
    %s416 = sphi 0, %s414
    %s417 = sphi 0, %s416
    %s431 = sphi 0, %s417
    %s437 = sphi 0, %s439
    %s440 = sphi 0, %s437
    %s441 = sphi 0, %s440
    %s457 = sphi 0, %s441
  $region4: #{cond_gaussian_diffusion_forward.1} parent=0 // loop_header_branch
    %27 = sbr.rel (%p25) target = $region8
  $region5: #{cond_gaussian_diffusion_forward.1} parent=0 // loop_body
    %s29 = ssub.s32 %s24, 1
    %s30 = ssub.s32 %s24, 2
    %s31 = sadd.s32 %s24, 1
    %s32 = ssub.s32 %s24, %s31
    %p33 = scmp.eq.s32.totalorder %s32, 0
    %s35 = sadd.s32 %s34, 1
    %s36 = scalar_select %p33, %s34, %s35
    %p39 = pneg %p33
    %p40 = scmp.eq.s32.totalorder %s24, 1
    %p41 = por %p39, %p40
    %p42 = scmp.ne.s32.totalorder %s34, %s37
    %p43 = scmp.eq.s32.totalorder %s24, 0
    %p44 = por %p42, %p43
    %p45 = scmp.ne.s32.totalorder %s34, %s37
    %p46 = scmp.eq.s32.totalorder %s29, 1
    %p47 = por %p45, %p46
    %p48 = scmp.ne.s32.totalorder %s37, %s38
    %p49 = scmp.eq.s32.totalorder %s29, 0
    %p50 = por %p48, %p49
    %p51 = scmp.ne.s32.totalorder %s37, %s38
    %p52 = scmp.eq.s32.totalorder %s30, 1
    %p53 = por %p51, %p52
    %p55 = scmp.ne.s32.totalorder %s38, %s54
    %p56 = scmp.eq.s32.totalorder %s30, 0
    %p57 = por %p55, %p56
    %s58 = ssub.s32 %s24, %s31
    %p59 = scmp.eq.s32.totalorder %s58, 0
    %s61 = sadd.s32 %s60, 1
    %s62 = scalar_select %p59, %s60, %s61
    %p65 = pneg %p59
    %p66 = scmp.eq.s32.totalorder %s24, 1
    %p67 = por %p65, %p66
    %p68 = scmp.ne.s32.totalorder %s60, %s63
    %p69 = scmp.eq.s32.totalorder %s24, 0
    %p70 = por %p68, %p69
    %p71 = scmp.ne.s32.totalorder %s60, %s63
    %p72 = scmp.eq.s32.totalorder %s29, 1
    %p73 = por %p71, %p72
    %p74 = scmp.ne.s32.totalorder %s63, %s64
    %p75 = scmp.eq.s32.totalorder %s29, 0
    %p76 = por %p74, %p75
    %p77 = scmp.ne.s32.totalorder %s63, %s64
    %p78 = scmp.eq.s32.totalorder %s30, 1
    %p79 = por %p77, %p78
    %p81 = scmp.ne.s32.totalorder %s64, %s80
    %p82 = scmp.eq.s32.totalorder %s30, 0
    %p83 = por %p81, %p82
    %s84 = ssub.s32 %s24, %s31
    %p85 = scmp.eq.s32.totalorder %s84, 0
    %s87 = sadd.s32 %s86, 1
    %s88 = scalar_select %p85, %s86, %s87
    %p91 = pneg %p85
    %p92 = scmp.eq.s32.totalorder %s24, 1
    %p93 = por %p91, %p92
    %p94 = scmp.ne.s32.totalorder %s86, %s89
    %p95 = scmp.eq.s32.totalorder %s24, 0
    %p96 = por %p94, %p95
    %p97 = scmp.ne.s32.totalorder %s86, %s89
    %p98 = scmp.eq.s32.totalorder %s29, 1
    %p99 = por %p97, %p98
    %p100 = scmp.ne.s32.totalorder %s89, %s90
    %p101 = scmp.eq.s32.totalorder %s29, 0
    %p102 = por %p100, %p101
    %p103 = scmp.ne.s32.totalorder %s89, %s90
    %p104 = scmp.eq.s32.totalorder %s30, 1
    %p105 = por %p103, %p104
    %p107 = scmp.ne.s32.totalorder %s90, %s106
    %p108 = scmp.eq.s32.totalorder %s30, 0
    %p109 = por %p107, %p108
    %s110 = ssub.s32 %s24, %s31
    %p111 = scmp.eq.s32.totalorder %s110, 0
    %s113 = sadd.s32 %s112, 1
    %s114 = scalar_select %p111, %s112, %s113
    %p117 = pneg %p111
    %p118 = scmp.eq.s32.totalorder %s24, 1
    %p119 = por %p117, %p118
    %p120 = scmp.ne.s32.totalorder %s112, %s115
    %p121 = scmp.eq.s32.totalorder %s24, 0
    %p122 = por %p120, %p121
    %p123 = scmp.ne.s32.totalorder %s112, %s115
    %p124 = scmp.eq.s32.totalorder %s29, 1
    %p125 = por %p123, %p124
    %p126 = scmp.ne.s32.totalorder %s115, %s116
    %p127 = scmp.eq.s32.totalorder %s29, 0
    %p128 = por %p126, %p127
    %p129 = scmp.ne.s32.totalorder %s115, %s116
    %p130 = scmp.eq.s32.totalorder %s30, 1
    %p131 = por %p129, %p130
    %p133 = scmp.ne.s32.totalorder %s116, %s132
    %p134 = scmp.eq.s32.totalorder %s30, 0
    %p135 = por %p133, %p134
    %s136 = ssub.s32 %s24, %s31
    %p137 = scmp.eq.s32.totalorder %s136, 0
    %s139 = sadd.s32 %s138, 1
    %s140 = scalar_select %p137, %s138, %s139
    %p143 = pneg %p137
    %p144 = scmp.eq.s32.totalorder %s24, 1
    %p145 = por %p143, %p144
    %p146 = scmp.ne.s32.totalorder %s138, %s141
    %p147 = scmp.eq.s32.totalorder %s24, 0
    %p148 = por %p146, %p147
    %p149 = scmp.ne.s32.totalorder %s138, %s141
    %p150 = scmp.eq.s32.totalorder %s29, 1
    %p151 = por %p149, %p150
    %p152 = scmp.ne.s32.totalorder %s141, %s142
    %p153 = scmp.eq.s32.totalorder %s29, 0
    %p154 = por %p152, %p153
    %p155 = scmp.ne.s32.totalorder %s141, %s142
    %p156 = scmp.eq.s32.totalorder %s30, 1
    %p157 = por %p155, %p156
    %p159 = scmp.ne.s32.totalorder %s142, %s158
    %p160 = scmp.eq.s32.totalorder %s30, 0
    %p161 = por %p159, %p160
    %s163 = sadd.s32 %s162, 1
    %p166 = scmp.eq.s32.totalorder %s24, 1
    %p167 = scmp.ne.s32.totalorder %s162, %s164
    %p168 = scmp.eq.s32.totalorder %s24, 0
    %p169 = por %p167, %p168
    %p170 = scmp.ne.s32.totalorder %s162, %s164
    %p171 = scmp.eq.s32.totalorder %s29, 1
    %p172 = por %p170, %p171
    %p173 = scmp.ne.s32.totalorder %s164, %s165
    %p174 = scmp.eq.s32.totalorder %s29, 0
    %p175 = por %p173, %p174
    %p176 = scmp.ne.s32.totalorder %s164, %s165
    %p177 = scmp.eq.s32.totalorder %s30, 1
    %p178 = por %p176, %p177
    %p180 = scmp.ne.s32.totalorder %s165, %s179
    %p181 = scmp.eq.s32.totalorder %s30, 0
    %p182 = por %p180, %p181
    %s184 = sadd.s32 %s183, 1
    %p187 = scmp.eq.s32.totalorder %s24, 1
    %p188 = scmp.ne.s32.totalorder %s183, %s185
    %p189 = scmp.eq.s32.totalorder %s24, 0
    %p190 = por %p188, %p189
    %p191 = scmp.ne.s32.totalorder %s183, %s185
    %p192 = scmp.eq.s32.totalorder %s29, 1
    %p193 = por %p191, %p192
    %p194 = scmp.ne.s32.totalorder %s185, %s186
    %p195 = scmp.eq.s32.totalorder %s29, 0
    %p196 = por %p194, %p195
    %p197 = scmp.ne.s32.totalorder %s185, %s186
    %p198 = scmp.eq.s32.totalorder %s30, 1
    %p199 = por %p197, %p198
    %p201 = scmp.ne.s32.totalorder %s186, %s200
    %p202 = scmp.eq.s32.totalorder %s30, 0
    %p203 = por %p201, %p202
    %s205 = sadd.s32 %s204, 1
    %p208 = scmp.eq.s32.totalorder %s24, 1
    %p209 = scmp.ne.s32.totalorder %s204, %s206
    %p210 = scmp.eq.s32.totalorder %s24, 0
    %p211 = por %p209, %p210
    %p212 = scmp.ne.s32.totalorder %s204, %s206
    %p213 = scmp.eq.s32.totalorder %s29, 1
    %p214 = por %p212, %p213
    %p215 = scmp.ne.s32.totalorder %s206, %s207
    %p216 = scmp.eq.s32.totalorder %s29, 0
    %p217 = por %p215, %p216
    %p218 = scmp.ne.s32.totalorder %s206, %s207
    %p219 = scmp.eq.s32.totalorder %s30, 1
    %p220 = por %p218, %p219
    %p222 = scmp.ne.s32.totalorder %s207, %s221
    %p223 = scmp.eq.s32.totalorder %s30, 0
    %p224 = por %p222, %p223
    %s226 = sadd.s32 %s225, 1
    %p229 = scmp.eq.s32.totalorder %s24, 1
    %p230 = scmp.ne.s32.totalorder %s225, %s227
    %p231 = scmp.eq.s32.totalorder %s24, 0
    %p232 = por %p230, %p231
    %p233 = scmp.ne.s32.totalorder %s225, %s227
    %p234 = scmp.eq.s32.totalorder %s29, 1
    %p235 = por %p233, %p234
    %p236 = scmp.ne.s32.totalorder %s227, %s228
    %p237 = scmp.eq.s32.totalorder %s29, 0
    %p238 = por %p236, %p237
    %p239 = scmp.ne.s32.totalorder %s227, %s228
    %p240 = scmp.eq.s32.totalorder %s30, 1
    %p241 = por %p239, %p240
    %p243 = scmp.ne.s32.totalorder %s228, %s242
    %p244 = scmp.eq.s32.totalorder %s30, 0
    %p245 = por %p243, %p244
    %s247 = sadd.s32 %s246, 1
    %p250 = scmp.eq.s32.totalorder %s24, 1
    %p251 = scmp.ne.s32.totalorder %s246, %s248
    %p252 = scmp.eq.s32.totalorder %s24, 0
    %p253 = por %p251, %p252
    %p254 = scmp.ne.s32.totalorder %s246, %s248
    %p255 = scmp.eq.s32.totalorder %s29, 1
    %p256 = por %p254, %p255
    %p257 = scmp.ne.s32.totalorder %s248, %s249
    %p258 = scmp.eq.s32.totalorder %s29, 0
    %p259 = por %p257, %p258
    %p260 = scmp.ne.s32.totalorder %s248, %s249
    %p261 = scmp.eq.s32.totalorder %s30, 1
    %p262 = por %p260, %p261
    %p264 = scmp.ne.s32.totalorder %s249, %s263
    %p265 = scmp.eq.s32.totalorder %s30, 0
    %p266 = por %p264, %p265
    %s268 = sadd.s32 %s267, 1
    %p271 = scmp.eq.s32.totalorder %s24, 1
    %p272 = scmp.ne.s32.totalorder %s267, %s269
    %p273 = scmp.eq.s32.totalorder %s24, 0
    %p274 = por %p272, %p273
    %p275 = scmp.ne.s32.totalorder %s267, %s269
    %p276 = scmp.eq.s32.totalorder %s29, 1
    %p277 = por %p275, %p276
    %p278 = scmp.ne.s32.totalorder %s269, %s270
    %p279 = scmp.eq.s32.totalorder %s29, 0
    %p280 = por %p278, %p279
    %p281 = scmp.ne.s32.totalorder %s269, %s270
    %p282 = scmp.eq.s32.totalorder %s30, 1
    %p283 = por %p281, %p282
    %p285 = scmp.ne.s32.totalorder %s270, %s284
    %p286 = scmp.eq.s32.totalorder %s30, 0
    %p287 = por %p285, %p286
    %s289 = sadd.s32 %s288, 1
    %p292 = scmp.eq.s32.totalorder %s24, 1
    %p293 = scmp.ne.s32.totalorder %s288, %s290
    %p294 = scmp.eq.s32.totalorder %s24, 0
    %p295 = por %p293, %p294
    %p296 = scmp.ne.s32.totalorder %s288, %s290
    %p297 = scmp.eq.s32.totalorder %s29, 1
    %p298 = por %p296, %p297
    %p299 = scmp.ne.s32.totalorder %s290, %s291
    %p300 = scmp.eq.s32.totalorder %s29, 0
    %p301 = por %p299, %p300
    %p302 = scmp.ne.s32.totalorder %s290, %s291
    %p303 = scmp.eq.s32.totalorder %s30, 1
    %p304 = por %p302, %p303
    %p306 = scmp.ne.s32.totalorder %s291, %s305
    %p307 = scmp.eq.s32.totalorder %s30, 0
    %p308 = por %p306, %p307
    %s310 = sadd.s32 %s309, 1
    %p313 = scmp.eq.s32.totalorder %s24, 1
    %p314 = scmp.ne.s32.totalorder %s309, %s311
    %p315 = scmp.eq.s32.totalorder %s24, 0
    %p316 = por %p314, %p315
    %p317 = scmp.ne.s32.totalorder %s309, %s311
    %p318 = scmp.eq.s32.totalorder %s29, 1
    %p319 = por %p317, %p318
    %p320 = scmp.ne.s32.totalorder %s311, %s312
    %p321 = scmp.eq.s32.totalorder %s29, 0
    %p322 = por %p320, %p321
    %p323 = scmp.ne.s32.totalorder %s311, %s312
    %p324 = scmp.eq.s32.totalorder %s30, 1
    %p325 = por %p323, %p324
    %p327 = scmp.ne.s32.totalorder %s312, %s326
    %p328 = scmp.eq.s32.totalorder %s30, 0
    %p329 = por %p327, %p328
    %s331 = sadd.s32 %s330, 1
    %p334 = scmp.eq.s32.totalorder %s24, 1
    %p335 = scmp.ne.s32.totalorder %s330, %s332
    %p336 = scmp.eq.s32.totalorder %s24, 0
    %p337 = por %p335, %p336
    %p338 = scmp.ne.s32.totalorder %s330, %s332
    %p339 = scmp.eq.s32.totalorder %s29, 1
    %p340 = por %p338, %p339
    %p341 = scmp.ne.s32.totalorder %s332, %s333
    %p342 = scmp.eq.s32.totalorder %s29, 0
    %p343 = por %p341, %p342
    %p344 = scmp.ne.s32.totalorder %s332, %s333
    %p345 = scmp.eq.s32.totalorder %s30, 1
    %p346 = por %p344, %p345
    %p348 = scmp.ne.s32.totalorder %s333, %s347
    %p349 = scmp.eq.s32.totalorder %s30, 0
    %p350 = por %p348, %p349
    %s352 = sadd.s32 %s351, 1
    %p355 = scmp.eq.s32.totalorder %s24, 1
    %p356 = scmp.ne.s32.totalorder %s351, %s353
    %p357 = scmp.eq.s32.totalorder %s24, 0
    %p358 = por %p356, %p357
    %p359 = scmp.ne.s32.totalorder %s351, %s353
    %p360 = scmp.eq.s32.totalorder %s29, 1
    %p361 = por %p359, %p360
    %p362 = scmp.ne.s32.totalorder %s353, %s354
    %p363 = scmp.eq.s32.totalorder %s29, 0
    %p364 = por %p362, %p363
    %p365 = scmp.ne.s32.totalorder %s353, %s354
    %p366 = scmp.eq.s32.totalorder %s30, 1
    %p367 = por %p365, %p366
    %p369 = scmp.ne.s32.totalorder %s354, %s368
    %p370 = scmp.eq.s32.totalorder %s30, 0
    %p371 = por %p369, %p370
    %s373 = sadd.s32 %s372, 1
    %p376 = scmp.eq.s32.totalorder %s24, 1
    %p377 = scmp.ne.s32.totalorder %s372, %s374
    %p378 = scmp.eq.s32.totalorder %s24, 0
    %p379 = por %p377, %p378
    %p380 = scmp.ne.s32.totalorder %s372, %s374
    %p381 = scmp.eq.s32.totalorder %s29, 1
    %p382 = por %p380, %p381
    %p383 = scmp.ne.s32.totalorder %s374, %s375
    %p384 = scmp.eq.s32.totalorder %s29, 0
    %p385 = por %p383, %p384
    %p386 = scmp.ne.s32.totalorder %s374, %s375
    %p387 = scmp.eq.s32.totalorder %s30, 1
    %p388 = por %p386, %p387
    %p390 = scmp.ne.s32.totalorder %s375, %s389
    %p391 = scmp.eq.s32.totalorder %s30, 0
    %p392 = por %p390, %p391
    %s394 = sadd.s32 %s393, 1
    %p397 = scmp.eq.s32.totalorder %s24, 1
    %p398 = scmp.ne.s32.totalorder %s393, %s395
    %p399 = scmp.eq.s32.totalorder %s24, 0
    %p400 = por %p398, %p399
    %p401 = scmp.ne.s32.totalorder %s393, %s395
    %p402 = scmp.eq.s32.totalorder %s29, 1
    %p403 = por %p401, %p402
    %p404 = scmp.ne.s32.totalorder %s395, %s396
    %p405 = scmp.eq.s32.totalorder %s29, 0
    %p406 = por %p404, %p405
    %p407 = scmp.ne.s32.totalorder %s395, %s396
    %p408 = scmp.eq.s32.totalorder %s30, 1
    %p409 = por %p407, %p408
    %p411 = scmp.ne.s32.totalorder %s396, %s410
    %p412 = scmp.eq.s32.totalorder %s30, 0
    %p413 = por %p411, %p412
    %s415 = sadd.s32 %s414, 1
    %p418 = scmp.eq.s32.totalorder %s24, 1
    %p419 = scmp.ne.s32.totalorder %s414, %s416
    %p420 = scmp.eq.s32.totalorder %s24, 0
    %p421 = por %p419, %p420
    %p422 = scmp.ne.s32.totalorder %s414, %s416
    %p423 = scmp.eq.s32.totalorder %s29, 1
    %p424 = por %p422, %p423
    %p425 = scmp.ne.s32.totalorder %s416, %s417
    %p426 = scmp.eq.s32.totalorder %s29, 0
    %p427 = por %p425, %p426
    %p428 = scmp.ne.s32.totalorder %s416, %s417
    %p429 = scmp.eq.s32.totalorder %s30, 1
    %p430 = por %p428, %p429
    %p432 = scmp.ne.s32.totalorder %s417, %s431
    %p433 = scmp.eq.s32.totalorder %s30, 0
    %p434 = por %p432, %p433
    %s435 = ssub.s32 %s24, %s31
    %p436 = scmp.eq.s32.totalorder %s435, 0
    %s438 = sadd.s32 %s437, 1
    %s439 = scalar_select %p436, %s437, %s438
    %p442 = pneg %p436
    %p443 = scmp.eq.s32.totalorder %s24, 1
    %p444 = por %p442, %p443
    %p445 = scmp.ne.s32.totalorder %s437, %s440
    %p446 = scmp.eq.s32.totalorder %s24, 0
    %p447 = por %p445, %p446
    %p448 = scmp.ne.s32.totalorder %s437, %s440
    %p449 = scmp.eq.s32.totalorder %s29, 1
    %p450 = por %p448, %p449
    %p451 = scmp.ne.s32.totalorder %s440, %s441
    %p452 = scmp.eq.s32.totalorder %s29, 0
    %p453 = por %p451, %p452
    %p454 = scmp.ne.s32.totalorder %s440, %s441
    %p455 = scmp.eq.s32.totalorder %s30, 1
    %p456 = por %p454, %p455
    %p458 = scmp.ne.s32.totalorder %s441, %s457
    %p459 = scmp.eq.s32.totalorder %s30, 0
    %p460 = por %p458, %p459
    %p461 = scmp.le.s32.totalorder 1, %s24
    %p462 = scmp.lt.s32.totalorder %s24, 3
    %p463 = pnand %p461, %p462
    %p464 = pneg %p463
    // Predicated region
    $region9: #{cond_gaussian_diffusion_forward.1} parent=5 // pred_check
      _
    $region10: #{cond_gaussian_diffusion_forward.1} parent=5 // pred_check_branch
      %466 = sbr.rel (%p463) target = $region12
    $region11: #{cond_gaussian_diffusion_forward.1} parent=5 // pred_region
      %s467 = ssub.s32 %s24, 1
      // Predicated region
      $region13: #{cond_gaussian_diffusion_forward.1} parent=11 // pred_check
        %p468 = pneg %p175
      $region14: #{cond_gaussian_diffusion_forward.1} parent=11 // pred_check_branch
        %470 = sbr.rel (%p468) target = $region16
      $region15: #{cond_gaussian_diffusion_forward.1} parent=11 // pred_region
        _
      $region16: #{cond_gaussian_diffusion_forward.1} parent=11 // pred_fallthru
        _
      // Predicated region
      $region17: #{cond_gaussian_diffusion_forward.1} parent=11 // pred_check
        %p471 = pneg %p196
      $region18: #{cond_gaussian_diffusion_forward.1} parent=11 // pred_check_branch
        %473 = sbr.rel (%p471) target = $region20
      $region19: #{cond_gaussian_diffusion_forward.1} parent=11 // pred_region
        _
      $region20: #{cond_gaussian_diffusion_forward.1} parent=11 // pred_fallthru
        _
      // Predicated region
      $region21: #{cond_gaussian_diffusion_forward.1} parent=11 // pred_check
        %p474 = pneg %p217
      $region22: #{cond_gaussian_diffusion_forward.1} parent=11 // pred_check_branch
        %476 = sbr.rel (%p474) target = $region24
      $region23: #{cond_gaussian_diffusion_forward.1} parent=11 // pred_region
        _
      $region24: #{cond_gaussian_diffusion_forward.1} parent=11 // pred_fallthru
        _
      // Predicated region
      $region25: #{cond_gaussian_diffusion_forward.1} parent=11 // pred_check
        %p477 = pneg %p238
      $region26: #{cond_gaussian_diffusion_forward.1} parent=11 // pred_check_branch
        %479 = sbr.rel (%p477) target = $region28
      $region27: #{cond_gaussian_diffusion_forward.1} parent=11 // pred_region
        _
      $region28: #{cond_gaussian_diffusion_forward.1} parent=11 // pred_fallthru
        _
      // Predicated region
      $region29: #{cond_gaussian_diffusion_forward.1} parent=11 // pred_check
        %p480 = pneg %p259
      $region30: #{cond_gaussian_diffusion_forward.1} parent=11 // pred_check_branch
        %482 = sbr.rel (%p480) target = $region32
      $region31: #{cond_gaussian_diffusion_forward.1} parent=11 // pred_region
        _
      $region32: #{cond_gaussian_diffusion_forward.1} parent=11 // pred_fallthru
        _
      // Predicated region
      $region33: #{cond_gaussian_diffusion_forward.1} parent=11 // pred_check
        %p483 = pneg %p280
      $region34: #{cond_gaussian_diffusion_forward.1} parent=11 // pred_check_branch
        %485 = sbr.rel (%p483) target = $region36
      $region35: #{cond_gaussian_diffusion_forward.1} parent=11 // pred_region
        _
      $region36: #{cond_gaussian_diffusion_forward.1} parent=11 // pred_fallthru
        _
      // Predicated region
      $region37: #{cond_gaussian_diffusion_forward.1} parent=11 // pred_check
        %p486 = pneg %p301
      $region38: #{cond_gaussian_diffusion_forward.1} parent=11 // pred_check_branch
        %488 = sbr.rel (%p486) target = $region40
      $region39: #{cond_gaussian_diffusion_forward.1} parent=11 // pred_region
        _
      $region40: #{cond_gaussian_diffusion_forward.1} parent=11 // pred_fallthru
        _
      // Predicated region
      $region41: #{cond_gaussian_diffusion_forward.1} parent=11 // pred_check
        %p489 = pneg %p322
      $region42: #{cond_gaussian_diffusion_forward.1} parent=11 // pred_check_branch
        %491 = sbr.rel (%p489) target = $region44
      $region43: #{cond_gaussian_diffusion_forward.1} parent=11 // pred_region
        _
      $region44: #{cond_gaussian_diffusion_forward.1} parent=11 // pred_fallthru
        _
      // Predicated region
      $region45: #{cond_gaussian_diffusion_forward.1} parent=11 // pred_check
        %p492 = pneg %p343
      $region46: #{cond_gaussian_diffusion_forward.1} parent=11 // pred_check_branch
        %494 = sbr.rel (%p492) target = $region48
      $region47: #{cond_gaussian_diffusion_forward.1} parent=11 // pred_region
        _
      $region48: #{cond_gaussian_diffusion_forward.1} parent=11 // pred_fallthru
        _
      // Predicated region
      $region49: #{cond_gaussian_diffusion_forward.1} parent=11 // pred_check
        %p495 = pneg %p364
      $region50: #{cond_gaussian_diffusion_forward.1} parent=11 // pred_check_branch
        %497 = sbr.rel (%p495) target = $region52
      $region51: #{cond_gaussian_diffusion_forward.1} parent=11 // pred_region
        _
      $region52: #{cond_gaussian_diffusion_forward.1} parent=11 // pred_fallthru
        _
      // Predicated region
      $region53: #{cond_gaussian_diffusion_forward.1} parent=11 // pred_check
        %p498 = pneg %p385
      $region54: #{cond_gaussian_diffusion_forward.1} parent=11 // pred_check_branch
        %500 = sbr.rel (%p498) target = $region56
      $region55: #{cond_gaussian_diffusion_forward.1} parent=11 // pred_region
        _
      $region56: #{cond_gaussian_diffusion_forward.1} parent=11 // pred_fallthru
        _
      // Predicated region
      $region57: #{cond_gaussian_diffusion_forward.1} parent=11 // pred_check
        %p501 = pneg %p406
      $region58: #{cond_gaussian_diffusion_forward.1} parent=11 // pred_check_branch
        %503 = sbr.rel (%p501) target = $region60
      $region59: #{cond_gaussian_diffusion_forward.1} parent=11 // pred_region
        _
      $region60: #{cond_gaussian_diffusion_forward.1} parent=11 // pred_fallthru
        _
      // Predicated region
      $region61: #{cond_gaussian_diffusion_forward.1} parent=11 // pred_check
        %p504 = pneg %p427
      $region62: #{cond_gaussian_diffusion_forward.1} parent=11 // pred_check_branch
        %506 = sbr.rel (%p504) target = $region64
      $region63: #{cond_gaussian_diffusion_forward.1} parent=11 // pred_region
        _
      $region64: #{cond_gaussian_diffusion_forward.1} parent=11 // pred_fallthru
        _
    $region12: #{cond_gaussian_diffusion_forward.1} parent=5 // pred_fallthru
      _
    %p507 = scmp.lt.s32.totalorder %s24, 2
    // Predicated region
    $region65: #{cond_gaussian_diffusion_forward.1} parent=5 // pred_check
      %p508 = pneg %p507
    $region66: #{cond_gaussian_diffusion_forward.1} parent=5 // pred_check_branch
      %510 = sbr.rel (%p508) target = $region68
    $region67: #{cond_gaussian_diffusion_forward.1} parent=5 // pred_region
      // Predicated region
      $region69: #{cond_gaussian_diffusion_forward.1} parent=67 // pred_check
        %p511 = pneg %p44
      $region70: #{cond_gaussian_diffusion_forward.1} parent=67 // pred_check_branch
        %513 = sbr.rel (%p511) target = $region72
      $region71: #{cond_gaussian_diffusion_forward.1} parent=67 // pred_region
        %s514 = smul.u32 16, %s24
        %p515 = scmp.lt.s32.totalorder %s514, 31
        %s516 = scalar_select %p515, %s514, 31
        %s517 = smul.addr %s516, 8
        %s518 = scalar_lea.vmem %s0, %s517
        %s519 = smul.u32 16, %s24
      $region72: #{cond_gaussian_diffusion_forward.1} parent=67 // pred_fallthru
        _
      // Predicated region
      $region73: #{cond_gaussian_diffusion_forward.1} parent=67 // pred_check
        %p520 = pneg %p70
      $region74: #{cond_gaussian_diffusion_forward.1} parent=67 // pred_check_branch
        %522 = sbr.rel (%p520) target = $region76
      $region75: #{cond_gaussian_diffusion_forward.1} parent=67 // pred_region
        %s523 = smul.u32 16, %s24
        %p524 = scmp.lt.s32.totalorder %s523, 31
        %s525 = scalar_select %p524, %s523, 31
        %s526 = smul.addr %s525, 8
        %s527 = scalar_lea.vmem %s1, %s526
        %s528 = smul.u32 16, %s24
      $region76: #{cond_gaussian_diffusion_forward.1} parent=67 // pred_fallthru
        _
      // Predicated region
      $region77: #{cond_gaussian_diffusion_forward.1} parent=67 // pred_check
        %p529 = pneg %p96
      $region78: #{cond_gaussian_diffusion_forward.1} parent=67 // pred_check_branch
        %531 = sbr.rel (%p529) target = $region80
      $region79: #{cond_gaussian_diffusion_forward.1} parent=67 // pred_region
        %s532 = smul.u32 16, %s24
        %p533 = scmp.lt.s32.totalorder %s532, 31
        %s534 = scalar_select %p533, %s532, 31
        %s535 = smul.addr %s534, 8
        %s536 = scalar_lea.vmem %s2, %s535
        %s537 = smul.u32 16, %s24
      $region80: #{cond_gaussian_diffusion_forward.1} parent=67 // pred_fallthru
        _
      // Predicated region
      $region81: #{cond_gaussian_diffusion_forward.1} parent=67 // pred_check
        %p538 = pneg %p122
      $region82: #{cond_gaussian_diffusion_forward.1} parent=67 // pred_check_branch
        %540 = sbr.rel (%p538) target = $region84
      $region83: #{cond_gaussian_diffusion_forward.1} parent=67 // pred_region
        %s541 = smul.u32 16, %s24
        %p542 = scmp.lt.s32.totalorder %s541, 31
        %s543 = scalar_select %p542, %s541, 31
        %s544 = smul.addr %s543, 8
        %s545 = scalar_lea.vmem %s3, %s544
        %s546 = smul.u32 16, %s24
      $region84: #{cond_gaussian_diffusion_forward.1} parent=67 // pred_fallthru
        _
      // Predicated region
      $region85: #{cond_gaussian_diffusion_forward.1} parent=67 // pred_check
        %p547 = pneg %p148
      $region86: #{cond_gaussian_diffusion_forward.1} parent=67 // pred_check_branch
        %549 = sbr.rel (%p547) target = $region88
      $region87: #{cond_gaussian_diffusion_forward.1} parent=67 // pred_region
        %s550 = smul.u32 2, %s24
        %p551 = scmp.lt.s32.totalorder %s550, 3
        %s552 = scalar_select %p551, %s550, 3
        %s553 = smul.addr %s552, 8
        %s554 = scalar_lea.vmem %s4, %s553
        %s555 = smul.u32 2, %s24
      $region88: #{cond_gaussian_diffusion_forward.1} parent=67 // pred_fallthru
        _
    $region68: #{cond_gaussian_diffusion_forward.1} parent=5 // pred_fallthru
      _
    %p556 = scmp.le.s32.totalorder 1, %s24
    %p557 = scmp.lt.s32.totalorder %s24, 3
    %p558 = pnand %p556, %p557
    %p559 = pneg %p558
    // Predicated region
    $region89: #{cond_gaussian_diffusion_forward.1} parent=5 // pred_check
      _
    $region90: #{cond_gaussian_diffusion_forward.1} parent=5 // pred_check_branch
      %561 = sbr.rel (%p558) target = $region92
    $region91: #{cond_gaussian_diffusion_forward.1} parent=5 // pred_region
      %s562 = ssub.s32 %s24, 1
      %s563 = smul.u32 16, %s29
      %p564 = scmp.lt.s32.totalorder %s563, 31
      %s565 = scalar_select %p564, %s563, 31
      %s566 = smul.addr %s565, 8
      %s567 = scalar_lea.vmem %s0, %s566
      %p568 = pneg %p50
      %p569 = pneg %p47
      %s570 = smul.u32 16, %s29
      %p571 = scmp.lt.s32.totalorder %s570, 31
      %s572 = scalar_select %p571, %s570, 31
      %s573 = smul.addr %s572, 8
      %s574 = scalar_lea.vmem %s1, %s573
      %p575 = pneg %p76
      %p576 = pneg %p73
      %s577 = smul.u32 16, %s29
      %p578 = scmp.lt.s32.totalorder %s577, 31
      %s579 = scalar_select %p578, %s577, 31
      %s580 = smul.addr %s579, 8
      %s581 = scalar_lea.vmem %s2, %s580
      %p582 = pneg %p102
      %p583 = pneg %p99
      %s584 = smul.u32 16, %s29
      %p585 = scmp.lt.s32.totalorder %s584, 31
      %s586 = scalar_select %p585, %s584, 31
      %s587 = smul.addr %s586, 8
      %s588 = scalar_lea.vmem %s3, %s587
      %p589 = pneg %p128
      %p590 = pneg %p125
      %s591 = smul.u32 2, %s29
      %p592 = scmp.lt.s32.totalorder %s591, 3
      %s593 = scalar_select %p592, %s591, 3
      %s594 = smul.addr %s593, 8
      %s595 = scalar_lea.vmem %s4, %s594
      %p596 = pneg %p154
      %p597 = pneg %p151
      %p598 = pneg %p175
      %p599 = pneg %p172
      %p600 = pneg %p196
      %p601 = pneg %p193
      %p602 = pneg %p217
      %p603 = pneg %p214
      %p604 = pneg %p238
      %p605 = pneg %p235
      %p606 = pneg %p259
      %p607 = pneg %p256
      %p608 = pneg %p280
      %p609 = pneg %p277
      %p610 = pneg %p301
      %p611 = pneg %p298
      %p612 = pneg %p322
      %p613 = pneg %p319
      %p614 = pneg %p343
      %p615 = pneg %p340
      %p616 = pneg %p364
      %p617 = pneg %p361
      %p618 = pneg %p385
      %p619 = pneg %p382
      %p620 = pneg %p406
      %p621 = pneg %p403
      %p622 = pneg %p427
      %p623 = pneg %p424
      %p624 = pneg %p453
      %p625 = pneg %p450
      %p626 = scmp.lt.s32.totalorder %s29, 1
      %s627 = scalar_select %p626, %s29, 1
      %s628 = scalar_lea.vmem %s18, %s627
      %s629 = smul.u32 16, %s29
      %p630 = scmp.lt.s32.totalorder %s629, 31
      %s631 = scalar_select %p630, %s629, 31
      %s632 = smul.addr %s631, 8
      %s633 = scalar_lea.vmem %s0, %s632
      %s634 = smul.u32 16, %s29
      %s635 = smul.u32 16, %s29
      %p636 = scmp.lt.s32.totalorder %s635, 31
      %s637 = scalar_select %p636, %s635, 31
      %s638 = smul.addr %s637, 8
      %s639 = scalar_lea.vmem %s1, %s638
      %s640 = smul.u32 16, %s29
      %s641 = smul.u32 16, %s29
      %p642 = scmp.lt.s32.totalorder %s641, 31
      %s643 = scalar_select %p642, %s641, 31
      %s644 = smul.addr %s643, 8
      %s645 = scalar_lea.vmem %s2, %s644
      %s646 = smul.u32 16, %s29
      %s647 = smul.u32 16, %s29
      %p648 = scmp.lt.s32.totalorder %s647, 31
      %s649 = scalar_select %p648, %s647, 31
      %s650 = smul.addr %s649, 8
      %s651 = scalar_lea.vmem %s3, %s650
      %s652 = smul.u32 16, %s29
      %s653 = smul.u32 2, %s29
      %p654 = scmp.lt.s32.totalorder %s653, 3
      %s655 = scalar_select %p654, %s653, 3
      %s656 = smul.addr %s655, 8
      %s657 = scalar_lea.vmem %s4, %s656
      %s658 = smul.u32 2, %s29
      %p659 = scmp.lt.s32.totalorder %s29, 1
      %s660 = scalar_select %p659, %s29, 1
      %s661 = scalar_lea.vmem %s18, %s660
      %v663 = vld [vmem:[%s651] sm:$0xff]
      %v664 = vld [vmem:[%s651 + $0x8] sm:$0xff]
      %v665 = vld [vmem:[%s651 + $0x10] sm:$0xff]
      %v666 = vld [vmem:[%s651 + $0x18] sm:$0xff]
      %v667 = vld [vmem:[%s651 + $0x20] sm:$0xff]
      %v668 = vld [vmem:[%s651 + $0x28] sm:$0xff]
      %v669 = vld [vmem:[%s651 + $0x30] sm:$0xff]
      %v670 = vld [vmem:[%s651 + $0x38] sm:$0xff]
      %v671 = vld [vmem:[%s651 + $0x40] sm:$0xff]
      %v672 = vld [vmem:[%s651 + $0x48] sm:$0xff]
      %v673 = vld [vmem:[%s651 + $0x50] sm:$0xff]
      %v674 = vld [vmem:[%s651 + $0x58] sm:$0xff]
      %v675 = vld [vmem:[%s651 + $0x60] sm:$0xff]
      %v676 = vld [vmem:[%s651 + $0x68] sm:$0xff]
      %v677 = vld [vmem:[%s651 + $0x70] sm:$0xff]
      %v678 = vld [vmem:[%s651 + $0x78] sm:$0xff]
      %v679 = vld [vmem:[%s639] sm:$0xff]
      %v680 = vld [vmem:[%s639 + $0x8] sm:$0xff]
      %v681 = vld [vmem:[%s639 + $0x10] sm:$0xff]
      %v682 = vld [vmem:[%s639 + $0x18] sm:$0xff]
      %v683 = vld [vmem:[%s639 + $0x20] sm:$0xff]
      %v684 = vld [vmem:[%s639 + $0x28] sm:$0xff]
      %v685 = vld [vmem:[%s639 + $0x30] sm:$0xff]
      %v686 = vld [vmem:[%s639 + $0x38] sm:$0xff]
      %v687 = vld [vmem:[%s639 + $0x40] sm:$0xff]
      %v688 = vld [vmem:[%s639 + $0x48] sm:$0xff]
      %v689 = vld [vmem:[%s639 + $0x50] sm:$0xff]
      %v690 = vld [vmem:[%s639 + $0x58] sm:$0xff]
      %v691 = vld [vmem:[%s639 + $0x60] sm:$0xff]
      %v692 = vld [vmem:[%s639 + $0x68] sm:$0xff]
      %v693 = vld [vmem:[%s639 + $0x70] sm:$0xff]
      %v694 = vld [vmem:[%s639 + $0x78] sm:$0xff]
      %v695 = vld [vmem:[%s633] sm:$0xff]
      %v696 = vld [vmem:[%s633 + $0x8] sm:$0xff]
      %v697 = vld [vmem:[%s633 + $0x10] sm:$0xff]
      %v698 = vld [vmem:[%s633 + $0x18] sm:$0xff]
      %v699 = vld [vmem:[%s633 + $0x20] sm:$0xff]
      %v700 = vld [vmem:[%s633 + $0x28] sm:$0xff]
      %v701 = vld [vmem:[%s633 + $0x30] sm:$0xff]
      %v702 = vld [vmem:[%s633 + $0x38] sm:$0xff]
      %v703 = vld [vmem:[%s633 + $0x40] sm:$0xff]
      %v704 = vld [vmem:[%s633 + $0x48] sm:$0xff]
      %v705 = vld [vmem:[%s633 + $0x50] sm:$0xff]
      %v706 = vld [vmem:[%s633 + $0x58] sm:$0xff]
      %v707 = vld [vmem:[%s633 + $0x60] sm:$0xff]
      %v708 = vld [vmem:[%s633 + $0x68] sm:$0xff]
      %v709 = vld [vmem:[%s633 + $0x70] sm:$0xff]
      %v710 = vld [vmem:[%s633 + $0x78] sm:$0xff]
      %712 = vset.pattern.permute.xlu0 0
      %713 = vperm.xlu0 %712, %v663
      %v714 = vpop.permute.xlu0 %713
      %717 = vset.pattern.permute.xlu0 0
      %718 = vperm.xlu0 %717, %v664
      %v719 = vpop.permute.xlu0 %718
      %722 = vset.pattern.permute.xlu0 0
      %723 = vperm.xlu0 %722, %v665
      %v724 = vpop.permute.xlu0 %723
      %727 = vset.pattern.permute.xlu0 0
      %728 = vperm.xlu0 %727, %v666
      %v729 = vpop.permute.xlu0 %728
      %732 = vset.pattern.permute.xlu0 0
      %733 = vperm.xlu0 %732, %v667
      %v734 = vpop.permute.xlu0 %733
      %737 = vset.pattern.permute.xlu0 0
      %738 = vperm.xlu0 %737, %v668
      %v739 = vpop.permute.xlu0 %738
      %742 = vset.pattern.permute.xlu0 0
      %743 = vperm.xlu0 %742, %v669
      %v744 = vpop.permute.xlu0 %743
      %747 = vset.pattern.permute.xlu0 0
      %748 = vperm.xlu0 %747, %v670
      %v749 = vpop.permute.xlu0 %748
      %752 = vset.pattern.permute.xlu0 0
      %753 = vperm.xlu0 %752, %v671
      %v754 = vpop.permute.xlu0 %753
      %757 = vset.pattern.permute.xlu0 0
      %758 = vperm.xlu0 %757, %v672
      %v759 = vpop.permute.xlu0 %758
      %762 = vset.pattern.permute.xlu0 0
      %763 = vperm.xlu0 %762, %v673
      %v764 = vpop.permute.xlu0 %763
      %767 = vset.pattern.permute.xlu0 0
      %768 = vperm.xlu0 %767, %v674
      %v769 = vpop.permute.xlu0 %768
      %772 = vset.pattern.permute.xlu0 0
      %773 = vperm.xlu0 %772, %v675
      %v774 = vpop.permute.xlu0 %773
      %777 = vset.pattern.permute.xlu0 0
      %778 = vperm.xlu0 %777, %v676
      %v779 = vpop.permute.xlu0 %778
      %782 = vset.pattern.permute.xlu0 0
      %783 = vperm.xlu0 %782, %v677
      %v784 = vpop.permute.xlu0 %783
      %787 = vset.pattern.permute.xlu0 0
      %788 = vperm.xlu0 %787, %v678
      %v789 = vpop.permute.xlu0 %788
      %v791 = vmul.f32 %v714, %v695
      %v792 = vmul.f32 %v719, %v696
      %v793 = vmul.f32 %v724, %v697
      %v794 = vmul.f32 %v729, %v698
      %v795 = vmul.f32 %v734, %v699
      %v796 = vmul.f32 %v739, %v700
      %v797 = vmul.f32 %v744, %v701
      %v798 = vmul.f32 %v749, %v702
      %v799 = vmul.f32 %v754, %v703
      %v800 = vmul.f32 %v759, %v704
      %v801 = vmul.f32 %v764, %v705
      %v802 = vmul.f32 %v769, %v706
      %v803 = vmul.f32 %v774, %v707
      %v804 = vmul.f32 %v779, %v708
      %v805 = vmul.f32 %v784, %v709
      %v806 = vmul.f32 %v789, %v710
      %807 = vset.pattern.permute.xlu0 1
      %808 = vperm.xlu0 %807, %v663
      %v809 = vpop.permute.xlu0 %808
      %811 = vset.pattern.permute.xlu0 1
      %812 = vperm.xlu0 %811, %v664
      %v813 = vpop.permute.xlu0 %812
      %815 = vset.pattern.permute.xlu0 1
      %816 = vperm.xlu0 %815, %v665
      %v817 = vpop.permute.xlu0 %816
      %819 = vset.pattern.permute.xlu0 1
      %820 = vperm.xlu0 %819, %v666
      %v821 = vpop.permute.xlu0 %820
      %823 = vset.pattern.permute.xlu0 1
      %824 = vperm.xlu0 %823, %v667
      %v825 = vpop.permute.xlu0 %824
      %827 = vset.pattern.permute.xlu0 1
      %828 = vperm.xlu0 %827, %v668
      %v829 = vpop.permute.xlu0 %828
      %831 = vset.pattern.permute.xlu0 1
      %832 = vperm.xlu0 %831, %v669
      %v833 = vpop.permute.xlu0 %832
      %835 = vset.pattern.permute.xlu0 1
      %836 = vperm.xlu0 %835, %v670
      %v837 = vpop.permute.xlu0 %836
      %839 = vset.pattern.permute.xlu0 1
      %840 = vperm.xlu0 %839, %v671
      %v841 = vpop.permute.xlu0 %840
      %843 = vset.pattern.permute.xlu0 1
      %844 = vperm.xlu0 %843, %v672
      %v845 = vpop.permute.xlu0 %844
      %847 = vset.pattern.permute.xlu0 1
      %848 = vperm.xlu0 %847, %v673
      %v849 = vpop.permute.xlu0 %848
      %851 = vset.pattern.permute.xlu0 1
      %852 = vperm.xlu0 %851, %v674
      %v853 = vpop.permute.xlu0 %852
      %855 = vset.pattern.permute.xlu0 1
      %856 = vperm.xlu0 %855, %v675
      %v857 = vpop.permute.xlu0 %856
      %859 = vset.pattern.permute.xlu0 1
      %860 = vperm.xlu0 %859, %v676
      %v861 = vpop.permute.xlu0 %860
      %863 = vset.pattern.permute.xlu0 1
      %864 = vperm.xlu0 %863, %v677
      %v865 = vpop.permute.xlu0 %864
      %867 = vset.pattern.permute.xlu0 1
      %868 = vperm.xlu0 %867, %v678
      %v869 = vpop.permute.xlu0 %868
      %v871 = vmul.f32 %v809, %v679
      %v872 = vmul.f32 %v813, %v680
      %v873 = vmul.f32 %v817, %v681
      %v874 = vmul.f32 %v821, %v682
      %v875 = vmul.f32 %v825, %v683
      %v876 = vmul.f32 %v829, %v684
      %v877 = vmul.f32 %v833, %v685
      %v878 = vmul.f32 %v837, %v686
      %v879 = vmul.f32 %v841, %v687
      %v880 = vmul.f32 %v845, %v688
      %v881 = vmul.f32 %v849, %v689
      %v882 = vmul.f32 %v853, %v690
      %v883 = vmul.f32 %v857, %v691
      %v884 = vmul.f32 %v861, %v692
      %v885 = vmul.f32 %v865, %v693
      %v886 = vmul.f32 %v869, %v694
      %v887 = vadd.f32 %v791, %v871
      %v888 = vadd.f32 %v792, %v872
      %v889 = vadd.f32 %v793, %v873
      %v890 = vadd.f32 %v794, %v874
      %v891 = vadd.f32 %v795, %v875
      %v892 = vadd.f32 %v796, %v876
      %v893 = vadd.f32 %v797, %v877
      %v894 = vadd.f32 %v798, %v878
      %v895 = vadd.f32 %v799, %v879
      %v896 = vadd.f32 %v800, %v880
      %v897 = vadd.f32 %v801, %v881
      %v898 = vadd.f32 %v802, %v882
      %v899 = vadd.f32 %v803, %v883
      %v900 = vadd.f32 %v804, %v884
      %v901 = vadd.f32 %v805, %v885
      %v902 = vadd.f32 %v806, %v886
      %v903 = vld [vmem:[%s7] sm:$0xf]
      %v904 = vld [vmem:[%s7 + $0x4] sm:$0xf]
      %v905 = vpack.c.bf16 %v888, %v887
      %v906 = vpack.c.bf16 %v890, %v889
      %v907 = vpack.c.bf16 %v892, %v891
      %v908 = vpack.c.bf16 %v894, %v893
      %v909 = vpack.c.bf16 %v896, %v895
      %v910 = vpack.c.bf16 %v898, %v897
      %v911 = vpack.c.bf16 %v900, %v899
      %v912 = vpack.c.bf16 %v902, %v901
      %v913 = vld [vmem:[%s645] sm:$0xff]
      %v914 = vld [vmem:[%s645 + $0x8] sm:$0xff]
      %v915 = vld [vmem:[%s645 + $0x10] sm:$0xff]
      %v916 = vld [vmem:[%s645 + $0x18] sm:$0xff]
      %v917 = vld [vmem:[%s645 + $0x20] sm:$0xff]
      %v918 = vld [vmem:[%s645 + $0x28] sm:$0xff]
      %v919 = vld [vmem:[%s645 + $0x30] sm:$0xff]
      %v920 = vld [vmem:[%s645 + $0x38] sm:$0xff]
      %v921 = vld [vmem:[%s645 + $0x40] sm:$0xff]
      %v922 = vld [vmem:[%s645 + $0x48] sm:$0xff]
      %v923 = vld [vmem:[%s645 + $0x50] sm:$0xff]
      %v924 = vld [vmem:[%s645 + $0x58] sm:$0xff]
      %v925 = vld [vmem:[%s645 + $0x60] sm:$0xff]
      %v926 = vld [vmem:[%s645 + $0x68] sm:$0xff]
      %v927 = vld [vmem:[%s645 + $0x70] sm:$0xff]
      %v928 = vld [vmem:[%s645 + $0x78] sm:$0xff]
      %v929 = vld [vmem:[%s7 + $0x8] sm:$0xf]
      %v930 = vld [vmem:[%s7 + $0xc] sm:$0xf]
      %v931 = vpack.c.bf16 %v914, %v913
      %v932 = vpack.c.bf16 %v916, %v915
      %v933 = vpack.c.bf16 %v918, %v917
      %v934 = vpack.c.bf16 %v920, %v919
      %v935 = vpack.c.bf16 %v922, %v921
      %v936 = vpack.c.bf16 %v924, %v923
      %v937 = vpack.c.bf16 %v926, %v925
      %v938 = vpack.c.bf16 %v928, %v927
      %v941 = vunpack.c.l.b16 %v929
      %v942 = vunpack.c.l.b16 %v930
      %v943 = vpack.c.b16 %v942, %v941
      %vm945 = vcmask 130048
      %v947 = vsel %vm945, %v931, 0
      %v950 = vsel %vm945, %v932, 0
      %v953 = vsel %vm945, %v933, 0
      %v956 = vsel %vm945, %v934, 0
      %v959 = vsel %vm945, %v935, 0
      %v962 = vsel %vm945, %v936, 0
      %v965 = vsel %vm945, %v937, 0
      %v968 = vsel %vm945, %v938, 0
      %970 = vmatprep.subr.bf16.mxu0 0
      %971 = vmatpush1.bf16.msra.mxu0 0
      %972 = vmatprep.subr.bf16.mxu0 0
      %973 = vmatpush1.bf16.msra.mxu0 0
      %974 = vmatprep.subr.bf16.mxu0 0
      %975 = vmatpush1.bf16.msra.mxu0 0
      %976 = vmatprep.subr.bf16.mxu0 0
      %977 = vmatpush1.bf16.msra.mxu0 0
      %978 = vmatprep.subr.bf16.mxu0 0
      %979 = vmatpush1.bf16.msra.mxu0 0
      %980 = vmatprep.subr.bf16.mxu0 0
      %981 = vmatpush1.bf16.msra.mxu0 0
      %982 = vmatprep.subr.bf16.mxu0 0
      %983 = vmatpush1.bf16.msra.mxu0 0
      %984 = vmatprep.subr.bf16.mxu0 0
      %985 = vmatpush1.bf16.msra.mxu0 %v943
      %986 = vmatprep.subr.bf16.mxu0 0
      %987 = vmatpush2.bf16.msra.mxu0 0
      %988 = vmatprep.subr.bf16.mxu0 0
      %989 = vmatpush2.bf16.msra.mxu0 0
      %990 = vmatprep.subr.bf16.mxu0 0
      %991 = vmatpush2.bf16.msra.mxu0 0
      %992 = vmatprep.subr.bf16.mxu0 0
      %993 = vmatpush2.bf16.msra.mxu0 0
      %994 = vmatprep.subr.bf16.mxu0 0
      %995 = vmatpush2.bf16.msra.mxu0 0
      %996 = vmatprep.subr.bf16.mxu0 0
      %997 = vmatpush2.bf16.msra.mxu0 0
      %998 = vmatprep.subr.bf16.mxu0 0
      %999 = vmatpush2.bf16.msra.mxu0 0
      %1000 = vmatprep.subr.bf16.mxu0 0
      %1001 = vmatpush2.bf16.msra.mxu0 0
      %1002 = vmatprep.mubr.bf16.mxu0 0
      %1003 = vmatmul.mubr.bf16.gmra.mxu0 %v947
      %v1004 = vpop.f32.mrf.mxu0
      %v1005 = vadd.f32 0.0, %v1004
      %v1006 = vpop.f32.mrf.mxu0
      %v1007 = vpop.f32.mrf.mxu0
      %v1008 = vadd.f32 0.0, %v1007
      %v1009 = vpop.f32.mrf.mxu0
      %1010 = vmatprep.mubr.bf16.mxu0 0
      %1011 = vmatmul.mubr.bf16.gmra.mxu0 %v950
      %v1012 = vpop.f32.mrf.mxu0
      %v1013 = vadd.f32 0.0, %v1012
      %v1014 = vpop.f32.mrf.mxu0
      %v1015 = vpop.f32.mrf.mxu0
      %v1016 = vadd.f32 0.0, %v1015
      %v1017 = vpop.f32.mrf.mxu0
      %1018 = vmatprep.mubr.bf16.mxu0 0
      %1019 = vmatmul.mubr.bf16.gmra.mxu0 %v953
      %v1020 = vpop.f32.mrf.mxu0
      %v1021 = vadd.f32 0.0, %v1020
      %v1022 = vpop.f32.mrf.mxu0
      %v1023 = vpop.f32.mrf.mxu0
      %v1024 = vadd.f32 0.0, %v1023
      %v1025 = vpop.f32.mrf.mxu0
      %1026 = vmatprep.mubr.bf16.mxu0 0
      %1027 = vmatmul.mubr.bf16.gmra.mxu0 %v956
      %v1028 = vpop.f32.mrf.mxu0
      %v1029 = vadd.f32 0.0, %v1028
      %v1030 = vpop.f32.mrf.mxu0
      %v1031 = vpop.f32.mrf.mxu0
      %v1032 = vadd.f32 0.0, %v1031
      %v1033 = vpop.f32.mrf.mxu0
      %1034 = vmatprep.mubr.bf16.mxu0 0
      %1035 = vmatmul.mubr.bf16.gmra.mxu0 %v959
      %v1036 = vpop.f32.mrf.mxu0
      %v1037 = vadd.f32 0.0, %v1036
      %v1038 = vpop.f32.mrf.mxu0
      %v1039 = vpop.f32.mrf.mxu0
      %v1040 = vadd.f32 0.0, %v1039
      %v1041 = vpop.f32.mrf.mxu0
      %1042 = vmatprep.mubr.bf16.mxu0 0
      %1043 = vmatmul.mubr.bf16.gmra.mxu0 %v962
      %v1044 = vpop.f32.mrf.mxu0
      %v1045 = vadd.f32 0.0, %v1044
      %v1046 = vpop.f32.mrf.mxu0
      %v1047 = vpop.f32.mrf.mxu0
      %v1048 = vadd.f32 0.0, %v1047
      %v1049 = vpop.f32.mrf.mxu0
      %1050 = vmatprep.mubr.bf16.mxu0 0
      %1051 = vmatmul.mubr.bf16.gmra.mxu0 %v965
      %v1052 = vpop.f32.mrf.mxu0
      %v1053 = vadd.f32 0.0, %v1052
      %v1054 = vpop.f32.mrf.mxu0
      %v1055 = vpop.f32.mrf.mxu0
      %v1056 = vadd.f32 0.0, %v1055
      %v1057 = vpop.f32.mrf.mxu0
      %1058 = vmatprep.mubr.bf16.mxu0 0
      %1059 = vmatmul.mubr.bf16.gmra.mxu0 %v968
      %v1060 = vpop.f32.mrf.mxu0
      %v1061 = vadd.f32 0.0, %v1060
      %v1062 = vpop.f32.mrf.mxu0
      %v1063 = vpop.f32.mrf.mxu0
      %v1064 = vadd.f32 0.0, %v1063
      %v1065 = vpop.f32.mrf.mxu0
      %1066 = vdwg.mxu0
      %v1069 = vunpack.c.l.b16 %v903
      %v1070 = vunpack.c.l.b16 %v904
      %v1071 = vpack.c.b16 %v1070, %v1069
      %v1074 = vsel %vm945, %v905, 0
      %v1077 = vsel %vm945, %v906, 0
      %v1080 = vsel %vm945, %v907, 0
      %v1083 = vsel %vm945, %v908, 0
      %v1086 = vsel %vm945, %v909, 0
      %v1089 = vsel %vm945, %v910, 0
      %v1092 = vsel %vm945, %v911, 0
      %v1095 = vsel %vm945, %v912, 0
      %1097 = vmatprep.subr.bf16.mxu0 0
      %1098 = vmatpush1.bf16.msra.mxu0 0
      %1099 = vmatprep.subr.bf16.mxu0 0
      %1100 = vmatpush1.bf16.msra.mxu0 0
      %1101 = vmatprep.subr.bf16.mxu0 0
      %1102 = vmatpush1.bf16.msra.mxu0 0
      %1103 = vmatprep.subr.bf16.mxu0 0
      %1104 = vmatpush1.bf16.msra.mxu0 0
      %1105 = vmatprep.subr.bf16.mxu0 0
      %1106 = vmatpush1.bf16.msra.mxu0 0
      %1107 = vmatprep.subr.bf16.mxu0 0
      %1108 = vmatpush1.bf16.msra.mxu0 0
      %1109 = vmatprep.subr.bf16.mxu0 0
      %1110 = vmatpush1.bf16.msra.mxu0 0
      %1111 = vmatprep.subr.bf16.mxu0 0
      %1112 = vmatpush1.bf16.msra.mxu0 %v1071
      %1113 = vmatprep.subr.bf16.mxu0 0
      %1114 = vmatpush2.bf16.msra.mxu0 0
      %1115 = vmatprep.subr.bf16.mxu0 0
      %1116 = vmatpush2.bf16.msra.mxu0 0
      %1117 = vmatprep.subr.bf16.mxu0 0
      %1118 = vmatpush2.bf16.msra.mxu0 0
      %1119 = vmatprep.subr.bf16.mxu0 0
      %1120 = vmatpush2.bf16.msra.mxu0 0
      %1121 = vmatprep.subr.bf16.mxu0 0
      %1122 = vmatpush2.bf16.msra.mxu0 0
      %1123 = vmatprep.subr.bf16.mxu0 0
      %1124 = vmatpush2.bf16.msra.mxu0 0
      %1125 = vmatprep.subr.bf16.mxu0 0
      %1126 = vmatpush2.bf16.msra.mxu0 0
      %1127 = vmatprep.subr.bf16.mxu0 0
      %1128 = vmatpush2.bf16.msra.mxu0 0
      %1129 = vmatprep.mubr.bf16.mxu0 0
      %1130 = vmatmul.mubr.bf16.gmra.mxu0 %v1074
      %v1131 = vpop.f32.mrf.mxu0
      %v1132 = vadd.f32 %v1005, %v1131
      %v1133 = vpop.f32.mrf.mxu0
      %v1134 = vpop.f32.mrf.mxu0
      %v1135 = vadd.f32 %v1008, %v1134
      %v1136 = vpop.f32.mrf.mxu0
      %1137 = vmatprep.mubr.bf16.mxu0 0
      %1138 = vmatmul.mubr.bf16.gmra.mxu0 %v1077
      %v1139 = vpop.f32.mrf.mxu0
      %v1140 = vadd.f32 %v1013, %v1139
      %v1141 = vpop.f32.mrf.mxu0
      %v1142 = vpop.f32.mrf.mxu0
      %v1143 = vadd.f32 %v1016, %v1142
      %v1144 = vpop.f32.mrf.mxu0
      %1145 = vmatprep.mubr.bf16.mxu0 0
      %1146 = vmatmul.mubr.bf16.gmra.mxu0 %v1080
      %v1147 = vpop.f32.mrf.mxu0
      %v1148 = vadd.f32 %v1021, %v1147
      %v1149 = vpop.f32.mrf.mxu0
      %v1150 = vpop.f32.mrf.mxu0
      %v1151 = vadd.f32 %v1024, %v1150
      %v1152 = vpop.f32.mrf.mxu0
      %1153 = vmatprep.mubr.bf16.mxu0 0
      %1154 = vmatmul.mubr.bf16.gmra.mxu0 %v1083
      %v1155 = vpop.f32.mrf.mxu0
      %v1156 = vadd.f32 %v1029, %v1155
      %v1157 = vpop.f32.mrf.mxu0
      %v1158 = vpop.f32.mrf.mxu0
      %v1159 = vadd.f32 %v1032, %v1158
      %v1160 = vpop.f32.mrf.mxu0
      %1161 = vmatprep.mubr.bf16.mxu0 0
      %1162 = vmatmul.mubr.bf16.gmra.mxu0 %v1086
      %v1163 = vpop.f32.mrf.mxu0
      %v1164 = vadd.f32 %v1037, %v1163
      %v1165 = vpop.f32.mrf.mxu0
      %v1166 = vpop.f32.mrf.mxu0
      %v1167 = vadd.f32 %v1040, %v1166
      %v1168 = vpop.f32.mrf.mxu0
      %1169 = vmatprep.mubr.bf16.mxu0 0
      %1170 = vmatmul.mubr.bf16.gmra.mxu0 %v1089
      %v1171 = vpop.f32.mrf.mxu0
      %v1172 = vadd.f32 %v1045, %v1171
      %v1173 = vpop.f32.mrf.mxu0
      %v1174 = vpop.f32.mrf.mxu0
      %v1175 = vadd.f32 %v1048, %v1174
      %v1176 = vpop.f32.mrf.mxu0
      %1177 = vmatprep.mubr.bf16.mxu0 0
      %1178 = vmatmul.mubr.bf16.gmra.mxu0 %v1092
      %v1179 = vpop.f32.mrf.mxu0
      %v1180 = vadd.f32 %v1053, %v1179
      %v1181 = vpop.f32.mrf.mxu0
      %v1182 = vpop.f32.mrf.mxu0
      %v1183 = vadd.f32 %v1056, %v1182
      %v1184 = vpop.f32.mrf.mxu0
      %1185 = vmatprep.mubr.bf16.mxu0 0
      %1186 = vmatmul.mubr.bf16.gmra.mxu0 %v1095
      %v1187 = vpop.f32.mrf.mxu0
      %v1188 = vadd.f32 %v1061, %v1187
      %v1189 = vpop.f32.mrf.mxu0
      %v1190 = vpop.f32.mrf.mxu0
      %v1191 = vadd.f32 %v1064, %v1190
      %v1192 = vpop.f32.mrf.mxu0
      %1193 = vdwg.mxu0
      %v1194 = vld [vmem:[%s8] sm:$0x1]
      %v1196 = vlaneseq
      %v1197 = vshrl.u32 %v1196, 7
      %v1198 = vsub.s32 0, %v1197
      %v1199 = vrot.slane %v1194, %v1198
      %v1201 = vadd.f32 %v1132, %v1199
      %v1202 = vadd.f32 %v1135, %v1199
      %v1203 = vadd.f32 %v1140, %v1199
      %v1204 = vadd.f32 %v1143, %v1199
      %v1205 = vadd.f32 %v1148, %v1199
      %v1206 = vadd.f32 %v1151, %v1199
      %v1207 = vadd.f32 %v1156, %v1199
      %v1208 = vadd.f32 %v1159, %v1199
      %v1209 = vadd.f32 %v1164, %v1199
      %v1210 = vadd.f32 %v1167, %v1199
      %v1211 = vadd.f32 %v1172, %v1199
      %v1212 = vadd.f32 %v1175, %v1199
      %v1213 = vadd.f32 %v1180, %v1199
      %v1214 = vadd.f32 %v1183, %v1199
      %v1215 = vadd.f32 %v1188, %v1199
      %v1216 = vadd.f32 %v1191, %v1199
      %v1217 = vld [vmem:[%s5] sm:$0xff]
      %v1218 = vld [vmem:[%s5 + $0x8] sm:$0xff]
      %v1219 = vld [vmem:[%s5 + $0x10] sm:$0xff]
      %v1220 = vld [vmem:[%s5 + $0x18] sm:$0xff]
      %v1221 = vld [vmem:[%s5 + $0x20] sm:$0xff]
      %v1222 = vld [vmem:[%s5 + $0x28] sm:$0xff]
      %v1223 = vld [vmem:[%s5 + $0x30] sm:$0xff]
      %v1224 = vld [vmem:[%s5 + $0x38] sm:$0xff]
      %v1225 = vld [vmem:[%s5 + $0x40] sm:$0xff]
      %v1226 = vld [vmem:[%s5 + $0x48] sm:$0xff]
      %v1227 = vld [vmem:[%s5 + $0x50] sm:$0xff]
      %v1228 = vld [vmem:[%s5 + $0x58] sm:$0xff]
      %v1229 = vld [vmem:[%s5 + $0x60] sm:$0xff]
      %v1230 = vld [vmem:[%s5 + $0x68] sm:$0xff]
      %v1231 = vld [vmem:[%s5 + $0x70] sm:$0xff]
      %v1232 = vld [vmem:[%s5 + $0x78] sm:$0xff]
      %v1233 = vadd.f32 %v1201, %v1217
      %v1234 = vadd.f32 %v1202, %v1218
      %v1235 = vadd.f32 %v1203, %v1219
      %v1236 = vadd.f32 %v1204, %v1220
      %v1237 = vadd.f32 %v1205, %v1221
      %v1238 = vadd.f32 %v1206, %v1222
      %v1239 = vadd.f32 %v1207, %v1223
      %v1240 = vadd.f32 %v1208, %v1224
      %v1241 = vadd.f32 %v1209, %v1225
      %v1242 = vadd.f32 %v1210, %v1226
      %v1243 = vadd.f32 %v1211, %v1227
      %v1244 = vadd.f32 %v1212, %v1228
      %v1245 = vadd.f32 %v1213, %v1229
      %v1246 = vadd.f32 %v1214, %v1230
      %v1247 = vadd.f32 %v1215, %v1231
      %v1248 = vadd.f32 %v1216, %v1232
      %vm1249 = vcmask 261120
      %1250 = vst.msk [vmem:[#allocation2] sm:$0xff] %vm1249, %v1233
      %1251 = vst.msk [vmem:[#allocation2 + $0x8] sm:$0xff] %vm1249, %v1234
      %1252 = vst.msk [vmem:[#allocation2 + $0x10] sm:$0xff] %vm1249, %v1235
      %1253 = vst.msk [vmem:[#allocation2 + $0x18] sm:$0xff] %vm1249, %v1236
      %1254 = vst.msk [vmem:[#allocation2 + $0x20] sm:$0xff] %vm1249, %v1237
      %1255 = vst.msk [vmem:[#allocation2 + $0x28] sm:$0xff] %vm1249, %v1238
      %1256 = vst.msk [vmem:[#allocation2 + $0x30] sm:$0xff] %vm1249, %v1239
      %1257 = vst.msk [vmem:[#allocation2 + $0x38] sm:$0xff] %vm1249, %v1240
      %1258 = vst.msk [vmem:[#allocation2 + $0x40] sm:$0xff] %vm1249, %v1241
      %1259 = vst.msk [vmem:[#allocation2 + $0x48] sm:$0xff] %vm1249, %v1242
      %1260 = vst.msk [vmem:[#allocation2 + $0x50] sm:$0xff] %vm1249, %v1243
      %1261 = vst.msk [vmem:[#allocation2 + $0x58] sm:$0xff] %vm1249, %v1244
      %1262 = vst.msk [vmem:[#allocation2 + $0x60] sm:$0xff] %vm1249, %v1245
      %1263 = vst.msk [vmem:[#allocation2 + $0x68] sm:$0xff] %vm1249, %v1246
      %1264 = vst.msk [vmem:[#allocation2 + $0x70] sm:$0xff] %vm1249, %v1247
      %1265 = vst.msk [vmem:[#allocation2 + $0x78] sm:$0xff] %vm1249, %v1248
      %v1266 = vld [vmem:[%s657] sm:$0xff]
      %v1267 = vld [vmem:[%s657 + $0x8] sm:$0xff]
      %1268 = vst.msk [vmem:[#allocation2 + $0x80] sm:$0xff] %vm1249, %v1266
      %1269 = vst.msk [vmem:[#allocation2 + $0x88] sm:$0xff] %vm1249, %v1267
      %v1270 = vld [vmem:[#allocation2] sm:$0xff]
      %v1271 = vld [vmem:[#allocation2 + $0x8] sm:$0xff]
      %v1272 = vld [vmem:[#allocation2 + $0x10] sm:$0xff]
      %v1273 = vld [vmem:[#allocation2 + $0x18] sm:$0xff]
      %v1274 = vld [vmem:[#allocation2 + $0x20] sm:$0xff]
      %v1275 = vld [vmem:[#allocation2 + $0x28] sm:$0xff]
      %v1276 = vld [vmem:[#allocation2 + $0x30] sm:$0xff]
      %v1277 = vld [vmem:[#allocation2 + $0x38] sm:$0xff]
      %v1278 = vld [vmem:[#allocation2 + $0x40] sm:$0xff]
      %v1279 = vld [vmem:[#allocation2 + $0x48] sm:$0xff]
      %v1280 = vld [vmem:[#allocation2 + $0x50] sm:$0xff]
      %v1281 = vld [vmem:[#allocation2 + $0x58] sm:$0xff]
      %v1282 = vld [vmem:[#allocation2 + $0x60] sm:$0xff]
      %v1283 = vld [vmem:[#allocation2 + $0x68] sm:$0xff]
      %v1284 = vld [vmem:[#allocation2 + $0x70] sm:$0xff]
      %v1285 = vld [vmem:[#allocation2 + $0x78] sm:$0xff]
      %v1286 = vld [vmem:[#allocation2 + $0x80] sm:$0xff]
      %v1287 = vld [vmem:[#allocation2 + $0x88] sm:$0xff]
      %v1288 = vld [vmem:[%s6] sm:$0xff]
      %v1289 = vld [vmem:[%s6 + $0x8] sm:$0xff]
      %v1290 = vld [vmem:[%s6 + $0x10] sm:$0xff]
      %v1291 = vld [vmem:[%s6 + $0x18] sm:$0xff]
      %v1292 = vld [vmem:[%s6 + $0x20] sm:$0xff]
      %v1293 = vld [vmem:[%s6 + $0x28] sm:$0xff]
      %v1294 = vld [vmem:[%s6 + $0x30] sm:$0xff]
      %v1295 = vld [vmem:[%s6 + $0x38] sm:$0xff]
      %v1296 = vld [vmem:[%s6 + $0x40] sm:$0xff]
      %v1297 = vld [vmem:[%s6 + $0x48] sm:$0xff]
      %v1298 = vld [vmem:[%s6 + $0x50] sm:$0xff]
      %v1299 = vld [vmem:[%s6 + $0x58] sm:$0xff]
      %v1300 = vld [vmem:[%s6 + $0x60] sm:$0xff]
      %v1301 = vld [vmem:[%s6 + $0x68] sm:$0xff]
      %v1302 = vld [vmem:[%s6 + $0x70] sm:$0xff]
      %v1303 = vld [vmem:[%s6 + $0x78] sm:$0xff]
      %v1304 = vld [vmem:[%s6 + $0x80] sm:$0xff]
      %v1305 = vld [vmem:[%s6 + $0x88] sm:$0xff]
      %v1306 = vld [vmem:[%s6 + $0x90] sm:$0xff]
      %v1307 = vld [vmem:[%s6 + $0x98] sm:$0xff]
      %v1308 = vld [vmem:[%s6 + $0xa0] sm:$0xff]
      %v1309 = vld [vmem:[%s6 + $0xa8] sm:$0xff]
      %v1310 = vld [vmem:[%s6 + $0xb0] sm:$0xff]
      %v1311 = vld [vmem:[%s6 + $0xb8] sm:$0xff]
      %v1312 = vld [vmem:[%s6 + $0xc0] sm:$0xff]
      %v1313 = vld [vmem:[%s6 + $0xc8] sm:$0xff]
      %v1314 = vld [vmem:[%s6 + $0xd0] sm:$0xff]
      %v1315 = vld [vmem:[%s6 + $0xd8] sm:$0xff]
      %v1316 = vld [vmem:[%s6 + $0xe0] sm:$0xff]
      %v1317 = vld [vmem:[%s6 + $0xe8] sm:$0xff]
      %v1318 = vld [vmem:[%s6 + $0xf0] sm:$0xff]
      %v1319 = vld [vmem:[%s6 + $0xf8] sm:$0xff]
      %v1320 = vld [vmem:[%s6 + $0x100] sm:$0xff]
      %v1321 = vld [vmem:[%s6 + $0x108] sm:$0xff]
      %v1322 = vld [vmem:[%s6 + $0x110] sm:$0xff]
      %v1323 = vld [vmem:[%s6 + $0x118] sm:$0xff]
      %v1324 = vld [vmem:[%s9] sm:$0xf]
      %v1325 = vld [vmem:[%s9 + $0x4] sm:$0xf]
      %v1326 = vld [vmem:[%s9 + $0x8] sm:$0xf]
      %v1327 = vld [vmem:[%s9 + $0xc] sm:$0xf]
      %v1328 = vpack.c.bf16 %v1271, %v1270
      %v1329 = vpack.c.bf16 %v1273, %v1272
      %v1330 = vpack.c.bf16 %v1275, %v1274
      %v1331 = vpack.c.bf16 %v1277, %v1276
      %v1332 = vpack.c.bf16 %v1279, %v1278
      %v1333 = vpack.c.bf16 %v1281, %v1280
      %v1334 = vpack.c.bf16 %v1283, %v1282
      %v1335 = vpack.c.bf16 %v1285, %v1284
      %v1336 = vpack.c.bf16 %v1287, %v1286
      %v1337 = vld [vmem:[%s10] sm:$0x1]
      %v1339 = vlaneseq
      %v1340 = vshrl.u32 %v1339, 7
      %v1341 = vsub.s32 0, %v1340
      %v1342 = vrot.slane %v1337, %v1341
      %v1348 = vunpack.c.l.b16 %v1324
      %v1349 = vunpack.c.l.b16 %v1325
      %v1350 = vunpack.c.l.b16 %v1326
      %v1351 = vunpack.c.l.b16 %v1327
      %v1352 = vpack.c.b16 %v1349, %v1348
      %v1353 = vpack.c.b16 %v1351, %v1350
      %v1357 = vsel %vm1249, %v1328, 0
      %v1360 = vsel %vm1249, %v1329, 0
      %v1363 = vsel %vm1249, %v1330, 0
      %v1366 = vsel %vm1249, %v1331, 0
      %v1369 = vsel %vm1249, %v1332, 0
      %v1372 = vsel %vm1249, %v1333, 0
      %v1375 = vsel %vm1249, %v1334, 0
      %v1378 = vsel %vm1249, %v1335, 0
      %v1381 = vsel %vm1249, %v1336, 0
      %1383 = vmatprep.subr.bf16.mxu0 0
      %1384 = vmatpush1.bf16.msra.mxu0 0
      %1385 = vmatprep.subr.bf16.mxu0 0
      %1386 = vmatpush1.bf16.msra.mxu0 0
      %1387 = vmatprep.subr.bf16.mxu0 0
      %1388 = vmatpush1.bf16.msra.mxu0 0
      %1389 = vmatprep.subr.bf16.mxu0 0
      %1390 = vmatpush1.bf16.msra.mxu0 0
      %1391 = vmatprep.subr.bf16.mxu0 0
      %1392 = vmatpush1.bf16.msra.mxu0 0
      %1393 = vmatprep.subr.bf16.mxu0 0
      %1394 = vmatpush1.bf16.msra.mxu0 0
      %1395 = vmatprep.subr.bf16.mxu0 0
      %1396 = vmatpush1.bf16.msra.mxu0 %v1353
      %1397 = vmatprep.subr.bf16.mxu0 0
      %1398 = vmatpush1.bf16.msra.mxu0 %v1352
      %1399 = vmatprep.subr.bf16.mxu0 0
      %1400 = vmatpush2.bf16.msra.mxu0 0
      %1401 = vmatprep.subr.bf16.mxu0 0
      %1402 = vmatpush2.bf16.msra.mxu0 0
      %1403 = vmatprep.subr.bf16.mxu0 0
      %1404 = vmatpush2.bf16.msra.mxu0 0
      %1405 = vmatprep.subr.bf16.mxu0 0
      %1406 = vmatpush2.bf16.msra.mxu0 0
      %1407 = vmatprep.subr.bf16.mxu0 0
      %1408 = vmatpush2.bf16.msra.mxu0 0
      %1409 = vmatprep.subr.bf16.mxu0 0
      %1410 = vmatpush2.bf16.msra.mxu0 0
      %1411 = vmatprep.subr.bf16.mxu0 0
      %1412 = vmatpush2.bf16.msra.mxu0 0
      %1413 = vmatprep.subr.bf16.mxu0 0
      %1414 = vmatpush2.bf16.msra.mxu0 0
      %1415 = vmatprep.mubr.bf16.mxu0 0
      %1416 = vmatmul.mubr.bf16.gmra.mxu0 %v1357
      %v1417 = vpop.f32.mrf.mxu0
      %v1418 = vadd.f32 %v1342, %v1417
      %v1419 = vpop.f32.mrf.mxu0
      %v1420 = vpop.f32.mrf.mxu0
      %v1421 = vadd.f32 %v1342, %v1420
      %v1422 = vpop.f32.mrf.mxu0
      %1423 = vmatprep.mubr.bf16.mxu0 0
      %1424 = vmatmul.mubr.bf16.gmra.mxu0 %v1360
      %v1425 = vpop.f32.mrf.mxu0
      %v1426 = vadd.f32 %v1342, %v1425
      %v1427 = vpop.f32.mrf.mxu0
      %v1428 = vpop.f32.mrf.mxu0
      %v1429 = vadd.f32 %v1342, %v1428
      %v1430 = vpop.f32.mrf.mxu0
      %1431 = vmatprep.mubr.bf16.mxu0 0
      %1432 = vmatmul.mubr.bf16.gmra.mxu0 %v1363
      %v1433 = vpop.f32.mrf.mxu0
      %v1434 = vadd.f32 %v1342, %v1433
      %v1435 = vpop.f32.mrf.mxu0
      %v1436 = vpop.f32.mrf.mxu0
      %v1437 = vadd.f32 %v1342, %v1436
      %v1438 = vpop.f32.mrf.mxu0
      %1439 = vmatprep.mubr.bf16.mxu0 0
      %1440 = vmatmul.mubr.bf16.gmra.mxu0 %v1366
      %v1441 = vpop.f32.mrf.mxu0
      %v1442 = vadd.f32 %v1342, %v1441
      %v1443 = vpop.f32.mrf.mxu0
      %v1444 = vpop.f32.mrf.mxu0
      %v1445 = vadd.f32 %v1342, %v1444
      %v1446 = vpop.f32.mrf.mxu0
      %1447 = vmatprep.mubr.bf16.mxu0 0
      %1448 = vmatmul.mubr.bf16.gmra.mxu0 %v1369
      %v1449 = vpop.f32.mrf.mxu0
      %v1450 = vadd.f32 %v1342, %v1449
      %v1451 = vpop.f32.mrf.mxu0
      %v1452 = vpop.f32.mrf.mxu0
      %v1453 = vadd.f32 %v1342, %v1452
      %v1454 = vpop.f32.mrf.mxu0
      %1455 = vmatprep.mubr.bf16.mxu0 0
      %1456 = vmatmul.mubr.bf16.gmra.mxu0 %v1372
      %v1457 = vpop.f32.mrf.mxu0
      %v1458 = vadd.f32 %v1342, %v1457
      %v1459 = vpop.f32.mrf.mxu0
      %v1460 = vpop.f32.mrf.mxu0
      %v1461 = vadd.f32 %v1342, %v1460
      %v1462 = vpop.f32.mrf.mxu0
      %1463 = vmatprep.mubr.bf16.mxu0 0
      %1464 = vmatmul.mubr.bf16.gmra.mxu0 %v1375
      %v1465 = vpop.f32.mrf.mxu0
      %v1466 = vadd.f32 %v1342, %v1465
      %v1467 = vpop.f32.mrf.mxu0
      %v1468 = vpop.f32.mrf.mxu0
      %v1469 = vadd.f32 %v1342, %v1468
      %v1470 = vpop.f32.mrf.mxu0
      %1471 = vmatprep.mubr.bf16.mxu0 0
      %1472 = vmatmul.mubr.bf16.gmra.mxu0 %v1378
      %v1473 = vpop.f32.mrf.mxu0
      %v1474 = vadd.f32 %v1342, %v1473
      %v1475 = vpop.f32.mrf.mxu0
      %v1476 = vpop.f32.mrf.mxu0
      %v1477 = vadd.f32 %v1342, %v1476
      %v1478 = vpop.f32.mrf.mxu0
      %1479 = vmatprep.mubr.bf16.mxu0 0
      %1480 = vmatmul.mubr.bf16.gmra.mxu0 %v1381
      %v1481 = vpop.f32.mrf.mxu0
      %v1482 = vadd.f32 %v1342, %v1481
      %v1483 = vpop.f32.mrf.mxu0
      %v1484 = vpop.f32.mrf.mxu0
      %v1485 = vadd.f32 %v1342, %v1484
      %v1486 = vpop.f32.mrf.mxu0
      %1487 = vdwg.mxu0
      %v1488 = vld [vmem:[%s15] sm:$0x1]
      %v1489 = vpack.c.bf16 %v1421, %v1418
      %v1490 = vpack.c.bf16 %v1429, %v1426
      %v1491 = vpack.c.bf16 %v1437, %v1434
      %v1492 = vpack.c.bf16 %v1445, %v1442
      %v1493 = vpack.c.bf16 %v1453, %v1450
      %v1494 = vpack.c.bf16 %v1461, %v1458
      %v1495 = vpack.c.bf16 %v1469, %v1466
      %v1496 = vpack.c.bf16 %v1477, %v1474
      %v1497 = vpack.c.bf16 %v1485, %v1482
      %1507 = vrot.lane.b32.xlu0 %v1489, 96
      %v1508 = vpop.permute.xlu0 %1507
      %1509 = vrot.lane.b32.xlu0 %v1490, 96
      %v1510 = vpop.permute.xlu0 %1509
      %1511 = vrot.lane.b32.xlu0 %v1491, 96
      %v1512 = vpop.permute.xlu0 %1511
      %1513 = vrot.lane.b32.xlu0 %v1492, 96
      %v1514 = vpop.permute.xlu0 %1513
      %1515 = vrot.lane.b32.xlu0 %v1493, 96
      %v1516 = vpop.permute.xlu0 %1515
      %1517 = vrot.lane.b32.xlu0 %v1494, 96
      %v1518 = vpop.permute.xlu0 %1517
      %1519 = vrot.lane.b32.xlu0 %v1495, 96
      %v1520 = vpop.permute.xlu0 %1519
      %1521 = vrot.lane.b32.xlu0 %v1496, 96
      %v1522 = vpop.permute.xlu0 %1521
      %1523 = vrot.lane.b32.xlu0 %v1497, 96
      %v1524 = vpop.permute.xlu0 %1523
      %v1526 = vsel %vm945, %v1489, 0
      %v1529 = vsel %vm945, %v1490, 0
      %v1532 = vsel %vm945, %v1491, 0
      %v1535 = vsel %vm945, %v1492, 0
      %v1538 = vsel %vm945, %v1493, 0
      %v1541 = vsel %vm945, %v1494, 0
      %v1544 = vsel %vm945, %v1495, 0
      %v1547 = vsel %vm945, %v1496, 0
      %v1550 = vsel %vm945, %v1497, 0
      %v1553 = vsel %vm945, %v1508, 0
      %v1556 = vsel %vm945, %v1510, 0
      %v1559 = vsel %vm945, %v1512, 0
      %v1562 = vsel %vm945, %v1514, 0
      %v1565 = vsel %vm945, %v1516, 0
      %v1568 = vsel %vm945, %v1518, 0
      %v1571 = vsel %vm945, %v1520, 0
      %v1574 = vsel %vm945, %v1522, 0
      %v1577 = vsel %vm945, %v1524, 0
      %1579 = vmatprep.subr.bf16.mxu0 0
      %1580 = vmatpush1.bf16.xpose.msra.mxu0 %v1574
      %1581 = vmatprep.subr.bf16.mxu0 0
      %1582 = vmatpush1.bf16.xpose.msra.mxu0 %v1571
      %1583 = vmatprep.subr.bf16.mxu0 0
      %1584 = vmatpush1.bf16.xpose.msra.mxu0 %v1568
      %1585 = vmatprep.subr.bf16.mxu0 0
      %1586 = vmatpush1.bf16.xpose.msra.mxu0 %v1565
      %1587 = vmatprep.subr.bf16.mxu0 0
      %1588 = vmatpush1.bf16.xpose.msra.mxu0 %v1562
      %1589 = vmatprep.subr.bf16.mxu0 0
      %1590 = vmatpush1.bf16.xpose.msra.mxu0 %v1559
      %1591 = vmatprep.subr.bf16.mxu0 0
      %1592 = vmatpush1.bf16.xpose.msra.mxu0 %v1556
      %1593 = vmatprep.subr.bf16.mxu0 0
      %1594 = vmatpush1.bf16.xpose.msra.mxu0 %v1553
      %1595 = vmatprep.subr.bf16.mxu0 0
      %1596 = vmatpush2.bf16.xpose.msra.mxu0 0
      %1597 = vmatprep.subr.bf16.mxu0 0
      %1598 = vmatpush2.bf16.xpose.msra.mxu0 0
      %1599 = vmatprep.subr.bf16.mxu0 0
      %1600 = vmatpush2.bf16.xpose.msra.mxu0 0
      %1601 = vmatprep.subr.bf16.mxu0 0
      %1602 = vmatpush2.bf16.xpose.msra.mxu0 0
      %1603 = vmatprep.subr.bf16.mxu0 0
      %1604 = vmatpush2.bf16.xpose.msra.mxu0 0
      %1605 = vmatprep.subr.bf16.mxu0 0
      %1606 = vmatpush2.bf16.xpose.msra.mxu0 0
      %1607 = vmatprep.subr.bf16.mxu0 0
      %1608 = vmatpush2.bf16.xpose.msra.mxu0 0
      %1609 = vmatprep.subr.bf16.mxu0 0
      %1610 = vmatpush2.bf16.xpose.msra.mxu0 %v1577
      %1611 = vmatprep.mubr.bf16.mxu0 0
      %1612 = vmatmul.mubr.bf16.gmra.mxu0 %v1526
      %v1613 = vpop.f32.mrf.mxu0
      %v1614 = vadd.f32 0.0, %v1613
      %v1615 = vpop.f32.mrf.mxu0
      %v1616 = vadd.f32 0.0, %v1615
      %v1617 = vpop.f32.mrf.mxu0
      %v1618 = vadd.f32 0.0, %v1617
      %v1619 = vpop.f32.mrf.mxu0
      %v1620 = vadd.f32 0.0, %v1619
      %1621 = vmatprep.mubr.bf16.mxu0 0
      %1622 = vmatmul.mubr.bf16.gmra.mxu0 %v1529
      %v1623 = vpop.f32.mrf.mxu0
      %v1624 = vadd.f32 0.0, %v1623
      %v1625 = vpop.f32.mrf.mxu0
      %v1626 = vadd.f32 0.0, %v1625
      %v1627 = vpop.f32.mrf.mxu0
      %v1628 = vadd.f32 0.0, %v1627
      %v1629 = vpop.f32.mrf.mxu0
      %v1630 = vadd.f32 0.0, %v1629
      %1631 = vmatprep.mubr.bf16.mxu0 0
      %1632 = vmatmul.mubr.bf16.gmra.mxu0 %v1532
      %v1633 = vpop.f32.mrf.mxu0
      %v1634 = vadd.f32 0.0, %v1633
      %v1635 = vpop.f32.mrf.mxu0
      %v1636 = vadd.f32 0.0, %v1635
      %v1637 = vpop.f32.mrf.mxu0
      %v1638 = vadd.f32 0.0, %v1637
      %v1639 = vpop.f32.mrf.mxu0
      %v1640 = vadd.f32 0.0, %v1639
      %1641 = vmatprep.mubr.bf16.mxu0 0
      %1642 = vmatmul.mubr.bf16.gmra.mxu0 %v1535
      %v1643 = vpop.f32.mrf.mxu0
      %v1644 = vadd.f32 0.0, %v1643
      %v1645 = vpop.f32.mrf.mxu0
      %v1646 = vadd.f32 0.0, %v1645
      %v1647 = vpop.f32.mrf.mxu0
      %v1648 = vadd.f32 0.0, %v1647
      %v1649 = vpop.f32.mrf.mxu0
      %v1650 = vadd.f32 0.0, %v1649
      %1651 = vmatprep.mubr.bf16.mxu0 0
      %1652 = vmatmul.mubr.bf16.gmra.mxu0 %v1538
      %v1653 = vpop.f32.mrf.mxu0
      %v1654 = vadd.f32 0.0, %v1653
      %v1655 = vpop.f32.mrf.mxu0
      %v1656 = vadd.f32 0.0, %v1655
      %v1657 = vpop.f32.mrf.mxu0
      %v1658 = vadd.f32 0.0, %v1657
      %v1659 = vpop.f32.mrf.mxu0
      %v1660 = vadd.f32 0.0, %v1659
      %1661 = vmatprep.mubr.bf16.mxu0 0
      %1662 = vmatmul.mubr.bf16.gmra.mxu0 %v1541
      %v1663 = vpop.f32.mrf.mxu0
      %v1664 = vadd.f32 0.0, %v1663
      %v1665 = vpop.f32.mrf.mxu0
      %v1666 = vadd.f32 0.0, %v1665
      %v1667 = vpop.f32.mrf.mxu0
      %v1668 = vadd.f32 0.0, %v1667
      %v1669 = vpop.f32.mrf.mxu0
      %v1670 = vadd.f32 0.0, %v1669
      %1671 = vmatprep.mubr.bf16.mxu0 0
      %1672 = vmatmul.mubr.bf16.gmra.mxu0 %v1544
      %v1673 = vpop.f32.mrf.mxu0
      %v1674 = vadd.f32 0.0, %v1673
      %v1675 = vpop.f32.mrf.mxu0
      %v1676 = vadd.f32 0.0, %v1675
      %v1677 = vpop.f32.mrf.mxu0
      %v1678 = vadd.f32 0.0, %v1677
      %v1679 = vpop.f32.mrf.mxu0
      %v1680 = vadd.f32 0.0, %v1679
      %1681 = vmatprep.mubr.bf16.mxu0 0
      %1682 = vmatmul.mubr.bf16.gmra.mxu0 %v1547
      %v1683 = vpop.f32.mrf.mxu0
      %v1684 = vadd.f32 0.0, %v1683
      %v1685 = vpop.f32.mrf.mxu0
      %v1686 = vadd.f32 0.0, %v1685
      %v1687 = vpop.f32.mrf.mxu0
      %v1688 = vadd.f32 0.0, %v1687
      %v1689 = vpop.f32.mrf.mxu0
      %v1690 = vadd.f32 0.0, %v1689
      %1691 = vmatprep.mubr.bf16.mxu0 0
      %1692 = vmatmul.mubr.bf16.gmra.mxu0 %v1550
      %v1693 = vpop.f32.mrf.mxu0
      %v1694 = vadd.f32 0.0, %v1693
      %v1695 = vpop.f32.mrf.mxu0
      %v1696 = vadd.f32 0.0, %v1695
      %v1697 = vpop.f32.mrf.mxu0
      %v1698 = vadd.f32 0.0, %v1697
      %v1699 = vpop.f32.mrf.mxu0
      %v1700 = vadd.f32 0.0, %v1699
      %1701 = vdwg.mxu0
      %v1702 = vmul.f32 %v1614, 0.25
      %v1703 = vmul.f32 %v1616, 0.25
      %v1704 = vmul.f32 %v1618, 0.25
      %v1705 = vmul.f32 %v1620, 0.25
      %v1706 = vmul.f32 %v1624, 0.25
      %v1707 = vmul.f32 %v1626, 0.25
      %v1708 = vmul.f32 %v1628, 0.25
      %v1709 = vmul.f32 %v1630, 0.25
      %v1710 = vmul.f32 %v1634, 0.25
      %v1711 = vmul.f32 %v1636, 0.25
      %v1712 = vmul.f32 %v1638, 0.25
      %v1713 = vmul.f32 %v1640, 0.25
      %v1714 = vmul.f32 %v1644, 0.25
      %v1715 = vmul.f32 %v1646, 0.25
      %v1716 = vmul.f32 %v1648, 0.25
      %v1717 = vmul.f32 %v1650, 0.25
      %v1718 = vmul.f32 %v1654, 0.25
      %v1719 = vmul.f32 %v1656, 0.25
      %v1720 = vmul.f32 %v1658, 0.25
      %v1721 = vmul.f32 %v1660, 0.25
      %v1722 = vmul.f32 %v1664, 0.25
      %v1723 = vmul.f32 %v1666, 0.25
      %v1724 = vmul.f32 %v1668, 0.25
      %v1725 = vmul.f32 %v1670, 0.25
      %v1726 = vmul.f32 %v1674, 0.25
      %v1727 = vmul.f32 %v1676, 0.25
      %v1728 = vmul.f32 %v1678, 0.25
      %v1729 = vmul.f32 %v1680, 0.25
      %v1730 = vmul.f32 %v1684, 0.25
      %v1731 = vmul.f32 %v1686, 0.25
      %v1732 = vmul.f32 %v1688, 0.25
      %v1733 = vmul.f32 %v1690, 0.25
      %v1734 = vmul.f32 %v1694, 0.25
      %v1735 = vmul.f32 %v1696, 0.25
      %v1736 = vmul.f32 %v1698, 0.25
      %v1737 = vmul.f32 %v1700, 0.25
      %v1738 = vadd.f32 %v1702, %v1288
      %v1739 = vadd.f32 %v1703, %v1289
      %v1740 = vadd.f32 %v1704, %v1290
      %v1741 = vadd.f32 %v1705, %v1291
      %v1742 = vadd.f32 %v1706, %v1292
      %v1743 = vadd.f32 %v1707, %v1293
      %v1744 = vadd.f32 %v1708, %v1294
      %v1745 = vadd.f32 %v1709, %v1295
      %v1746 = vadd.f32 %v1710, %v1296
      %v1747 = vadd.f32 %v1711, %v1297
      %v1748 = vadd.f32 %v1712, %v1298
      %v1749 = vadd.f32 %v1713, %v1299
      %v1750 = vadd.f32 %v1714, %v1300
      %v1751 = vadd.f32 %v1715, %v1301
      %v1752 = vadd.f32 %v1716, %v1302
      %v1753 = vadd.f32 %v1717, %v1303
      %v1754 = vadd.f32 %v1718, %v1304
      %v1755 = vadd.f32 %v1719, %v1305
      %v1756 = vadd.f32 %v1720, %v1306
      %v1757 = vadd.f32 %v1721, %v1307
      %v1758 = vadd.f32 %v1722, %v1308
      %v1759 = vadd.f32 %v1723, %v1309
      %v1760 = vadd.f32 %v1724, %v1310
      %v1761 = vadd.f32 %v1725, %v1311
      %v1762 = vadd.f32 %v1726, %v1312
      %v1763 = vadd.f32 %v1727, %v1313
      %v1764 = vadd.f32 %v1728, %v1314
      %v1765 = vadd.f32 %v1729, %v1315
      %v1766 = vadd.f32 %v1730, %v1316
      %v1767 = vadd.f32 %v1731, %v1317
      %v1768 = vadd.f32 %v1732, %v1318
      %v1769 = vadd.f32 %v1733, %v1319
      %v1770 = vadd.f32 %v1734, %v1320
      %v1771 = vadd.f32 %v1735, %v1321
      %v1772 = vadd.f32 %v1736, %v1322
      %v1773 = vadd.f32 %v1737, %v1323
      %v1774 = vsel %vm945, %v1739, -inf
      %v1775 = vmax.f32 %v1738, %v1774
      %1776 = vmax.xlane.f32.xlu0 %v1775
      %v1777 = vpop.xlane.xlu0 %1776
      %v1778 = vsel %vm945, %v1741, -inf
      %v1779 = vmax.f32 %v1740, %v1778
      %1780 = vmax.xlane.f32.xlu0 %v1779
      %v1781 = vpop.xlane.xlu0 %1780
      %v1782 = vsel %vm945, %v1743, -inf
      %v1783 = vmax.f32 %v1742, %v1782
      %1784 = vmax.xlane.f32.xlu0 %v1783
      %v1785 = vpop.xlane.xlu0 %1784
      %v1786 = vsel %vm945, %v1745, -inf
      %v1787 = vmax.f32 %v1744, %v1786
      %1788 = vmax.xlane.f32.xlu0 %v1787
      %v1789 = vpop.xlane.xlu0 %1788
      %v1790 = vsel %vm945, %v1747, -inf
      %v1791 = vmax.f32 %v1746, %v1790
      %1792 = vmax.xlane.f32.xlu0 %v1791
      %v1793 = vpop.xlane.xlu0 %1792
      %v1794 = vsel %vm945, %v1749, -inf
      %v1795 = vmax.f32 %v1748, %v1794
      %1796 = vmax.xlane.f32.xlu0 %v1795
      %v1797 = vpop.xlane.xlu0 %1796
      %v1798 = vsel %vm945, %v1751, -inf
      %v1799 = vmax.f32 %v1750, %v1798
      %1800 = vmax.xlane.f32.xlu0 %v1799
      %v1801 = vpop.xlane.xlu0 %1800
      %v1802 = vsel %vm945, %v1753, -inf
      %v1803 = vmax.f32 %v1752, %v1802
      %1804 = vmax.xlane.f32.xlu0 %v1803
      %v1805 = vpop.xlane.xlu0 %1804
      %v1806 = vsel %vm945, %v1755, -inf
      %v1807 = vmax.f32 %v1754, %v1806
      %1808 = vmax.xlane.f32.xlu0 %v1807
      %v1809 = vpop.xlane.xlu0 %1808
      %v1810 = vsel %vm945, %v1757, -inf
      %v1811 = vmax.f32 %v1756, %v1810
      %1812 = vmax.xlane.f32.xlu0 %v1811
      %v1813 = vpop.xlane.xlu0 %1812
      %v1814 = vsel %vm945, %v1759, -inf
      %v1815 = vmax.f32 %v1758, %v1814
      %1816 = vmax.xlane.f32.xlu0 %v1815
      %v1817 = vpop.xlane.xlu0 %1816
      %v1818 = vsel %vm945, %v1761, -inf
      %v1819 = vmax.f32 %v1760, %v1818
      %1820 = vmax.xlane.f32.xlu0 %v1819
      %v1821 = vpop.xlane.xlu0 %1820
      %v1822 = vsel %vm945, %v1763, -inf
      %v1823 = vmax.f32 %v1762, %v1822
      %1824 = vmax.xlane.f32.xlu0 %v1823
      %v1825 = vpop.xlane.xlu0 %1824
      %v1826 = vsel %vm945, %v1765, -inf
      %v1827 = vmax.f32 %v1764, %v1826
      %1828 = vmax.xlane.f32.xlu0 %v1827
      %v1829 = vpop.xlane.xlu0 %1828
      %v1830 = vsel %vm945, %v1767, -inf
      %v1831 = vmax.f32 %v1766, %v1830
      %1832 = vmax.xlane.f32.xlu0 %v1831
      %v1833 = vpop.xlane.xlu0 %1832
      %v1834 = vsel %vm945, %v1769, -inf
      %v1835 = vmax.f32 %v1768, %v1834
      %1836 = vmax.xlane.f32.xlu0 %v1835
      %v1837 = vpop.xlane.xlu0 %1836
      %v1838 = vsel %vm945, %v1771, -inf
      %v1839 = vmax.f32 %v1770, %v1838
      %1840 = vmax.xlane.f32.xlu0 %v1839
      %v1841 = vpop.xlane.xlu0 %1840
      %v1842 = vsel %vm945, %v1773, -inf
      %v1843 = vmax.f32 %v1772, %v1842
      %1844 = vmax.xlane.f32.xlu0 %v1843
      %v1845 = vpop.xlane.xlu0 %1844
      %v1846 = vsub.f32 %v1738, %v1777
      %v1847 = vsub.f32 %v1739, %v1777
      %v1848 = vsub.f32 %v1740, %v1781
      %v1849 = vsub.f32 %v1741, %v1781
      %v1850 = vsub.f32 %v1742, %v1785
      %v1851 = vsub.f32 %v1743, %v1785
      %v1852 = vsub.f32 %v1744, %v1789
      %v1853 = vsub.f32 %v1745, %v1789
      %v1854 = vsub.f32 %v1746, %v1793
      %v1855 = vsub.f32 %v1747, %v1793
      %v1856 = vsub.f32 %v1748, %v1797
      %v1857 = vsub.f32 %v1749, %v1797
      %v1858 = vsub.f32 %v1750, %v1801
      %v1859 = vsub.f32 %v1751, %v1801
      %v1860 = vsub.f32 %v1752, %v1805
      %v1861 = vsub.f32 %v1753, %v1805
      %v1862 = vsub.f32 %v1754, %v1809
      %v1863 = vsub.f32 %v1755, %v1809
      %v1864 = vsub.f32 %v1756, %v1813
      %v1865 = vsub.f32 %v1757, %v1813
      %v1866 = vsub.f32 %v1758, %v1817
      %v1867 = vsub.f32 %v1759, %v1817
      %v1868 = vsub.f32 %v1760, %v1821
      %v1869 = vsub.f32 %v1761, %v1821
      %v1870 = vsub.f32 %v1762, %v1825
      %v1871 = vsub.f32 %v1763, %v1825
      %v1872 = vsub.f32 %v1764, %v1829
      %v1873 = vsub.f32 %v1765, %v1829
      %v1874 = vsub.f32 %v1766, %v1833
      %v1875 = vsub.f32 %v1767, %v1833
      %v1876 = vsub.f32 %v1768, %v1837
      %v1877 = vsub.f32 %v1769, %v1837
      %v1878 = vsub.f32 %v1770, %v1841
      %v1879 = vsub.f32 %v1771, %v1841
      %v1880 = vsub.f32 %v1772, %v1845
      %v1881 = vsub.f32 %v1773, %v1845
      %v1882 = vmul.f32 %v1846, 1.442695
      %v1883 = vpow.pop %v1882
      %v1884 = vmul.f32 %v1847, 1.442695
      %v1885 = vpow.pop %v1884
      %v1886 = vmul.f32 %v1848, 1.442695
      %v1887 = vpow.pop %v1886
      %v1888 = vmul.f32 %v1849, 1.442695
      %v1889 = vpow.pop %v1888
      %v1890 = vmul.f32 %v1850, 1.442695
      %v1891 = vpow.pop %v1890
      %v1892 = vmul.f32 %v1851, 1.442695
      %v1893 = vpow.pop %v1892
      %v1894 = vmul.f32 %v1852, 1.442695
      %v1895 = vpow.pop %v1894
      %v1896 = vmul.f32 %v1853, 1.442695
      %v1897 = vpow.pop %v1896
      %v1898 = vmul.f32 %v1854, 1.442695
      %v1899 = vpow.pop %v1898
      %v1900 = vmul.f32 %v1855, 1.442695
      %v1901 = vpow.pop %v1900
      %v1902 = vmul.f32 %v1856, 1.442695
      %v1903 = vpow.pop %v1902
      %v1904 = vmul.f32 %v1857, 1.442695
      %v1905 = vpow.pop %v1904
      %v1906 = vmul.f32 %v1858, 1.442695
      %v1907 = vpow.pop %v1906
      %v1908 = vmul.f32 %v1859, 1.442695
      %v1909 = vpow.pop %v1908
      %v1910 = vmul.f32 %v1860, 1.442695
      %v1911 = vpow.pop %v1910
      %v1912 = vmul.f32 %v1861, 1.442695
      %v1913 = vpow.pop %v1912
      %v1914 = vmul.f32 %v1862, 1.442695
      %v1915 = vpow.pop %v1914
      %v1916 = vmul.f32 %v1863, 1.442695
      %v1917 = vpow.pop %v1916
      %v1918 = vmul.f32 %v1864, 1.442695
      %v1919 = vpow.pop %v1918
      %v1920 = vmul.f32 %v1865, 1.442695
      %v1921 = vpow.pop %v1920
      %v1922 = vmul.f32 %v1866, 1.442695
      %v1923 = vpow.pop %v1922
      %v1924 = vmul.f32 %v1867, 1.442695
      %v1925 = vpow.pop %v1924
      %v1926 = vmul.f32 %v1868, 1.442695
      %v1927 = vpow.pop %v1926
      %v1928 = vmul.f32 %v1869, 1.442695
      %v1929 = vpow.pop %v1928
      %v1930 = vmul.f32 %v1870, 1.442695
      %v1931 = vpow.pop %v1930
      %v1932 = vmul.f32 %v1871, 1.442695
      %v1933 = vpow.pop %v1932
      %v1934 = vmul.f32 %v1872, 1.442695
      %v1935 = vpow.pop %v1934
      %v1936 = vmul.f32 %v1873, 1.442695
      %v1937 = vpow.pop %v1936
      %v1938 = vmul.f32 %v1874, 1.442695
      %v1939 = vpow.pop %v1938
      %v1940 = vmul.f32 %v1875, 1.442695
      %v1941 = vpow.pop %v1940
      %v1942 = vmul.f32 %v1876, 1.442695
      %v1943 = vpow.pop %v1942
      %v1944 = vmul.f32 %v1877, 1.442695
      %v1945 = vpow.pop %v1944
      %v1946 = vmul.f32 %v1878, 1.442695
      %v1947 = vpow.pop %v1946
      %v1948 = vmul.f32 %v1879, 1.442695
      %v1949 = vpow.pop %v1948
      %v1950 = vmul.f32 %v1880, 1.442695
      %v1951 = vpow.pop %v1950
      %v1952 = vmul.f32 %v1881, 1.442695
      %v1953 = vpow.pop %v1952
      %v1954 = vsel %vm945, %v1885, 0.0
      %v1955 = vadd.f32 %v1883, %v1954
      %1956 = vadd.xlane.f32.xlu0 %v1955
      %v1957 = vpop.xlane.xlu0 %1956
      %v1958 = vsel %vm945, %v1889, 0.0
      %v1959 = vadd.f32 %v1887, %v1958
      %1960 = vadd.xlane.f32.xlu0 %v1959
      %v1961 = vpop.xlane.xlu0 %1960
      %v1962 = vsel %vm945, %v1893, 0.0
      %v1963 = vadd.f32 %v1891, %v1962
      %1964 = vadd.xlane.f32.xlu0 %v1963
      %v1965 = vpop.xlane.xlu0 %1964
      %v1966 = vsel %vm945, %v1897, 0.0
      %v1967 = vadd.f32 %v1895, %v1966
      %1968 = vadd.xlane.f32.xlu0 %v1967
      %v1969 = vpop.xlane.xlu0 %1968
      %v1970 = vsel %vm945, %v1901, 0.0
      %v1971 = vadd.f32 %v1899, %v1970
      %1972 = vadd.xlane.f32.xlu0 %v1971
      %v1973 = vpop.xlane.xlu0 %1972
      %v1974 = vsel %vm945, %v1905, 0.0
      %v1975 = vadd.f32 %v1903, %v1974
      %1976 = vadd.xlane.f32.xlu0 %v1975
      %v1977 = vpop.xlane.xlu0 %1976
      %v1978 = vsel %vm945, %v1909, 0.0
      %v1979 = vadd.f32 %v1907, %v1978
      %1980 = vadd.xlane.f32.xlu0 %v1979
      %v1981 = vpop.xlane.xlu0 %1980
      %v1982 = vsel %vm945, %v1913, 0.0
      %v1983 = vadd.f32 %v1911, %v1982
      %1984 = vadd.xlane.f32.xlu0 %v1983
      %v1985 = vpop.xlane.xlu0 %1984
      %v1986 = vsel %vm945, %v1917, 0.0
      %v1987 = vadd.f32 %v1915, %v1986
      %1988 = vadd.xlane.f32.xlu0 %v1987
      %v1989 = vpop.xlane.xlu0 %1988
      %v1990 = vsel %vm945, %v1921, 0.0
      %v1991 = vadd.f32 %v1919, %v1990
      %1992 = vadd.xlane.f32.xlu0 %v1991
      %v1993 = vpop.xlane.xlu0 %1992
      %v1994 = vsel %vm945, %v1925, 0.0
      %v1995 = vadd.f32 %v1923, %v1994
      %1996 = vadd.xlane.f32.xlu0 %v1995
      %v1997 = vpop.xlane.xlu0 %1996
      %v1998 = vsel %vm945, %v1929, 0.0
      %v1999 = vadd.f32 %v1927, %v1998
      %2000 = vadd.xlane.f32.xlu0 %v1999
      %v2001 = vpop.xlane.xlu0 %2000
      %v2002 = vsel %vm945, %v1933, 0.0
      %v2003 = vadd.f32 %v1931, %v2002
      %2004 = vadd.xlane.f32.xlu0 %v2003
      %v2005 = vpop.xlane.xlu0 %2004
      %v2006 = vsel %vm945, %v1937, 0.0
      %v2007 = vadd.f32 %v1935, %v2006
      %2008 = vadd.xlane.f32.xlu0 %v2007
      %v2009 = vpop.xlane.xlu0 %2008
      %v2010 = vsel %vm945, %v1941, 0.0
      %v2011 = vadd.f32 %v1939, %v2010
      %2012 = vadd.xlane.f32.xlu0 %v2011
      %v2013 = vpop.xlane.xlu0 %2012
      %v2014 = vsel %vm945, %v1945, 0.0
      %v2015 = vadd.f32 %v1943, %v2014
      %2016 = vadd.xlane.f32.xlu0 %v2015
      %v2017 = vpop.xlane.xlu0 %2016
      %v2018 = vsel %vm945, %v1949, 0.0
      %v2019 = vadd.f32 %v1947, %v2018
      %2020 = vadd.xlane.f32.xlu0 %v2019
      %v2021 = vpop.xlane.xlu0 %2020
      %v2022 = vsel %vm945, %v1953, 0.0
      %v2023 = vadd.f32 %v1951, %v2022
      %2024 = vadd.xlane.f32.xlu0 %v2023
      %v2025 = vpop.xlane.xlu0 %2024
      %v2026 = vrcp.pop %v1957
      %v2027 = vmul.f32 %v1883, %v2026
      %v2028 = vmul.f32 %v1885, %v2026
      %v2029 = vrcp.pop %v1961
      %v2030 = vmul.f32 %v1887, %v2029
      %v2031 = vmul.f32 %v1889, %v2029
      %v2032 = vrcp.pop %v1965
      %v2033 = vmul.f32 %v1891, %v2032
      %v2034 = vmul.f32 %v1893, %v2032
      %v2035 = vrcp.pop %v1969
      %v2036 = vmul.f32 %v1895, %v2035
      %v2037 = vmul.f32 %v1897, %v2035
      %v2038 = vrcp.pop %v1973
      %v2039 = vmul.f32 %v1899, %v2038
      %v2040 = vmul.f32 %v1901, %v2038
      %v2041 = vrcp.pop %v1977
      %v2042 = vmul.f32 %v1903, %v2041
      %v2043 = vmul.f32 %v1905, %v2041
      %v2044 = vrcp.pop %v1981
      %v2045 = vmul.f32 %v1907, %v2044
      %v2046 = vmul.f32 %v1909, %v2044
      %v2047 = vrcp.pop %v1985
      %v2048 = vmul.f32 %v1911, %v2047
      %v2049 = vmul.f32 %v1913, %v2047
      %v2050 = vrcp.pop %v1989
      %v2051 = vmul.f32 %v1915, %v2050
      %v2052 = vmul.f32 %v1917, %v2050
      %v2053 = vrcp.pop %v1993
      %v2054 = vmul.f32 %v1919, %v2053
      %v2055 = vmul.f32 %v1921, %v2053
      %v2056 = vrcp.pop %v1997
      %v2057 = vmul.f32 %v1923, %v2056
      %v2058 = vmul.f32 %v1925, %v2056
      %v2059 = vrcp.pop %v2001
      %v2060 = vmul.f32 %v1927, %v2059
      %v2061 = vmul.f32 %v1929, %v2059
      %v2062 = vrcp.pop %v2005
      %v2063 = vmul.f32 %v1931, %v2062
      %v2064 = vmul.f32 %v1933, %v2062
      %v2065 = vrcp.pop %v2009
      %v2066 = vmul.f32 %v1935, %v2065
      %v2067 = vmul.f32 %v1937, %v2065
      %v2068 = vrcp.pop %v2013
      %v2069 = vmul.f32 %v1939, %v2068
      %v2070 = vmul.f32 %v1941, %v2068
      %v2071 = vrcp.pop %v2017
      %v2072 = vmul.f32 %v1943, %v2071
      %v2073 = vmul.f32 %v1945, %v2071
      %v2074 = vrcp.pop %v2021
      %v2075 = vmul.f32 %v1947, %v2074
      %v2076 = vmul.f32 %v1949, %v2074
      %v2077 = vrcp.pop %v2025
      %v2078 = vmul.f32 %v1951, %v2077
      %v2079 = vmul.f32 %v1953, %v2077
      %v2080 = vpack.c.bf16 %v2030, %v2027
      %v2081 = vpack.c.bf16 %v2031, %v2028
      %v2082 = vpack.c.bf16 %v2036, %v2033
      %v2083 = vpack.c.bf16 %v2037, %v2034
      %v2084 = vpack.c.bf16 %v2042, %v2039
      %v2085 = vpack.c.bf16 %v2043, %v2040
      %v2086 = vpack.c.bf16 %v2048, %v2045
      %v2087 = vpack.c.bf16 %v2049, %v2046
      %v2088 = vpack.c.bf16 %v2054, %v2051
      %v2089 = vpack.c.bf16 %v2055, %v2052
      %v2090 = vpack.c.bf16 %v2060, %v2057
      %v2091 = vpack.c.bf16 %v2061, %v2058
      %v2092 = vpack.c.bf16 %v2066, %v2063
      %v2093 = vpack.c.bf16 %v2067, %v2064
      %v2094 = vpack.c.bf16 %v2072, %v2069
      %v2095 = vpack.c.bf16 %v2073, %v2070
      %v2096 = vpack.c.bf16 %v2078, %v2075
      %v2097 = vpack.c.bf16 %v2079, %v2076
      %2098 = vrot.lane.b32.xlu0 %v1489, 64
      %v2099 = vpop.permute.xlu0 %2098
      %2100 = vrot.lane.b32.xlu0 %v1490, 64
      %v2101 = vpop.permute.xlu0 %2100
      %2102 = vrot.lane.b32.xlu0 %v1491, 64
      %v2103 = vpop.permute.xlu0 %2102
      %2104 = vrot.lane.b32.xlu0 %v1492, 64
      %v2105 = vpop.permute.xlu0 %2104
      %2106 = vrot.lane.b32.xlu0 %v1493, 64
      %v2107 = vpop.permute.xlu0 %2106
      %2108 = vrot.lane.b32.xlu0 %v1494, 64
      %v2109 = vpop.permute.xlu0 %2108
      %2110 = vrot.lane.b32.xlu0 %v1495, 64
      %v2111 = vpop.permute.xlu0 %2110
      %2112 = vrot.lane.b32.xlu0 %v1496, 64
      %v2113 = vpop.permute.xlu0 %2112
      %2114 = vrot.lane.b32.xlu0 %v1497, 64
      %v2115 = vpop.permute.xlu0 %2114
      %v2126 = vsel %vm945, %v2081, 0
      %v2129 = vsel %vm945, %v2083, 0
      %v2132 = vsel %vm945, %v2085, 0
      %v2135 = vsel %vm945, %v2087, 0
      %v2138 = vsel %vm945, %v2089, 0
      %v2141 = vsel %vm945, %v2091, 0
      %v2144 = vsel %vm945, %v2093, 0
      %v2147 = vsel %vm945, %v2095, 0
      %v2150 = vsel %vm945, %v2097, 0
      %2152 = vmatprep.subr.bf16.mxu0 0
      %2153 = vmatpush1.bf16.msra.mxu0 %v2113
      %2154 = vmatprep.subr.bf16.mxu0 0
      %2155 = vmatpush1.bf16.msra.mxu0 %v2111
      %2156 = vmatprep.subr.bf16.mxu0 0
      %2157 = vmatpush1.bf16.msra.mxu0 %v2109
      %2158 = vmatprep.subr.bf16.mxu0 0
      %2159 = vmatpush1.bf16.msra.mxu0 %v2107
      %2160 = vmatprep.subr.bf16.mxu0 0
      %2161 = vmatpush1.bf16.msra.mxu0 %v2105
      %2162 = vmatprep.subr.bf16.mxu0 0
      %2163 = vmatpush1.bf16.msra.mxu0 %v2103
      %2164 = vmatprep.subr.bf16.mxu0 0
      %2165 = vmatpush1.bf16.msra.mxu0 %v2101
      %2166 = vmatprep.subr.bf16.mxu0 0
      %2167 = vmatpush1.bf16.msra.mxu0 %v2099
      %2168 = vmatprep.subr.bf16.mxu0 0
      %2169 = vmatpush2.bf16.msra.mxu0 0
      %2170 = vmatprep.subr.bf16.mxu0 0
      %2171 = vmatpush2.bf16.msra.mxu0 0
      %2172 = vmatprep.subr.bf16.mxu0 0
      %2173 = vmatpush2.bf16.msra.mxu0 0
      %2174 = vmatprep.subr.bf16.mxu0 0
      %2175 = vmatpush2.bf16.msra.mxu0 0
      %2176 = vmatprep.subr.bf16.mxu0 0
      %2177 = vmatpush2.bf16.msra.mxu0 0
      %2178 = vmatprep.subr.bf16.mxu0 0
      %2179 = vmatpush2.bf16.msra.mxu0 0
      %2180 = vmatprep.subr.bf16.mxu0 0
      %2181 = vmatpush2.bf16.msra.mxu0 0
      %2182 = vmatprep.subr.bf16.mxu0 0
      %2183 = vmatpush2.bf16.msra.mxu0 %v2115
      %2184 = vmatprep.mubr.bf16.mxu0 %v2126
      %2185 = vmatmul.mubr.bf16.gmra.mxu0 %v2080
      %v2186 = vpop.f32.mrf.mxu0
      %v2187 = vadd.f32 0.0, %v2186
      %v2188 = vpop.f32.mrf.mxu0
      %v2189 = vpop.f32.mrf.mxu0
      %v2190 = vadd.f32 0.0, %v2189
      %v2191 = vpop.f32.mrf.mxu0
      %2192 = vmatprep.mubr.bf16.mxu0 %v2129
      %2193 = vmatmul.mubr.bf16.gmra.mxu0 %v2082
      %v2194 = vpop.f32.mrf.mxu0
      %v2195 = vadd.f32 0.0, %v2194
      %v2196 = vpop.f32.mrf.mxu0
      %v2197 = vpop.f32.mrf.mxu0
      %v2198 = vadd.f32 0.0, %v2197
      %v2199 = vpop.f32.mrf.mxu0
      %2200 = vmatprep.mubr.bf16.mxu0 %v2132
      %2201 = vmatmul.mubr.bf16.gmra.mxu0 %v2084
      %v2202 = vpop.f32.mrf.mxu0
      %v2203 = vadd.f32 0.0, %v2202
      %v2204 = vpop.f32.mrf.mxu0
      %v2205 = vpop.f32.mrf.mxu0
      %v2206 = vadd.f32 0.0, %v2205
      %v2207 = vpop.f32.mrf.mxu0
      %2208 = vmatprep.mubr.bf16.mxu0 %v2135
      %2209 = vmatmul.mubr.bf16.gmra.mxu0 %v2086
      %v2210 = vpop.f32.mrf.mxu0
      %v2211 = vadd.f32 0.0, %v2210
      %v2212 = vpop.f32.mrf.mxu0
      %v2213 = vpop.f32.mrf.mxu0
      %v2214 = vadd.f32 0.0, %v2213
      %v2215 = vpop.f32.mrf.mxu0
      %2216 = vmatprep.mubr.bf16.mxu0 %v2138
      %2217 = vmatmul.mubr.bf16.gmra.mxu0 %v2088
      %v2218 = vpop.f32.mrf.mxu0
      %v2219 = vadd.f32 0.0, %v2218
      %v2220 = vpop.f32.mrf.mxu0
      %v2221 = vpop.f32.mrf.mxu0
      %v2222 = vadd.f32 0.0, %v2221
      %v2223 = vpop.f32.mrf.mxu0
      %2224 = vmatprep.mubr.bf16.mxu0 %v2141
      %2225 = vmatmul.mubr.bf16.gmra.mxu0 %v2090
      %v2226 = vpop.f32.mrf.mxu0
      %v2227 = vadd.f32 0.0, %v2226
      %v2228 = vpop.f32.mrf.mxu0
      %v2229 = vpop.f32.mrf.mxu0
      %v2230 = vadd.f32 0.0, %v2229
      %v2231 = vpop.f32.mrf.mxu0
      %2232 = vmatprep.mubr.bf16.mxu0 %v2144
      %2233 = vmatmul.mubr.bf16.gmra.mxu0 %v2092
      %v2234 = vpop.f32.mrf.mxu0
      %v2235 = vadd.f32 0.0, %v2234
      %v2236 = vpop.f32.mrf.mxu0
      %v2237 = vpop.f32.mrf.mxu0
      %v2238 = vadd.f32 0.0, %v2237
      %v2239 = vpop.f32.mrf.mxu0
      %2240 = vmatprep.mubr.bf16.mxu0 %v2147
      %2241 = vmatmul.mubr.bf16.gmra.mxu0 %v2094
      %v2242 = vpop.f32.mrf.mxu0
      %v2243 = vadd.f32 0.0, %v2242
      %v2244 = vpop.f32.mrf.mxu0
      %v2245 = vpop.f32.mrf.mxu0
      %v2246 = vadd.f32 0.0, %v2245
      %v2247 = vpop.f32.mrf.mxu0
      %2248 = vmatprep.mubr.bf16.mxu0 %v2150
      %2249 = vmatmul.mubr.bf16.gmra.mxu0 %v2096
      %v2250 = vpop.f32.mrf.mxu0
      %v2251 = vadd.f32 0.0, %v2250
      %v2252 = vpop.f32.mrf.mxu0
      %v2253 = vpop.f32.mrf.mxu0
      %v2254 = vadd.f32 0.0, %v2253
      %v2255 = vpop.f32.mrf.mxu0
      %2256 = vdwg.mxu0
      %v2257 = vld [vmem:[%s11] sm:$0xf]
      %v2258 = vld [vmem:[%s11 + $0x4] sm:$0xf]
      %v2259 = vpack.c.bf16 %v2190, %v2187
      %v2260 = vpack.c.bf16 %v2198, %v2195
      %v2261 = vpack.c.bf16 %v2206, %v2203
      %v2262 = vpack.c.bf16 %v2214, %v2211
      %v2263 = vpack.c.bf16 %v2222, %v2219
      %v2264 = vpack.c.bf16 %v2230, %v2227
      %v2265 = vpack.c.bf16 %v2238, %v2235
      %v2266 = vpack.c.bf16 %v2246, %v2243
      %v2267 = vpack.c.bf16 %v2254, %v2251
      %v2270 = vunpack.c.l.b16 %v2257
      %v2271 = vunpack.c.l.b16 %v2258
      %v2272 = vpack.c.b16 %v2271, %v2270
      %v2275 = vsel %vm945, %v2259, 0
      %v2278 = vsel %vm945, %v2260, 0
      %v2281 = vsel %vm945, %v2261, 0
      %v2284 = vsel %vm945, %v2262, 0
      %v2287 = vsel %vm945, %v2263, 0
      %v2290 = vsel %vm945, %v2264, 0
      %v2293 = vsel %vm945, %v2265, 0
      %v2296 = vsel %vm945, %v2266, 0
      %v2299 = vsel %vm945, %v2267, 0
      %2301 = vmatprep.subr.bf16.mxu0 0
      %2302 = vmatpush1.bf16.msra.mxu0 0
      %2303 = vmatprep.subr.bf16.mxu0 0
      %2304 = vmatpush1.bf16.msra.mxu0 0
      %2305 = vmatprep.subr.bf16.mxu0 0
      %2306 = vmatpush1.bf16.msra.mxu0 0
      %2307 = vmatprep.subr.bf16.mxu0 0
      %2308 = vmatpush1.bf16.msra.mxu0 0
      %2309 = vmatprep.subr.bf16.mxu0 0
      %2310 = vmatpush1.bf16.msra.mxu0 0
      %2311 = vmatprep.subr.bf16.mxu0 0
      %2312 = vmatpush1.bf16.msra.mxu0 0
      %2313 = vmatprep.subr.bf16.mxu0 0
      %2314 = vmatpush1.bf16.msra.mxu0 0
      %2315 = vmatprep.subr.bf16.mxu0 0
      %2316 = vmatpush1.bf16.msra.mxu0 %v2272
      %2317 = vmatprep.subr.bf16.mxu0 0
      %2318 = vmatpush2.bf16.msra.mxu0 0
      %2319 = vmatprep.subr.bf16.mxu0 0
      %2320 = vmatpush2.bf16.msra.mxu0 0
      %2321 = vmatprep.subr.bf16.mxu0 0
      %2322 = vmatpush2.bf16.msra.mxu0 0
      %2323 = vmatprep.subr.bf16.mxu0 0
      %2324 = vmatpush2.bf16.msra.mxu0 0
      %2325 = vmatprep.subr.bf16.mxu0 0
      %2326 = vmatpush2.bf16.msra.mxu0 0
      %2327 = vmatprep.subr.bf16.mxu0 0
      %2328 = vmatpush2.bf16.msra.mxu0 0
      %2329 = vmatprep.subr.bf16.mxu0 0
      %2330 = vmatpush2.bf16.msra.mxu0 0
      %2331 = vmatprep.subr.bf16.mxu0 0
      %2332 = vmatpush2.bf16.msra.mxu0 0
      %2333 = vmatprep.mubr.bf16.mxu0 0
      %2334 = vmatmul.mubr.bf16.gmra.mxu0 %v2275
      %v2335 = vpop.f32.mrf.mxu0
      %v2336 = vadd.f32 0.0, %v2335
      %v2337 = vpop.f32.mrf.mxu0
      %v2338 = vpop.f32.mrf.mxu0
      %v2339 = vadd.f32 0.0, %v2338
      %v2340 = vpop.f32.mrf.mxu0
      %2341 = vmatprep.mubr.bf16.mxu0 0
      %2342 = vmatmul.mubr.bf16.gmra.mxu0 %v2278
      %v2343 = vpop.f32.mrf.mxu0
      %v2344 = vadd.f32 0.0, %v2343
      %v2345 = vpop.f32.mrf.mxu0
      %v2346 = vpop.f32.mrf.mxu0
      %v2347 = vadd.f32 0.0, %v2346
      %v2348 = vpop.f32.mrf.mxu0
      %2349 = vmatprep.mubr.bf16.mxu0 0
      %2350 = vmatmul.mubr.bf16.gmra.mxu0 %v2281
      %v2351 = vpop.f32.mrf.mxu0
      %v2352 = vadd.f32 0.0, %v2351
      %v2353 = vpop.f32.mrf.mxu0
      %v2354 = vpop.f32.mrf.mxu0
      %v2355 = vadd.f32 0.0, %v2354
      %v2356 = vpop.f32.mrf.mxu0
      %2357 = vmatprep.mubr.bf16.mxu0 0
      %2358 = vmatmul.mubr.bf16.gmra.mxu0 %v2284
      %v2359 = vpop.f32.mrf.mxu0
      %v2360 = vadd.f32 0.0, %v2359
      %v2361 = vpop.f32.mrf.mxu0
      %v2362 = vpop.f32.mrf.mxu0
      %v2363 = vadd.f32 0.0, %v2362
      %v2364 = vpop.f32.mrf.mxu0
      %2365 = vmatprep.mubr.bf16.mxu0 0
      %2366 = vmatmul.mubr.bf16.gmra.mxu0 %v2287
      %v2367 = vpop.f32.mrf.mxu0
      %v2368 = vadd.f32 0.0, %v2367
      %v2369 = vpop.f32.mrf.mxu0
      %v2370 = vpop.f32.mrf.mxu0
      %v2371 = vadd.f32 0.0, %v2370
      %v2372 = vpop.f32.mrf.mxu0
      %2373 = vmatprep.mubr.bf16.mxu0 0
      %2374 = vmatmul.mubr.bf16.gmra.mxu0 %v2290
      %v2375 = vpop.f32.mrf.mxu0
      %v2376 = vadd.f32 0.0, %v2375
      %v2377 = vpop.f32.mrf.mxu0
      %v2378 = vpop.f32.mrf.mxu0
      %v2379 = vadd.f32 0.0, %v2378
      %v2380 = vpop.f32.mrf.mxu0
      %2381 = vmatprep.mubr.bf16.mxu0 0
      %2382 = vmatmul.mubr.bf16.gmra.mxu0 %v2293
      %v2383 = vpop.f32.mrf.mxu0
      %v2384 = vadd.f32 0.0, %v2383
      %v2385 = vpop.f32.mrf.mxu0
      %v2386 = vpop.f32.mrf.mxu0
      %v2387 = vadd.f32 0.0, %v2386
      %v2388 = vpop.f32.mrf.mxu0
      %2389 = vmatprep.mubr.bf16.mxu0 0
      %2390 = vmatmul.mubr.bf16.gmra.mxu0 %v2296
      %v2391 = vpop.f32.mrf.mxu0
      %v2392 = vadd.f32 0.0, %v2391
      %v2393 = vpop.f32.mrf.mxu0
      %v2394 = vpop.f32.mrf.mxu0
      %v2395 = vadd.f32 0.0, %v2394
      %v2396 = vpop.f32.mrf.mxu0
      %2397 = vmatprep.mubr.bf16.mxu0 0
      %2398 = vmatmul.mubr.bf16.gmra.mxu0 %v2299
      %v2399 = vpop.f32.mrf.mxu0
      %v2400 = vadd.f32 0.0, %v2399
      %v2401 = vpop.f32.mrf.mxu0
      %v2402 = vpop.f32.mrf.mxu0
      %v2403 = vadd.f32 0.0, %v2402
      %v2404 = vpop.f32.mrf.mxu0
      %2405 = vdwg.mxu0
      %v2406 = vlaneseq
      %v2407 = vshrl.u32 %v2406, 7
      %v2408 = vsub.s32 0, %v2407
      %v2409 = vrot.slane %v1488, %v2408
      %v2410 = vadd.f32 %v2409, %v2336
      %v2411 = vadd.f32 %v2409, %v2339
      %v2412 = vadd.f32 %v2409, %v2344
      %v2413 = vadd.f32 %v2409, %v2347
      %v2414 = vadd.f32 %v2409, %v2352
      %v2415 = vadd.f32 %v2409, %v2355
      %v2416 = vadd.f32 %v2409, %v2360
      %v2417 = vadd.f32 %v2409, %v2363
      %v2418 = vadd.f32 %v2409, %v2368
      %v2419 = vadd.f32 %v2409, %v2371
      %v2420 = vadd.f32 %v2409, %v2376
      %v2421 = vadd.f32 %v2409, %v2379
      %v2422 = vadd.f32 %v2409, %v2384
      %v2423 = vadd.f32 %v2409, %v2387
      %v2424 = vadd.f32 %v2409, %v2392
      %v2425 = vadd.f32 %v2409, %v2395
      %v2426 = vadd.f32 %v2409, %v2400
      %v2427 = vadd.f32 %v2409, %v2403
      %2428 = vrot.lane.b32.xlu0 %v1489, 112
      %v2429 = vpop.permute.xlu0 %2428
      %2430 = vrot.lane.b32.xlu0 %v1490, 112
      %v2431 = vpop.permute.xlu0 %2430
      %2432 = vrot.lane.b32.xlu0 %v1491, 112
      %v2433 = vpop.permute.xlu0 %2432
      %2434 = vrot.lane.b32.xlu0 %v1492, 112
      %v2435 = vpop.permute.xlu0 %2434
      %2436 = vrot.lane.b32.xlu0 %v1493, 112
      %v2437 = vpop.permute.xlu0 %2436
      %2438 = vrot.lane.b32.xlu0 %v1494, 112
      %v2439 = vpop.permute.xlu0 %2438
      %2440 = vrot.lane.b32.xlu0 %v1495, 112
      %v2441 = vpop.permute.xlu0 %2440
      %2442 = vrot.lane.b32.xlu0 %v1496, 112
      %v2443 = vpop.permute.xlu0 %2442
      %2444 = vrot.lane.b32.xlu0 %v1497, 112
      %v2445 = vpop.permute.xlu0 %2444
      %2446 = vrot.lane.b32.xlu0 %v1489, 80
      %v2447 = vpop.permute.xlu0 %2446
      %2448 = vrot.lane.b32.xlu0 %v1490, 80
      %v2449 = vpop.permute.xlu0 %2448
      %2450 = vrot.lane.b32.xlu0 %v1491, 80
      %v2451 = vpop.permute.xlu0 %2450
      %2452 = vrot.lane.b32.xlu0 %v1492, 80
      %v2453 = vpop.permute.xlu0 %2452
      %2454 = vrot.lane.b32.xlu0 %v1493, 80
      %v2455 = vpop.permute.xlu0 %2454
      %2456 = vrot.lane.b32.xlu0 %v1494, 80
      %v2457 = vpop.permute.xlu0 %2456
      %2458 = vrot.lane.b32.xlu0 %v1495, 80
      %v2459 = vpop.permute.xlu0 %2458
      %2460 = vrot.lane.b32.xlu0 %v1496, 80
      %v2461 = vpop.permute.xlu0 %2460
      %2462 = vrot.lane.b32.xlu0 %v1497, 80
      %v2463 = vpop.permute.xlu0 %2462
      %v2465 = vsel %vm945, %v2429, 0
      %v2468 = vsel %vm945, %v2431, 0
      %v2471 = vsel %vm945, %v2433, 0
      %v2474 = vsel %vm945, %v2435, 0
      %v2477 = vsel %vm945, %v2437, 0
      %v2480 = vsel %vm945, %v2439, 0
      %v2483 = vsel %vm945, %v2441, 0
      %v2486 = vsel %vm945, %v2443, 0
      %v2489 = vsel %vm945, %v2445, 0
      %v2492 = vsel %vm945, %v2447, 0
      %v2495 = vsel %vm945, %v2449, 0
      %v2498 = vsel %vm945, %v2451, 0
      %v2501 = vsel %vm945, %v2453, 0
      %v2504 = vsel %vm945, %v2455, 0
      %v2507 = vsel %vm945, %v2457, 0
      %v2510 = vsel %vm945, %v2459, 0
      %v2513 = vsel %vm945, %v2461, 0
      %v2516 = vsel %vm945, %v2463, 0
      %2518 = vmatprep.subr.bf16.mxu0 0
      %2519 = vmatpush1.bf16.xpose.msra.mxu0 %v2513
      %2520 = vmatprep.subr.bf16.mxu0 0
      %2521 = vmatpush1.bf16.xpose.msra.mxu0 %v2510
      %2522 = vmatprep.subr.bf16.mxu0 0
      %2523 = vmatpush1.bf16.xpose.msra.mxu0 %v2507
      %2524 = vmatprep.subr.bf16.mxu0 0
      %2525 = vmatpush1.bf16.xpose.msra.mxu0 %v2504
      %2526 = vmatprep.subr.bf16.mxu0 0
      %2527 = vmatpush1.bf16.xpose.msra.mxu0 %v2501
      %2528 = vmatprep.subr.bf16.mxu0 0
      %2529 = vmatpush1.bf16.xpose.msra.mxu0 %v2498
      %2530 = vmatprep.subr.bf16.mxu0 0
      %2531 = vmatpush1.bf16.xpose.msra.mxu0 %v2495
      %2532 = vmatprep.subr.bf16.mxu0 0
      %2533 = vmatpush1.bf16.xpose.msra.mxu0 %v2492
      %2534 = vmatprep.subr.bf16.mxu0 0
      %2535 = vmatpush2.bf16.xpose.msra.mxu0 0
      %2536 = vmatprep.subr.bf16.mxu0 0
      %2537 = vmatpush2.bf16.xpose.msra.mxu0 0
      %2538 = vmatprep.subr.bf16.mxu0 0
      %2539 = vmatpush2.bf16.xpose.msra.mxu0 0
      %2540 = vmatprep.subr.bf16.mxu0 0
      %2541 = vmatpush2.bf16.xpose.msra.mxu0 0
      %2542 = vmatprep.subr.bf16.mxu0 0
      %2543 = vmatpush2.bf16.xpose.msra.mxu0 0
      %2544 = vmatprep.subr.bf16.mxu0 0
      %2545 = vmatpush2.bf16.xpose.msra.mxu0 0
      %2546 = vmatprep.subr.bf16.mxu0 0
      %2547 = vmatpush2.bf16.xpose.msra.mxu0 0
      %2548 = vmatprep.subr.bf16.mxu0 0
      %2549 = vmatpush2.bf16.xpose.msra.mxu0 %v2516
      %2550 = vmatprep.mubr.bf16.mxu0 0
      %2551 = vmatmul.mubr.bf16.gmra.mxu0 %v2465
      %v2552 = vpop.f32.mrf.mxu0
      %v2553 = vadd.f32 0.0, %v2552
      %v2554 = vpop.f32.mrf.mxu0
      %v2555 = vadd.f32 0.0, %v2554
      %v2556 = vpop.f32.mrf.mxu0
      %v2557 = vadd.f32 0.0, %v2556
      %v2558 = vpop.f32.mrf.mxu0
      %v2559 = vadd.f32 0.0, %v2558
      %2560 = vmatprep.mubr.bf16.mxu0 0
      %2561 = vmatmul.mubr.bf16.gmra.mxu0 %v2468
      %v2562 = vpop.f32.mrf.mxu0
      %v2563 = vadd.f32 0.0, %v2562
      %v2564 = vpop.f32.mrf.mxu0
      %v2565 = vadd.f32 0.0, %v2564
      %v2566 = vpop.f32.mrf.mxu0
      %v2567 = vadd.f32 0.0, %v2566
      %v2568 = vpop.f32.mrf.mxu0
      %v2569 = vadd.f32 0.0, %v2568
      %2570 = vmatprep.mubr.bf16.mxu0 0
      %2571 = vmatmul.mubr.bf16.gmra.mxu0 %v2471
      %v2572 = vpop.f32.mrf.mxu0
      %v2573 = vadd.f32 0.0, %v2572
      %v2574 = vpop.f32.mrf.mxu0
      %v2575 = vadd.f32 0.0, %v2574
      %v2576 = vpop.f32.mrf.mxu0
      %v2577 = vadd.f32 0.0, %v2576
      %v2578 = vpop.f32.mrf.mxu0
      %v2579 = vadd.f32 0.0, %v2578
      %2580 = vmatprep.mubr.bf16.mxu0 0
      %2581 = vmatmul.mubr.bf16.gmra.mxu0 %v2474
      %v2582 = vpop.f32.mrf.mxu0
      %v2583 = vadd.f32 0.0, %v2582
      %v2584 = vpop.f32.mrf.mxu0
      %v2585 = vadd.f32 0.0, %v2584
      %v2586 = vpop.f32.mrf.mxu0
      %v2587 = vadd.f32 0.0, %v2586
      %v2588 = vpop.f32.mrf.mxu0
      %v2589 = vadd.f32 0.0, %v2588
      %2590 = vmatprep.mubr.bf16.mxu0 0
      %2591 = vmatmul.mubr.bf16.gmra.mxu0 %v2477
      %v2592 = vpop.f32.mrf.mxu0
      %v2593 = vadd.f32 0.0, %v2592
      %v2594 = vpop.f32.mrf.mxu0
      %v2595 = vadd.f32 0.0, %v2594
      %v2596 = vpop.f32.mrf.mxu0
      %v2597 = vadd.f32 0.0, %v2596
      %v2598 = vpop.f32.mrf.mxu0
      %v2599 = vadd.f32 0.0, %v2598
      %2600 = vmatprep.mubr.bf16.mxu0 0
      %2601 = vmatmul.mubr.bf16.gmra.mxu0 %v2480
      %v2602 = vpop.f32.mrf.mxu0
      %v2603 = vadd.f32 0.0, %v2602
      %v2604 = vpop.f32.mrf.mxu0
      %v2605 = vadd.f32 0.0, %v2604
      %v2606 = vpop.f32.mrf.mxu0
      %v2607 = vadd.f32 0.0, %v2606
      %v2608 = vpop.f32.mrf.mxu0
      %v2609 = vadd.f32 0.0, %v2608
      %2610 = vmatprep.mubr.bf16.mxu0 0
      %2611 = vmatmul.mubr.bf16.gmra.mxu0 %v2483
      %v2612 = vpop.f32.mrf.mxu0
      %v2613 = vadd.f32 0.0, %v2612
      %v2614 = vpop.f32.mrf.mxu0
      %v2615 = vadd.f32 0.0, %v2614
      %v2616 = vpop.f32.mrf.mxu0
      %v2617 = vadd.f32 0.0, %v2616
      %v2618 = vpop.f32.mrf.mxu0
      %v2619 = vadd.f32 0.0, %v2618
      %2620 = vmatprep.mubr.bf16.mxu0 0
      %2621 = vmatmul.mubr.bf16.gmra.mxu0 %v2486
      %v2622 = vpop.f32.mrf.mxu0
      %v2623 = vadd.f32 0.0, %v2622
      %v2624 = vpop.f32.mrf.mxu0
      %v2625 = vadd.f32 0.0, %v2624
      %v2626 = vpop.f32.mrf.mxu0
      %v2627 = vadd.f32 0.0, %v2626
      %v2628 = vpop.f32.mrf.mxu0
      %v2629 = vadd.f32 0.0, %v2628
      %2630 = vmatprep.mubr.bf16.mxu0 0
      %2631 = vmatmul.mubr.bf16.gmra.mxu0 %v2489
      %v2632 = vpop.f32.mrf.mxu0
      %v2633 = vadd.f32 0.0, %v2632
      %v2634 = vpop.f32.mrf.mxu0
      %v2635 = vadd.f32 0.0, %v2634
      %v2636 = vpop.f32.mrf.mxu0
      %v2637 = vadd.f32 0.0, %v2636
      %v2638 = vpop.f32.mrf.mxu0
      %v2639 = vadd.f32 0.0, %v2638
      %2640 = vdwg.mxu0
      %v2641 = vmul.f32 %v2553, 0.25
      %v2642 = vmul.f32 %v2555, 0.25
      %v2643 = vmul.f32 %v2557, 0.25
      %v2644 = vmul.f32 %v2559, 0.25
      %v2645 = vmul.f32 %v2563, 0.25
      %v2646 = vmul.f32 %v2565, 0.25
      %v2647 = vmul.f32 %v2567, 0.25
      %v2648 = vmul.f32 %v2569, 0.25
      %v2649 = vmul.f32 %v2573, 0.25
      %v2650 = vmul.f32 %v2575, 0.25
      %v2651 = vmul.f32 %v2577, 0.25
      %v2652 = vmul.f32 %v2579, 0.25
      %v2653 = vmul.f32 %v2583, 0.25
      %v2654 = vmul.f32 %v2585, 0.25
      %v2655 = vmul.f32 %v2587, 0.25
      %v2656 = vmul.f32 %v2589, 0.25
      %v2657 = vmul.f32 %v2593, 0.25
      %v2658 = vmul.f32 %v2595, 0.25
      %v2659 = vmul.f32 %v2597, 0.25
      %v2660 = vmul.f32 %v2599, 0.25
      %v2661 = vmul.f32 %v2603, 0.25
      %v2662 = vmul.f32 %v2605, 0.25
      %v2663 = vmul.f32 %v2607, 0.25
      %v2664 = vmul.f32 %v2609, 0.25
      %v2665 = vmul.f32 %v2613, 0.25
      %v2666 = vmul.f32 %v2615, 0.25
      %v2667 = vmul.f32 %v2617, 0.25
      %v2668 = vmul.f32 %v2619, 0.25
      %v2669 = vmul.f32 %v2623, 0.25
      %v2670 = vmul.f32 %v2625, 0.25
      %v2671 = vmul.f32 %v2627, 0.25
      %v2672 = vmul.f32 %v2629, 0.25
      %v2673 = vmul.f32 %v2633, 0.25
      %v2674 = vmul.f32 %v2635, 0.25
      %v2675 = vmul.f32 %v2637, 0.25
      %v2676 = vmul.f32 %v2639, 0.25
      %v2677 = vadd.f32 %v2641, %v1288
      %v2678 = vadd.f32 %v2642, %v1289
      %v2679 = vadd.f32 %v2643, %v1290
      %v2680 = vadd.f32 %v2644, %v1291
      %v2681 = vadd.f32 %v2645, %v1292
      %v2682 = vadd.f32 %v2646, %v1293
      %v2683 = vadd.f32 %v2647, %v1294
      %v2684 = vadd.f32 %v2648, %v1295
      %v2685 = vadd.f32 %v2649, %v1296
      %v2686 = vadd.f32 %v2650, %v1297
      %v2687 = vadd.f32 %v2651, %v1298
      %v2688 = vadd.f32 %v2652, %v1299
      %v2689 = vadd.f32 %v2653, %v1300
      %v2690 = vadd.f32 %v2654, %v1301
      %v2691 = vadd.f32 %v2655, %v1302
      %v2692 = vadd.f32 %v2656, %v1303
      %v2693 = vadd.f32 %v2657, %v1304
      %v2694 = vadd.f32 %v2658, %v1305
      %v2695 = vadd.f32 %v2659, %v1306
      %v2696 = vadd.f32 %v2660, %v1307
      %v2697 = vadd.f32 %v2661, %v1308
      %v2698 = vadd.f32 %v2662, %v1309
      %v2699 = vadd.f32 %v2663, %v1310
      %v2700 = vadd.f32 %v2664, %v1311
      %v2701 = vadd.f32 %v2665, %v1312
      %v2702 = vadd.f32 %v2666, %v1313
      %v2703 = vadd.f32 %v2667, %v1314
      %v2704 = vadd.f32 %v2668, %v1315
      %v2705 = vadd.f32 %v2669, %v1316
      %v2706 = vadd.f32 %v2670, %v1317
      %v2707 = vadd.f32 %v2671, %v1318
      %v2708 = vadd.f32 %v2672, %v1319
      %v2709 = vadd.f32 %v2673, %v1320
      %v2710 = vadd.f32 %v2674, %v1321
      %v2711 = vadd.f32 %v2675, %v1322
      %v2712 = vadd.f32 %v2676, %v1323
      %v2713 = vsel %vm945, %v2678, -inf
      %v2714 = vmax.f32 %v2677, %v2713
      %2715 = vmax.xlane.f32.xlu0 %v2714
      %v2716 = vpop.xlane.xlu0 %2715
      %v2717 = vsel %vm945, %v2680, -inf
      %v2718 = vmax.f32 %v2679, %v2717
      %2719 = vmax.xlane.f32.xlu0 %v2718
      %v2720 = vpop.xlane.xlu0 %2719
      %v2721 = vsel %vm945, %v2682, -inf
      %v2722 = vmax.f32 %v2681, %v2721
      %2723 = vmax.xlane.f32.xlu0 %v2722
      %v2724 = vpop.xlane.xlu0 %2723
      %v2725 = vsel %vm945, %v2684, -inf
      %v2726 = vmax.f32 %v2683, %v2725
      %2727 = vmax.xlane.f32.xlu0 %v2726
      %v2728 = vpop.xlane.xlu0 %2727
      %v2729 = vsel %vm945, %v2686, -inf
      %v2730 = vmax.f32 %v2685, %v2729
      %2731 = vmax.xlane.f32.xlu0 %v2730
      %v2732 = vpop.xlane.xlu0 %2731
      %v2733 = vsel %vm945, %v2688, -inf
      %v2734 = vmax.f32 %v2687, %v2733
      %2735 = vmax.xlane.f32.xlu0 %v2734
      %v2736 = vpop.xlane.xlu0 %2735
      %v2737 = vsel %vm945, %v2690, -inf
      %v2738 = vmax.f32 %v2689, %v2737
      %2739 = vmax.xlane.f32.xlu0 %v2738
      %v2740 = vpop.xlane.xlu0 %2739
      %v2741 = vsel %vm945, %v2692, -inf
      %v2742 = vmax.f32 %v2691, %v2741
      %2743 = vmax.xlane.f32.xlu0 %v2742
      %v2744 = vpop.xlane.xlu0 %2743
      %v2745 = vsel %vm945, %v2694, -inf
      %v2746 = vmax.f32 %v2693, %v2745
      %2747 = vmax.xlane.f32.xlu0 %v2746
      %v2748 = vpop.xlane.xlu0 %2747
      %v2749 = vsel %vm945, %v2696, -inf
      %v2750 = vmax.f32 %v2695, %v2749
      %2751 = vmax.xlane.f32.xlu0 %v2750
      %v2752 = vpop.xlane.xlu0 %2751
      %v2753 = vsel %vm945, %v2698, -inf
      %v2754 = vmax.f32 %v2697, %v2753
      %2755 = vmax.xlane.f32.xlu0 %v2754
      %v2756 = vpop.xlane.xlu0 %2755
      %v2757 = vsel %vm945, %v2700, -inf
      %v2758 = vmax.f32 %v2699, %v2757
      %2759 = vmax.xlane.f32.xlu0 %v2758
      %v2760 = vpop.xlane.xlu0 %2759
      %v2761 = vsel %vm945, %v2702, -inf
      %v2762 = vmax.f32 %v2701, %v2761
      %2763 = vmax.xlane.f32.xlu0 %v2762
      %v2764 = vpop.xlane.xlu0 %2763
      %v2765 = vsel %vm945, %v2704, -inf
      %v2766 = vmax.f32 %v2703, %v2765
      %2767 = vmax.xlane.f32.xlu0 %v2766
      %v2768 = vpop.xlane.xlu0 %2767
      %v2769 = vsel %vm945, %v2706, -inf
      %v2770 = vmax.f32 %v2705, %v2769
      %2771 = vmax.xlane.f32.xlu0 %v2770
      %v2772 = vpop.xlane.xlu0 %2771
      %v2773 = vsel %vm945, %v2708, -inf
      %v2774 = vmax.f32 %v2707, %v2773
      %2775 = vmax.xlane.f32.xlu0 %v2774
      %v2776 = vpop.xlane.xlu0 %2775
      %v2777 = vsel %vm945, %v2710, -inf
      %v2778 = vmax.f32 %v2709, %v2777
      %2779 = vmax.xlane.f32.xlu0 %v2778
      %v2780 = vpop.xlane.xlu0 %2779
      %v2781 = vsel %vm945, %v2712, -inf
      %v2782 = vmax.f32 %v2711, %v2781
      %2783 = vmax.xlane.f32.xlu0 %v2782
      %v2784 = vpop.xlane.xlu0 %2783
      %v2785 = vsub.f32 %v2677, %v2716
      %v2786 = vsub.f32 %v2678, %v2716
      %v2787 = vsub.f32 %v2679, %v2720
      %v2788 = vsub.f32 %v2680, %v2720
      %v2789 = vsub.f32 %v2681, %v2724
      %v2790 = vsub.f32 %v2682, %v2724
      %v2791 = vsub.f32 %v2683, %v2728
      %v2792 = vsub.f32 %v2684, %v2728
      %v2793 = vsub.f32 %v2685, %v2732
      %v2794 = vsub.f32 %v2686, %v2732
      %v2795 = vsub.f32 %v2687, %v2736
      %v2796 = vsub.f32 %v2688, %v2736
      %v2797 = vsub.f32 %v2689, %v2740
      %v2798 = vsub.f32 %v2690, %v2740
      %v2799 = vsub.f32 %v2691, %v2744
      %v2800 = vsub.f32 %v2692, %v2744
      %v2801 = vsub.f32 %v2693, %v2748
      %v2802 = vsub.f32 %v2694, %v2748
      %v2803 = vsub.f32 %v2695, %v2752
      %v2804 = vsub.f32 %v2696, %v2752
      %v2805 = vsub.f32 %v2697, %v2756
      %v2806 = vsub.f32 %v2698, %v2756
      %v2807 = vsub.f32 %v2699, %v2760
      %v2808 = vsub.f32 %v2700, %v2760
      %v2809 = vsub.f32 %v2701, %v2764
      %v2810 = vsub.f32 %v2702, %v2764
      %v2811 = vsub.f32 %v2703, %v2768
      %v2812 = vsub.f32 %v2704, %v2768
      %v2813 = vsub.f32 %v2705, %v2772
      %v2814 = vsub.f32 %v2706, %v2772
      %v2815 = vsub.f32 %v2707, %v2776
      %v2816 = vsub.f32 %v2708, %v2776
      %v2817 = vsub.f32 %v2709, %v2780
      %v2818 = vsub.f32 %v2710, %v2780
      %v2819 = vsub.f32 %v2711, %v2784
      %v2820 = vsub.f32 %v2712, %v2784
      %v2821 = vmul.f32 %v2785, 1.442695
      %v2822 = vpow.pop %v2821
      %v2823 = vmul.f32 %v2786, 1.442695
      %v2824 = vpow.pop %v2823
      %v2825 = vmul.f32 %v2787, 1.442695
      %v2826 = vpow.pop %v2825
      %v2827 = vmul.f32 %v2788, 1.442695
      %v2828 = vpow.pop %v2827
      %v2829 = vmul.f32 %v2789, 1.442695
      %v2830 = vpow.pop %v2829
      %v2831 = vmul.f32 %v2790, 1.442695
      %v2832 = vpow.pop %v2831
      %v2833 = vmul.f32 %v2791, 1.442695
      %v2834 = vpow.pop %v2833
      %v2835 = vmul.f32 %v2792, 1.442695
      %v2836 = vpow.pop %v2835
      %v2837 = vmul.f32 %v2793, 1.442695
      %v2838 = vpow.pop %v2837
      %v2839 = vmul.f32 %v2794, 1.442695
      %v2840 = vpow.pop %v2839
      %v2841 = vmul.f32 %v2795, 1.442695
      %v2842 = vpow.pop %v2841
      %v2843 = vmul.f32 %v2796, 1.442695
      %v2844 = vpow.pop %v2843
      %v2845 = vmul.f32 %v2797, 1.442695
      %v2846 = vpow.pop %v2845
      %v2847 = vmul.f32 %v2798, 1.442695
      %v2848 = vpow.pop %v2847
      %v2849 = vmul.f32 %v2799, 1.442695
      %v2850 = vpow.pop %v2849
      %v2851 = vmul.f32 %v2800, 1.442695
      %v2852 = vpow.pop %v2851
      %v2853 = vmul.f32 %v2801, 1.442695
      %v2854 = vpow.pop %v2853
      %v2855 = vmul.f32 %v2802, 1.442695
      %v2856 = vpow.pop %v2855
      %v2857 = vmul.f32 %v2803, 1.442695
      %v2858 = vpow.pop %v2857
      %v2859 = vmul.f32 %v2804, 1.442695
      %v2860 = vpow.pop %v2859
      %v2861 = vmul.f32 %v2805, 1.442695
      %v2862 = vpow.pop %v2861
      %v2863 = vmul.f32 %v2806, 1.442695
      %v2864 = vpow.pop %v2863
      %v2865 = vmul.f32 %v2807, 1.442695
      %v2866 = vpow.pop %v2865
      %v2867 = vmul.f32 %v2808, 1.442695
      %v2868 = vpow.pop %v2867
      %v2869 = vmul.f32 %v2809, 1.442695
      %v2870 = vpow.pop %v2869
      %v2871 = vmul.f32 %v2810, 1.442695
      %v2872 = vpow.pop %v2871
      %v2873 = vmul.f32 %v2811, 1.442695
      %v2874 = vpow.pop %v2873
      %v2875 = vmul.f32 %v2812, 1.442695
      %v2876 = vpow.pop %v2875
      %v2877 = vmul.f32 %v2813, 1.442695
      %v2878 = vpow.pop %v2877
      %v2879 = vmul.f32 %v2814, 1.442695
      %v2880 = vpow.pop %v2879
      %v2881 = vmul.f32 %v2815, 1.442695
      %v2882 = vpow.pop %v2881
      %v2883 = vmul.f32 %v2816, 1.442695
      %v2884 = vpow.pop %v2883
      %v2885 = vmul.f32 %v2817, 1.442695
      %v2886 = vpow.pop %v2885
      %v2887 = vmul.f32 %v2818, 1.442695
      %v2888 = vpow.pop %v2887
      %v2889 = vmul.f32 %v2819, 1.442695
      %v2890 = vpow.pop %v2889
      %v2891 = vmul.f32 %v2820, 1.442695
      %v2892 = vpow.pop %v2891
      %v2893 = vsel %vm945, %v2824, 0.0
      %v2894 = vadd.f32 %v2822, %v2893
      %2895 = vadd.xlane.f32.xlu0 %v2894
      %v2896 = vpop.xlane.xlu0 %2895
      %v2897 = vsel %vm945, %v2828, 0.0
      %v2898 = vadd.f32 %v2826, %v2897
      %2899 = vadd.xlane.f32.xlu0 %v2898
      %v2900 = vpop.xlane.xlu0 %2899
      %v2901 = vsel %vm945, %v2832, 0.0
      %v2902 = vadd.f32 %v2830, %v2901
      %2903 = vadd.xlane.f32.xlu0 %v2902
      %v2904 = vpop.xlane.xlu0 %2903
      %v2905 = vsel %vm945, %v2836, 0.0
      %v2906 = vadd.f32 %v2834, %v2905
      %2907 = vadd.xlane.f32.xlu0 %v2906
      %v2908 = vpop.xlane.xlu0 %2907
      %v2909 = vsel %vm945, %v2840, 0.0
      %v2910 = vadd.f32 %v2838, %v2909
      %2911 = vadd.xlane.f32.xlu0 %v2910
      %v2912 = vpop.xlane.xlu0 %2911
      %v2913 = vsel %vm945, %v2844, 0.0
      %v2914 = vadd.f32 %v2842, %v2913
      %2915 = vadd.xlane.f32.xlu0 %v2914
      %v2916 = vpop.xlane.xlu0 %2915
      %v2917 = vsel %vm945, %v2848, 0.0
      %v2918 = vadd.f32 %v2846, %v2917
      %2919 = vadd.xlane.f32.xlu0 %v2918
      %v2920 = vpop.xlane.xlu0 %2919
      %v2921 = vsel %vm945, %v2852, 0.0
      %v2922 = vadd.f32 %v2850, %v2921
      %2923 = vadd.xlane.f32.xlu0 %v2922
      %v2924 = vpop.xlane.xlu0 %2923
      %v2925 = vsel %vm945, %v2856, 0.0
      %v2926 = vadd.f32 %v2854, %v2925
      %2927 = vadd.xlane.f32.xlu0 %v2926
      %v2928 = vpop.xlane.xlu0 %2927
      %v2929 = vsel %vm945, %v2860, 0.0
      %v2930 = vadd.f32 %v2858, %v2929
      %2931 = vadd.xlane.f32.xlu0 %v2930
      %v2932 = vpop.xlane.xlu0 %2931
      %v2933 = vsel %vm945, %v2864, 0.0
      %v2934 = vadd.f32 %v2862, %v2933
      %2935 = vadd.xlane.f32.xlu0 %v2934
      %v2936 = vpop.xlane.xlu0 %2935
      %v2937 = vsel %vm945, %v2868, 0.0
      %v2938 = vadd.f32 %v2866, %v2937
      %2939 = vadd.xlane.f32.xlu0 %v2938
      %v2940 = vpop.xlane.xlu0 %2939
      %v2941 = vsel %vm945, %v2872, 0.0
      %v2942 = vadd.f32 %v2870, %v2941
      %2943 = vadd.xlane.f32.xlu0 %v2942
      %v2944 = vpop.xlane.xlu0 %2943
      %v2945 = vsel %vm945, %v2876, 0.0
      %v2946 = vadd.f32 %v2874, %v2945
      %2947 = vadd.xlane.f32.xlu0 %v2946
      %v2948 = vpop.xlane.xlu0 %2947
      %v2949 = vsel %vm945, %v2880, 0.0
      %v2950 = vadd.f32 %v2878, %v2949
      %2951 = vadd.xlane.f32.xlu0 %v2950
      %v2952 = vpop.xlane.xlu0 %2951
      %v2953 = vsel %vm945, %v2884, 0.0
      %v2954 = vadd.f32 %v2882, %v2953
      %2955 = vadd.xlane.f32.xlu0 %v2954
      %v2956 = vpop.xlane.xlu0 %2955
      %v2957 = vsel %vm945, %v2888, 0.0
      %v2958 = vadd.f32 %v2886, %v2957
      %2959 = vadd.xlane.f32.xlu0 %v2958
      %v2960 = vpop.xlane.xlu0 %2959
      %v2961 = vsel %vm945, %v2892, 0.0
      %v2962 = vadd.f32 %v2890, %v2961
      %2963 = vadd.xlane.f32.xlu0 %v2962
      %v2964 = vpop.xlane.xlu0 %2963
      %v2965 = vrcp.pop %v2896
      %v2966 = vmul.f32 %v2822, %v2965
      %v2967 = vmul.f32 %v2824, %v2965
      %v2968 = vrcp.pop %v2900
      %v2969 = vmul.f32 %v2826, %v2968
      %v2970 = vmul.f32 %v2828, %v2968
      %v2971 = vrcp.pop %v2904
      %v2972 = vmul.f32 %v2830, %v2971
      %v2973 = vmul.f32 %v2832, %v2971
      %v2974 = vrcp.pop %v2908
      %v2975 = vmul.f32 %v2834, %v2974
      %v2976 = vmul.f32 %v2836, %v2974
      %v2977 = vrcp.pop %v2912
      %v2978 = vmul.f32 %v2838, %v2977
      %v2979 = vmul.f32 %v2840, %v2977
      %v2980 = vrcp.pop %v2916
      %v2981 = vmul.f32 %v2842, %v2980
      %v2982 = vmul.f32 %v2844, %v2980
      %v2983 = vrcp.pop %v2920
      %v2984 = vmul.f32 %v2846, %v2983
      %v2985 = vmul.f32 %v2848, %v2983
      %v2986 = vrcp.pop %v2924
      %v2987 = vmul.f32 %v2850, %v2986
      %v2988 = vmul.f32 %v2852, %v2986
      %v2989 = vrcp.pop %v2928
      %v2990 = vmul.f32 %v2854, %v2989
      %v2991 = vmul.f32 %v2856, %v2989
      %v2992 = vrcp.pop %v2932
      %v2993 = vmul.f32 %v2858, %v2992
      %v2994 = vmul.f32 %v2860, %v2992
      %v2995 = vrcp.pop %v2936
      %v2996 = vmul.f32 %v2862, %v2995
      %v2997 = vmul.f32 %v2864, %v2995
      %v2998 = vrcp.pop %v2940
      %v2999 = vmul.f32 %v2866, %v2998
      %v3000 = vmul.f32 %v2868, %v2998
      %v3001 = vrcp.pop %v2944
      %v3002 = vmul.f32 %v2870, %v3001
      %v3003 = vmul.f32 %v2872, %v3001
      %v3004 = vrcp.pop %v2948
      %v3005 = vmul.f32 %v2874, %v3004
      %v3006 = vmul.f32 %v2876, %v3004
      %v3007 = vrcp.pop %v2952
      %v3008 = vmul.f32 %v2878, %v3007
      %v3009 = vmul.f32 %v2880, %v3007
      %v3010 = vrcp.pop %v2956
      %v3011 = vmul.f32 %v2882, %v3010
      %v3012 = vmul.f32 %v2884, %v3010
      %v3013 = vrcp.pop %v2960
      %v3014 = vmul.f32 %v2886, %v3013
      %v3015 = vmul.f32 %v2888, %v3013
      %v3016 = vrcp.pop %v2964
      %v3017 = vmul.f32 %v2890, %v3016
      %v3018 = vmul.f32 %v2892, %v3016
      %v3019 = vpack.c.bf16 %v2969, %v2966
      %v3020 = vpack.c.bf16 %v2970, %v2967
      %v3021 = vpack.c.bf16 %v2975, %v2972
      %v3022 = vpack.c.bf16 %v2976, %v2973
      %v3023 = vpack.c.bf16 %v2981, %v2978
      %v3024 = vpack.c.bf16 %v2982, %v2979
      %v3025 = vpack.c.bf16 %v2987, %v2984
      %v3026 = vpack.c.bf16 %v2988, %v2985
      %v3027 = vpack.c.bf16 %v2993, %v2990
      %v3028 = vpack.c.bf16 %v2994, %v2991
      %v3029 = vpack.c.bf16 %v2999, %v2996
      %v3030 = vpack.c.bf16 %v3000, %v2997
      %v3031 = vpack.c.bf16 %v3005, %v3002
      %v3032 = vpack.c.bf16 %v3006, %v3003
      %v3033 = vpack.c.bf16 %v3011, %v3008
      %v3034 = vpack.c.bf16 %v3012, %v3009
      %v3035 = vpack.c.bf16 %v3017, %v3014
      %v3036 = vpack.c.bf16 %v3018, %v3015
      %3037 = vrot.lane.b32.xlu0 %v1489, 48
      %v3038 = vpop.permute.xlu0 %3037
      %3039 = vrot.lane.b32.xlu0 %v1490, 48
      %v3040 = vpop.permute.xlu0 %3039
      %3041 = vrot.lane.b32.xlu0 %v1491, 48
      %v3042 = vpop.permute.xlu0 %3041
      %3043 = vrot.lane.b32.xlu0 %v1492, 48
      %v3044 = vpop.permute.xlu0 %3043
      %3045 = vrot.lane.b32.xlu0 %v1493, 48
      %v3046 = vpop.permute.xlu0 %3045
      %3047 = vrot.lane.b32.xlu0 %v1494, 48
      %v3048 = vpop.permute.xlu0 %3047
      %3049 = vrot.lane.b32.xlu0 %v1495, 48
      %v3050 = vpop.permute.xlu0 %3049
      %3051 = vrot.lane.b32.xlu0 %v1496, 48
      %v3052 = vpop.permute.xlu0 %3051
      %3053 = vrot.lane.b32.xlu0 %v1497, 48
      %v3054 = vpop.permute.xlu0 %3053
      %v3065 = vsel %vm945, %v3020, 0
      %v3068 = vsel %vm945, %v3022, 0
      %v3071 = vsel %vm945, %v3024, 0
      %v3074 = vsel %vm945, %v3026, 0
      %v3077 = vsel %vm945, %v3028, 0
      %v3080 = vsel %vm945, %v3030, 0
      %v3083 = vsel %vm945, %v3032, 0
      %v3086 = vsel %vm945, %v3034, 0
      %v3089 = vsel %vm945, %v3036, 0
      %3091 = vmatprep.subr.bf16.mxu0 0
      %3092 = vmatpush1.bf16.msra.mxu0 %v3052
      %3093 = vmatprep.subr.bf16.mxu0 0
      %3094 = vmatpush1.bf16.msra.mxu0 %v3050
      %3095 = vmatprep.subr.bf16.mxu0 0
      %3096 = vmatpush1.bf16.msra.mxu0 %v3048
      %3097 = vmatprep.subr.bf16.mxu0 0
      %3098 = vmatpush1.bf16.msra.mxu0 %v3046
      %3099 = vmatprep.subr.bf16.mxu0 0
      %3100 = vmatpush1.bf16.msra.mxu0 %v3044
      %3101 = vmatprep.subr.bf16.mxu0 0
      %3102 = vmatpush1.bf16.msra.mxu0 %v3042
      %3103 = vmatprep.subr.bf16.mxu0 0
      %3104 = vmatpush1.bf16.msra.mxu0 %v3040
      %3105 = vmatprep.subr.bf16.mxu0 0
      %3106 = vmatpush1.bf16.msra.mxu0 %v3038
      %3107 = vmatprep.subr.bf16.mxu0 0
      %3108 = vmatpush2.bf16.msra.mxu0 0
      %3109 = vmatprep.subr.bf16.mxu0 0
      %3110 = vmatpush2.bf16.msra.mxu0 0
      %3111 = vmatprep.subr.bf16.mxu0 0
      %3112 = vmatpush2.bf16.msra.mxu0 0
      %3113 = vmatprep.subr.bf16.mxu0 0
      %3114 = vmatpush2.bf16.msra.mxu0 0
      %3115 = vmatprep.subr.bf16.mxu0 0
      %3116 = vmatpush2.bf16.msra.mxu0 0
      %3117 = vmatprep.subr.bf16.mxu0 0
      %3118 = vmatpush2.bf16.msra.mxu0 0
      %3119 = vmatprep.subr.bf16.mxu0 0
      %3120 = vmatpush2.bf16.msra.mxu0 0
      %3121 = vmatprep.subr.bf16.mxu0 0
      %3122 = vmatpush2.bf16.msra.mxu0 %v3054
      %3123 = vmatprep.mubr.bf16.mxu0 %v3065
      %3124 = vmatmul.mubr.bf16.gmra.mxu0 %v3019
      %v3125 = vpop.f32.mrf.mxu0
      %v3126 = vadd.f32 0.0, %v3125
      %v3127 = vpop.f32.mrf.mxu0
      %v3128 = vpop.f32.mrf.mxu0
      %v3129 = vadd.f32 0.0, %v3128
      %v3130 = vpop.f32.mrf.mxu0
      %3131 = vmatprep.mubr.bf16.mxu0 %v3068
      %3132 = vmatmul.mubr.bf16.gmra.mxu0 %v3021
      %v3133 = vpop.f32.mrf.mxu0
      %v3134 = vadd.f32 0.0, %v3133
      %v3135 = vpop.f32.mrf.mxu0
      %v3136 = vpop.f32.mrf.mxu0
      %v3137 = vadd.f32 0.0, %v3136
      %v3138 = vpop.f32.mrf.mxu0
      %3139 = vmatprep.mubr.bf16.mxu0 %v3071
      %3140 = vmatmul.mubr.bf16.gmra.mxu0 %v3023
      %v3141 = vpop.f32.mrf.mxu0
      %v3142 = vadd.f32 0.0, %v3141
      %v3143 = vpop.f32.mrf.mxu0
      %v3144 = vpop.f32.mrf.mxu0
      %v3145 = vadd.f32 0.0, %v3144
      %v3146 = vpop.f32.mrf.mxu0
      %3147 = vmatprep.mubr.bf16.mxu0 %v3074
      %3148 = vmatmul.mubr.bf16.gmra.mxu0 %v3025
      %v3149 = vpop.f32.mrf.mxu0
      %v3150 = vadd.f32 0.0, %v3149
      %v3151 = vpop.f32.mrf.mxu0
      %v3152 = vpop.f32.mrf.mxu0
      %v3153 = vadd.f32 0.0, %v3152
      %v3154 = vpop.f32.mrf.mxu0
      %3155 = vmatprep.mubr.bf16.mxu0 %v3077
      %3156 = vmatmul.mubr.bf16.gmra.mxu0 %v3027
      %v3157 = vpop.f32.mrf.mxu0
      %v3158 = vadd.f32 0.0, %v3157
      %v3159 = vpop.f32.mrf.mxu0
      %v3160 = vpop.f32.mrf.mxu0
      %v3161 = vadd.f32 0.0, %v3160
      %v3162 = vpop.f32.mrf.mxu0
      %3163 = vmatprep.mubr.bf16.mxu0 %v3080
      %3164 = vmatmul.mubr.bf16.gmra.mxu0 %v3029
      %v3165 = vpop.f32.mrf.mxu0
      %v3166 = vadd.f32 0.0, %v3165
      %v3167 = vpop.f32.mrf.mxu0
      %v3168 = vpop.f32.mrf.mxu0
      %v3169 = vadd.f32 0.0, %v3168
      %v3170 = vpop.f32.mrf.mxu0
      %3171 = vmatprep.mubr.bf16.mxu0 %v3083
      %3172 = vmatmul.mubr.bf16.gmra.mxu0 %v3031
      %v3173 = vpop.f32.mrf.mxu0
      %v3174 = vadd.f32 0.0, %v3173
      %v3175 = vpop.f32.mrf.mxu0
      %v3176 = vpop.f32.mrf.mxu0
      %v3177 = vadd.f32 0.0, %v3176
      %v3178 = vpop.f32.mrf.mxu0
      %3179 = vmatprep.mubr.bf16.mxu0 %v3086
      %3180 = vmatmul.mubr.bf16.gmra.mxu0 %v3033
      %v3181 = vpop.f32.mrf.mxu0
      %v3182 = vadd.f32 0.0, %v3181
      %v3183 = vpop.f32.mrf.mxu0
      %v3184 = vpop.f32.mrf.mxu0
      %v3185 = vadd.f32 0.0, %v3184
      %v3186 = vpop.f32.mrf.mxu0
      %3187 = vmatprep.mubr.bf16.mxu0 %v3089
      %3188 = vmatmul.mubr.bf16.gmra.mxu0 %v3035
      %v3189 = vpop.f32.mrf.mxu0
      %v3190 = vadd.f32 0.0, %v3189
      %v3191 = vpop.f32.mrf.mxu0
      %v3192 = vpop.f32.mrf.mxu0
      %v3193 = vadd.f32 0.0, %v3192
      %v3194 = vpop.f32.mrf.mxu0
      %3195 = vdwg.mxu0
      %v3196 = vld [vmem:[%s11 + $0x8] sm:$0xf]
      %v3197 = vld [vmem:[%s11 + $0xc] sm:$0xf]
      %v3198 = vpack.c.bf16 %v3129, %v3126
      %v3199 = vpack.c.bf16 %v3137, %v3134
      %v3200 = vpack.c.bf16 %v3145, %v3142
      %v3201 = vpack.c.bf16 %v3153, %v3150
      %v3202 = vpack.c.bf16 %v3161, %v3158
      %v3203 = vpack.c.bf16 %v3169, %v3166
      %v3204 = vpack.c.bf16 %v3177, %v3174
      %v3205 = vpack.c.bf16 %v3185, %v3182
      %v3206 = vpack.c.bf16 %v3193, %v3190
      %v3209 = vunpack.c.l.b16 %v3196
      %v3210 = vunpack.c.l.b16 %v3197
      %v3211 = vpack.c.b16 %v3210, %v3209
      %v3214 = vsel %vm945, %v3198, 0
      %v3217 = vsel %vm945, %v3199, 0
      %v3220 = vsel %vm945, %v3200, 0
      %v3223 = vsel %vm945, %v3201, 0
      %v3226 = vsel %vm945, %v3202, 0
      %v3229 = vsel %vm945, %v3203, 0
      %v3232 = vsel %vm945, %v3204, 0
      %v3235 = vsel %vm945, %v3205, 0
      %v3238 = vsel %vm945, %v3206, 0
      %3240 = vmatprep.subr.bf16.mxu0 0
      %3241 = vmatpush1.bf16.msra.mxu0 0
      %3242 = vmatprep.subr.bf16.mxu0 0
      %3243 = vmatpush1.bf16.msra.mxu0 0
      %3244 = vmatprep.subr.bf16.mxu0 0
      %3245 = vmatpush1.bf16.msra.mxu0 0
      %3246 = vmatprep.subr.bf16.mxu0 0
      %3247 = vmatpush1.bf16.msra.mxu0 0
      %3248 = vmatprep.subr.bf16.mxu0 0
      %3249 = vmatpush1.bf16.msra.mxu0 0
      %3250 = vmatprep.subr.bf16.mxu0 0
      %3251 = vmatpush1.bf16.msra.mxu0 0
      %3252 = vmatprep.subr.bf16.mxu0 0
      %3253 = vmatpush1.bf16.msra.mxu0 0
      %3254 = vmatprep.subr.bf16.mxu0 0
      %3255 = vmatpush1.bf16.msra.mxu0 %v3211
      %3256 = vmatprep.subr.bf16.mxu0 0
      %3257 = vmatpush2.bf16.msra.mxu0 0
      %3258 = vmatprep.subr.bf16.mxu0 0
      %3259 = vmatpush2.bf16.msra.mxu0 0
      %3260 = vmatprep.subr.bf16.mxu0 0
      %3261 = vmatpush2.bf16.msra.mxu0 0
      %3262 = vmatprep.subr.bf16.mxu0 0
      %3263 = vmatpush2.bf16.msra.mxu0 0
      %3264 = vmatprep.subr.bf16.mxu0 0
      %3265 = vmatpush2.bf16.msra.mxu0 0
      %3266 = vmatprep.subr.bf16.mxu0 0
      %3267 = vmatpush2.bf16.msra.mxu0 0
      %3268 = vmatprep.subr.bf16.mxu0 0
      %3269 = vmatpush2.bf16.msra.mxu0 0
      %3270 = vmatprep.subr.bf16.mxu0 0
      %3271 = vmatpush2.bf16.msra.mxu0 0
      %3272 = vmatprep.mubr.bf16.mxu0 0
      %3273 = vmatmul.mubr.bf16.gmra.mxu0 %v3214
      %v3274 = vpop.f32.mrf.mxu0
      %v3275 = vadd.f32 0.0, %v3274
      %v3276 = vpop.f32.mrf.mxu0
      %v3277 = vpop.f32.mrf.mxu0
      %v3278 = vadd.f32 0.0, %v3277
      %v3279 = vpop.f32.mrf.mxu0
      %3280 = vmatprep.mubr.bf16.mxu0 0
      %3281 = vmatmul.mubr.bf16.gmra.mxu0 %v3217
      %v3282 = vpop.f32.mrf.mxu0
      %v3283 = vadd.f32 0.0, %v3282
      %v3284 = vpop.f32.mrf.mxu0
      %v3285 = vpop.f32.mrf.mxu0
      %v3286 = vadd.f32 0.0, %v3285
      %v3287 = vpop.f32.mrf.mxu0
      %3288 = vmatprep.mubr.bf16.mxu0 0
      %3289 = vmatmul.mubr.bf16.gmra.mxu0 %v3220
      %v3290 = vpop.f32.mrf.mxu0
      %v3291 = vadd.f32 0.0, %v3290
      %v3292 = vpop.f32.mrf.mxu0
      %v3293 = vpop.f32.mrf.mxu0
      %v3294 = vadd.f32 0.0, %v3293
      %v3295 = vpop.f32.mrf.mxu0
      %3296 = vmatprep.mubr.bf16.mxu0 0
      %3297 = vmatmul.mubr.bf16.gmra.mxu0 %v3223
      %v3298 = vpop.f32.mrf.mxu0
      %v3299 = vadd.f32 0.0, %v3298
      %v3300 = vpop.f32.mrf.mxu0
      %v3301 = vpop.f32.mrf.mxu0
      %v3302 = vadd.f32 0.0, %v3301
      %v3303 = vpop.f32.mrf.mxu0
      %3304 = vmatprep.mubr.bf16.mxu0 0
      %3305 = vmatmul.mubr.bf16.gmra.mxu0 %v3226
      %v3306 = vpop.f32.mrf.mxu0
      %v3307 = vadd.f32 0.0, %v3306
      %v3308 = vpop.f32.mrf.mxu0
      %v3309 = vpop.f32.mrf.mxu0
      %v3310 = vadd.f32 0.0, %v3309
      %v3311 = vpop.f32.mrf.mxu0
      %3312 = vmatprep.mubr.bf16.mxu0 0
      %3313 = vmatmul.mubr.bf16.gmra.mxu0 %v3229
      %v3314 = vpop.f32.mrf.mxu0
      %v3315 = vadd.f32 0.0, %v3314
      %v3316 = vpop.f32.mrf.mxu0
      %v3317 = vpop.f32.mrf.mxu0
      %v3318 = vadd.f32 0.0, %v3317
      %v3319 = vpop.f32.mrf.mxu0
      %3320 = vmatprep.mubr.bf16.mxu0 0
      %3321 = vmatmul.mubr.bf16.gmra.mxu0 %v3232
      %v3322 = vpop.f32.mrf.mxu0
      %v3323 = vadd.f32 0.0, %v3322
      %v3324 = vpop.f32.mrf.mxu0
      %v3325 = vpop.f32.mrf.mxu0
      %v3326 = vadd.f32 0.0, %v3325
      %v3327 = vpop.f32.mrf.mxu0
      %3328 = vmatprep.mubr.bf16.mxu0 0
      %3329 = vmatmul.mubr.bf16.gmra.mxu0 %v3235
      %v3330 = vpop.f32.mrf.mxu0
      %v3331 = vadd.f32 0.0, %v3330
      %v3332 = vpop.f32.mrf.mxu0
      %v3333 = vpop.f32.mrf.mxu0
      %v3334 = vadd.f32 0.0, %v3333
      %v3335 = vpop.f32.mrf.mxu0
      %3336 = vmatprep.mubr.bf16.mxu0 0
      %3337 = vmatmul.mubr.bf16.gmra.mxu0 %v3238
      %v3338 = vpop.f32.mrf.mxu0
      %v3339 = vadd.f32 0.0, %v3338
      %v3340 = vpop.f32.mrf.mxu0
      %v3341 = vpop.f32.mrf.mxu0
      %v3342 = vadd.f32 0.0, %v3341
      %v3343 = vpop.f32.mrf.mxu0
      %3344 = vdwg.mxu0
      %v3345 = vadd.f32 %v2410, %v3275
      %v3346 = vadd.f32 %v2411, %v3278
      %v3347 = vadd.f32 %v2412, %v3283
      %v3348 = vadd.f32 %v2413, %v3286
      %v3349 = vadd.f32 %v2414, %v3291
      %v3350 = vadd.f32 %v2415, %v3294
      %v3351 = vadd.f32 %v2416, %v3299
      %v3352 = vadd.f32 %v2417, %v3302
      %v3353 = vadd.f32 %v2418, %v3307
      %v3354 = vadd.f32 %v2419, %v3310
      %v3355 = vadd.f32 %v2420, %v3315
      %v3356 = vadd.f32 %v2421, %v3318
      %v3357 = vadd.f32 %v2422, %v3323
      %v3358 = vadd.f32 %v2423, %v3326
      %v3359 = vadd.f32 %v2424, %v3331
      %v3360 = vadd.f32 %v2425, %v3334
      %v3361 = vadd.f32 %v2426, %v3339
      %v3362 = vadd.f32 %v2427, %v3342
      %v3363 = vadd.f32 %v3345, %v1270
      %v3364 = vadd.f32 %v3346, %v1271
      %v3365 = vadd.f32 %v3347, %v1272
      %v3366 = vadd.f32 %v3348, %v1273
      %v3367 = vadd.f32 %v3349, %v1274
      %v3368 = vadd.f32 %v3350, %v1275
      %v3369 = vadd.f32 %v3351, %v1276
      %v3370 = vadd.f32 %v3352, %v1277
      %v3371 = vadd.f32 %v3353, %v1278
      %v3372 = vadd.f32 %v3354, %v1279
      %v3373 = vadd.f32 %v3355, %v1280
      %v3374 = vadd.f32 %v3356, %v1281
      %v3375 = vadd.f32 %v3357, %v1282
      %v3376 = vadd.f32 %v3358, %v1283
      %v3377 = vadd.f32 %v3359, %v1284
      %v3378 = vadd.f32 %v3360, %v1285
      %v3379 = vadd.f32 %v3361, %v1286
      %v3380 = vadd.f32 %v3362, %v1287
      %v3381 = vld [vmem:[%s15 + $0x1] sm:$0x1]
      %v3382 = vld [vmem:[%s15 + $0x2] sm:$0x1]
      %v3383 = vsel %vm1249, %v3363, 0.0
      %3384 = vadd.xlane.f32.xlu0 %v3383
      %v3385 = vpop.xlane.xlu0 %3384
      %v3386 = vsel %vm1249, %v3364, 0.0
      %3387 = vadd.xlane.f32.xlu0 %v3386
      %v3388 = vpop.xlane.xlu0 %3387
      %v3389 = vsel %vm1249, %v3365, 0.0
      %3390 = vadd.xlane.f32.xlu0 %v3389
      %v3391 = vpop.xlane.xlu0 %3390
      %v3392 = vsel %vm1249, %v3366, 0.0
      %3393 = vadd.xlane.f32.xlu0 %v3392
      %v3394 = vpop.xlane.xlu0 %3393
      %v3395 = vsel %vm1249, %v3367, 0.0
      %3396 = vadd.xlane.f32.xlu0 %v3395
      %v3397 = vpop.xlane.xlu0 %3396
      %v3398 = vsel %vm1249, %v3368, 0.0
      %3399 = vadd.xlane.f32.xlu0 %v3398
      %v3400 = vpop.xlane.xlu0 %3399
      %v3401 = vsel %vm1249, %v3369, 0.0
      %3402 = vadd.xlane.f32.xlu0 %v3401
      %v3403 = vpop.xlane.xlu0 %3402
      %v3404 = vsel %vm1249, %v3370, 0.0
      %3405 = vadd.xlane.f32.xlu0 %v3404
      %v3406 = vpop.xlane.xlu0 %3405
      %v3407 = vsel %vm1249, %v3371, 0.0
      %3408 = vadd.xlane.f32.xlu0 %v3407
      %v3409 = vpop.xlane.xlu0 %3408
      %v3410 = vsel %vm1249, %v3372, 0.0
      %3411 = vadd.xlane.f32.xlu0 %v3410
      %v3412 = vpop.xlane.xlu0 %3411
      %v3413 = vsel %vm1249, %v3373, 0.0
      %3414 = vadd.xlane.f32.xlu0 %v3413
      %v3415 = vpop.xlane.xlu0 %3414
      %v3416 = vsel %vm1249, %v3374, 0.0
      %3417 = vadd.xlane.f32.xlu0 %v3416
      %v3418 = vpop.xlane.xlu0 %3417
      %v3419 = vsel %vm1249, %v3375, 0.0
      %3420 = vadd.xlane.f32.xlu0 %v3419
      %v3421 = vpop.xlane.xlu0 %3420
      %v3422 = vsel %vm1249, %v3376, 0.0
      %3423 = vadd.xlane.f32.xlu0 %v3422
      %v3424 = vpop.xlane.xlu0 %3423
      %v3425 = vsel %vm1249, %v3377, 0.0
      %3426 = vadd.xlane.f32.xlu0 %v3425
      %v3427 = vpop.xlane.xlu0 %3426
      %v3428 = vsel %vm1249, %v3378, 0.0
      %3429 = vadd.xlane.f32.xlu0 %v3428
      %v3430 = vpop.xlane.xlu0 %3429
      %v3431 = vsel %vm1249, %v3379, 0.0
      %3432 = vadd.xlane.f32.xlu0 %v3431
      %v3433 = vpop.xlane.xlu0 %3432
      %v3434 = vsel %vm1249, %v3380, 0.0
      %3435 = vadd.xlane.f32.xlu0 %v3434
      %v3436 = vpop.xlane.xlu0 %3435
      %v3437 = vrcp.pop 32.0
      %v3438 = vmul.f32 %v3385, %v3437
      %v3439 = vmul.f32 %v3388, %v3437
      %v3440 = vmul.f32 %v3391, %v3437
      %v3441 = vmul.f32 %v3394, %v3437
      %v3442 = vmul.f32 %v3397, %v3437
      %v3443 = vmul.f32 %v3400, %v3437
      %v3444 = vmul.f32 %v3403, %v3437
      %v3445 = vmul.f32 %v3406, %v3437
      %v3446 = vmul.f32 %v3409, %v3437
      %v3447 = vmul.f32 %v3412, %v3437
      %v3448 = vmul.f32 %v3415, %v3437
      %v3449 = vmul.f32 %v3418, %v3437
      %v3450 = vmul.f32 %v3421, %v3437
      %v3451 = vmul.f32 %v3424, %v3437
      %v3452 = vmul.f32 %v3427, %v3437
      %v3453 = vmul.f32 %v3430, %v3437
      %v3454 = vmul.f32 %v3433, %v3437
      %v3455 = vmul.f32 %v3436, %v3437
      %v3456 = vsub.f32 %v3363, %v3438
      %v3457 = vsub.f32 %v3364, %v3439
      %v3458 = vsub.f32 %v3365, %v3440
      %v3459 = vsub.f32 %v3366, %v3441
      %v3460 = vsub.f32 %v3367, %v3442
      %v3461 = vsub.f32 %v3368, %v3443
      %v3462 = vsub.f32 %v3369, %v3444
      %v3463 = vsub.f32 %v3370, %v3445
      %v3464 = vsub.f32 %v3371, %v3446
      %v3465 = vsub.f32 %v3372, %v3447
      %v3466 = vsub.f32 %v3373, %v3448
      %v3467 = vsub.f32 %v3374, %v3449
      %v3468 = vsub.f32 %v3375, %v3450
      %v3469 = vsub.f32 %v3376, %v3451
      %v3470 = vsub.f32 %v3377, %v3452
      %v3471 = vsub.f32 %v3378, %v3453
      %v3472 = vsub.f32 %v3379, %v3454
      %v3473 = vsub.f32 %v3380, %v3455
      %v3474 = vmul.f32 %v3456, %v3456
      %v3475 = vmul.f32 %v3457, %v3457
      %v3476 = vmul.f32 %v3458, %v3458
      %v3477 = vmul.f32 %v3459, %v3459
      %v3478 = vmul.f32 %v3460, %v3460
      %v3479 = vmul.f32 %v3461, %v3461
      %v3480 = vmul.f32 %v3462, %v3462
      %v3481 = vmul.f32 %v3463, %v3463
      %v3482 = vmul.f32 %v3464, %v3464
      %v3483 = vmul.f32 %v3465, %v3465
      %v3484 = vmul.f32 %v3466, %v3466
      %v3485 = vmul.f32 %v3467, %v3467
      %v3486 = vmul.f32 %v3468, %v3468
      %v3487 = vmul.f32 %v3469, %v3469
      %v3488 = vmul.f32 %v3470, %v3470
      %v3489 = vmul.f32 %v3471, %v3471
      %v3490 = vmul.f32 %v3472, %v3472
      %v3491 = vmul.f32 %v3473, %v3473
      %v3492 = vsel %vm1249, %v3474, 0.0
      %3493 = vadd.xlane.f32.xlu0 %v3492
      %v3494 = vpop.xlane.xlu0 %3493
      %v3495 = vsel %vm1249, %v3475, 0.0
      %3496 = vadd.xlane.f32.xlu0 %v3495
      %v3497 = vpop.xlane.xlu0 %3496
      %v3498 = vsel %vm1249, %v3476, 0.0
      %3499 = vadd.xlane.f32.xlu0 %v3498
      %v3500 = vpop.xlane.xlu0 %3499
      %v3501 = vsel %vm1249, %v3477, 0.0
      %3502 = vadd.xlane.f32.xlu0 %v3501
      %v3503 = vpop.xlane.xlu0 %3502
      %v3504 = vsel %vm1249, %v3478, 0.0
      %3505 = vadd.xlane.f32.xlu0 %v3504
      %v3506 = vpop.xlane.xlu0 %3505
      %v3507 = vsel %vm1249, %v3479, 0.0
      %3508 = vadd.xlane.f32.xlu0 %v3507
      %v3509 = vpop.xlane.xlu0 %3508
      %v3510 = vsel %vm1249, %v3480, 0.0
      %3511 = vadd.xlane.f32.xlu0 %v3510
      %v3512 = vpop.xlane.xlu0 %3511
      %v3513 = vsel %vm1249, %v3481, 0.0
      %3514 = vadd.xlane.f32.xlu0 %v3513
      %v3515 = vpop.xlane.xlu0 %3514
      %v3516 = vsel %vm1249, %v3482, 0.0
      %3517 = vadd.xlane.f32.xlu0 %v3516
      %v3518 = vpop.xlane.xlu0 %3517
      %v3519 = vsel %vm1249, %v3483, 0.0
      %3520 = vadd.xlane.f32.xlu0 %v3519
      %v3521 = vpop.xlane.xlu0 %3520
      %v3522 = vsel %vm1249, %v3484, 0.0
      %3523 = vadd.xlane.f32.xlu0 %v3522
      %v3524 = vpop.xlane.xlu0 %3523
      %v3525 = vsel %vm1249, %v3485, 0.0
      %3526 = vadd.xlane.f32.xlu0 %v3525
      %v3527 = vpop.xlane.xlu0 %3526
      %v3528 = vsel %vm1249, %v3486, 0.0
      %3529 = vadd.xlane.f32.xlu0 %v3528
      %v3530 = vpop.xlane.xlu0 %3529
      %v3531 = vsel %vm1249, %v3487, 0.0
      %3532 = vadd.xlane.f32.xlu0 %v3531
      %v3533 = vpop.xlane.xlu0 %3532
      %v3534 = vsel %vm1249, %v3488, 0.0
      %3535 = vadd.xlane.f32.xlu0 %v3534
      %v3536 = vpop.xlane.xlu0 %3535
      %v3537 = vsel %vm1249, %v3489, 0.0
      %3538 = vadd.xlane.f32.xlu0 %v3537
      %v3539 = vpop.xlane.xlu0 %3538
      %v3540 = vsel %vm1249, %v3490, 0.0
      %3541 = vadd.xlane.f32.xlu0 %v3540
      %v3542 = vpop.xlane.xlu0 %3541
      %v3543 = vsel %vm1249, %v3491, 0.0
      %3544 = vadd.xlane.f32.xlu0 %v3543
      %v3545 = vpop.xlane.xlu0 %3544
      %v3546 = vmul.f32 %v3494, %v3437
      %v3547 = vmul.f32 %v3497, %v3437
      %v3548 = vmul.f32 %v3500, %v3437
      %v3549 = vmul.f32 %v3503, %v3437
      %v3550 = vmul.f32 %v3506, %v3437
      %v3551 = vmul.f32 %v3509, %v3437
      %v3552 = vmul.f32 %v3512, %v3437
      %v3553 = vmul.f32 %v3515, %v3437
      %v3554 = vmul.f32 %v3518, %v3437
      %v3555 = vmul.f32 %v3521, %v3437
      %v3556 = vmul.f32 %v3524, %v3437
      %v3557 = vmul.f32 %v3527, %v3437
      %v3558 = vmul.f32 %v3530, %v3437
      %v3559 = vmul.f32 %v3533, %v3437
      %v3560 = vmul.f32 %v3536, %v3437
      %v3561 = vmul.f32 %v3539, %v3437
      %v3562 = vmul.f32 %v3542, %v3437
      %v3563 = vmul.f32 %v3545, %v3437
      %v3564 = vadd.f32 %v3546, 1e-05
      %v3565 = vadd.f32 %v3547, 1e-05
      %v3566 = vadd.f32 %v3548, 1e-05
      %v3567 = vadd.f32 %v3549, 1e-05
      %v3568 = vadd.f32 %v3550, 1e-05
      %v3569 = vadd.f32 %v3551, 1e-05
      %v3570 = vadd.f32 %v3552, 1e-05
      %v3571 = vadd.f32 %v3553, 1e-05
      %v3572 = vadd.f32 %v3554, 1e-05
      %v3573 = vadd.f32 %v3555, 1e-05
      %v3574 = vadd.f32 %v3556, 1e-05
      %v3575 = vadd.f32 %v3557, 1e-05
      %v3576 = vadd.f32 %v3558, 1e-05
      %v3577 = vadd.f32 %v3559, 1e-05
      %v3578 = vadd.f32 %v3560, 1e-05
      %v3579 = vadd.f32 %v3561, 1e-05
      %v3580 = vadd.f32 %v3562, 1e-05
      %v3581 = vadd.f32 %v3563, 1e-05
      %v3582 = vrsqrt.pop %v3564
      %v3583 = vrsqrt.pop %v3565
      %v3584 = vrsqrt.pop %v3566
      %v3585 = vrsqrt.pop %v3567
      %v3586 = vrsqrt.pop %v3568
      %v3587 = vrsqrt.pop %v3569
      %v3588 = vrsqrt.pop %v3570
      %v3589 = vrsqrt.pop %v3571
      %v3590 = vrsqrt.pop %v3572
      %v3591 = vrsqrt.pop %v3573
      %v3592 = vrsqrt.pop %v3574
      %v3593 = vrsqrt.pop %v3575
      %v3594 = vrsqrt.pop %v3576
      %v3595 = vrsqrt.pop %v3577
      %v3596 = vrsqrt.pop %v3578
      %v3597 = vrsqrt.pop %v3579
      %v3598 = vrsqrt.pop %v3580
      %v3599 = vrsqrt.pop %v3581
      %v3600 = vmul.f32 %v3456, %v3582
      %v3601 = vmul.f32 %v3457, %v3583
      %v3602 = vmul.f32 %v3458, %v3584
      %v3603 = vmul.f32 %v3459, %v3585
      %v3604 = vmul.f32 %v3460, %v3586
      %v3605 = vmul.f32 %v3461, %v3587
      %v3606 = vmul.f32 %v3462, %v3588
      %v3607 = vmul.f32 %v3463, %v3589
      %v3608 = vmul.f32 %v3464, %v3590
      %v3609 = vmul.f32 %v3465, %v3591
      %v3610 = vmul.f32 %v3466, %v3592
      %v3611 = vmul.f32 %v3467, %v3593
      %v3612 = vmul.f32 %v3468, %v3594
      %v3613 = vmul.f32 %v3469, %v3595
      %v3614 = vmul.f32 %v3470, %v3596
      %v3615 = vmul.f32 %v3471, %v3597
      %v3616 = vmul.f32 %v3472, %v3598
      %v3617 = vmul.f32 %v3473, %v3599
      %v3618 = vlaneseq
      %v3619 = vshrl.u32 %v3618, 7
      %v3620 = vsub.s32 0, %v3619
      %v3621 = vrot.slane %v3381, %v3620
      %v3622 = vmul.f32 %v3600, %v3621
      %v3623 = vmul.f32 %v3601, %v3621
      %v3624 = vmul.f32 %v3602, %v3621
      %v3625 = vmul.f32 %v3603, %v3621
      %v3626 = vmul.f32 %v3604, %v3621
      %v3627 = vmul.f32 %v3605, %v3621
      %v3628 = vmul.f32 %v3606, %v3621
      %v3629 = vmul.f32 %v3607, %v3621
      %v3630 = vmul.f32 %v3608, %v3621
      %v3631 = vmul.f32 %v3609, %v3621
      %v3632 = vmul.f32 %v3610, %v3621
      %v3633 = vmul.f32 %v3611, %v3621
      %v3634 = vmul.f32 %v3612, %v3621
      %v3635 = vmul.f32 %v3613, %v3621
      %v3636 = vmul.f32 %v3614, %v3621
      %v3637 = vmul.f32 %v3615, %v3621
      %v3638 = vmul.f32 %v3616, %v3621
      %v3639 = vmul.f32 %v3617, %v3621
      %v3640 = vlaneseq
      %v3641 = vshrl.u32 %v3640, 7
      %v3642 = vsub.s32 0, %v3641
      %v3643 = vrot.slane %v3382, %v3642
      %v3644 = vadd.f32 %v3622, %v3643
      %v3645 = vadd.f32 %v3623, %v3643
      %v3646 = vadd.f32 %v3624, %v3643
      %v3647 = vadd.f32 %v3625, %v3643
      %v3648 = vadd.f32 %v3626, %v3643
      %v3649 = vadd.f32 %v3627, %v3643
      %v3650 = vadd.f32 %v3628, %v3643
      %v3651 = vadd.f32 %v3629, %v3643
      %v3652 = vadd.f32 %v3630, %v3643
      %v3653 = vadd.f32 %v3631, %v3643
      %v3654 = vadd.f32 %v3632, %v3643
      %v3655 = vadd.f32 %v3633, %v3643
      %v3656 = vadd.f32 %v3634, %v3643
      %v3657 = vadd.f32 %v3635, %v3643
      %v3658 = vadd.f32 %v3636, %v3643
      %v3659 = vadd.f32 %v3637, %v3643
      %v3660 = vadd.f32 %v3638, %v3643
      %v3661 = vadd.f32 %v3639, %v3643
      %v3662 = vld [vmem:[%s12] sm:$0xf]
      %v3663 = vld [vmem:[%s12 + $0x4] sm:$0xf]
      %v3664 = vld [vmem:[%s12 + $0x8] sm:$0xf]
      %v3665 = vld [vmem:[%s12 + $0xc] sm:$0xf]
      %v3666 = vpack.c.bf16 %v3645, %v3644
      %v3667 = vpack.c.bf16 %v3647, %v3646
      %v3668 = vpack.c.bf16 %v3649, %v3648
      %v3669 = vpack.c.bf16 %v3651, %v3650
      %v3670 = vpack.c.bf16 %v3653, %v3652
      %v3671 = vpack.c.bf16 %v3655, %v3654
      %v3672 = vpack.c.bf16 %v3657, %v3656
      %v3673 = vpack.c.bf16 %v3659, %v3658
      %v3674 = vpack.c.bf16 %v3661, %v3660
      %v3675 = vld [vmem:[%s13] sm:$0x1]
      %v3677 = vlaneseq
      %v3678 = vshrl.u32 %v3677, 7
      %v3679 = vsub.s32 0, %v3678
      %v3680 = vrot.slane %v3675, %v3679
      %v3686 = vunpack.c.l.b16 %v3662
      %v3687 = vunpack.c.l.b16 %v3663
      %v3688 = vunpack.c.l.b16 %v3664
      %v3689 = vunpack.c.l.b16 %v3665
      %v3690 = vpack.c.b16 %v3687, %v3686
      %v3691 = vpack.c.b16 %v3689, %v3688
      %v3695 = vsel %vm1249, %v3666, 0
      %v3698 = vsel %vm1249, %v3667, 0
      %v3701 = vsel %vm1249, %v3668, 0
      %v3704 = vsel %vm1249, %v3669, 0
      %v3707 = vsel %vm1249, %v3670, 0
      %v3710 = vsel %vm1249, %v3671, 0
      %v3713 = vsel %vm1249, %v3672, 0
      %v3716 = vsel %vm1249, %v3673, 0
      %v3719 = vsel %vm1249, %v3674, 0
      %3721 = vmatprep.subr.bf16.mxu0 0
      %3722 = vmatpush1.bf16.msra.mxu0 0
      %3723 = vmatprep.subr.bf16.mxu0 0
      %3724 = vmatpush1.bf16.msra.mxu0 0
      %3725 = vmatprep.subr.bf16.mxu0 0
      %3726 = vmatpush1.bf16.msra.mxu0 0
      %3727 = vmatprep.subr.bf16.mxu0 0
      %3728 = vmatpush1.bf16.msra.mxu0 0
      %3729 = vmatprep.subr.bf16.mxu0 0
      %3730 = vmatpush1.bf16.msra.mxu0 0
      %3731 = vmatprep.subr.bf16.mxu0 0
      %3732 = vmatpush1.bf16.msra.mxu0 0
      %3733 = vmatprep.subr.bf16.mxu0 0
      %3734 = vmatpush1.bf16.msra.mxu0 %v3691
      %3735 = vmatprep.subr.bf16.mxu0 0
      %3736 = vmatpush1.bf16.msra.mxu0 %v3690
      %3737 = vmatprep.subr.bf16.mxu0 0
      %3738 = vmatpush2.bf16.msra.mxu0 0
      %3739 = vmatprep.subr.bf16.mxu0 0
      %3740 = vmatpush2.bf16.msra.mxu0 0
      %3741 = vmatprep.subr.bf16.mxu0 0
      %3742 = vmatpush2.bf16.msra.mxu0 0
      %3743 = vmatprep.subr.bf16.mxu0 0
      %3744 = vmatpush2.bf16.msra.mxu0 0
      %3745 = vmatprep.subr.bf16.mxu0 0
      %3746 = vmatpush2.bf16.msra.mxu0 0
      %3747 = vmatprep.subr.bf16.mxu0 0
      %3748 = vmatpush2.bf16.msra.mxu0 0
      %3749 = vmatprep.subr.bf16.mxu0 0
      %3750 = vmatpush2.bf16.msra.mxu0 0
      %3751 = vmatprep.subr.bf16.mxu0 0
      %3752 = vmatpush2.bf16.msra.mxu0 0
      %3753 = vmatprep.mubr.bf16.mxu0 0
      %3754 = vmatmul.mubr.bf16.gmra.mxu0 %v3695
      %v3755 = vpop.f32.mrf.mxu0
      %v3756 = vadd.f32 %v3680, %v3755
      %v3757 = vpop.f32.mrf.mxu0
      %v3758 = vpop.f32.mrf.mxu0
      %v3759 = vadd.f32 %v3680, %v3758
      %v3760 = vpop.f32.mrf.mxu0
      %3761 = vmatprep.mubr.bf16.mxu0 0
      %3762 = vmatmul.mubr.bf16.gmra.mxu0 %v3698
      %v3763 = vpop.f32.mrf.mxu0
      %v3764 = vadd.f32 %v3680, %v3763
      %v3765 = vpop.f32.mrf.mxu0
      %v3766 = vpop.f32.mrf.mxu0
      %v3767 = vadd.f32 %v3680, %v3766
      %v3768 = vpop.f32.mrf.mxu0
      %3769 = vmatprep.mubr.bf16.mxu0 0
      %3770 = vmatmul.mubr.bf16.gmra.mxu0 %v3701
      %v3771 = vpop.f32.mrf.mxu0
      %v3772 = vadd.f32 %v3680, %v3771
      %v3773 = vpop.f32.mrf.mxu0
      %v3774 = vpop.f32.mrf.mxu0
      %v3775 = vadd.f32 %v3680, %v3774
      %v3776 = vpop.f32.mrf.mxu0
      %3777 = vmatprep.mubr.bf16.mxu0 0
      %3778 = vmatmul.mubr.bf16.gmra.mxu0 %v3704
      %v3779 = vpop.f32.mrf.mxu0
      %v3780 = vadd.f32 %v3680, %v3779
      %v3781 = vpop.f32.mrf.mxu0
      %v3782 = vpop.f32.mrf.mxu0
      %v3783 = vadd.f32 %v3680, %v3782
      %v3784 = vpop.f32.mrf.mxu0
      %3785 = vmatprep.mubr.bf16.mxu0 0
      %3786 = vmatmul.mubr.bf16.gmra.mxu0 %v3707
      %v3787 = vpop.f32.mrf.mxu0
      %v3788 = vadd.f32 %v3680, %v3787
      %v3789 = vpop.f32.mrf.mxu0
      %v3790 = vpop.f32.mrf.mxu0
      %v3791 = vadd.f32 %v3680, %v3790
      %v3792 = vpop.f32.mrf.mxu0
      %3793 = vmatprep.mubr.bf16.mxu0 0
      %3794 = vmatmul.mubr.bf16.gmra.mxu0 %v3710
      %v3795 = vpop.f32.mrf.mxu0
      %v3796 = vadd.f32 %v3680, %v3795
      %v3797 = vpop.f32.mrf.mxu0
      %v3798 = vpop.f32.mrf.mxu0
      %v3799 = vadd.f32 %v3680, %v3798
      %v3800 = vpop.f32.mrf.mxu0
      %3801 = vmatprep.mubr.bf16.mxu0 0
      %3802 = vmatmul.mubr.bf16.gmra.mxu0 %v3713
      %v3803 = vpop.f32.mrf.mxu0
      %v3804 = vadd.f32 %v3680, %v3803
      %v3805 = vpop.f32.mrf.mxu0
      %v3806 = vpop.f32.mrf.mxu0
      %v3807 = vadd.f32 %v3680, %v3806
      %v3808 = vpop.f32.mrf.mxu0
      %3809 = vmatprep.mubr.bf16.mxu0 0
      %3810 = vmatmul.mubr.bf16.gmra.mxu0 %v3716
      %v3811 = vpop.f32.mrf.mxu0
      %v3812 = vadd.f32 %v3680, %v3811
      %v3813 = vpop.f32.mrf.mxu0
      %v3814 = vpop.f32.mrf.mxu0
      %v3815 = vadd.f32 %v3680, %v3814
      %v3816 = vpop.f32.mrf.mxu0
      %3817 = vmatprep.mubr.bf16.mxu0 0
      %3818 = vmatmul.mubr.bf16.gmra.mxu0 %v3719
      %v3819 = vpop.f32.mrf.mxu0
      %v3820 = vadd.f32 %v3680, %v3819
      %v3821 = vpop.f32.mrf.mxu0
      %v3822 = vpop.f32.mrf.mxu0
      %v3823 = vadd.f32 %v3680, %v3822
      %v3824 = vpop.f32.mrf.mxu0
      %3825 = vdwg.mxu0
      %v3826 = vmax.f32 %v3756, 0.0
      %v3827 = vmax.f32 %v3759, 0.0
      %v3828 = vmax.f32 %v3764, 0.0
      %v3829 = vmax.f32 %v3767, 0.0
      %v3830 = vmax.f32 %v3772, 0.0
      %v3831 = vmax.f32 %v3775, 0.0
      %v3832 = vmax.f32 %v3780, 0.0
      %v3833 = vmax.f32 %v3783, 0.0
      %v3834 = vmax.f32 %v3788, 0.0
      %v3835 = vmax.f32 %v3791, 0.0
      %v3836 = vmax.f32 %v3796, 0.0
      %v3837 = vmax.f32 %v3799, 0.0
      %v3838 = vmax.f32 %v3804, 0.0
      %v3839 = vmax.f32 %v3807, 0.0
      %v3840 = vmax.f32 %v3812, 0.0
      %v3841 = vmax.f32 %v3815, 0.0
      %v3842 = vmax.f32 %v3820, 0.0
      %v3843 = vmax.f32 %v3823, 0.0
      %v3844 = vld [vmem:[%s14] sm:$0xf]
      %v3845 = vld [vmem:[%s14 + $0x4] sm:$0xf]
      %v3846 = vld [vmem:[%s14 + $0x8] sm:$0xf]
      %v3847 = vld [vmem:[%s14 + $0xc] sm:$0xf]
      %v3848 = vld [vmem:[%s14 + $0x10] sm:$0xf]
      %v3849 = vld [vmem:[%s14 + $0x14] sm:$0xf]
      %v3850 = vld [vmem:[%s14 + $0x18] sm:$0xf]
      %v3851 = vld [vmem:[%s14 + $0x1c] sm:$0xf]
      %v3852 = vpack.c.bf16 %v3827, %v3826
      %v3853 = vpack.c.bf16 %v3829, %v3828
      %v3854 = vpack.c.bf16 %v3831, %v3830
      %v3855 = vpack.c.bf16 %v3833, %v3832
      %v3856 = vpack.c.bf16 %v3835, %v3834
      %v3857 = vpack.c.bf16 %v3837, %v3836
      %v3858 = vpack.c.bf16 %v3839, %v3838
      %v3859 = vpack.c.bf16 %v3841, %v3840
      %v3860 = vpack.c.bf16 %v3843, %v3842
      %v3861 = vld [vmem:[%s15 + $0x3] sm:$0x1]
      %v3862 = vlaneseq
      %v3863 = vshrl.u32 %v3862, 7
      %v3864 = vsub.s32 0, %v3863
      %v3865 = vrot.slane %v3861, %v3864
      %v3874 = vunpack.c.l.b16 %v3844
      %v3875 = vunpack.c.l.b16 %v3845
      %v3876 = vunpack.c.l.b16 %v3846
      %v3877 = vunpack.c.l.b16 %v3847
      %v3878 = vunpack.c.l.b16 %v3848
      %v3879 = vunpack.c.l.b16 %v3849
      %v3880 = vunpack.c.l.b16 %v3850
      %v3881 = vunpack.c.l.b16 %v3851
      %v3882 = vpack.c.b16 %v3875, %v3874
      %v3883 = vpack.c.b16 %v3877, %v3876
      %v3884 = vpack.c.b16 %v3879, %v3878
      %v3885 = vpack.c.b16 %v3881, %v3880
      %vm3890 = vcmask 523264
      %v3892 = vsel %vm3890, %v3852, 0
      %v3895 = vsel %vm3890, %v3853, 0
      %v3898 = vsel %vm3890, %v3854, 0
      %v3901 = vsel %vm3890, %v3855, 0
      %v3904 = vsel %vm3890, %v3856, 0
      %v3907 = vsel %vm3890, %v3857, 0
      %v3910 = vsel %vm3890, %v3858, 0
      %v3913 = vsel %vm3890, %v3859, 0
      %v3916 = vsel %vm3890, %v3860, 0
      %3918 = vmatprep.subr.bf16.mxu0 0
      %3919 = vmatpush1.bf16.msra.mxu0 0
      %3920 = vmatprep.subr.bf16.mxu0 0
      %3921 = vmatpush1.bf16.msra.mxu0 0
      %3922 = vmatprep.subr.bf16.mxu0 0
      %3923 = vmatpush1.bf16.msra.mxu0 0
      %3924 = vmatprep.subr.bf16.mxu0 0
      %3925 = vmatpush1.bf16.msra.mxu0 0
      %3926 = vmatprep.subr.bf16.mxu0 0
      %3927 = vmatpush1.bf16.msra.mxu0 %v3885
      %3928 = vmatprep.subr.bf16.mxu0 0
      %3929 = vmatpush1.bf16.msra.mxu0 %v3884
      %3930 = vmatprep.subr.bf16.mxu0 0
      %3931 = vmatpush1.bf16.msra.mxu0 %v3883
      %3932 = vmatprep.subr.bf16.mxu0 0
      %3933 = vmatpush1.bf16.msra.mxu0 %v3882
      %3934 = vmatprep.subr.bf16.mxu0 0
      %3935 = vmatpush2.bf16.msra.mxu0 0
      %3936 = vmatprep.subr.bf16.mxu0 0
      %3937 = vmatpush2.bf16.msra.mxu0 0
      %3938 = vmatprep.subr.bf16.mxu0 0
      %3939 = vmatpush2.bf16.msra.mxu0 0
      %3940 = vmatprep.subr.bf16.mxu0 0
      %3941 = vmatpush2.bf16.msra.mxu0 0
      %3942 = vmatprep.subr.bf16.mxu0 0
      %3943 = vmatpush2.bf16.msra.mxu0 0
      %3944 = vmatprep.subr.bf16.mxu0 0
      %3945 = vmatpush2.bf16.msra.mxu0 0
      %3946 = vmatprep.subr.bf16.mxu0 0
      %3947 = vmatpush2.bf16.msra.mxu0 0
      %3948 = vmatprep.subr.bf16.mxu0 0
      %3949 = vmatpush2.bf16.msra.mxu0 0
      %3950 = vmatprep.mubr.bf16.mxu0 0
      %3951 = vmatmul.mubr.bf16.gmra.mxu0 %v3892
      %v3952 = vpop.f32.mrf.mxu0
      %v3953 = vadd.f32 %v3865, %v3952
      %v3954 = vpop.f32.mrf.mxu0
      %v3955 = vpop.f32.mrf.mxu0
      %v3956 = vadd.f32 %v3865, %v3955
      %v3957 = vpop.f32.mrf.mxu0
      %3958 = vmatprep.mubr.bf16.mxu0 0
      %3959 = vmatmul.mubr.bf16.gmra.mxu0 %v3895
      %v3960 = vpop.f32.mrf.mxu0
      %v3961 = vadd.f32 %v3865, %v3960
      %v3962 = vpop.f32.mrf.mxu0
      %v3963 = vpop.f32.mrf.mxu0
      %v3964 = vadd.f32 %v3865, %v3963
      %v3965 = vpop.f32.mrf.mxu0
      %3966 = vmatprep.mubr.bf16.mxu0 0
      %3967 = vmatmul.mubr.bf16.gmra.mxu0 %v3898
      %v3968 = vpop.f32.mrf.mxu0
      %v3969 = vadd.f32 %v3865, %v3968
      %v3970 = vpop.f32.mrf.mxu0
      %v3971 = vpop.f32.mrf.mxu0
      %v3972 = vadd.f32 %v3865, %v3971
      %v3973 = vpop.f32.mrf.mxu0
      %3974 = vmatprep.mubr.bf16.mxu0 0
      %3975 = vmatmul.mubr.bf16.gmra.mxu0 %v3901
      %v3976 = vpop.f32.mrf.mxu0
      %v3977 = vadd.f32 %v3865, %v3976
      %v3978 = vpop.f32.mrf.mxu0
      %v3979 = vpop.f32.mrf.mxu0
      %v3980 = vadd.f32 %v3865, %v3979
      %v3981 = vpop.f32.mrf.mxu0
      %3982 = vmatprep.mubr.bf16.mxu0 0
      %3983 = vmatmul.mubr.bf16.gmra.mxu0 %v3904
      %v3984 = vpop.f32.mrf.mxu0
      %v3985 = vadd.f32 %v3865, %v3984
      %v3986 = vpop.f32.mrf.mxu0
      %v3987 = vpop.f32.mrf.mxu0
      %v3988 = vadd.f32 %v3865, %v3987
      %v3989 = vpop.f32.mrf.mxu0
      %3990 = vmatprep.mubr.bf16.mxu0 0
      %3991 = vmatmul.mubr.bf16.gmra.mxu0 %v3907
      %v3992 = vpop.f32.mrf.mxu0
      %v3993 = vadd.f32 %v3865, %v3992
      %v3994 = vpop.f32.mrf.mxu0
      %v3995 = vpop.f32.mrf.mxu0
      %v3996 = vadd.f32 %v3865, %v3995
      %v3997 = vpop.f32.mrf.mxu0
      %3998 = vmatprep.mubr.bf16.mxu0 0
      %3999 = vmatmul.mubr.bf16.gmra.mxu0 %v3910
      %v4000 = vpop.f32.mrf.mxu0
      %v4001 = vadd.f32 %v3865, %v4000
      %v4002 = vpop.f32.mrf.mxu0
      %v4003 = vpop.f32.mrf.mxu0
      %v4004 = vadd.f32 %v3865, %v4003
      %v4005 = vpop.f32.mrf.mxu0
      %4006 = vmatprep.mubr.bf16.mxu0 0
      %4007 = vmatmul.mubr.bf16.gmra.mxu0 %v3913
      %v4008 = vpop.f32.mrf.mxu0
      %v4009 = vadd.f32 %v3865, %v4008
      %v4010 = vpop.f32.mrf.mxu0
      %v4011 = vpop.f32.mrf.mxu0
      %v4012 = vadd.f32 %v3865, %v4011
      %v4013 = vpop.f32.mrf.mxu0
      %4014 = vmatprep.mubr.bf16.mxu0 0
      %4015 = vmatmul.mubr.bf16.gmra.mxu0 %v3916
      %v4016 = vpop.f32.mrf.mxu0
      %v4017 = vadd.f32 %v3865, %v4016
      %v4018 = vpop.f32.mrf.mxu0
      %v4019 = vpop.f32.mrf.mxu0
      %v4020 = vadd.f32 %v3865, %v4019
      %v4021 = vpop.f32.mrf.mxu0
      %4022 = vdwg.mxu0
      %v4023 = vadd.f32 %v3953, %v3644
      %v4024 = vadd.f32 %v3956, %v3645
      %v4025 = vadd.f32 %v3961, %v3646
      %v4026 = vadd.f32 %v3964, %v3647
      %v4027 = vadd.f32 %v3969, %v3648
      %v4028 = vadd.f32 %v3972, %v3649
      %v4029 = vadd.f32 %v3977, %v3650
      %v4030 = vadd.f32 %v3980, %v3651
      %v4031 = vadd.f32 %v3985, %v3652
      %v4032 = vadd.f32 %v3988, %v3653
      %v4033 = vadd.f32 %v3993, %v3654
      %v4034 = vadd.f32 %v3996, %v3655
      %v4035 = vadd.f32 %v4001, %v3656
      %v4036 = vadd.f32 %v4004, %v3657
      %v4037 = vadd.f32 %v4009, %v3658
      %v4038 = vadd.f32 %v4012, %v3659
      %v4039 = vadd.f32 %v4017, %v3660
      %v4040 = vadd.f32 %v4020, %v3661
      %v4041 = vld [vmem:[%s15 + $0x4] sm:$0x1]
      %v4042 = vld [vmem:[%s15 + $0x5] sm:$0x1]
      %v4043 = vsel %vm1249, %v4023, 0.0
      %4044 = vadd.xlane.f32.xlu0 %v4043
      %v4045 = vpop.xlane.xlu0 %4044
      %v4046 = vsel %vm1249, %v4024, 0.0
      %4047 = vadd.xlane.f32.xlu0 %v4046
      %v4048 = vpop.xlane.xlu0 %4047
      %v4049 = vsel %vm1249, %v4025, 0.0
      %4050 = vadd.xlane.f32.xlu0 %v4049
      %v4051 = vpop.xlane.xlu0 %4050
      %v4052 = vsel %vm1249, %v4026, 0.0
      %4053 = vadd.xlane.f32.xlu0 %v4052
      %v4054 = vpop.xlane.xlu0 %4053
      %v4055 = vsel %vm1249, %v4027, 0.0
      %4056 = vadd.xlane.f32.xlu0 %v4055
      %v4057 = vpop.xlane.xlu0 %4056
      %v4058 = vsel %vm1249, %v4028, 0.0
      %4059 = vadd.xlane.f32.xlu0 %v4058
      %v4060 = vpop.xlane.xlu0 %4059
      %v4061 = vsel %vm1249, %v4029, 0.0
      %4062 = vadd.xlane.f32.xlu0 %v4061
      %v4063 = vpop.xlane.xlu0 %4062
      %v4064 = vsel %vm1249, %v4030, 0.0
      %4065 = vadd.xlane.f32.xlu0 %v4064
      %v4066 = vpop.xlane.xlu0 %4065
      %v4067 = vsel %vm1249, %v4031, 0.0
      %4068 = vadd.xlane.f32.xlu0 %v4067
      %v4069 = vpop.xlane.xlu0 %4068
      %v4070 = vsel %vm1249, %v4032, 0.0
      %4071 = vadd.xlane.f32.xlu0 %v4070
      %v4072 = vpop.xlane.xlu0 %4071
      %v4073 = vsel %vm1249, %v4033, 0.0
      %4074 = vadd.xlane.f32.xlu0 %v4073
      %v4075 = vpop.xlane.xlu0 %4074
      %v4076 = vsel %vm1249, %v4034, 0.0
      %4077 = vadd.xlane.f32.xlu0 %v4076
      %v4078 = vpop.xlane.xlu0 %4077
      %v4079 = vsel %vm1249, %v4035, 0.0
      %4080 = vadd.xlane.f32.xlu0 %v4079
      %v4081 = vpop.xlane.xlu0 %4080
      %v4082 = vsel %vm1249, %v4036, 0.0
      %4083 = vadd.xlane.f32.xlu0 %v4082
      %v4084 = vpop.xlane.xlu0 %4083
      %v4085 = vsel %vm1249, %v4037, 0.0
      %4086 = vadd.xlane.f32.xlu0 %v4085
      %v4087 = vpop.xlane.xlu0 %4086
      %v4088 = vsel %vm1249, %v4038, 0.0
      %4089 = vadd.xlane.f32.xlu0 %v4088
      %v4090 = vpop.xlane.xlu0 %4089
      %v4091 = vsel %vm1249, %v4039, 0.0
      %4092 = vadd.xlane.f32.xlu0 %v4091
      %v4093 = vpop.xlane.xlu0 %4092
      %v4094 = vsel %vm1249, %v4040, 0.0
      %4095 = vadd.xlane.f32.xlu0 %v4094
      %v4096 = vpop.xlane.xlu0 %4095
      %v4097 = vmul.f32 %v4045, %v3437
      %v4098 = vmul.f32 %v4048, %v3437
      %v4099 = vmul.f32 %v4051, %v3437
      %v4100 = vmul.f32 %v4054, %v3437
      %v4101 = vmul.f32 %v4057, %v3437
      %v4102 = vmul.f32 %v4060, %v3437
      %v4103 = vmul.f32 %v4063, %v3437
      %v4104 = vmul.f32 %v4066, %v3437
      %v4105 = vmul.f32 %v4069, %v3437
      %v4106 = vmul.f32 %v4072, %v3437
      %v4107 = vmul.f32 %v4075, %v3437
      %v4108 = vmul.f32 %v4078, %v3437
      %v4109 = vmul.f32 %v4081, %v3437
      %v4110 = vmul.f32 %v4084, %v3437
      %v4111 = vmul.f32 %v4087, %v3437
      %v4112 = vmul.f32 %v4090, %v3437
      %v4113 = vmul.f32 %v4093, %v3437
      %v4114 = vmul.f32 %v4096, %v3437
      %v4115 = vsub.f32 %v4023, %v4097
      %v4116 = vsub.f32 %v4024, %v4098
      %v4117 = vsub.f32 %v4025, %v4099
      %v4118 = vsub.f32 %v4026, %v4100
      %v4119 = vsub.f32 %v4027, %v4101
      %v4120 = vsub.f32 %v4028, %v4102
      %v4121 = vsub.f32 %v4029, %v4103
      %v4122 = vsub.f32 %v4030, %v4104
      %v4123 = vsub.f32 %v4031, %v4105
      %v4124 = vsub.f32 %v4032, %v4106
      %v4125 = vsub.f32 %v4033, %v4107
      %v4126 = vsub.f32 %v4034, %v4108
      %v4127 = vsub.f32 %v4035, %v4109
      %v4128 = vsub.f32 %v4036, %v4110
      %v4129 = vsub.f32 %v4037, %v4111
      %v4130 = vsub.f32 %v4038, %v4112
      %v4131 = vsub.f32 %v4039, %v4113
      %v4132 = vsub.f32 %v4040, %v4114
      %v4133 = vmul.f32 %v4115, %v4115
      %v4134 = vmul.f32 %v4116, %v4116
      %v4135 = vmul.f32 %v4117, %v4117
      %v4136 = vmul.f32 %v4118, %v4118
      %v4137 = vmul.f32 %v4119, %v4119
      %v4138 = vmul.f32 %v4120, %v4120
      %v4139 = vmul.f32 %v4121, %v4121
      %v4140 = vmul.f32 %v4122, %v4122
      %v4141 = vmul.f32 %v4123, %v4123
      %v4142 = vmul.f32 %v4124, %v4124
      %v4143 = vmul.f32 %v4125, %v4125
      %v4144 = vmul.f32 %v4126, %v4126
      %v4145 = vmul.f32 %v4127, %v4127
      %v4146 = vmul.f32 %v4128, %v4128
      %v4147 = vmul.f32 %v4129, %v4129
      %v4148 = vmul.f32 %v4130, %v4130
      %v4149 = vmul.f32 %v4131, %v4131
      %v4150 = vmul.f32 %v4132, %v4132
      %v4151 = vsel %vm1249, %v4133, 0.0
      %4152 = vadd.xlane.f32.xlu0 %v4151
      %v4153 = vpop.xlane.xlu0 %4152
      %v4154 = vsel %vm1249, %v4134, 0.0
      %4155 = vadd.xlane.f32.xlu0 %v4154
      %v4156 = vpop.xlane.xlu0 %4155
      %v4157 = vsel %vm1249, %v4135, 0.0
      %4158 = vadd.xlane.f32.xlu0 %v4157
      %v4159 = vpop.xlane.xlu0 %4158
      %v4160 = vsel %vm1249, %v4136, 0.0
      %4161 = vadd.xlane.f32.xlu0 %v4160
      %v4162 = vpop.xlane.xlu0 %4161
      %v4163 = vsel %vm1249, %v4137, 0.0
      %4164 = vadd.xlane.f32.xlu0 %v4163
      %v4165 = vpop.xlane.xlu0 %4164
      %v4166 = vsel %vm1249, %v4138, 0.0
      %4167 = vadd.xlane.f32.xlu0 %v4166
      %v4168 = vpop.xlane.xlu0 %4167
      %v4169 = vsel %vm1249, %v4139, 0.0
      %4170 = vadd.xlane.f32.xlu0 %v4169
      %v4171 = vpop.xlane.xlu0 %4170
      %v4172 = vsel %vm1249, %v4140, 0.0
      %4173 = vadd.xlane.f32.xlu0 %v4172
      %v4174 = vpop.xlane.xlu0 %4173
      %v4175 = vsel %vm1249, %v4141, 0.0
      %4176 = vadd.xlane.f32.xlu0 %v4175
      %v4177 = vpop.xlane.xlu0 %4176
      %v4178 = vsel %vm1249, %v4142, 0.0
      %4179 = vadd.xlane.f32.xlu0 %v4178
      %v4180 = vpop.xlane.xlu0 %4179
      %v4181 = vsel %vm1249, %v4143, 0.0
      %4182 = vadd.xlane.f32.xlu0 %v4181
      %v4183 = vpop.xlane.xlu0 %4182
      %v4184 = vsel %vm1249, %v4144, 0.0
      %4185 = vadd.xlane.f32.xlu0 %v4184
      %v4186 = vpop.xlane.xlu0 %4185
      %v4187 = vsel %vm1249, %v4145, 0.0
      %4188 = vadd.xlane.f32.xlu0 %v4187
      %v4189 = vpop.xlane.xlu0 %4188
      %v4190 = vsel %vm1249, %v4146, 0.0
      %4191 = vadd.xlane.f32.xlu0 %v4190
      %v4192 = vpop.xlane.xlu0 %4191
      %v4193 = vsel %vm1249, %v4147, 0.0
      %4194 = vadd.xlane.f32.xlu0 %v4193
      %v4195 = vpop.xlane.xlu0 %4194
      %v4196 = vsel %vm1249, %v4148, 0.0
      %4197 = vadd.xlane.f32.xlu0 %v4196
      %v4198 = vpop.xlane.xlu0 %4197
      %v4199 = vsel %vm1249, %v4149, 0.0
      %4200 = vadd.xlane.f32.xlu0 %v4199
      %v4201 = vpop.xlane.xlu0 %4200
      %v4202 = vsel %vm1249, %v4150, 0.0
      %4203 = vadd.xlane.f32.xlu0 %v4202
      %v4204 = vpop.xlane.xlu0 %4203
      %v4205 = vmul.f32 %v4153, %v3437
      %v4206 = vmul.f32 %v4156, %v3437
      %v4207 = vmul.f32 %v4159, %v3437
      %v4208 = vmul.f32 %v4162, %v3437
      %v4209 = vmul.f32 %v4165, %v3437
      %v4210 = vmul.f32 %v4168, %v3437
      %v4211 = vmul.f32 %v4171, %v3437
      %v4212 = vmul.f32 %v4174, %v3437
      %v4213 = vmul.f32 %v4177, %v3437
      %v4214 = vmul.f32 %v4180, %v3437
      %v4215 = vmul.f32 %v4183, %v3437
      %v4216 = vmul.f32 %v4186, %v3437
      %v4217 = vmul.f32 %v4189, %v3437
      %v4218 = vmul.f32 %v4192, %v3437
      %v4219 = vmul.f32 %v4195, %v3437
      %v4220 = vmul.f32 %v4198, %v3437
      %v4221 = vmul.f32 %v4201, %v3437
      %v4222 = vmul.f32 %v4204, %v3437
      %v4223 = vadd.f32 %v4205, 1e-05
      %v4224 = vadd.f32 %v4206, 1e-05
      %v4225 = vadd.f32 %v4207, 1e-05
      %v4226 = vadd.f32 %v4208, 1e-05
      %v4227 = vadd.f32 %v4209, 1e-05
      %v4228 = vadd.f32 %v4210, 1e-05
      %v4229 = vadd.f32 %v4211, 1e-05
      %v4230 = vadd.f32 %v4212, 1e-05
      %v4231 = vadd.f32 %v4213, 1e-05
      %v4232 = vadd.f32 %v4214, 1e-05
      %v4233 = vadd.f32 %v4215, 1e-05
      %v4234 = vadd.f32 %v4216, 1e-05
      %v4235 = vadd.f32 %v4217, 1e-05
      %v4236 = vadd.f32 %v4218, 1e-05
      %v4237 = vadd.f32 %v4219, 1e-05
      %v4238 = vadd.f32 %v4220, 1e-05
      %v4239 = vadd.f32 %v4221, 1e-05
      %v4240 = vadd.f32 %v4222, 1e-05
      %v4241 = vrsqrt.pop %v4223
      %v4242 = vrsqrt.pop %v4224
      %v4243 = vrsqrt.pop %v4225
      %v4244 = vrsqrt.pop %v4226
      %v4245 = vrsqrt.pop %v4227
      %v4246 = vrsqrt.pop %v4228
      %v4247 = vrsqrt.pop %v4229
      %v4248 = vrsqrt.pop %v4230
      %v4249 = vrsqrt.pop %v4231
      %v4250 = vrsqrt.pop %v4232
      %v4251 = vrsqrt.pop %v4233
      %v4252 = vrsqrt.pop %v4234
      %v4253 = vrsqrt.pop %v4235
      %v4254 = vrsqrt.pop %v4236
      %v4255 = vrsqrt.pop %v4237
      %v4256 = vrsqrt.pop %v4238
      %v4257 = vrsqrt.pop %v4239
      %v4258 = vrsqrt.pop %v4240
      %v4259 = vmul.f32 %v4115, %v4241
      %v4260 = vmul.f32 %v4116, %v4242
      %v4261 = vmul.f32 %v4117, %v4243
      %v4262 = vmul.f32 %v4118, %v4244
      %v4263 = vmul.f32 %v4119, %v4245
      %v4264 = vmul.f32 %v4120, %v4246
      %v4265 = vmul.f32 %v4121, %v4247
      %v4266 = vmul.f32 %v4122, %v4248
      %v4267 = vmul.f32 %v4123, %v4249
      %v4268 = vmul.f32 %v4124, %v4250
      %v4269 = vmul.f32 %v4125, %v4251
      %v4270 = vmul.f32 %v4126, %v4252
      %v4271 = vmul.f32 %v4127, %v4253
      %v4272 = vmul.f32 %v4128, %v4254
      %v4273 = vmul.f32 %v4129, %v4255
      %v4274 = vmul.f32 %v4130, %v4256
      %v4275 = vmul.f32 %v4131, %v4257
      %v4276 = vmul.f32 %v4132, %v4258
      %v4277 = vlaneseq
      %v4278 = vshrl.u32 %v4277, 7
      %v4279 = vsub.s32 0, %v4278
      %v4280 = vrot.slane %v4041, %v4279
      %v4281 = vmul.f32 %v4259, %v4280
      %v4282 = vmul.f32 %v4260, %v4280
      %v4283 = vmul.f32 %v4261, %v4280
      %v4284 = vmul.f32 %v4262, %v4280
      %v4285 = vmul.f32 %v4263, %v4280
      %v4286 = vmul.f32 %v4264, %v4280
      %v4287 = vmul.f32 %v4265, %v4280
      %v4288 = vmul.f32 %v4266, %v4280
      %v4289 = vmul.f32 %v4267, %v4280
      %v4290 = vmul.f32 %v4268, %v4280
      %v4291 = vmul.f32 %v4269, %v4280
      %v4292 = vmul.f32 %v4270, %v4280
      %v4293 = vmul.f32 %v4271, %v4280
      %v4294 = vmul.f32 %v4272, %v4280
      %v4295 = vmul.f32 %v4273, %v4280
      %v4296 = vmul.f32 %v4274, %v4280
      %v4297 = vmul.f32 %v4275, %v4280
      %v4298 = vmul.f32 %v4276, %v4280
      %v4299 = vlaneseq
      %v4300 = vshrl.u32 %v4299, 7
      %v4301 = vsub.s32 0, %v4300
      %v4302 = vrot.slane %v4042, %v4301
      %v4303 = vadd.f32 %v4281, %v4302
      %v4304 = vadd.f32 %v4282, %v4302
      %v4305 = vadd.f32 %v4283, %v4302
      %v4306 = vadd.f32 %v4284, %v4302
      %v4307 = vadd.f32 %v4285, %v4302
      %v4308 = vadd.f32 %v4286, %v4302
      %v4309 = vadd.f32 %v4287, %v4302
      %v4310 = vadd.f32 %v4288, %v4302
      %v4311 = vadd.f32 %v4289, %v4302
      %v4312 = vadd.f32 %v4290, %v4302
      %v4313 = vadd.f32 %v4291, %v4302
      %v4314 = vadd.f32 %v4292, %v4302
      %v4315 = vadd.f32 %v4293, %v4302
      %v4316 = vadd.f32 %v4294, %v4302
      %v4317 = vadd.f32 %v4295, %v4302
      %v4318 = vadd.f32 %v4296, %v4302
      %v4319 = vadd.f32 %v4297, %v4302
      %v4320 = vadd.f32 %v4298, %v4302
      %s4321 = scalar_lea.vmem %s9, 16
      %v4322 = vld [vmem:[%s4321] sm:$0xf]
      %v4323 = vld [vmem:[%s4321 + $0x4] sm:$0xf]
      %v4324 = vld [vmem:[%s4321 + $0x8] sm:$0xf]
      %v4325 = vld [vmem:[%s4321 + $0xc] sm:$0xf]
      %v4326 = vpack.c.bf16 %v4304, %v4303
      %v4327 = vpack.c.bf16 %v4306, %v4305
      %v4328 = vpack.c.bf16 %v4308, %v4307
      %v4329 = vpack.c.bf16 %v4310, %v4309
      %v4330 = vpack.c.bf16 %v4312, %v4311
      %v4331 = vpack.c.bf16 %v4314, %v4313
      %v4332 = vpack.c.bf16 %v4316, %v4315
      %v4333 = vpack.c.bf16 %v4318, %v4317
      %v4334 = vpack.c.bf16 %v4320, %v4319
      %s4335 = scalar_lea.vmem %s10, 1
      %v4336 = vld [vmem:[%s4335] sm:$0x1]
      %v4338 = vlaneseq
      %v4339 = vshrl.u32 %v4338, 7
      %v4340 = vsub.s32 0, %v4339
      %v4341 = vrot.slane %v4336, %v4340
      %v4347 = vunpack.c.l.b16 %v4322
      %v4348 = vunpack.c.l.b16 %v4323
      %v4349 = vunpack.c.l.b16 %v4324
      %v4350 = vunpack.c.l.b16 %v4325
      %v4351 = vpack.c.b16 %v4348, %v4347
      %v4352 = vpack.c.b16 %v4350, %v4349
      %v4356 = vsel %vm1249, %v4326, 0
      %v4359 = vsel %vm1249, %v4327, 0
      %v4362 = vsel %vm1249, %v4328, 0
      %v4365 = vsel %vm1249, %v4329, 0
      %v4368 = vsel %vm1249, %v4330, 0
      %v4371 = vsel %vm1249, %v4331, 0
      %v4374 = vsel %vm1249, %v4332, 0
      %v4377 = vsel %vm1249, %v4333, 0
      %v4380 = vsel %vm1249, %v4334, 0
      %4382 = vmatprep.subr.bf16.mxu0 0
      %4383 = vmatpush1.bf16.msra.mxu0 0
      %4384 = vmatprep.subr.bf16.mxu0 0
      %4385 = vmatpush1.bf16.msra.mxu0 0
      %4386 = vmatprep.subr.bf16.mxu0 0
      %4387 = vmatpush1.bf16.msra.mxu0 0
      %4388 = vmatprep.subr.bf16.mxu0 0
      %4389 = vmatpush1.bf16.msra.mxu0 0
      %4390 = vmatprep.subr.bf16.mxu0 0
      %4391 = vmatpush1.bf16.msra.mxu0 0
      %4392 = vmatprep.subr.bf16.mxu0 0
      %4393 = vmatpush1.bf16.msra.mxu0 0
      %4394 = vmatprep.subr.bf16.mxu0 0
      %4395 = vmatpush1.bf16.msra.mxu0 %v4352
      %4396 = vmatprep.subr.bf16.mxu0 0
      %4397 = vmatpush1.bf16.msra.mxu0 %v4351
      %4398 = vmatprep.subr.bf16.mxu0 0
      %4399 = vmatpush2.bf16.msra.mxu0 0
      %4400 = vmatprep.subr.bf16.mxu0 0
      %4401 = vmatpush2.bf16.msra.mxu0 0
      %4402 = vmatprep.subr.bf16.mxu0 0
      %4403 = vmatpush2.bf16.msra.mxu0 0
      %4404 = vmatprep.subr.bf16.mxu0 0
      %4405 = vmatpush2.bf16.msra.mxu0 0
      %4406 = vmatprep.subr.bf16.mxu0 0
      %4407 = vmatpush2.bf16.msra.mxu0 0
      %4408 = vmatprep.subr.bf16.mxu0 0
      %4409 = vmatpush2.bf16.msra.mxu0 0
      %4410 = vmatprep.subr.bf16.mxu0 0
      %4411 = vmatpush2.bf16.msra.mxu0 0
      %4412 = vmatprep.subr.bf16.mxu0 0
      %4413 = vmatpush2.bf16.msra.mxu0 0
      %4414 = vmatprep.mubr.bf16.mxu0 0
      %4415 = vmatmul.mubr.bf16.gmra.mxu0 %v4356
      %v4416 = vpop.f32.mrf.mxu0
      %v4417 = vadd.f32 %v4341, %v4416
      %v4418 = vpop.f32.mrf.mxu0
      %v4419 = vpop.f32.mrf.mxu0
      %v4420 = vadd.f32 %v4341, %v4419
      %v4421 = vpop.f32.mrf.mxu0
      %4422 = vmatprep.mubr.bf16.mxu0 0
      %4423 = vmatmul.mubr.bf16.gmra.mxu0 %v4359
      %v4424 = vpop.f32.mrf.mxu0
      %v4425 = vadd.f32 %v4341, %v4424
      %v4426 = vpop.f32.mrf.mxu0
      %v4427 = vpop.f32.mrf.mxu0
      %v4428 = vadd.f32 %v4341, %v4427
      %v4429 = vpop.f32.mrf.mxu0
      %4430 = vmatprep.mubr.bf16.mxu0 0
      %4431 = vmatmul.mubr.bf16.gmra.mxu0 %v4362
      %v4432 = vpop.f32.mrf.mxu0
      %v4433 = vadd.f32 %v4341, %v4432
      %v4434 = vpop.f32.mrf.mxu0
      %v4435 = vpop.f32.mrf.mxu0
      %v4436 = vadd.f32 %v4341, %v4435
      %v4437 = vpop.f32.mrf.mxu0
      %4438 = vmatprep.mubr.bf16.mxu0 0
      %4439 = vmatmul.mubr.bf16.gmra.mxu0 %v4365
      %v4440 = vpop.f32.mrf.mxu0
      %v4441 = vadd.f32 %v4341, %v4440
      %v4442 = vpop.f32.mrf.mxu0
      %v4443 = vpop.f32.mrf.mxu0
      %v4444 = vadd.f32 %v4341, %v4443
      %v4445 = vpop.f32.mrf.mxu0
      %4446 = vmatprep.mubr.bf16.mxu0 0
      %4447 = vmatmul.mubr.bf16.gmra.mxu0 %v4368
      %v4448 = vpop.f32.mrf.mxu0
      %v4449 = vadd.f32 %v4341, %v4448
      %v4450 = vpop.f32.mrf.mxu0
      %v4451 = vpop.f32.mrf.mxu0
      %v4452 = vadd.f32 %v4341, %v4451
      %v4453 = vpop.f32.mrf.mxu0
      %4454 = vmatprep.mubr.bf16.mxu0 0
      %4455 = vmatmul.mubr.bf16.gmra.mxu0 %v4371
      %v4456 = vpop.f32.mrf.mxu0
      %v4457 = vadd.f32 %v4341, %v4456
      %v4458 = vpop.f32.mrf.mxu0
      %v4459 = vpop.f32.mrf.mxu0
      %v4460 = vadd.f32 %v4341, %v4459
      %v4461 = vpop.f32.mrf.mxu0
      %4462 = vmatprep.mubr.bf16.mxu0 0
      %4463 = vmatmul.mubr.bf16.gmra.mxu0 %v4374
      %v4464 = vpop.f32.mrf.mxu0
      %v4465 = vadd.f32 %v4341, %v4464
      %v4466 = vpop.f32.mrf.mxu0
      %v4467 = vpop.f32.mrf.mxu0
      %v4468 = vadd.f32 %v4341, %v4467
      %v4469 = vpop.f32.mrf.mxu0
      %4470 = vmatprep.mubr.bf16.mxu0 0
      %4471 = vmatmul.mubr.bf16.gmra.mxu0 %v4377
      %v4472 = vpop.f32.mrf.mxu0
      %v4473 = vadd.f32 %v4341, %v4472
      %v4474 = vpop.f32.mrf.mxu0
      %v4475 = vpop.f32.mrf.mxu0
      %v4476 = vadd.f32 %v4341, %v4475
      %v4477 = vpop.f32.mrf.mxu0
      %4478 = vmatprep.mubr.bf16.mxu0 0
      %4479 = vmatmul.mubr.bf16.gmra.mxu0 %v4380
      %v4480 = vpop.f32.mrf.mxu0
      %v4481 = vadd.f32 %v4341, %v4480
      %v4482 = vpop.f32.mrf.mxu0
      %v4483 = vpop.f32.mrf.mxu0
      %v4484 = vadd.f32 %v4341, %v4483
      %v4485 = vpop.f32.mrf.mxu0
      %4486 = vdwg.mxu0
      %s4487 = scalar_lea.vmem %s15, 8
      %v4488 = vld [vmem:[%s4487] sm:$0x1]
      %v4489 = vpack.c.bf16 %v4420, %v4417
      %v4490 = vpack.c.bf16 %v4428, %v4425
      %v4491 = vpack.c.bf16 %v4436, %v4433
      %v4492 = vpack.c.bf16 %v4444, %v4441
      %v4493 = vpack.c.bf16 %v4452, %v4449
      %v4494 = vpack.c.bf16 %v4460, %v4457
      %v4495 = vpack.c.bf16 %v4468, %v4465
      %v4496 = vpack.c.bf16 %v4476, %v4473
      %v4497 = vpack.c.bf16 %v4484, %v4481
      %4507 = vrot.lane.b32.xlu0 %v4489, 96
      %v4508 = vpop.permute.xlu0 %4507
      %4509 = vrot.lane.b32.xlu0 %v4490, 96
      %v4510 = vpop.permute.xlu0 %4509
      %4511 = vrot.lane.b32.xlu0 %v4491, 96
      %v4512 = vpop.permute.xlu0 %4511
      %4513 = vrot.lane.b32.xlu0 %v4492, 96
      %v4514 = vpop.permute.xlu0 %4513
      %4515 = vrot.lane.b32.xlu0 %v4493, 96
      %v4516 = vpop.permute.xlu0 %4515
      %4517 = vrot.lane.b32.xlu0 %v4494, 96
      %v4518 = vpop.permute.xlu0 %4517
      %4519 = vrot.lane.b32.xlu0 %v4495, 96
      %v4520 = vpop.permute.xlu0 %4519
      %4521 = vrot.lane.b32.xlu0 %v4496, 96
      %v4522 = vpop.permute.xlu0 %4521
      %4523 = vrot.lane.b32.xlu0 %v4497, 96
      %v4524 = vpop.permute.xlu0 %4523
      %v4526 = vsel %vm945, %v4489, 0
      %v4529 = vsel %vm945, %v4490, 0
      %v4532 = vsel %vm945, %v4491, 0
      %v4535 = vsel %vm945, %v4492, 0
      %v4538 = vsel %vm945, %v4493, 0
      %v4541 = vsel %vm945, %v4494, 0
      %v4544 = vsel %vm945, %v4495, 0
      %v4547 = vsel %vm945, %v4496, 0
      %v4550 = vsel %vm945, %v4497, 0
      %v4553 = vsel %vm945, %v4508, 0
      %v4556 = vsel %vm945, %v4510, 0
      %v4559 = vsel %vm945, %v4512, 0
      %v4562 = vsel %vm945, %v4514, 0
      %v4565 = vsel %vm945, %v4516, 0
      %v4568 = vsel %vm945, %v4518, 0
      %v4571 = vsel %vm945, %v4520, 0
      %v4574 = vsel %vm945, %v4522, 0
      %v4577 = vsel %vm945, %v4524, 0
      %4579 = vmatprep.subr.bf16.mxu0 0
      %4580 = vmatpush1.bf16.xpose.msra.mxu0 %v4574
      %4581 = vmatprep.subr.bf16.mxu0 0
      %4582 = vmatpush1.bf16.xpose.msra.mxu0 %v4571
      %4583 = vmatprep.subr.bf16.mxu0 0
      %4584 = vmatpush1.bf16.xpose.msra.mxu0 %v4568
      %4585 = vmatprep.subr.bf16.mxu0 0
      %4586 = vmatpush1.bf16.xpose.msra.mxu0 %v4565
      %4587 = vmatprep.subr.bf16.mxu0 0
      %4588 = vmatpush1.bf16.xpose.msra.mxu0 %v4562
      %4589 = vmatprep.subr.bf16.mxu0 0
      %4590 = vmatpush1.bf16.xpose.msra.mxu0 %v4559
      %4591 = vmatprep.subr.bf16.mxu0 0
      %4592 = vmatpush1.bf16.xpose.msra.mxu0 %v4556
      %4593 = vmatprep.subr.bf16.mxu0 0
      %4594 = vmatpush1.bf16.xpose.msra.mxu0 %v4553
      %4595 = vmatprep.subr.bf16.mxu0 0
      %4596 = vmatpush2.bf16.xpose.msra.mxu0 0
      %4597 = vmatprep.subr.bf16.mxu0 0
      %4598 = vmatpush2.bf16.xpose.msra.mxu0 0
      %4599 = vmatprep.subr.bf16.mxu0 0
      %4600 = vmatpush2.bf16.xpose.msra.mxu0 0
      %4601 = vmatprep.subr.bf16.mxu0 0
      %4602 = vmatpush2.bf16.xpose.msra.mxu0 0
      %4603 = vmatprep.subr.bf16.mxu0 0
      %4604 = vmatpush2.bf16.xpose.msra.mxu0 0
      %4605 = vmatprep.subr.bf16.mxu0 0
      %4606 = vmatpush2.bf16.xpose.msra.mxu0 0
      %4607 = vmatprep.subr.bf16.mxu0 0
      %4608 = vmatpush2.bf16.xpose.msra.mxu0 0
      %4609 = vmatprep.subr.bf16.mxu0 0
      %4610 = vmatpush2.bf16.xpose.msra.mxu0 %v4577
      %4611 = vmatprep.mubr.bf16.mxu0 0
      %4612 = vmatmul.mubr.bf16.gmra.mxu0 %v4526
      %v4613 = vpop.f32.mrf.mxu0
      %v4614 = vadd.f32 0.0, %v4613
      %v4615 = vpop.f32.mrf.mxu0
      %v4616 = vadd.f32 0.0, %v4615
      %v4617 = vpop.f32.mrf.mxu0
      %v4618 = vadd.f32 0.0, %v4617
      %v4619 = vpop.f32.mrf.mxu0
      %v4620 = vadd.f32 0.0, %v4619
      %4621 = vmatprep.mubr.bf16.mxu0 0
      %4622 = vmatmul.mubr.bf16.gmra.mxu0 %v4529
      %v4623 = vpop.f32.mrf.mxu0
      %v4624 = vadd.f32 0.0, %v4623
      %v4625 = vpop.f32.mrf.mxu0
      %v4626 = vadd.f32 0.0, %v4625
      %v4627 = vpop.f32.mrf.mxu0
      %v4628 = vadd.f32 0.0, %v4627
      %v4629 = vpop.f32.mrf.mxu0
      %v4630 = vadd.f32 0.0, %v4629
      %4631 = vmatprep.mubr.bf16.mxu0 0
      %4632 = vmatmul.mubr.bf16.gmra.mxu0 %v4532
      %v4633 = vpop.f32.mrf.mxu0
      %v4634 = vadd.f32 0.0, %v4633
      %v4635 = vpop.f32.mrf.mxu0
      %v4636 = vadd.f32 0.0, %v4635
      %v4637 = vpop.f32.mrf.mxu0
      %v4638 = vadd.f32 0.0, %v4637
      %v4639 = vpop.f32.mrf.mxu0
      %v4640 = vadd.f32 0.0, %v4639
      %4641 = vmatprep.mubr.bf16.mxu0 0
      %4642 = vmatmul.mubr.bf16.gmra.mxu0 %v4535
      %v4643 = vpop.f32.mrf.mxu0
      %v4644 = vadd.f32 0.0, %v4643
      %v4645 = vpop.f32.mrf.mxu0
      %v4646 = vadd.f32 0.0, %v4645
      %v4647 = vpop.f32.mrf.mxu0
      %v4648 = vadd.f32 0.0, %v4647
      %v4649 = vpop.f32.mrf.mxu0
      %v4650 = vadd.f32 0.0, %v4649
      %4651 = vmatprep.mubr.bf16.mxu0 0
      %4652 = vmatmul.mubr.bf16.gmra.mxu0 %v4538
      %v4653 = vpop.f32.mrf.mxu0
      %v4654 = vadd.f32 0.0, %v4653
      %v4655 = vpop.f32.mrf.mxu0
      %v4656 = vadd.f32 0.0, %v4655
      %v4657 = vpop.f32.mrf.mxu0
      %v4658 = vadd.f32 0.0, %v4657
      %v4659 = vpop.f32.mrf.mxu0
      %v4660 = vadd.f32 0.0, %v4659
      %4661 = vmatprep.mubr.bf16.mxu0 0
      %4662 = vmatmul.mubr.bf16.gmra.mxu0 %v4541
      %v4663 = vpop.f32.mrf.mxu0
      %v4664 = vadd.f32 0.0, %v4663
      %v4665 = vpop.f32.mrf.mxu0
      %v4666 = vadd.f32 0.0, %v4665
      %v4667 = vpop.f32.mrf.mxu0
      %v4668 = vadd.f32 0.0, %v4667
      %v4669 = vpop.f32.mrf.mxu0
      %v4670 = vadd.f32 0.0, %v4669
      %4671 = vmatprep.mubr.bf16.mxu0 0
      %4672 = vmatmul.mubr.bf16.gmra.mxu0 %v4544
      %v4673 = vpop.f32.mrf.mxu0
      %v4674 = vadd.f32 0.0, %v4673
      %v4675 = vpop.f32.mrf.mxu0
      %v4676 = vadd.f32 0.0, %v4675
      %v4677 = vpop.f32.mrf.mxu0
      %v4678 = vadd.f32 0.0, %v4677
      %v4679 = vpop.f32.mrf.mxu0
      %v4680 = vadd.f32 0.0, %v4679
      %4681 = vmatprep.mubr.bf16.mxu0 0
      %4682 = vmatmul.mubr.bf16.gmra.mxu0 %v4547
      %v4683 = vpop.f32.mrf.mxu0
      %v4684 = vadd.f32 0.0, %v4683
      %v4685 = vpop.f32.mrf.mxu0
      %v4686 = vadd.f32 0.0, %v4685
      %v4687 = vpop.f32.mrf.mxu0
      %v4688 = vadd.f32 0.0, %v4687
      %v4689 = vpop.f32.mrf.mxu0
      %v4690 = vadd.f32 0.0, %v4689
      %4691 = vmatprep.mubr.bf16.mxu0 0
      %4692 = vmatmul.mubr.bf16.gmra.mxu0 %v4550
      %v4693 = vpop.f32.mrf.mxu0
      %v4694 = vadd.f32 0.0, %v4693
      %v4695 = vpop.f32.mrf.mxu0
      %v4696 = vadd.f32 0.0, %v4695
      %v4697 = vpop.f32.mrf.mxu0
      %v4698 = vadd.f32 0.0, %v4697
      %v4699 = vpop.f32.mrf.mxu0
      %v4700 = vadd.f32 0.0, %v4699
      %4701 = vdwg.mxu0
      %v4702 = vmul.f32 %v4614, 0.25
      %v4703 = vmul.f32 %v4616, 0.25
      %v4704 = vmul.f32 %v4618, 0.25
      %v4705 = vmul.f32 %v4620, 0.25
      %v4706 = vmul.f32 %v4624, 0.25
      %v4707 = vmul.f32 %v4626, 0.25
      %v4708 = vmul.f32 %v4628, 0.25
      %v4709 = vmul.f32 %v4630, 0.25
      %v4710 = vmul.f32 %v4634, 0.25
      %v4711 = vmul.f32 %v4636, 0.25
      %v4712 = vmul.f32 %v4638, 0.25
      %v4713 = vmul.f32 %v4640, 0.25
      %v4714 = vmul.f32 %v4644, 0.25
      %v4715 = vmul.f32 %v4646, 0.25
      %v4716 = vmul.f32 %v4648, 0.25
      %v4717 = vmul.f32 %v4650, 0.25
      %v4718 = vmul.f32 %v4654, 0.25
      %v4719 = vmul.f32 %v4656, 0.25
      %v4720 = vmul.f32 %v4658, 0.25
      %v4721 = vmul.f32 %v4660, 0.25
      %v4722 = vmul.f32 %v4664, 0.25
      %v4723 = vmul.f32 %v4666, 0.25
      %v4724 = vmul.f32 %v4668, 0.25
      %v4725 = vmul.f32 %v4670, 0.25
      %v4726 = vmul.f32 %v4674, 0.25
      %v4727 = vmul.f32 %v4676, 0.25
      %v4728 = vmul.f32 %v4678, 0.25
      %v4729 = vmul.f32 %v4680, 0.25
      %v4730 = vmul.f32 %v4684, 0.25
      %v4731 = vmul.f32 %v4686, 0.25
      %v4732 = vmul.f32 %v4688, 0.25
      %v4733 = vmul.f32 %v4690, 0.25
      %v4734 = vmul.f32 %v4694, 0.25
      %v4735 = vmul.f32 %v4696, 0.25
      %v4736 = vmul.f32 %v4698, 0.25
      %v4737 = vmul.f32 %v4700, 0.25
      %v4738 = vadd.f32 %v4702, %v1288
      %v4739 = vadd.f32 %v4703, %v1289
      %v4740 = vadd.f32 %v4704, %v1290
      %v4741 = vadd.f32 %v4705, %v1291
      %v4742 = vadd.f32 %v4706, %v1292
      %v4743 = vadd.f32 %v4707, %v1293
      %v4744 = vadd.f32 %v4708, %v1294
      %v4745 = vadd.f32 %v4709, %v1295
      %v4746 = vadd.f32 %v4710, %v1296
      %v4747 = vadd.f32 %v4711, %v1297
      %v4748 = vadd.f32 %v4712, %v1298
      %v4749 = vadd.f32 %v4713, %v1299
      %v4750 = vadd.f32 %v4714, %v1300
      %v4751 = vadd.f32 %v4715, %v1301
      %v4752 = vadd.f32 %v4716, %v1302
      %v4753 = vadd.f32 %v4717, %v1303
      %v4754 = vadd.f32 %v4718, %v1304
      %v4755 = vadd.f32 %v4719, %v1305
      %v4756 = vadd.f32 %v4720, %v1306
      %v4757 = vadd.f32 %v4721, %v1307
      %v4758 = vadd.f32 %v4722, %v1308
      %v4759 = vadd.f32 %v4723, %v1309
      %v4760 = vadd.f32 %v4724, %v1310
      %v4761 = vadd.f32 %v4725, %v1311
      %v4762 = vadd.f32 %v4726, %v1312
      %v4763 = vadd.f32 %v4727, %v1313
      %v4764 = vadd.f32 %v4728, %v1314
      %v4765 = vadd.f32 %v4729, %v1315
      %v4766 = vadd.f32 %v4730, %v1316
      %v4767 = vadd.f32 %v4731, %v1317
      %v4768 = vadd.f32 %v4732, %v1318
      %v4769 = vadd.f32 %v4733, %v1319
      %v4770 = vadd.f32 %v4734, %v1320
      %v4771 = vadd.f32 %v4735, %v1321
      %v4772 = vadd.f32 %v4736, %v1322
      %v4773 = vadd.f32 %v4737, %v1323
      %v4774 = vsel %vm945, %v4739, -inf
      %v4775 = vmax.f32 %v4738, %v4774
      %4776 = vmax.xlane.f32.xlu0 %v4775
      %v4777 = vpop.xlane.xlu0 %4776
      %v4778 = vsel %vm945, %v4741, -inf
      %v4779 = vmax.f32 %v4740, %v4778
      %4780 = vmax.xlane.f32.xlu0 %v4779
      %v4781 = vpop.xlane.xlu0 %4780
      %v4782 = vsel %vm945, %v4743, -inf
      %v4783 = vmax.f32 %v4742, %v4782
      %4784 = vmax.xlane.f32.xlu0 %v4783
      %v4785 = vpop.xlane.xlu0 %4784
      %v4786 = vsel %vm945, %v4745, -inf
      %v4787 = vmax.f32 %v4744, %v4786
      %4788 = vmax.xlane.f32.xlu0 %v4787
      %v4789 = vpop.xlane.xlu0 %4788
      %v4790 = vsel %vm945, %v4747, -inf
      %v4791 = vmax.f32 %v4746, %v4790
      %4792 = vmax.xlane.f32.xlu0 %v4791
      %v4793 = vpop.xlane.xlu0 %4792
      %v4794 = vsel %vm945, %v4749, -inf
      %v4795 = vmax.f32 %v4748, %v4794
      %4796 = vmax.xlane.f32.xlu0 %v4795
      %v4797 = vpop.xlane.xlu0 %4796
      %v4798 = vsel %vm945, %v4751, -inf
      %v4799 = vmax.f32 %v4750, %v4798
      %4800 = vmax.xlane.f32.xlu0 %v4799
      %v4801 = vpop.xlane.xlu0 %4800
      %v4802 = vsel %vm945, %v4753, -inf
      %v4803 = vmax.f32 %v4752, %v4802
      %4804 = vmax.xlane.f32.xlu0 %v4803
      %v4805 = vpop.xlane.xlu0 %4804
      %v4806 = vsel %vm945, %v4755, -inf
      %v4807 = vmax.f32 %v4754, %v4806
      %4808 = vmax.xlane.f32.xlu0 %v4807
      %v4809 = vpop.xlane.xlu0 %4808
      %v4810 = vsel %vm945, %v4757, -inf
      %v4811 = vmax.f32 %v4756, %v4810
      %4812 = vmax.xlane.f32.xlu0 %v4811
      %v4813 = vpop.xlane.xlu0 %4812
      %v4814 = vsel %vm945, %v4759, -inf
      %v4815 = vmax.f32 %v4758, %v4814
      %4816 = vmax.xlane.f32.xlu0 %v4815
      %v4817 = vpop.xlane.xlu0 %4816
      %v4818 = vsel %vm945, %v4761, -inf
      %v4819 = vmax.f32 %v4760, %v4818
      %4820 = vmax.xlane.f32.xlu0 %v4819
      %v4821 = vpop.xlane.xlu0 %4820
      %v4822 = vsel %vm945, %v4763, -inf
      %v4823 = vmax.f32 %v4762, %v4822
      %4824 = vmax.xlane.f32.xlu0 %v4823
      %v4825 = vpop.xlane.xlu0 %4824
      %v4826 = vsel %vm945, %v4765, -inf
      %v4827 = vmax.f32 %v4764, %v4826
      %4828 = vmax.xlane.f32.xlu0 %v4827
      %v4829 = vpop.xlane.xlu0 %4828
      %v4830 = vsel %vm945, %v4767, -inf
      %v4831 = vmax.f32 %v4766, %v4830
      %4832 = vmax.xlane.f32.xlu0 %v4831
      %v4833 = vpop.xlane.xlu0 %4832
      %v4834 = vsel %vm945, %v4769, -inf
      %v4835 = vmax.f32 %v4768, %v4834
      %4836 = vmax.xlane.f32.xlu0 %v4835
      %v4837 = vpop.xlane.xlu0 %4836
      %v4838 = vsel %vm945, %v4771, -inf
      %v4839 = vmax.f32 %v4770, %v4838
      %4840 = vmax.xlane.f32.xlu0 %v4839
      %v4841 = vpop.xlane.xlu0 %4840
      %v4842 = vsel %vm945, %v4773, -inf
      %v4843 = vmax.f32 %v4772, %v4842
      %4844 = vmax.xlane.f32.xlu0 %v4843
      %v4845 = vpop.xlane.xlu0 %4844
      %v4846 = vsub.f32 %v4738, %v4777
      %v4847 = vsub.f32 %v4739, %v4777
      %v4848 = vsub.f32 %v4740, %v4781
      %v4849 = vsub.f32 %v4741, %v4781
      %v4850 = vsub.f32 %v4742, %v4785
      %v4851 = vsub.f32 %v4743, %v4785
      %v4852 = vsub.f32 %v4744, %v4789
      %v4853 = vsub.f32 %v4745, %v4789
      %v4854 = vsub.f32 %v4746, %v4793
      %v4855 = vsub.f32 %v4747, %v4793
      %v4856 = vsub.f32 %v4748, %v4797
      %v4857 = vsub.f32 %v4749, %v4797
      %v4858 = vsub.f32 %v4750, %v4801
      %v4859 = vsub.f32 %v4751, %v4801
      %v4860 = vsub.f32 %v4752, %v4805
      %v4861 = vsub.f32 %v4753, %v4805
      %v4862 = vsub.f32 %v4754, %v4809
      %v4863 = vsub.f32 %v4755, %v4809
      %v4864 = vsub.f32 %v4756, %v4813
      %v4865 = vsub.f32 %v4757, %v4813
      %v4866 = vsub.f32 %v4758, %v4817
      %v4867 = vsub.f32 %v4759, %v4817
      %v4868 = vsub.f32 %v4760, %v4821
      %v4869 = vsub.f32 %v4761, %v4821
      %v4870 = vsub.f32 %v4762, %v4825
      %v4871 = vsub.f32 %v4763, %v4825
      %v4872 = vsub.f32 %v4764, %v4829
      %v4873 = vsub.f32 %v4765, %v4829
      %v4874 = vsub.f32 %v4766, %v4833
      %v4875 = vsub.f32 %v4767, %v4833
      %v4876 = vsub.f32 %v4768, %v4837
      %v4877 = vsub.f32 %v4769, %v4837
      %v4878 = vsub.f32 %v4770, %v4841
      %v4879 = vsub.f32 %v4771, %v4841
      %v4880 = vsub.f32 %v4772, %v4845
      %v4881 = vsub.f32 %v4773, %v4845
      %v4882 = vmul.f32 %v4846, 1.442695
      %v4883 = vpow.pop %v4882
      %v4884 = vmul.f32 %v4847, 1.442695
      %v4885 = vpow.pop %v4884
      %v4886 = vmul.f32 %v4848, 1.442695
      %v4887 = vpow.pop %v4886
      %v4888 = vmul.f32 %v4849, 1.442695
      %v4889 = vpow.pop %v4888
      %v4890 = vmul.f32 %v4850, 1.442695
      %v4891 = vpow.pop %v4890
      %v4892 = vmul.f32 %v4851, 1.442695
      %v4893 = vpow.pop %v4892
      %v4894 = vmul.f32 %v4852, 1.442695
      %v4895 = vpow.pop %v4894
      %v4896 = vmul.f32 %v4853, 1.442695
      %v4897 = vpow.pop %v4896
      %v4898 = vmul.f32 %v4854, 1.442695
      %v4899 = vpow.pop %v4898
      %v4900 = vmul.f32 %v4855, 1.442695
      %v4901 = vpow.pop %v4900
      %v4902 = vmul.f32 %v4856, 1.442695
      %v4903 = vpow.pop %v4902
      %v4904 = vmul.f32 %v4857, 1.442695
      %v4905 = vpow.pop %v4904
      %v4906 = vmul.f32 %v4858, 1.442695
      %v4907 = vpow.pop %v4906
      %v4908 = vmul.f32 %v4859, 1.442695
      %v4909 = vpow.pop %v4908
      %v4910 = vmul.f32 %v4860, 1.442695
      %v4911 = vpow.pop %v4910
      %v4912 = vmul.f32 %v4861, 1.442695
      %v4913 = vpow.pop %v4912
      %v4914 = vmul.f32 %v4862, 1.442695
      %v4915 = vpow.pop %v4914
      %v4916 = vmul.f32 %v4863, 1.442695
      %v4917 = vpow.pop %v4916
      %v4918 = vmul.f32 %v4864, 1.442695
      %v4919 = vpow.pop %v4918
      %v4920 = vmul.f32 %v4865, 1.442695
      %v4921 = vpow.pop %v4920
      %v4922 = vmul.f32 %v4866, 1.442695
      %v4923 = vpow.pop %v4922
      %v4924 = vmul.f32 %v4867, 1.442695
      %v4925 = vpow.pop %v4924
      %v4926 = vmul.f32 %v4868, 1.442695
      %v4927 = vpow.pop %v4926
      %v4928 = vmul.f32 %v4869, 1.442695
      %v4929 = vpow.pop %v4928
      %v4930 = vmul.f32 %v4870, 1.442695
      %v4931 = vpow.pop %v4930
      %v4932 = vmul.f32 %v4871, 1.442695
      %v4933 = vpow.pop %v4932
      %v4934 = vmul.f32 %v4872, 1.442695
      %v4935 = vpow.pop %v4934
      %v4936 = vmul.f32 %v4873, 1.442695
      %v4937 = vpow.pop %v4936
      %v4938 = vmul.f32 %v4874, 1.442695
      %v4939 = vpow.pop %v4938
      %v4940 = vmul.f32 %v4875, 1.442695
      %v4941 = vpow.pop %v4940
      %v4942 = vmul.f32 %v4876, 1.442695
      %v4943 = vpow.pop %v4942
      %v4944 = vmul.f32 %v4877, 1.442695
      %v4945 = vpow.pop %v4944
      %v4946 = vmul.f32 %v4878, 1.442695
      %v4947 = vpow.pop %v4946
      %v4948 = vmul.f32 %v4879, 1.442695
      %v4949 = vpow.pop %v4948
      %v4950 = vmul.f32 %v4880, 1.442695
      %v4951 = vpow.pop %v4950
      %v4952 = vmul.f32 %v4881, 1.442695
      %v4953 = vpow.pop %v4952
      %v4954 = vsel %vm945, %v4885, 0.0
      %v4955 = vadd.f32 %v4883, %v4954
      %4956 = vadd.xlane.f32.xlu0 %v4955
      %v4957 = vpop.xlane.xlu0 %4956
      %v4958 = vsel %vm945, %v4889, 0.0
      %v4959 = vadd.f32 %v4887, %v4958
      %4960 = vadd.xlane.f32.xlu0 %v4959
      %v4961 = vpop.xlane.xlu0 %4960
      %v4962 = vsel %vm945, %v4893, 0.0
      %v4963 = vadd.f32 %v4891, %v4962
      %4964 = vadd.xlane.f32.xlu0 %v4963
      %v4965 = vpop.xlane.xlu0 %4964
      %v4966 = vsel %vm945, %v4897, 0.0
      %v4967 = vadd.f32 %v4895, %v4966
      %4968 = vadd.xlane.f32.xlu0 %v4967
      %v4969 = vpop.xlane.xlu0 %4968
      %v4970 = vsel %vm945, %v4901, 0.0
      %v4971 = vadd.f32 %v4899, %v4970
      %4972 = vadd.xlane.f32.xlu0 %v4971
      %v4973 = vpop.xlane.xlu0 %4972
      %v4974 = vsel %vm945, %v4905, 0.0
      %v4975 = vadd.f32 %v4903, %v4974
      %4976 = vadd.xlane.f32.xlu0 %v4975
      %v4977 = vpop.xlane.xlu0 %4976
      %v4978 = vsel %vm945, %v4909, 0.0
      %v4979 = vadd.f32 %v4907, %v4978
      %4980 = vadd.xlane.f32.xlu0 %v4979
      %v4981 = vpop.xlane.xlu0 %4980
      %v4982 = vsel %vm945, %v4913, 0.0
      %v4983 = vadd.f32 %v4911, %v4982
      %4984 = vadd.xlane.f32.xlu0 %v4983
      %v4985 = vpop.xlane.xlu0 %4984
      %v4986 = vsel %vm945, %v4917, 0.0
      %v4987 = vadd.f32 %v4915, %v4986
      %4988 = vadd.xlane.f32.xlu0 %v4987
      %v4989 = vpop.xlane.xlu0 %4988
      %v4990 = vsel %vm945, %v4921, 0.0
      %v4991 = vadd.f32 %v4919, %v4990
      %4992 = vadd.xlane.f32.xlu0 %v4991
      %v4993 = vpop.xlane.xlu0 %4992
      %v4994 = vsel %vm945, %v4925, 0.0
      %v4995 = vadd.f32 %v4923, %v4994
      %4996 = vadd.xlane.f32.xlu0 %v4995
      %v4997 = vpop.xlane.xlu0 %4996
      %v4998 = vsel %vm945, %v4929, 0.0
      %v4999 = vadd.f32 %v4927, %v4998
      %5000 = vadd.xlane.f32.xlu0 %v4999
      %v5001 = vpop.xlane.xlu0 %5000
      %v5002 = vsel %vm945, %v4933, 0.0
      %v5003 = vadd.f32 %v4931, %v5002
      %5004 = vadd.xlane.f32.xlu0 %v5003
      %v5005 = vpop.xlane.xlu0 %5004
      %v5006 = vsel %vm945, %v4937, 0.0
      %v5007 = vadd.f32 %v4935, %v5006
      %5008 = vadd.xlane.f32.xlu0 %v5007
      %v5009 = vpop.xlane.xlu0 %5008
      %v5010 = vsel %vm945, %v4941, 0.0
      %v5011 = vadd.f32 %v4939, %v5010
      %5012 = vadd.xlane.f32.xlu0 %v5011
      %v5013 = vpop.xlane.xlu0 %5012
      %v5014 = vsel %vm945, %v4945, 0.0
      %v5015 = vadd.f32 %v4943, %v5014
      %5016 = vadd.xlane.f32.xlu0 %v5015
      %v5017 = vpop.xlane.xlu0 %5016
      %v5018 = vsel %vm945, %v4949, 0.0
      %v5019 = vadd.f32 %v4947, %v5018
      %5020 = vadd.xlane.f32.xlu0 %v5019
      %v5021 = vpop.xlane.xlu0 %5020
      %v5022 = vsel %vm945, %v4953, 0.0
      %v5023 = vadd.f32 %v4951, %v5022
      %5024 = vadd.xlane.f32.xlu0 %v5023
      %v5025 = vpop.xlane.xlu0 %5024
      %v5026 = vrcp.pop %v4957
      %v5027 = vmul.f32 %v4883, %v5026
      %v5028 = vmul.f32 %v4885, %v5026
      %v5029 = vrcp.pop %v4961
      %v5030 = vmul.f32 %v4887, %v5029
      %v5031 = vmul.f32 %v4889, %v5029
      %v5032 = vrcp.pop %v4965
      %v5033 = vmul.f32 %v4891, %v5032
      %v5034 = vmul.f32 %v4893, %v5032
      %v5035 = vrcp.pop %v4969
      %v5036 = vmul.f32 %v4895, %v5035
      %v5037 = vmul.f32 %v4897, %v5035
      %v5038 = vrcp.pop %v4973
      %v5039 = vmul.f32 %v4899, %v5038
      %v5040 = vmul.f32 %v4901, %v5038
      %v5041 = vrcp.pop %v4977
      %v5042 = vmul.f32 %v4903, %v5041
      %v5043 = vmul.f32 %v4905, %v5041
      %v5044 = vrcp.pop %v4981
      %v5045 = vmul.f32 %v4907, %v5044
      %v5046 = vmul.f32 %v4909, %v5044
      %v5047 = vrcp.pop %v4985
      %v5048 = vmul.f32 %v4911, %v5047
      %v5049 = vmul.f32 %v4913, %v5047
      %v5050 = vrcp.pop %v4989
      %v5051 = vmul.f32 %v4915, %v5050
      %v5052 = vmul.f32 %v4917, %v5050
      %v5053 = vrcp.pop %v4993
      %v5054 = vmul.f32 %v4919, %v5053
      %v5055 = vmul.f32 %v4921, %v5053
      %v5056 = vrcp.pop %v4997
      %v5057 = vmul.f32 %v4923, %v5056
      %v5058 = vmul.f32 %v4925, %v5056
      %v5059 = vrcp.pop %v5001
      %v5060 = vmul.f32 %v4927, %v5059
      %v5061 = vmul.f32 %v4929, %v5059
      %v5062 = vrcp.pop %v5005
      %v5063 = vmul.f32 %v4931, %v5062
      %v5064 = vmul.f32 %v4933, %v5062
      %v5065 = vrcp.pop %v5009
      %v5066 = vmul.f32 %v4935, %v5065
      %v5067 = vmul.f32 %v4937, %v5065
      %v5068 = vrcp.pop %v5013
      %v5069 = vmul.f32 %v4939, %v5068
      %v5070 = vmul.f32 %v4941, %v5068
      %v5071 = vrcp.pop %v5017
      %v5072 = vmul.f32 %v4943, %v5071
      %v5073 = vmul.f32 %v4945, %v5071
      %v5074 = vrcp.pop %v5021
      %v5075 = vmul.f32 %v4947, %v5074
      %v5076 = vmul.f32 %v4949, %v5074
      %v5077 = vrcp.pop %v5025
      %v5078 = vmul.f32 %v4951, %v5077
      %v5079 = vmul.f32 %v4953, %v5077
      %v5080 = vpack.c.bf16 %v5030, %v5027
      %v5081 = vpack.c.bf16 %v5031, %v5028
      %v5082 = vpack.c.bf16 %v5036, %v5033
      %v5083 = vpack.c.bf16 %v5037, %v5034
      %v5084 = vpack.c.bf16 %v5042, %v5039
      %v5085 = vpack.c.bf16 %v5043, %v5040
      %v5086 = vpack.c.bf16 %v5048, %v5045
      %v5087 = vpack.c.bf16 %v5049, %v5046
      %v5088 = vpack.c.bf16 %v5054, %v5051
      %v5089 = vpack.c.bf16 %v5055, %v5052
      %v5090 = vpack.c.bf16 %v5060, %v5057
      %v5091 = vpack.c.bf16 %v5061, %v5058
      %v5092 = vpack.c.bf16 %v5066, %v5063
      %v5093 = vpack.c.bf16 %v5067, %v5064
      %v5094 = vpack.c.bf16 %v5072, %v5069
      %v5095 = vpack.c.bf16 %v5073, %v5070
      %v5096 = vpack.c.bf16 %v5078, %v5075
      %v5097 = vpack.c.bf16 %v5079, %v5076
      %5098 = vrot.lane.b32.xlu0 %v4489, 64
      %v5099 = vpop.permute.xlu0 %5098
      %5100 = vrot.lane.b32.xlu0 %v4490, 64
      %v5101 = vpop.permute.xlu0 %5100
      %5102 = vrot.lane.b32.xlu0 %v4491, 64
      %v5103 = vpop.permute.xlu0 %5102
      %5104 = vrot.lane.b32.xlu0 %v4492, 64
      %v5105 = vpop.permute.xlu0 %5104
      %5106 = vrot.lane.b32.xlu0 %v4493, 64
      %v5107 = vpop.permute.xlu0 %5106
      %5108 = vrot.lane.b32.xlu0 %v4494, 64
      %v5109 = vpop.permute.xlu0 %5108
      %5110 = vrot.lane.b32.xlu0 %v4495, 64
      %v5111 = vpop.permute.xlu0 %5110
      %5112 = vrot.lane.b32.xlu0 %v4496, 64
      %v5113 = vpop.permute.xlu0 %5112
      %5114 = vrot.lane.b32.xlu0 %v4497, 64
      %v5115 = vpop.permute.xlu0 %5114
      %v5126 = vsel %vm945, %v5081, 0
      %v5129 = vsel %vm945, %v5083, 0
      %v5132 = vsel %vm945, %v5085, 0
      %v5135 = vsel %vm945, %v5087, 0
      %v5138 = vsel %vm945, %v5089, 0
      %v5141 = vsel %vm945, %v5091, 0
      %v5144 = vsel %vm945, %v5093, 0
      %v5147 = vsel %vm945, %v5095, 0
      %v5150 = vsel %vm945, %v5097, 0
      %5152 = vmatprep.subr.bf16.mxu0 0
      %5153 = vmatpush1.bf16.msra.mxu0 %v5113
      %5154 = vmatprep.subr.bf16.mxu0 0
      %5155 = vmatpush1.bf16.msra.mxu0 %v5111
      %5156 = vmatprep.subr.bf16.mxu0 0
      %5157 = vmatpush1.bf16.msra.mxu0 %v5109
      %5158 = vmatprep.subr.bf16.mxu0 0
      %5159 = vmatpush1.bf16.msra.mxu0 %v5107
      %5160 = vmatprep.subr.bf16.mxu0 0
      %5161 = vmatpush1.bf16.msra.mxu0 %v5105
      %5162 = vmatprep.subr.bf16.mxu0 0
      %5163 = vmatpush1.bf16.msra.mxu0 %v5103
      %5164 = vmatprep.subr.bf16.mxu0 0
      %5165 = vmatpush1.bf16.msra.mxu0 %v5101
      %5166 = vmatprep.subr.bf16.mxu0 0
      %5167 = vmatpush1.bf16.msra.mxu0 %v5099
      %5168 = vmatprep.subr.bf16.mxu0 0
      %5169 = vmatpush2.bf16.msra.mxu0 0
      %5170 = vmatprep.subr.bf16.mxu0 0
      %5171 = vmatpush2.bf16.msra.mxu0 0
      %5172 = vmatprep.subr.bf16.mxu0 0
      %5173 = vmatpush2.bf16.msra.mxu0 0
      %5174 = vmatprep.subr.bf16.mxu0 0
      %5175 = vmatpush2.bf16.msra.mxu0 0
      %5176 = vmatprep.subr.bf16.mxu0 0
      %5177 = vmatpush2.bf16.msra.mxu0 0
      %5178 = vmatprep.subr.bf16.mxu0 0
      %5179 = vmatpush2.bf16.msra.mxu0 0
      %5180 = vmatprep.subr.bf16.mxu0 0
      %5181 = vmatpush2.bf16.msra.mxu0 0
      %5182 = vmatprep.subr.bf16.mxu0 0
      %5183 = vmatpush2.bf16.msra.mxu0 %v5115
      %5184 = vmatprep.mubr.bf16.mxu0 %v5126
      %5185 = vmatmul.mubr.bf16.gmra.mxu0 %v5080
      %v5186 = vpop.f32.mrf.mxu0
      %v5187 = vadd.f32 0.0, %v5186
      %v5188 = vpop.f32.mrf.mxu0
      %v5189 = vpop.f32.mrf.mxu0
      %v5190 = vadd.f32 0.0, %v5189
      %v5191 = vpop.f32.mrf.mxu0
      %5192 = vmatprep.mubr.bf16.mxu0 %v5129
      %5193 = vmatmul.mubr.bf16.gmra.mxu0 %v5082
      %v5194 = vpop.f32.mrf.mxu0
      %v5195 = vadd.f32 0.0, %v5194
      %v5196 = vpop.f32.mrf.mxu0
      %v5197 = vpop.f32.mrf.mxu0
      %v5198 = vadd.f32 0.0, %v5197
      %v5199 = vpop.f32.mrf.mxu0
      %5200 = vmatprep.mubr.bf16.mxu0 %v5132
      %5201 = vmatmul.mubr.bf16.gmra.mxu0 %v5084
      %v5202 = vpop.f32.mrf.mxu0
      %v5203 = vadd.f32 0.0, %v5202
      %v5204 = vpop.f32.mrf.mxu0
      %v5205 = vpop.f32.mrf.mxu0
      %v5206 = vadd.f32 0.0, %v5205
      %v5207 = vpop.f32.mrf.mxu0
      %5208 = vmatprep.mubr.bf16.mxu0 %v5135
      %5209 = vmatmul.mubr.bf16.gmra.mxu0 %v5086
      %v5210 = vpop.f32.mrf.mxu0
      %v5211 = vadd.f32 0.0, %v5210
      %v5212 = vpop.f32.mrf.mxu0
      %v5213 = vpop.f32.mrf.mxu0
      %v5214 = vadd.f32 0.0, %v5213
      %v5215 = vpop.f32.mrf.mxu0
      %5216 = vmatprep.mubr.bf16.mxu0 %v5138
      %5217 = vmatmul.mubr.bf16.gmra.mxu0 %v5088
      %v5218 = vpop.f32.mrf.mxu0
      %v5219 = vadd.f32 0.0, %v5218
      %v5220 = vpop.f32.mrf.mxu0
      %v5221 = vpop.f32.mrf.mxu0
      %v5222 = vadd.f32 0.0, %v5221
      %v5223 = vpop.f32.mrf.mxu0
      %5224 = vmatprep.mubr.bf16.mxu0 %v5141
      %5225 = vmatmul.mubr.bf16.gmra.mxu0 %v5090
      %v5226 = vpop.f32.mrf.mxu0
      %v5227 = vadd.f32 0.0, %v5226
      %v5228 = vpop.f32.mrf.mxu0
      %v5229 = vpop.f32.mrf.mxu0
      %v5230 = vadd.f32 0.0, %v5229
      %v5231 = vpop.f32.mrf.mxu0
      %5232 = vmatprep.mubr.bf16.mxu0 %v5144
      %5233 = vmatmul.mubr.bf16.gmra.mxu0 %v5092
      %v5234 = vpop.f32.mrf.mxu0
      %v5235 = vadd.f32 0.0, %v5234
      %v5236 = vpop.f32.mrf.mxu0
      %v5237 = vpop.f32.mrf.mxu0
      %v5238 = vadd.f32 0.0, %v5237
      %v5239 = vpop.f32.mrf.mxu0
      %5240 = vmatprep.mubr.bf16.mxu0 %v5147
      %5241 = vmatmul.mubr.bf16.gmra.mxu0 %v5094
      %v5242 = vpop.f32.mrf.mxu0
      %v5243 = vadd.f32 0.0, %v5242
      %v5244 = vpop.f32.mrf.mxu0
      %v5245 = vpop.f32.mrf.mxu0
      %v5246 = vadd.f32 0.0, %v5245
      %v5247 = vpop.f32.mrf.mxu0
      %5248 = vmatprep.mubr.bf16.mxu0 %v5150
      %5249 = vmatmul.mubr.bf16.gmra.mxu0 %v5096
      %v5250 = vpop.f32.mrf.mxu0
      %v5251 = vadd.f32 0.0, %v5250
      %v5252 = vpop.f32.mrf.mxu0
      %v5253 = vpop.f32.mrf.mxu0
      %v5254 = vadd.f32 0.0, %v5253
      %v5255 = vpop.f32.mrf.mxu0
      %5256 = vdwg.mxu0
      %s5257 = scalar_lea.vmem %s11, 16
      %v5258 = vld [vmem:[%s5257] sm:$0xf]
      %v5259 = vld [vmem:[%s5257 + $0x4] sm:$0xf]
      %v5260 = vpack.c.bf16 %v5190, %v5187
      %v5261 = vpack.c.bf16 %v5198, %v5195
      %v5262 = vpack.c.bf16 %v5206, %v5203
      %v5263 = vpack.c.bf16 %v5214, %v5211
      %v5264 = vpack.c.bf16 %v5222, %v5219
      %v5265 = vpack.c.bf16 %v5230, %v5227
      %v5266 = vpack.c.bf16 %v5238, %v5235
      %v5267 = vpack.c.bf16 %v5246, %v5243
      %v5268 = vpack.c.bf16 %v5254, %v5251
      %v5271 = vunpack.c.l.b16 %v5258
      %v5272 = vunpack.c.l.b16 %v5259
      %v5273 = vpack.c.b16 %v5272, %v5271
      %v5276 = vsel %vm945, %v5260, 0
      %v5279 = vsel %vm945, %v5261, 0
      %v5282 = vsel %vm945, %v5262, 0
      %v5285 = vsel %vm945, %v5263, 0
      %v5288 = vsel %vm945, %v5264, 0
      %v5291 = vsel %vm945, %v5265, 0
      %v5294 = vsel %vm945, %v5266, 0
      %v5297 = vsel %vm945, %v5267, 0
      %v5300 = vsel %vm945, %v5268, 0
      %5302 = vmatprep.subr.bf16.mxu0 0
      %5303 = vmatpush1.bf16.msra.mxu0 0
      %5304 = vmatprep.subr.bf16.mxu0 0
      %5305 = vmatpush1.bf16.msra.mxu0 0
      %5306 = vmatprep.subr.bf16.mxu0 0
      %5307 = vmatpush1.bf16.msra.mxu0 0
      %5308 = vmatprep.subr.bf16.mxu0 0
      %5309 = vmatpush1.bf16.msra.mxu0 0
      %5310 = vmatprep.subr.bf16.mxu0 0
      %5311 = vmatpush1.bf16.msra.mxu0 0
      %5312 = vmatprep.subr.bf16.mxu0 0
      %5313 = vmatpush1.bf16.msra.mxu0 0
      %5314 = vmatprep.subr.bf16.mxu0 0
      %5315 = vmatpush1.bf16.msra.mxu0 0
      %5316 = vmatprep.subr.bf16.mxu0 0
      %5317 = vmatpush1.bf16.msra.mxu0 %v5273
      %5318 = vmatprep.subr.bf16.mxu0 0
      %5319 = vmatpush2.bf16.msra.mxu0 0
      %5320 = vmatprep.subr.bf16.mxu0 0
      %5321 = vmatpush2.bf16.msra.mxu0 0
      %5322 = vmatprep.subr.bf16.mxu0 0
      %5323 = vmatpush2.bf16.msra.mxu0 0
      %5324 = vmatprep.subr.bf16.mxu0 0
      %5325 = vmatpush2.bf16.msra.mxu0 0
      %5326 = vmatprep.subr.bf16.mxu0 0
      %5327 = vmatpush2.bf16.msra.mxu0 0
      %5328 = vmatprep.subr.bf16.mxu0 0
      %5329 = vmatpush2.bf16.msra.mxu0 0
      %5330 = vmatprep.subr.bf16.mxu0 0
      %5331 = vmatpush2.bf16.msra.mxu0 0
      %5332 = vmatprep.subr.bf16.mxu0 0
      %5333 = vmatpush2.bf16.msra.mxu0 0
      %5334 = vmatprep.mubr.bf16.mxu0 0
      %5335 = vmatmul.mubr.bf16.gmra.mxu0 %v5276
      %v5336 = vpop.f32.mrf.mxu0
      %v5337 = vadd.f32 0.0, %v5336
      %v5338 = vpop.f32.mrf.mxu0
      %v5339 = vpop.f32.mrf.mxu0
      %v5340 = vadd.f32 0.0, %v5339
      %v5341 = vpop.f32.mrf.mxu0
      %5342 = vmatprep.mubr.bf16.mxu0 0
      %5343 = vmatmul.mubr.bf16.gmra.mxu0 %v5279
      %v5344 = vpop.f32.mrf.mxu0
      %v5345 = vadd.f32 0.0, %v5344
      %v5346 = vpop.f32.mrf.mxu0
      %v5347 = vpop.f32.mrf.mxu0
      %v5348 = vadd.f32 0.0, %v5347
      %v5349 = vpop.f32.mrf.mxu0
      %5350 = vmatprep.mubr.bf16.mxu0 0
      %5351 = vmatmul.mubr.bf16.gmra.mxu0 %v5282
      %v5352 = vpop.f32.mrf.mxu0
      %v5353 = vadd.f32 0.0, %v5352
      %v5354 = vpop.f32.mrf.mxu0
      %v5355 = vpop.f32.mrf.mxu0
      %v5356 = vadd.f32 0.0, %v5355
      %v5357 = vpop.f32.mrf.mxu0
      %5358 = vmatprep.mubr.bf16.mxu0 0
      %5359 = vmatmul.mubr.bf16.gmra.mxu0 %v5285
      %v5360 = vpop.f32.mrf.mxu0
      %v5361 = vadd.f32 0.0, %v5360
      %v5362 = vpop.f32.mrf.mxu0
      %v5363 = vpop.f32.mrf.mxu0
      %v5364 = vadd.f32 0.0, %v5363
      %v5365 = vpop.f32.mrf.mxu0
      %5366 = vmatprep.mubr.bf16.mxu0 0
      %5367 = vmatmul.mubr.bf16.gmra.mxu0 %v5288
      %v5368 = vpop.f32.mrf.mxu0
      %v5369 = vadd.f32 0.0, %v5368
      %v5370 = vpop.f32.mrf.mxu0
      %v5371 = vpop.f32.mrf.mxu0
      %v5372 = vadd.f32 0.0, %v5371
      %v5373 = vpop.f32.mrf.mxu0
      %5374 = vmatprep.mubr.bf16.mxu0 0
      %5375 = vmatmul.mubr.bf16.gmra.mxu0 %v5291
      %v5376 = vpop.f32.mrf.mxu0
      %v5377 = vadd.f32 0.0, %v5376
      %v5378 = vpop.f32.mrf.mxu0
      %v5379 = vpop.f32.mrf.mxu0
      %v5380 = vadd.f32 0.0, %v5379
      %v5381 = vpop.f32.mrf.mxu0
      %5382 = vmatprep.mubr.bf16.mxu0 0
      %5383 = vmatmul.mubr.bf16.gmra.mxu0 %v5294
      %v5384 = vpop.f32.mrf.mxu0
      %v5385 = vadd.f32 0.0, %v5384
      %v5386 = vpop.f32.mrf.mxu0
      %v5387 = vpop.f32.mrf.mxu0
      %v5388 = vadd.f32 0.0, %v5387
      %v5389 = vpop.f32.mrf.mxu0
      %5390 = vmatprep.mubr.bf16.mxu0 0
      %5391 = vmatmul.mubr.bf16.gmra.mxu0 %v5297
      %v5392 = vpop.f32.mrf.mxu0
      %v5393 = vadd.f32 0.0, %v5392
      %v5394 = vpop.f32.mrf.mxu0
      %v5395 = vpop.f32.mrf.mxu0
      %v5396 = vadd.f32 0.0, %v5395
      %v5397 = vpop.f32.mrf.mxu0
      %5398 = vmatprep.mubr.bf16.mxu0 0
      %5399 = vmatmul.mubr.bf16.gmra.mxu0 %v5300
      %v5400 = vpop.f32.mrf.mxu0
      %v5401 = vadd.f32 0.0, %v5400
      %v5402 = vpop.f32.mrf.mxu0
      %v5403 = vpop.f32.mrf.mxu0
      %v5404 = vadd.f32 0.0, %v5403
      %v5405 = vpop.f32.mrf.mxu0
      %5406 = vdwg.mxu0
      %v5407 = vlaneseq
      %v5408 = vshrl.u32 %v5407, 7
      %v5409 = vsub.s32 0, %v5408
      %v5410 = vrot.slane %v4488, %v5409
      %v5411 = vadd.f32 %v5410, %v5337
      %v5412 = vadd.f32 %v5410, %v5340
      %v5413 = vadd.f32 %v5410, %v5345
      %v5414 = vadd.f32 %v5410, %v5348
      %v5415 = vadd.f32 %v5410, %v5353
      %v5416 = vadd.f32 %v5410, %v5356
      %v5417 = vadd.f32 %v5410, %v5361
      %v5418 = vadd.f32 %v5410, %v5364
      %v5419 = vadd.f32 %v5410, %v5369
      %v5420 = vadd.f32 %v5410, %v5372
      %v5421 = vadd.f32 %v5410, %v5377
      %v5422 = vadd.f32 %v5410, %v5380
      %v5423 = vadd.f32 %v5410, %v5385
      %v5424 = vadd.f32 %v5410, %v5388
      %v5425 = vadd.f32 %v5410, %v5393
      %v5426 = vadd.f32 %v5410, %v5396
      %v5427 = vadd.f32 %v5410, %v5401
      %v5428 = vadd.f32 %v5410, %v5404
      %5429 = vrot.lane.b32.xlu0 %v4489, 112
      %v5430 = vpop.permute.xlu0 %5429
      %5431 = vrot.lane.b32.xlu0 %v4490, 112
      %v5432 = vpop.permute.xlu0 %5431
      %5433 = vrot.lane.b32.xlu0 %v4491, 112
      %v5434 = vpop.permute.xlu0 %5433
      %5435 = vrot.lane.b32.xlu0 %v4492, 112
      %v5436 = vpop.permute.xlu0 %5435
      %5437 = vrot.lane.b32.xlu0 %v4493, 112
      %v5438 = vpop.permute.xlu0 %5437
      %5439 = vrot.lane.b32.xlu0 %v4494, 112
      %v5440 = vpop.permute.xlu0 %5439
      %5441 = vrot.lane.b32.xlu0 %v4495, 112
      %v5442 = vpop.permute.xlu0 %5441
      %5443 = vrot.lane.b32.xlu0 %v4496, 112
      %v5444 = vpop.permute.xlu0 %5443
      %5445 = vrot.lane.b32.xlu0 %v4497, 112
      %v5446 = vpop.permute.xlu0 %5445
      %5447 = vrot.lane.b32.xlu0 %v4489, 80
      %v5448 = vpop.permute.xlu0 %5447
      %5449 = vrot.lane.b32.xlu0 %v4490, 80
      %v5450 = vpop.permute.xlu0 %5449
      %5451 = vrot.lane.b32.xlu0 %v4491, 80
      %v5452 = vpop.permute.xlu0 %5451
      %5453 = vrot.lane.b32.xlu0 %v4492, 80
      %v5454 = vpop.permute.xlu0 %5453
      %5455 = vrot.lane.b32.xlu0 %v4493, 80
      %v5456 = vpop.permute.xlu0 %5455
      %5457 = vrot.lane.b32.xlu0 %v4494, 80
      %v5458 = vpop.permute.xlu0 %5457
      %5459 = vrot.lane.b32.xlu0 %v4495, 80
      %v5460 = vpop.permute.xlu0 %5459
      %5461 = vrot.lane.b32.xlu0 %v4496, 80
      %v5462 = vpop.permute.xlu0 %5461
      %5463 = vrot.lane.b32.xlu0 %v4497, 80
      %v5464 = vpop.permute.xlu0 %5463
      %v5466 = vsel %vm945, %v5430, 0
      %v5469 = vsel %vm945, %v5432, 0
      %v5472 = vsel %vm945, %v5434, 0
      %v5475 = vsel %vm945, %v5436, 0
      %v5478 = vsel %vm945, %v5438, 0
      %v5481 = vsel %vm945, %v5440, 0
      %v5484 = vsel %vm945, %v5442, 0
      %v5487 = vsel %vm945, %v5444, 0
      %v5490 = vsel %vm945, %v5446, 0
      %v5493 = vsel %vm945, %v5448, 0
      %v5496 = vsel %vm945, %v5450, 0
      %v5499 = vsel %vm945, %v5452, 0
      %v5502 = vsel %vm945, %v5454, 0
      %v5505 = vsel %vm945, %v5456, 0
      %v5508 = vsel %vm945, %v5458, 0
      %v5511 = vsel %vm945, %v5460, 0
      %v5514 = vsel %vm945, %v5462, 0
      %v5517 = vsel %vm945, %v5464, 0
      %5519 = vmatprep.subr.bf16.mxu0 0
      %5520 = vmatpush1.bf16.xpose.msra.mxu0 %v5514
      %5521 = vmatprep.subr.bf16.mxu0 0
      %5522 = vmatpush1.bf16.xpose.msra.mxu0 %v5511
      %5523 = vmatprep.subr.bf16.mxu0 0
      %5524 = vmatpush1.bf16.xpose.msra.mxu0 %v5508
      %5525 = vmatprep.subr.bf16.mxu0 0
      %5526 = vmatpush1.bf16.xpose.msra.mxu0 %v5505
      %5527 = vmatprep.subr.bf16.mxu0 0
      %5528 = vmatpush1.bf16.xpose.msra.mxu0 %v5502
      %5529 = vmatprep.subr.bf16.mxu0 0
      %5530 = vmatpush1.bf16.xpose.msra.mxu0 %v5499
      %5531 = vmatprep.subr.bf16.mxu0 0
      %5532 = vmatpush1.bf16.xpose.msra.mxu0 %v5496
      %5533 = vmatprep.subr.bf16.mxu0 0
      %5534 = vmatpush1.bf16.xpose.msra.mxu0 %v5493
      %5535 = vmatprep.subr.bf16.mxu0 0
      %5536 = vmatpush2.bf16.xpose.msra.mxu0 0
      %5537 = vmatprep.subr.bf16.mxu0 0
      %5538 = vmatpush2.bf16.xpose.msra.mxu0 0
      %5539 = vmatprep.subr.bf16.mxu0 0
      %5540 = vmatpush2.bf16.xpose.msra.mxu0 0
      %5541 = vmatprep.subr.bf16.mxu0 0
      %5542 = vmatpush2.bf16.xpose.msra.mxu0 0
      %5543 = vmatprep.subr.bf16.mxu0 0
      %5544 = vmatpush2.bf16.xpose.msra.mxu0 0
      %5545 = vmatprep.subr.bf16.mxu0 0
      %5546 = vmatpush2.bf16.xpose.msra.mxu0 0
      %5547 = vmatprep.subr.bf16.mxu0 0
      %5548 = vmatpush2.bf16.xpose.msra.mxu0 0
      %5549 = vmatprep.subr.bf16.mxu0 0
      %5550 = vmatpush2.bf16.xpose.msra.mxu0 %v5517
      %5551 = vmatprep.mubr.bf16.mxu0 0
      %5552 = vmatmul.mubr.bf16.gmra.mxu0 %v5466
      %v5553 = vpop.f32.mrf.mxu0
      %v5554 = vadd.f32 0.0, %v5553
      %v5555 = vpop.f32.mrf.mxu0
      %v5556 = vadd.f32 0.0, %v5555
      %v5557 = vpop.f32.mrf.mxu0
      %v5558 = vadd.f32 0.0, %v5557
      %v5559 = vpop.f32.mrf.mxu0
      %v5560 = vadd.f32 0.0, %v5559
      %5561 = vmatprep.mubr.bf16.mxu0 0
      %5562 = vmatmul.mubr.bf16.gmra.mxu0 %v5469
      %v5563 = vpop.f32.mrf.mxu0
      %v5564 = vadd.f32 0.0, %v5563
      %v5565 = vpop.f32.mrf.mxu0
      %v5566 = vadd.f32 0.0, %v5565
      %v5567 = vpop.f32.mrf.mxu0
      %v5568 = vadd.f32 0.0, %v5567
      %v5569 = vpop.f32.mrf.mxu0
      %v5570 = vadd.f32 0.0, %v5569
      %5571 = vmatprep.mubr.bf16.mxu0 0
      %5572 = vmatmul.mubr.bf16.gmra.mxu0 %v5472
      %v5573 = vpop.f32.mrf.mxu0
      %v5574 = vadd.f32 0.0, %v5573
      %v5575 = vpop.f32.mrf.mxu0
      %v5576 = vadd.f32 0.0, %v5575
      %v5577 = vpop.f32.mrf.mxu0
      %v5578 = vadd.f32 0.0, %v5577
      %v5579 = vpop.f32.mrf.mxu0
      %v5580 = vadd.f32 0.0, %v5579
      %5581 = vmatprep.mubr.bf16.mxu0 0
      %5582 = vmatmul.mubr.bf16.gmra.mxu0 %v5475
      %v5583 = vpop.f32.mrf.mxu0
      %v5584 = vadd.f32 0.0, %v5583
      %v5585 = vpop.f32.mrf.mxu0
      %v5586 = vadd.f32 0.0, %v5585
      %v5587 = vpop.f32.mrf.mxu0
      %v5588 = vadd.f32 0.0, %v5587
      %v5589 = vpop.f32.mrf.mxu0
      %v5590 = vadd.f32 0.0, %v5589
      %5591 = vmatprep.mubr.bf16.mxu0 0
      %5592 = vmatmul.mubr.bf16.gmra.mxu0 %v5478
      %v5593 = vpop.f32.mrf.mxu0
      %v5594 = vadd.f32 0.0, %v5593
      %v5595 = vpop.f32.mrf.mxu0
      %v5596 = vadd.f32 0.0, %v5595
      %v5597 = vpop.f32.mrf.mxu0
      %v5598 = vadd.f32 0.0, %v5597
      %v5599 = vpop.f32.mrf.mxu0
      %v5600 = vadd.f32 0.0, %v5599
      %5601 = vmatprep.mubr.bf16.mxu0 0
      %5602 = vmatmul.mubr.bf16.gmra.mxu0 %v5481
      %v5603 = vpop.f32.mrf.mxu0
      %v5604 = vadd.f32 0.0, %v5603
      %v5605 = vpop.f32.mrf.mxu0
      %v5606 = vadd.f32 0.0, %v5605
      %v5607 = vpop.f32.mrf.mxu0
      %v5608 = vadd.f32 0.0, %v5607
      %v5609 = vpop.f32.mrf.mxu0
      %v5610 = vadd.f32 0.0, %v5609
      %5611 = vmatprep.mubr.bf16.mxu0 0
      %5612 = vmatmul.mubr.bf16.gmra.mxu0 %v5484
      %v5613 = vpop.f32.mrf.mxu0
      %v5614 = vadd.f32 0.0, %v5613
      %v5615 = vpop.f32.mrf.mxu0
      %v5616 = vadd.f32 0.0, %v5615
      %v5617 = vpop.f32.mrf.mxu0
      %v5618 = vadd.f32 0.0, %v5617
      %v5619 = vpop.f32.mrf.mxu0
      %v5620 = vadd.f32 0.0, %v5619
      %5621 = vmatprep.mubr.bf16.mxu0 0
      %5622 = vmatmul.mubr.bf16.gmra.mxu0 %v5487
      %v5623 = vpop.f32.mrf.mxu0
      %v5624 = vadd.f32 0.0, %v5623
      %v5625 = vpop.f32.mrf.mxu0
      %v5626 = vadd.f32 0.0, %v5625
      %v5627 = vpop.f32.mrf.mxu0
      %v5628 = vadd.f32 0.0, %v5627
      %v5629 = vpop.f32.mrf.mxu0
      %v5630 = vadd.f32 0.0, %v5629
      %5631 = vmatprep.mubr.bf16.mxu0 0
      %5632 = vmatmul.mubr.bf16.gmra.mxu0 %v5490
      %v5633 = vpop.f32.mrf.mxu0
      %v5634 = vadd.f32 0.0, %v5633
      %v5635 = vpop.f32.mrf.mxu0
      %v5636 = vadd.f32 0.0, %v5635
      %v5637 = vpop.f32.mrf.mxu0
      %v5638 = vadd.f32 0.0, %v5637
      %v5639 = vpop.f32.mrf.mxu0
      %v5640 = vadd.f32 0.0, %v5639
      %5641 = vdwg.mxu0
      %v5642 = vmul.f32 %v5554, 0.25
      %v5643 = vmul.f32 %v5556, 0.25
      %v5644 = vmul.f32 %v5558, 0.25
      %v5645 = vmul.f32 %v5560, 0.25
      %v5646 = vmul.f32 %v5564, 0.25
      %v5647 = vmul.f32 %v5566, 0.25
      %v5648 = vmul.f32 %v5568, 0.25
      %v5649 = vmul.f32 %v5570, 0.25
      %v5650 = vmul.f32 %v5574, 0.25
      %v5651 = vmul.f32 %v5576, 0.25
      %v5652 = vmul.f32 %v5578, 0.25
      %v5653 = vmul.f32 %v5580, 0.25
      %v5654 = vmul.f32 %v5584, 0.25
      %v5655 = vmul.f32 %v5586, 0.25
      %v5656 = vmul.f32 %v5588, 0.25
      %v5657 = vmul.f32 %v5590, 0.25
      %v5658 = vmul.f32 %v5594, 0.25
      %v5659 = vmul.f32 %v5596, 0.25
      %v5660 = vmul.f32 %v5598, 0.25
      %v5661 = vmul.f32 %v5600, 0.25
      %v5662 = vmul.f32 %v5604, 0.25
      %v5663 = vmul.f32 %v5606, 0.25
      %v5664 = vmul.f32 %v5608, 0.25
      %v5665 = vmul.f32 %v5610, 0.25
      %v5666 = vmul.f32 %v5614, 0.25
      %v5667 = vmul.f32 %v5616, 0.25
      %v5668 = vmul.f32 %v5618, 0.25
      %v5669 = vmul.f32 %v5620, 0.25
      %v5670 = vmul.f32 %v5624, 0.25
      %v5671 = vmul.f32 %v5626, 0.25
      %v5672 = vmul.f32 %v5628, 0.25
      %v5673 = vmul.f32 %v5630, 0.25
      %v5674 = vmul.f32 %v5634, 0.25
      %v5675 = vmul.f32 %v5636, 0.25
      %v5676 = vmul.f32 %v5638, 0.25
      %v5677 = vmul.f32 %v5640, 0.25
      %v5678 = vadd.f32 %v5642, %v1288
      %v5679 = vadd.f32 %v5643, %v1289
      %v5680 = vadd.f32 %v5644, %v1290
      %v5681 = vadd.f32 %v5645, %v1291
      %v5682 = vadd.f32 %v5646, %v1292
      %v5683 = vadd.f32 %v5647, %v1293
      %v5684 = vadd.f32 %v5648, %v1294
      %v5685 = vadd.f32 %v5649, %v1295
      %v5686 = vadd.f32 %v5650, %v1296
      %v5687 = vadd.f32 %v5651, %v1297
      %v5688 = vadd.f32 %v5652, %v1298
      %v5689 = vadd.f32 %v5653, %v1299
      %v5690 = vadd.f32 %v5654, %v1300
      %v5691 = vadd.f32 %v5655, %v1301
      %v5692 = vadd.f32 %v5656, %v1302
      %v5693 = vadd.f32 %v5657, %v1303
      %v5694 = vadd.f32 %v5658, %v1304
      %v5695 = vadd.f32 %v5659, %v1305
      %v5696 = vadd.f32 %v5660, %v1306
      %v5697 = vadd.f32 %v5661, %v1307
      %v5698 = vadd.f32 %v5662, %v1308
      %v5699 = vadd.f32 %v5663, %v1309
      %v5700 = vadd.f32 %v5664, %v1310
      %v5701 = vadd.f32 %v5665, %v1311
      %v5702 = vadd.f32 %v5666, %v1312
      %v5703 = vadd.f32 %v5667, %v1313
      %v5704 = vadd.f32 %v5668, %v1314
      %v5705 = vadd.f32 %v5669, %v1315
      %v5706 = vadd.f32 %v5670, %v1316
      %v5707 = vadd.f32 %v5671, %v1317
      %v5708 = vadd.f32 %v5672, %v1318
      %v5709 = vadd.f32 %v5673, %v1319
      %v5710 = vadd.f32 %v5674, %v1320
      %v5711 = vadd.f32 %v5675, %v1321
      %v5712 = vadd.f32 %v5676, %v1322
      %v5713 = vadd.f32 %v5677, %v1323
      %v5714 = vsel %vm945, %v5679, -inf
      %v5715 = vmax.f32 %v5678, %v5714
      %5716 = vmax.xlane.f32.xlu0 %v5715
      %v5717 = vpop.xlane.xlu0 %5716
      %v5718 = vsel %vm945, %v5681, -inf
      %v5719 = vmax.f32 %v5680, %v5718
      %5720 = vmax.xlane.f32.xlu0 %v5719
      %v5721 = vpop.xlane.xlu0 %5720
      %v5722 = vsel %vm945, %v5683, -inf
      %v5723 = vmax.f32 %v5682, %v5722
      %5724 = vmax.xlane.f32.xlu0 %v5723
      %v5725 = vpop.xlane.xlu0 %5724
      %v5726 = vsel %vm945, %v5685, -inf
      %v5727 = vmax.f32 %v5684, %v5726
      %5728 = vmax.xlane.f32.xlu0 %v5727
      %v5729 = vpop.xlane.xlu0 %5728
      %v5730 = vsel %vm945, %v5687, -inf
      %v5731 = vmax.f32 %v5686, %v5730
      %5732 = vmax.xlane.f32.xlu0 %v5731
      %v5733 = vpop.xlane.xlu0 %5732
      %v5734 = vsel %vm945, %v5689, -inf
      %v5735 = vmax.f32 %v5688, %v5734
      %5736 = vmax.xlane.f32.xlu0 %v5735
      %v5737 = vpop.xlane.xlu0 %5736
      %v5738 = vsel %vm945, %v5691, -inf
      %v5739 = vmax.f32 %v5690, %v5738
      %5740 = vmax.xlane.f32.xlu0 %v5739
      %v5741 = vpop.xlane.xlu0 %5740
      %v5742 = vsel %vm945, %v5693, -inf
      %v5743 = vmax.f32 %v5692, %v5742
      %5744 = vmax.xlane.f32.xlu0 %v5743
      %v5745 = vpop.xlane.xlu0 %5744
      %v5746 = vsel %vm945, %v5695, -inf
      %v5747 = vmax.f32 %v5694, %v5746
      %5748 = vmax.xlane.f32.xlu0 %v5747
      %v5749 = vpop.xlane.xlu0 %5748
      %v5750 = vsel %vm945, %v5697, -inf
      %v5751 = vmax.f32 %v5696, %v5750
      %5752 = vmax.xlane.f32.xlu0 %v5751
      %v5753 = vpop.xlane.xlu0 %5752
      %v5754 = vsel %vm945, %v5699, -inf
      %v5755 = vmax.f32 %v5698, %v5754
      %5756 = vmax.xlane.f32.xlu0 %v5755
      %v5757 = vpop.xlane.xlu0 %5756
      %v5758 = vsel %vm945, %v5701, -inf
      %v5759 = vmax.f32 %v5700, %v5758
      %5760 = vmax.xlane.f32.xlu0 %v5759
      %v5761 = vpop.xlane.xlu0 %5760
      %v5762 = vsel %vm945, %v5703, -inf
      %v5763 = vmax.f32 %v5702, %v5762
      %5764 = vmax.xlane.f32.xlu0 %v5763
      %v5765 = vpop.xlane.xlu0 %5764
      %v5766 = vsel %vm945, %v5705, -inf
      %v5767 = vmax.f32 %v5704, %v5766
      %5768 = vmax.xlane.f32.xlu0 %v5767
      %v5769 = vpop.xlane.xlu0 %5768
      %v5770 = vsel %vm945, %v5707, -inf
      %v5771 = vmax.f32 %v5706, %v5770
      %5772 = vmax.xlane.f32.xlu0 %v5771
      %v5773 = vpop.xlane.xlu0 %5772
      %v5774 = vsel %vm945, %v5709, -inf
      %v5775 = vmax.f32 %v5708, %v5774
      %5776 = vmax.xlane.f32.xlu0 %v5775
      %v5777 = vpop.xlane.xlu0 %5776
      %v5778 = vsel %vm945, %v5711, -inf
      %v5779 = vmax.f32 %v5710, %v5778
      %5780 = vmax.xlane.f32.xlu0 %v5779
      %v5781 = vpop.xlane.xlu0 %5780
      %v5782 = vsel %vm945, %v5713, -inf
      %v5783 = vmax.f32 %v5712, %v5782
      %5784 = vmax.xlane.f32.xlu0 %v5783
      %v5785 = vpop.xlane.xlu0 %5784
      %v5786 = vsub.f32 %v5678, %v5717
      %v5787 = vsub.f32 %v5679, %v5717
      %v5788 = vsub.f32 %v5680, %v5721
      %v5789 = vsub.f32 %v5681, %v5721
      %v5790 = vsub.f32 %v5682, %v5725
      %v5791 = vsub.f32 %v5683, %v5725
      %v5792 = vsub.f32 %v5684, %v5729
      %v5793 = vsub.f32 %v5685, %v5729
      %v5794 = vsub.f32 %v5686, %v5733
      %v5795 = vsub.f32 %v5687, %v5733
      %v5796 = vsub.f32 %v5688, %v5737
      %v5797 = vsub.f32 %v5689, %v5737
      %v5798 = vsub.f32 %v5690, %v5741
      %v5799 = vsub.f32 %v5691, %v5741
      %v5800 = vsub.f32 %v5692, %v5745
      %v5801 = vsub.f32 %v5693, %v5745
      %v5802 = vsub.f32 %v5694, %v5749
      %v5803 = vsub.f32 %v5695, %v5749
      %v5804 = vsub.f32 %v5696, %v5753
      %v5805 = vsub.f32 %v5697, %v5753
      %v5806 = vsub.f32 %v5698, %v5757
      %v5807 = vsub.f32 %v5699, %v5757
      %v5808 = vsub.f32 %v5700, %v5761
      %v5809 = vsub.f32 %v5701, %v5761
      %v5810 = vsub.f32 %v5702, %v5765
      %v5811 = vsub.f32 %v5703, %v5765
      %v5812 = vsub.f32 %v5704, %v5769
      %v5813 = vsub.f32 %v5705, %v5769
      %v5814 = vsub.f32 %v5706, %v5773
      %v5815 = vsub.f32 %v5707, %v5773
      %v5816 = vsub.f32 %v5708, %v5777
      %v5817 = vsub.f32 %v5709, %v5777
      %v5818 = vsub.f32 %v5710, %v5781
      %v5819 = vsub.f32 %v5711, %v5781
      %v5820 = vsub.f32 %v5712, %v5785
      %v5821 = vsub.f32 %v5713, %v5785
      %v5822 = vmul.f32 %v5786, 1.442695
      %v5823 = vpow.pop %v5822
      %v5824 = vmul.f32 %v5787, 1.442695
      %v5825 = vpow.pop %v5824
      %v5826 = vmul.f32 %v5788, 1.442695
      %v5827 = vpow.pop %v5826
      %v5828 = vmul.f32 %v5789, 1.442695
      %v5829 = vpow.pop %v5828
      %v5830 = vmul.f32 %v5790, 1.442695
      %v5831 = vpow.pop %v5830
      %v5832 = vmul.f32 %v5791, 1.442695
      %v5833 = vpow.pop %v5832
      %v5834 = vmul.f32 %v5792, 1.442695
      %v5835 = vpow.pop %v5834
      %v5836 = vmul.f32 %v5793, 1.442695
      %v5837 = vpow.pop %v5836
      %v5838 = vmul.f32 %v5794, 1.442695
      %v5839 = vpow.pop %v5838
      %v5840 = vmul.f32 %v5795, 1.442695
      %v5841 = vpow.pop %v5840
      %v5842 = vmul.f32 %v5796, 1.442695
      %v5843 = vpow.pop %v5842
      %v5844 = vmul.f32 %v5797, 1.442695
      %v5845 = vpow.pop %v5844
      %v5846 = vmul.f32 %v5798, 1.442695
      %v5847 = vpow.pop %v5846
      %v5848 = vmul.f32 %v5799, 1.442695
      %v5849 = vpow.pop %v5848
      %v5850 = vmul.f32 %v5800, 1.442695
      %v5851 = vpow.pop %v5850
      %v5852 = vmul.f32 %v5801, 1.442695
      %v5853 = vpow.pop %v5852
      %v5854 = vmul.f32 %v5802, 1.442695
      %v5855 = vpow.pop %v5854
      %v5856 = vmul.f32 %v5803, 1.442695
      %v5857 = vpow.pop %v5856
      %v5858 = vmul.f32 %v5804, 1.442695
      %v5859 = vpow.pop %v5858
      %v5860 = vmul.f32 %v5805, 1.442695
      %v5861 = vpow.pop %v5860
      %v5862 = vmul.f32 %v5806, 1.442695
      %v5863 = vpow.pop %v5862
      %v5864 = vmul.f32 %v5807, 1.442695
      %v5865 = vpow.pop %v5864
      %v5866 = vmul.f32 %v5808, 1.442695
      %v5867 = vpow.pop %v5866
      %v5868 = vmul.f32 %v5809, 1.442695
      %v5869 = vpow.pop %v5868
      %v5870 = vmul.f32 %v5810, 1.442695
      %v5871 = vpow.pop %v5870
      %v5872 = vmul.f32 %v5811, 1.442695
      %v5873 = vpow.pop %v5872
      %v5874 = vmul.f32 %v5812, 1.442695
      %v5875 = vpow.pop %v5874
      %v5876 = vmul.f32 %v5813, 1.442695
      %v5877 = vpow.pop %v5876
      %v5878 = vmul.f32 %v5814, 1.442695
      %v5879 = vpow.pop %v5878
      %v5880 = vmul.f32 %v5815, 1.442695
      %v5881 = vpow.pop %v5880
      %v5882 = vmul.f32 %v5816, 1.442695
      %v5883 = vpow.pop %v5882
      %v5884 = vmul.f32 %v5817, 1.442695
      %v5885 = vpow.pop %v5884
      %v5886 = vmul.f32 %v5818, 1.442695
      %v5887 = vpow.pop %v5886
      %v5888 = vmul.f32 %v5819, 1.442695
      %v5889 = vpow.pop %v5888
      %v5890 = vmul.f32 %v5820, 1.442695
      %v5891 = vpow.pop %v5890
      %v5892 = vmul.f32 %v5821, 1.442695
      %v5893 = vpow.pop %v5892
      %v5894 = vsel %vm945, %v5825, 0.0
      %v5895 = vadd.f32 %v5823, %v5894
      %5896 = vadd.xlane.f32.xlu0 %v5895
      %v5897 = vpop.xlane.xlu0 %5896
      %v5898 = vsel %vm945, %v5829, 0.0
      %v5899 = vadd.f32 %v5827, %v5898
      %5900 = vadd.xlane.f32.xlu0 %v5899
      %v5901 = vpop.xlane.xlu0 %5900
      %v5902 = vsel %vm945, %v5833, 0.0
      %v5903 = vadd.f32 %v5831, %v5902
      %5904 = vadd.xlane.f32.xlu0 %v5903
      %v5905 = vpop.xlane.xlu0 %5904
      %v5906 = vsel %vm945, %v5837, 0.0
      %v5907 = vadd.f32 %v5835, %v5906
      %5908 = vadd.xlane.f32.xlu0 %v5907
      %v5909 = vpop.xlane.xlu0 %5908
      %v5910 = vsel %vm945, %v5841, 0.0
      %v5911 = vadd.f32 %v5839, %v5910
      %5912 = vadd.xlane.f32.xlu0 %v5911
      %v5913 = vpop.xlane.xlu0 %5912
      %v5914 = vsel %vm945, %v5845, 0.0
      %v5915 = vadd.f32 %v5843, %v5914
      %5916 = vadd.xlane.f32.xlu0 %v5915
      %v5917 = vpop.xlane.xlu0 %5916
      %v5918 = vsel %vm945, %v5849, 0.0
      %v5919 = vadd.f32 %v5847, %v5918
      %5920 = vadd.xlane.f32.xlu0 %v5919
      %v5921 = vpop.xlane.xlu0 %5920
      %v5922 = vsel %vm945, %v5853, 0.0
      %v5923 = vadd.f32 %v5851, %v5922
      %5924 = vadd.xlane.f32.xlu0 %v5923
      %v5925 = vpop.xlane.xlu0 %5924
      %v5926 = vsel %vm945, %v5857, 0.0
      %v5927 = vadd.f32 %v5855, %v5926
      %5928 = vadd.xlane.f32.xlu0 %v5927
      %v5929 = vpop.xlane.xlu0 %5928
      %v5930 = vsel %vm945, %v5861, 0.0
      %v5931 = vadd.f32 %v5859, %v5930
      %5932 = vadd.xlane.f32.xlu0 %v5931
      %v5933 = vpop.xlane.xlu0 %5932
      %v5934 = vsel %vm945, %v5865, 0.0
      %v5935 = vadd.f32 %v5863, %v5934
      %5936 = vadd.xlane.f32.xlu0 %v5935
      %v5937 = vpop.xlane.xlu0 %5936
      %v5938 = vsel %vm945, %v5869, 0.0
      %v5939 = vadd.f32 %v5867, %v5938
      %5940 = vadd.xlane.f32.xlu0 %v5939
      %v5941 = vpop.xlane.xlu0 %5940
      %v5942 = vsel %vm945, %v5873, 0.0
      %v5943 = vadd.f32 %v5871, %v5942
      %5944 = vadd.xlane.f32.xlu0 %v5943
      %v5945 = vpop.xlane.xlu0 %5944
      %v5946 = vsel %vm945, %v5877, 0.0
      %v5947 = vadd.f32 %v5875, %v5946
      %5948 = vadd.xlane.f32.xlu0 %v5947
      %v5949 = vpop.xlane.xlu0 %5948
      %v5950 = vsel %vm945, %v5881, 0.0
      %v5951 = vadd.f32 %v5879, %v5950
      %5952 = vadd.xlane.f32.xlu0 %v5951
      %v5953 = vpop.xlane.xlu0 %5952
      %v5954 = vsel %vm945, %v5885, 0.0
      %v5955 = vadd.f32 %v5883, %v5954
      %5956 = vadd.xlane.f32.xlu0 %v5955
      %v5957 = vpop.xlane.xlu0 %5956
      %v5958 = vsel %vm945, %v5889, 0.0
      %v5959 = vadd.f32 %v5887, %v5958
      %5960 = vadd.xlane.f32.xlu0 %v5959
      %v5961 = vpop.xlane.xlu0 %5960
      %v5962 = vsel %vm945, %v5893, 0.0
      %v5963 = vadd.f32 %v5891, %v5962
      %5964 = vadd.xlane.f32.xlu0 %v5963
      %v5965 = vpop.xlane.xlu0 %5964
      %v5966 = vrcp.pop %v5897
      %v5967 = vmul.f32 %v5823, %v5966
      %v5968 = vmul.f32 %v5825, %v5966
      %v5969 = vrcp.pop %v5901
      %v5970 = vmul.f32 %v5827, %v5969
      %v5971 = vmul.f32 %v5829, %v5969
      %v5972 = vrcp.pop %v5905
      %v5973 = vmul.f32 %v5831, %v5972
      %v5974 = vmul.f32 %v5833, %v5972
      %v5975 = vrcp.pop %v5909
      %v5976 = vmul.f32 %v5835, %v5975
      %v5977 = vmul.f32 %v5837, %v5975
      %v5978 = vrcp.pop %v5913
      %v5979 = vmul.f32 %v5839, %v5978
      %v5980 = vmul.f32 %v5841, %v5978
      %v5981 = vrcp.pop %v5917
      %v5982 = vmul.f32 %v5843, %v5981
      %v5983 = vmul.f32 %v5845, %v5981
      %v5984 = vrcp.pop %v5921
      %v5985 = vmul.f32 %v5847, %v5984
      %v5986 = vmul.f32 %v5849, %v5984
      %v5987 = vrcp.pop %v5925
      %v5988 = vmul.f32 %v5851, %v5987
      %v5989 = vmul.f32 %v5853, %v5987
      %v5990 = vrcp.pop %v5929
      %v5991 = vmul.f32 %v5855, %v5990
      %v5992 = vmul.f32 %v5857, %v5990
      %v5993 = vrcp.pop %v5933
      %v5994 = vmul.f32 %v5859, %v5993
      %v5995 = vmul.f32 %v5861, %v5993
      %v5996 = vrcp.pop %v5937
      %v5997 = vmul.f32 %v5863, %v5996
      %v5998 = vmul.f32 %v5865, %v5996
      %v5999 = vrcp.pop %v5941
      %v6000 = vmul.f32 %v5867, %v5999
      %v6001 = vmul.f32 %v5869, %v5999
      %v6002 = vrcp.pop %v5945
      %v6003 = vmul.f32 %v5871, %v6002
      %v6004 = vmul.f32 %v5873, %v6002
      %v6005 = vrcp.pop %v5949
      %v6006 = vmul.f32 %v5875, %v6005
      %v6007 = vmul.f32 %v5877, %v6005
      %v6008 = vrcp.pop %v5953
      %v6009 = vmul.f32 %v5879, %v6008
      %v6010 = vmul.f32 %v5881, %v6008
      %v6011 = vrcp.pop %v5957
      %v6012 = vmul.f32 %v5883, %v6011
      %v6013 = vmul.f32 %v5885, %v6011
      %v6014 = vrcp.pop %v5961
      %v6015 = vmul.f32 %v5887, %v6014
      %v6016 = vmul.f32 %v5889, %v6014
      %v6017 = vrcp.pop %v5965
      %v6018 = vmul.f32 %v5891, %v6017
      %v6019 = vmul.f32 %v5893, %v6017
      %v6020 = vpack.c.bf16 %v5970, %v5967
      %v6021 = vpack.c.bf16 %v5971, %v5968
      %v6022 = vpack.c.bf16 %v5976, %v5973
      %v6023 = vpack.c.bf16 %v5977, %v5974
      %v6024 = vpack.c.bf16 %v5982, %v5979
      %v6025 = vpack.c.bf16 %v5983, %v5980
      %v6026 = vpack.c.bf16 %v5988, %v5985
      %v6027 = vpack.c.bf16 %v5989, %v5986
      %v6028 = vpack.c.bf16 %v5994, %v5991
      %v6029 = vpack.c.bf16 %v5995, %v5992
      %v6030 = vpack.c.bf16 %v6000, %v5997
      %v6031 = vpack.c.bf16 %v6001, %v5998
      %v6032 = vpack.c.bf16 %v6006, %v6003
      %v6033 = vpack.c.bf16 %v6007, %v6004
      %v6034 = vpack.c.bf16 %v6012, %v6009
      %v6035 = vpack.c.bf16 %v6013, %v6010
      %v6036 = vpack.c.bf16 %v6018, %v6015
      %v6037 = vpack.c.bf16 %v6019, %v6016
      %6038 = vrot.lane.b32.xlu0 %v4489, 48
      %v6039 = vpop.permute.xlu0 %6038
      %6040 = vrot.lane.b32.xlu0 %v4490, 48
      %v6041 = vpop.permute.xlu0 %6040
      %6042 = vrot.lane.b32.xlu0 %v4491, 48
      %v6043 = vpop.permute.xlu0 %6042
      %6044 = vrot.lane.b32.xlu0 %v4492, 48
      %v6045 = vpop.permute.xlu0 %6044
      %6046 = vrot.lane.b32.xlu0 %v4493, 48
      %v6047 = vpop.permute.xlu0 %6046
      %6048 = vrot.lane.b32.xlu0 %v4494, 48
      %v6049 = vpop.permute.xlu0 %6048
      %6050 = vrot.lane.b32.xlu0 %v4495, 48
      %v6051 = vpop.permute.xlu0 %6050
      %6052 = vrot.lane.b32.xlu0 %v4496, 48
      %v6053 = vpop.permute.xlu0 %6052
      %6054 = vrot.lane.b32.xlu0 %v4497, 48
      %v6055 = vpop.permute.xlu0 %6054
      %v6066 = vsel %vm945, %v6021, 0
      %v6069 = vsel %vm945, %v6023, 0
      %v6072 = vsel %vm945, %v6025, 0
      %v6075 = vsel %vm945, %v6027, 0
      %v6078 = vsel %vm945, %v6029, 0
      %v6081 = vsel %vm945, %v6031, 0
      %v6084 = vsel %vm945, %v6033, 0
      %v6087 = vsel %vm945, %v6035, 0
      %v6090 = vsel %vm945, %v6037, 0
      %6092 = vmatprep.subr.bf16.mxu0 0
      %6093 = vmatpush1.bf16.msra.mxu0 %v6053
      %6094 = vmatprep.subr.bf16.mxu0 0
      %6095 = vmatpush1.bf16.msra.mxu0 %v6051
      %6096 = vmatprep.subr.bf16.mxu0 0
      %6097 = vmatpush1.bf16.msra.mxu0 %v6049
      %6098 = vmatprep.subr.bf16.mxu0 0
      %6099 = vmatpush1.bf16.msra.mxu0 %v6047
      %6100 = vmatprep.subr.bf16.mxu0 0
      %6101 = vmatpush1.bf16.msra.mxu0 %v6045
      %6102 = vmatprep.subr.bf16.mxu0 0
      %6103 = vmatpush1.bf16.msra.mxu0 %v6043
      %6104 = vmatprep.subr.bf16.mxu0 0
      %6105 = vmatpush1.bf16.msra.mxu0 %v6041
      %6106 = vmatprep.subr.bf16.mxu0 0
      %6107 = vmatpush1.bf16.msra.mxu0 %v6039
      %6108 = vmatprep.subr.bf16.mxu0 0
      %6109 = vmatpush2.bf16.msra.mxu0 0
      %6110 = vmatprep.subr.bf16.mxu0 0
      %6111 = vmatpush2.bf16.msra.mxu0 0
      %6112 = vmatprep.subr.bf16.mxu0 0
      %6113 = vmatpush2.bf16.msra.mxu0 0
      %6114 = vmatprep.subr.bf16.mxu0 0
      %6115 = vmatpush2.bf16.msra.mxu0 0
      %6116 = vmatprep.subr.bf16.mxu0 0
      %6117 = vmatpush2.bf16.msra.mxu0 0
      %6118 = vmatprep.subr.bf16.mxu0 0
      %6119 = vmatpush2.bf16.msra.mxu0 0
      %6120 = vmatprep.subr.bf16.mxu0 0
      %6121 = vmatpush2.bf16.msra.mxu0 0
      %6122 = vmatprep.subr.bf16.mxu0 0
      %6123 = vmatpush2.bf16.msra.mxu0 %v6055
      %6124 = vmatprep.mubr.bf16.mxu0 %v6066
      %6125 = vmatmul.mubr.bf16.gmra.mxu0 %v6020
      %v6126 = vpop.f32.mrf.mxu0
      %v6127 = vadd.f32 0.0, %v6126
      %v6128 = vpop.f32.mrf.mxu0
      %v6129 = vpop.f32.mrf.mxu0
      %v6130 = vadd.f32 0.0, %v6129
      %v6131 = vpop.f32.mrf.mxu0
      %6132 = vmatprep.mubr.bf16.mxu0 %v6069
      %6133 = vmatmul.mubr.bf16.gmra.mxu0 %v6022
      %v6134 = vpop.f32.mrf.mxu0
      %v6135 = vadd.f32 0.0, %v6134
      %v6136 = vpop.f32.mrf.mxu0
      %v6137 = vpop.f32.mrf.mxu0
      %v6138 = vadd.f32 0.0, %v6137
      %v6139 = vpop.f32.mrf.mxu0
      %6140 = vmatprep.mubr.bf16.mxu0 %v6072
      %6141 = vmatmul.mubr.bf16.gmra.mxu0 %v6024
      %v6142 = vpop.f32.mrf.mxu0
      %v6143 = vadd.f32 0.0, %v6142
      %v6144 = vpop.f32.mrf.mxu0
      %v6145 = vpop.f32.mrf.mxu0
      %v6146 = vadd.f32 0.0, %v6145
      %v6147 = vpop.f32.mrf.mxu0
      %6148 = vmatprep.mubr.bf16.mxu0 %v6075
      %6149 = vmatmul.mubr.bf16.gmra.mxu0 %v6026
      %v6150 = vpop.f32.mrf.mxu0
      %v6151 = vadd.f32 0.0, %v6150
      %v6152 = vpop.f32.mrf.mxu0
      %v6153 = vpop.f32.mrf.mxu0
      %v6154 = vadd.f32 0.0, %v6153
      %v6155 = vpop.f32.mrf.mxu0
      %6156 = vmatprep.mubr.bf16.mxu0 %v6078
      %6157 = vmatmul.mubr.bf16.gmra.mxu0 %v6028
      %v6158 = vpop.f32.mrf.mxu0
      %v6159 = vadd.f32 0.0, %v6158
      %v6160 = vpop.f32.mrf.mxu0
      %v6161 = vpop.f32.mrf.mxu0
      %v6162 = vadd.f32 0.0, %v6161
      %v6163 = vpop.f32.mrf.mxu0
      %6164 = vmatprep.mubr.bf16.mxu0 %v6081
      %6165 = vmatmul.mubr.bf16.gmra.mxu0 %v6030
      %v6166 = vpop.f32.mrf.mxu0
      %v6167 = vadd.f32 0.0, %v6166
      %v6168 = vpop.f32.mrf.mxu0
      %v6169 = vpop.f32.mrf.mxu0
      %v6170 = vadd.f32 0.0, %v6169
      %v6171 = vpop.f32.mrf.mxu0
      %6172 = vmatprep.mubr.bf16.mxu0 %v6084
      %6173 = vmatmul.mubr.bf16.gmra.mxu0 %v6032
      %v6174 = vpop.f32.mrf.mxu0
      %v6175 = vadd.f32 0.0, %v6174
      %v6176 = vpop.f32.mrf.mxu0
      %v6177 = vpop.f32.mrf.mxu0
      %v6178 = vadd.f32 0.0, %v6177
      %v6179 = vpop.f32.mrf.mxu0
      %6180 = vmatprep.mubr.bf16.mxu0 %v6087
      %6181 = vmatmul.mubr.bf16.gmra.mxu0 %v6034
      %v6182 = vpop.f32.mrf.mxu0
      %v6183 = vadd.f32 0.0, %v6182
      %v6184 = vpop.f32.mrf.mxu0
      %v6185 = vpop.f32.mrf.mxu0
      %v6186 = vadd.f32 0.0, %v6185
      %v6187 = vpop.f32.mrf.mxu0
      %6188 = vmatprep.mubr.bf16.mxu0 %v6090
      %6189 = vmatmul.mubr.bf16.gmra.mxu0 %v6036
      %v6190 = vpop.f32.mrf.mxu0
      %v6191 = vadd.f32 0.0, %v6190
      %v6192 = vpop.f32.mrf.mxu0
      %v6193 = vpop.f32.mrf.mxu0
      %v6194 = vadd.f32 0.0, %v6193
      %v6195 = vpop.f32.mrf.mxu0
      %6196 = vdwg.mxu0
      %v6197 = vld [vmem:[%s5257 + $0x8] sm:$0xf]
      %v6198 = vld [vmem:[%s5257 + $0xc] sm:$0xf]
      %v6199 = vpack.c.bf16 %v6130, %v6127
      %v6200 = vpack.c.bf16 %v6138, %v6135
      %v6201 = vpack.c.bf16 %v6146, %v6143
      %v6202 = vpack.c.bf16 %v6154, %v6151
      %v6203 = vpack.c.bf16 %v6162, %v6159
      %v6204 = vpack.c.bf16 %v6170, %v6167
      %v6205 = vpack.c.bf16 %v6178, %v6175
      %v6206 = vpack.c.bf16 %v6186, %v6183
      %v6207 = vpack.c.bf16 %v6194, %v6191
      %v6210 = vunpack.c.l.b16 %v6197
      %v6211 = vunpack.c.l.b16 %v6198
      %v6212 = vpack.c.b16 %v6211, %v6210
      %v6215 = vsel %vm945, %v6199, 0
      %v6218 = vsel %vm945, %v6200, 0
      %v6221 = vsel %vm945, %v6201, 0
      %v6224 = vsel %vm945, %v6202, 0
      %v6227 = vsel %vm945, %v6203, 0
      %v6230 = vsel %vm945, %v6204, 0
      %v6233 = vsel %vm945, %v6205, 0
      %v6236 = vsel %vm945, %v6206, 0
      %v6239 = vsel %vm945, %v6207, 0
      %6241 = vmatprep.subr.bf16.mxu0 0
      %6242 = vmatpush1.bf16.msra.mxu0 0
      %6243 = vmatprep.subr.bf16.mxu0 0
      %6244 = vmatpush1.bf16.msra.mxu0 0
      %6245 = vmatprep.subr.bf16.mxu0 0
      %6246 = vmatpush1.bf16.msra.mxu0 0
      %6247 = vmatprep.subr.bf16.mxu0 0
      %6248 = vmatpush1.bf16.msra.mxu0 0
      %6249 = vmatprep.subr.bf16.mxu0 0
      %6250 = vmatpush1.bf16.msra.mxu0 0
      %6251 = vmatprep.subr.bf16.mxu0 0
      %6252 = vmatpush1.bf16.msra.mxu0 0
      %6253 = vmatprep.subr.bf16.mxu0 0
      %6254 = vmatpush1.bf16.msra.mxu0 0
      %6255 = vmatprep.subr.bf16.mxu0 0
      %6256 = vmatpush1.bf16.msra.mxu0 %v6212
      %6257 = vmatprep.subr.bf16.mxu0 0
      %6258 = vmatpush2.bf16.msra.mxu0 0
      %6259 = vmatprep.subr.bf16.mxu0 0
      %6260 = vmatpush2.bf16.msra.mxu0 0
      %6261 = vmatprep.subr.bf16.mxu0 0
      %6262 = vmatpush2.bf16.msra.mxu0 0
      %6263 = vmatprep.subr.bf16.mxu0 0
      %6264 = vmatpush2.bf16.msra.mxu0 0
      %6265 = vmatprep.subr.bf16.mxu0 0
      %6266 = vmatpush2.bf16.msra.mxu0 0
      %6267 = vmatprep.subr.bf16.mxu0 0
      %6268 = vmatpush2.bf16.msra.mxu0 0
      %6269 = vmatprep.subr.bf16.mxu0 0
      %6270 = vmatpush2.bf16.msra.mxu0 0
      %6271 = vmatprep.subr.bf16.mxu0 0
      %6272 = vmatpush2.bf16.msra.mxu0 0
      %6273 = vmatprep.mubr.bf16.mxu0 0
      %6274 = vmatmul.mubr.bf16.gmra.mxu0 %v6215
      %v6275 = vpop.f32.mrf.mxu0
      %v6276 = vadd.f32 0.0, %v6275
      %v6277 = vpop.f32.mrf.mxu0
      %v6278 = vpop.f32.mrf.mxu0
      %v6279 = vadd.f32 0.0, %v6278
      %v6280 = vpop.f32.mrf.mxu0
      %6281 = vmatprep.mubr.bf16.mxu0 0
      %6282 = vmatmul.mubr.bf16.gmra.mxu0 %v6218
      %v6283 = vpop.f32.mrf.mxu0
      %v6284 = vadd.f32 0.0, %v6283
      %v6285 = vpop.f32.mrf.mxu0
      %v6286 = vpop.f32.mrf.mxu0
      %v6287 = vadd.f32 0.0, %v6286
      %v6288 = vpop.f32.mrf.mxu0
      %6289 = vmatprep.mubr.bf16.mxu0 0
      %6290 = vmatmul.mubr.bf16.gmra.mxu0 %v6221
      %v6291 = vpop.f32.mrf.mxu0
      %v6292 = vadd.f32 0.0, %v6291
      %v6293 = vpop.f32.mrf.mxu0
      %v6294 = vpop.f32.mrf.mxu0
      %v6295 = vadd.f32 0.0, %v6294
      %v6296 = vpop.f32.mrf.mxu0
      %6297 = vmatprep.mubr.bf16.mxu0 0
      %6298 = vmatmul.mubr.bf16.gmra.mxu0 %v6224
      %v6299 = vpop.f32.mrf.mxu0
      %v6300 = vadd.f32 0.0, %v6299
      %v6301 = vpop.f32.mrf.mxu0
      %v6302 = vpop.f32.mrf.mxu0
      %v6303 = vadd.f32 0.0, %v6302
      %v6304 = vpop.f32.mrf.mxu0
      %6305 = vmatprep.mubr.bf16.mxu0 0
      %6306 = vmatmul.mubr.bf16.gmra.mxu0 %v6227
      %v6307 = vpop.f32.mrf.mxu0
      %v6308 = vadd.f32 0.0, %v6307
      %v6309 = vpop.f32.mrf.mxu0
      %v6310 = vpop.f32.mrf.mxu0
      %v6311 = vadd.f32 0.0, %v6310
      %v6312 = vpop.f32.mrf.mxu0
      %6313 = vmatprep.mubr.bf16.mxu0 0
      %6314 = vmatmul.mubr.bf16.gmra.mxu0 %v6230
      %v6315 = vpop.f32.mrf.mxu0
      %v6316 = vadd.f32 0.0, %v6315
      %v6317 = vpop.f32.mrf.mxu0
      %v6318 = vpop.f32.mrf.mxu0
      %v6319 = vadd.f32 0.0, %v6318
      %v6320 = vpop.f32.mrf.mxu0
      %6321 = vmatprep.mubr.bf16.mxu0 0
      %6322 = vmatmul.mubr.bf16.gmra.mxu0 %v6233
      %v6323 = vpop.f32.mrf.mxu0
      %v6324 = vadd.f32 0.0, %v6323
      %v6325 = vpop.f32.mrf.mxu0
      %v6326 = vpop.f32.mrf.mxu0
      %v6327 = vadd.f32 0.0, %v6326
      %v6328 = vpop.f32.mrf.mxu0
      %6329 = vmatprep.mubr.bf16.mxu0 0
      %6330 = vmatmul.mubr.bf16.gmra.mxu0 %v6236
      %v6331 = vpop.f32.mrf.mxu0
      %v6332 = vadd.f32 0.0, %v6331
      %v6333 = vpop.f32.mrf.mxu0
      %v6334 = vpop.f32.mrf.mxu0
      %v6335 = vadd.f32 0.0, %v6334
      %v6336 = vpop.f32.mrf.mxu0
      %6337 = vmatprep.mubr.bf16.mxu0 0
      %6338 = vmatmul.mubr.bf16.gmra.mxu0 %v6239
      %v6339 = vpop.f32.mrf.mxu0
      %v6340 = vadd.f32 0.0, %v6339
      %v6341 = vpop.f32.mrf.mxu0
      %v6342 = vpop.f32.mrf.mxu0
      %v6343 = vadd.f32 0.0, %v6342
      %v6344 = vpop.f32.mrf.mxu0
      %6345 = vdwg.mxu0
      %v6346 = vadd.f32 %v5411, %v6276
      %v6347 = vadd.f32 %v5412, %v6279
      %v6348 = vadd.f32 %v5413, %v6284
      %v6349 = vadd.f32 %v5414, %v6287
      %v6350 = vadd.f32 %v5415, %v6292
      %v6351 = vadd.f32 %v5416, %v6295
      %v6352 = vadd.f32 %v5417, %v6300
      %v6353 = vadd.f32 %v5418, %v6303
      %v6354 = vadd.f32 %v5419, %v6308
      %v6355 = vadd.f32 %v5420, %v6311
      %v6356 = vadd.f32 %v5421, %v6316
      %v6357 = vadd.f32 %v5422, %v6319
      %v6358 = vadd.f32 %v5423, %v6324
      %v6359 = vadd.f32 %v5424, %v6327
      %v6360 = vadd.f32 %v5425, %v6332
      %v6361 = vadd.f32 %v5426, %v6335
      %v6362 = vadd.f32 %v5427, %v6340
      %v6363 = vadd.f32 %v5428, %v6343
      %v6364 = vadd.f32 %v6346, %v4303
      %v6365 = vadd.f32 %v6347, %v4304
      %v6366 = vadd.f32 %v6348, %v4305
      %v6367 = vadd.f32 %v6349, %v4306
      %v6368 = vadd.f32 %v6350, %v4307
      %v6369 = vadd.f32 %v6351, %v4308
      %v6370 = vadd.f32 %v6352, %v4309
      %v6371 = vadd.f32 %v6353, %v4310
      %v6372 = vadd.f32 %v6354, %v4311
      %v6373 = vadd.f32 %v6355, %v4312
      %v6374 = vadd.f32 %v6356, %v4313
      %v6375 = vadd.f32 %v6357, %v4314
      %v6376 = vadd.f32 %v6358, %v4315
      %v6377 = vadd.f32 %v6359, %v4316
      %v6378 = vadd.f32 %v6360, %v4317
      %v6379 = vadd.f32 %v6361, %v4318
      %v6380 = vadd.f32 %v6362, %v4319
      %v6381 = vadd.f32 %v6363, %v4320
      %v6382 = vld [vmem:[%s4487 + $0x1] sm:$0x1]
      %v6383 = vld [vmem:[%s4487 + $0x2] sm:$0x1]
      %v6384 = vsel %vm1249, %v6364, 0.0
      %6385 = vadd.xlane.f32.xlu0 %v6384
      %v6386 = vpop.xlane.xlu0 %6385
      %v6387 = vsel %vm1249, %v6365, 0.0
      %6388 = vadd.xlane.f32.xlu0 %v6387
      %v6389 = vpop.xlane.xlu0 %6388
      %v6390 = vsel %vm1249, %v6366, 0.0
      %6391 = vadd.xlane.f32.xlu0 %v6390
      %v6392 = vpop.xlane.xlu0 %6391
      %v6393 = vsel %vm1249, %v6367, 0.0
      %6394 = vadd.xlane.f32.xlu0 %v6393
      %v6395 = vpop.xlane.xlu0 %6394
      %v6396 = vsel %vm1249, %v6368, 0.0
      %6397 = vadd.xlane.f32.xlu0 %v6396
      %v6398 = vpop.xlane.xlu0 %6397
      %v6399 = vsel %vm1249, %v6369, 0.0
      %6400 = vadd.xlane.f32.xlu0 %v6399
      %v6401 = vpop.xlane.xlu0 %6400
      %v6402 = vsel %vm1249, %v6370, 0.0
      %6403 = vadd.xlane.f32.xlu0 %v6402
      %v6404 = vpop.xlane.xlu0 %6403
      %v6405 = vsel %vm1249, %v6371, 0.0
      %6406 = vadd.xlane.f32.xlu0 %v6405
      %v6407 = vpop.xlane.xlu0 %6406
      %v6408 = vsel %vm1249, %v6372, 0.0
      %6409 = vadd.xlane.f32.xlu0 %v6408
      %v6410 = vpop.xlane.xlu0 %6409
      %v6411 = vsel %vm1249, %v6373, 0.0
      %6412 = vadd.xlane.f32.xlu0 %v6411
      %v6413 = vpop.xlane.xlu0 %6412
      %v6414 = vsel %vm1249, %v6374, 0.0
      %6415 = vadd.xlane.f32.xlu0 %v6414
      %v6416 = vpop.xlane.xlu0 %6415
      %v6417 = vsel %vm1249, %v6375, 0.0
      %6418 = vadd.xlane.f32.xlu0 %v6417
      %v6419 = vpop.xlane.xlu0 %6418
      %v6420 = vsel %vm1249, %v6376, 0.0
      %6421 = vadd.xlane.f32.xlu0 %v6420
      %v6422 = vpop.xlane.xlu0 %6421
      %v6423 = vsel %vm1249, %v6377, 0.0
      %6424 = vadd.xlane.f32.xlu0 %v6423
      %v6425 = vpop.xlane.xlu0 %6424
      %v6426 = vsel %vm1249, %v6378, 0.0
      %6427 = vadd.xlane.f32.xlu0 %v6426
      %v6428 = vpop.xlane.xlu0 %6427
      %v6429 = vsel %vm1249, %v6379, 0.0
      %6430 = vadd.xlane.f32.xlu0 %v6429
      %v6431 = vpop.xlane.xlu0 %6430
      %v6432 = vsel %vm1249, %v6380, 0.0
      %6433 = vadd.xlane.f32.xlu0 %v6432
      %v6434 = vpop.xlane.xlu0 %6433
      %v6435 = vsel %vm1249, %v6381, 0.0
      %6436 = vadd.xlane.f32.xlu0 %v6435
      %v6437 = vpop.xlane.xlu0 %6436
      %v6438 = vmul.f32 %v6386, %v3437
      %v6439 = vmul.f32 %v6389, %v3437
      %v6440 = vmul.f32 %v6392, %v3437
      %v6441 = vmul.f32 %v6395, %v3437
      %v6442 = vmul.f32 %v6398, %v3437
      %v6443 = vmul.f32 %v6401, %v3437
      %v6444 = vmul.f32 %v6404, %v3437
      %v6445 = vmul.f32 %v6407, %v3437
      %v6446 = vmul.f32 %v6410, %v3437
      %v6447 = vmul.f32 %v6413, %v3437
      %v6448 = vmul.f32 %v6416, %v3437
      %v6449 = vmul.f32 %v6419, %v3437
      %v6450 = vmul.f32 %v6422, %v3437
      %v6451 = vmul.f32 %v6425, %v3437
      %v6452 = vmul.f32 %v6428, %v3437
      %v6453 = vmul.f32 %v6431, %v3437
      %v6454 = vmul.f32 %v6434, %v3437
      %v6455 = vmul.f32 %v6437, %v3437
      %v6456 = vsub.f32 %v6364, %v6438
      %v6457 = vsub.f32 %v6365, %v6439
      %v6458 = vsub.f32 %v6366, %v6440
      %v6459 = vsub.f32 %v6367, %v6441
      %v6460 = vsub.f32 %v6368, %v6442
      %v6461 = vsub.f32 %v6369, %v6443
      %v6462 = vsub.f32 %v6370, %v6444
      %v6463 = vsub.f32 %v6371, %v6445
      %v6464 = vsub.f32 %v6372, %v6446
      %v6465 = vsub.f32 %v6373, %v6447
      %v6466 = vsub.f32 %v6374, %v6448
      %v6467 = vsub.f32 %v6375, %v6449
      %v6468 = vsub.f32 %v6376, %v6450
      %v6469 = vsub.f32 %v6377, %v6451
      %v6470 = vsub.f32 %v6378, %v6452
      %v6471 = vsub.f32 %v6379, %v6453
      %v6472 = vsub.f32 %v6380, %v6454
      %v6473 = vsub.f32 %v6381, %v6455
      %v6474 = vmul.f32 %v6456, %v6456
      %v6475 = vmul.f32 %v6457, %v6457
      %v6476 = vmul.f32 %v6458, %v6458
      %v6477 = vmul.f32 %v6459, %v6459
      %v6478 = vmul.f32 %v6460, %v6460
      %v6479 = vmul.f32 %v6461, %v6461
      %v6480 = vmul.f32 %v6462, %v6462
      %v6481 = vmul.f32 %v6463, %v6463
      %v6482 = vmul.f32 %v6464, %v6464
      %v6483 = vmul.f32 %v6465, %v6465
      %v6484 = vmul.f32 %v6466, %v6466
      %v6485 = vmul.f32 %v6467, %v6467
      %v6486 = vmul.f32 %v6468, %v6468
      %v6487 = vmul.f32 %v6469, %v6469
      %v6488 = vmul.f32 %v6470, %v6470
      %v6489 = vmul.f32 %v6471, %v6471
      %v6490 = vmul.f32 %v6472, %v6472
      %v6491 = vmul.f32 %v6473, %v6473
      %v6492 = vsel %vm1249, %v6474, 0.0
      %6493 = vadd.xlane.f32.xlu0 %v6492
      %v6494 = vpop.xlane.xlu0 %6493
      %v6495 = vsel %vm1249, %v6475, 0.0
      %6496 = vadd.xlane.f32.xlu0 %v6495
      %v6497 = vpop.xlane.xlu0 %6496
      %v6498 = vsel %vm1249, %v6476, 0.0
      %6499 = vadd.xlane.f32.xlu0 %v6498
      %v6500 = vpop.xlane.xlu0 %6499
      %v6501 = vsel %vm1249, %v6477, 0.0
      %6502 = vadd.xlane.f32.xlu0 %v6501
      %v6503 = vpop.xlane.xlu0 %6502
      %v6504 = vsel %vm1249, %v6478, 0.0
      %6505 = vadd.xlane.f32.xlu0 %v6504
      %v6506 = vpop.xlane.xlu0 %6505
      %v6507 = vsel %vm1249, %v6479, 0.0
      %6508 = vadd.xlane.f32.xlu0 %v6507
      %v6509 = vpop.xlane.xlu0 %6508
      %v6510 = vsel %vm1249, %v6480, 0.0
      %6511 = vadd.xlane.f32.xlu0 %v6510
      %v6512 = vpop.xlane.xlu0 %6511
      %v6513 = vsel %vm1249, %v6481, 0.0
      %6514 = vadd.xlane.f32.xlu0 %v6513
      %v6515 = vpop.xlane.xlu0 %6514
      %v6516 = vsel %vm1249, %v6482, 0.0
      %6517 = vadd.xlane.f32.xlu0 %v6516
      %v6518 = vpop.xlane.xlu0 %6517
      %v6519 = vsel %vm1249, %v6483, 0.0
      %6520 = vadd.xlane.f32.xlu0 %v6519
      %v6521 = vpop.xlane.xlu0 %6520
      %v6522 = vsel %vm1249, %v6484, 0.0
      %6523 = vadd.xlane.f32.xlu0 %v6522
      %v6524 = vpop.xlane.xlu0 %6523
      %v6525 = vsel %vm1249, %v6485, 0.0
      %6526 = vadd.xlane.f32.xlu0 %v6525
      %v6527 = vpop.xlane.xlu0 %6526
      %v6528 = vsel %vm1249, %v6486, 0.0
      %6529 = vadd.xlane.f32.xlu0 %v6528
      %v6530 = vpop.xlane.xlu0 %6529
      %v6531 = vsel %vm1249, %v6487, 0.0
      %6532 = vadd.xlane.f32.xlu0 %v6531
      %v6533 = vpop.xlane.xlu0 %6532
      %v6534 = vsel %vm1249, %v6488, 0.0
      %6535 = vadd.xlane.f32.xlu0 %v6534
      %v6536 = vpop.xlane.xlu0 %6535
      %v6537 = vsel %vm1249, %v6489, 0.0
      %6538 = vadd.xlane.f32.xlu0 %v6537
      %v6539 = vpop.xlane.xlu0 %6538
      %v6540 = vsel %vm1249, %v6490, 0.0
      %6541 = vadd.xlane.f32.xlu0 %v6540
      %v6542 = vpop.xlane.xlu0 %6541
      %v6543 = vsel %vm1249, %v6491, 0.0
      %6544 = vadd.xlane.f32.xlu0 %v6543
      %v6545 = vpop.xlane.xlu0 %6544
      %v6546 = vmul.f32 %v6494, %v3437
      %v6547 = vmul.f32 %v6497, %v3437
      %v6548 = vmul.f32 %v6500, %v3437
      %v6549 = vmul.f32 %v6503, %v3437
      %v6550 = vmul.f32 %v6506, %v3437
      %v6551 = vmul.f32 %v6509, %v3437
      %v6552 = vmul.f32 %v6512, %v3437
      %v6553 = vmul.f32 %v6515, %v3437
      %v6554 = vmul.f32 %v6518, %v3437
      %v6555 = vmul.f32 %v6521, %v3437
      %v6556 = vmul.f32 %v6524, %v3437
      %v6557 = vmul.f32 %v6527, %v3437
      %v6558 = vmul.f32 %v6530, %v3437
      %v6559 = vmul.f32 %v6533, %v3437
      %v6560 = vmul.f32 %v6536, %v3437
      %v6561 = vmul.f32 %v6539, %v3437
      %v6562 = vmul.f32 %v6542, %v3437
      %v6563 = vmul.f32 %v6545, %v3437
      %v6564 = vadd.f32 %v6546, 1e-05
      %v6565 = vadd.f32 %v6547, 1e-05
      %v6566 = vadd.f32 %v6548, 1e-05
      %v6567 = vadd.f32 %v6549, 1e-05
      %v6568 = vadd.f32 %v6550, 1e-05
      %v6569 = vadd.f32 %v6551, 1e-05
      %v6570 = vadd.f32 %v6552, 1e-05
      %v6571 = vadd.f32 %v6553, 1e-05
      %v6572 = vadd.f32 %v6554, 1e-05
      %v6573 = vadd.f32 %v6555, 1e-05
      %v6574 = vadd.f32 %v6556, 1e-05
      %v6575 = vadd.f32 %v6557, 1e-05
      %v6576 = vadd.f32 %v6558, 1e-05
      %v6577 = vadd.f32 %v6559, 1e-05
      %v6578 = vadd.f32 %v6560, 1e-05
      %v6579 = vadd.f32 %v6561, 1e-05
      %v6580 = vadd.f32 %v6562, 1e-05
      %v6581 = vadd.f32 %v6563, 1e-05
      %v6582 = vrsqrt.pop %v6564
      %v6583 = vrsqrt.pop %v6565
      %v6584 = vrsqrt.pop %v6566
      %v6585 = vrsqrt.pop %v6567
      %v6586 = vrsqrt.pop %v6568
      %v6587 = vrsqrt.pop %v6569
      %v6588 = vrsqrt.pop %v6570
      %v6589 = vrsqrt.pop %v6571
      %v6590 = vrsqrt.pop %v6572
      %v6591 = vrsqrt.pop %v6573
      %v6592 = vrsqrt.pop %v6574
      %v6593 = vrsqrt.pop %v6575
      %v6594 = vrsqrt.pop %v6576
      %v6595 = vrsqrt.pop %v6577
      %v6596 = vrsqrt.pop %v6578
      %v6597 = vrsqrt.pop %v6579
      %v6598 = vrsqrt.pop %v6580
      %v6599 = vrsqrt.pop %v6581
      %v6600 = vmul.f32 %v6456, %v6582
      %v6601 = vmul.f32 %v6457, %v6583
      %v6602 = vmul.f32 %v6458, %v6584
      %v6603 = vmul.f32 %v6459, %v6585
      %v6604 = vmul.f32 %v6460, %v6586
      %v6605 = vmul.f32 %v6461, %v6587
      %v6606 = vmul.f32 %v6462, %v6588
      %v6607 = vmul.f32 %v6463, %v6589
      %v6608 = vmul.f32 %v6464, %v6590
      %v6609 = vmul.f32 %v6465, %v6591
      %v6610 = vmul.f32 %v6466, %v6592
      %v6611 = vmul.f32 %v6467, %v6593
      %v6612 = vmul.f32 %v6468, %v6594
      %v6613 = vmul.f32 %v6469, %v6595
      %v6614 = vmul.f32 %v6470, %v6596
      %v6615 = vmul.f32 %v6471, %v6597
      %v6616 = vmul.f32 %v6472, %v6598
      %v6617 = vmul.f32 %v6473, %v6599
      %v6618 = vlaneseq
      %v6619 = vshrl.u32 %v6618, 7
      %v6620 = vsub.s32 0, %v6619
      %v6621 = vrot.slane %v6382, %v6620
      %v6622 = vmul.f32 %v6600, %v6621
      %v6623 = vmul.f32 %v6601, %v6621
      %v6624 = vmul.f32 %v6602, %v6621
      %v6625 = vmul.f32 %v6603, %v6621
      %v6626 = vmul.f32 %v6604, %v6621
      %v6627 = vmul.f32 %v6605, %v6621
      %v6628 = vmul.f32 %v6606, %v6621
      %v6629 = vmul.f32 %v6607, %v6621
      %v6630 = vmul.f32 %v6608, %v6621
      %v6631 = vmul.f32 %v6609, %v6621
      %v6632 = vmul.f32 %v6610, %v6621
      %v6633 = vmul.f32 %v6611, %v6621
      %v6634 = vmul.f32 %v6612, %v6621
      %v6635 = vmul.f32 %v6613, %v6621
      %v6636 = vmul.f32 %v6614, %v6621
      %v6637 = vmul.f32 %v6615, %v6621
      %v6638 = vmul.f32 %v6616, %v6621
      %v6639 = vmul.f32 %v6617, %v6621
      %v6640 = vlaneseq
      %v6641 = vshrl.u32 %v6640, 7
      %v6642 = vsub.s32 0, %v6641
      %v6643 = vrot.slane %v6383, %v6642
      %v6644 = vadd.f32 %v6622, %v6643
      %v6645 = vadd.f32 %v6623, %v6643
      %v6646 = vadd.f32 %v6624, %v6643
      %v6647 = vadd.f32 %v6625, %v6643
      %v6648 = vadd.f32 %v6626, %v6643
      %v6649 = vadd.f32 %v6627, %v6643
      %v6650 = vadd.f32 %v6628, %v6643
      %v6651 = vadd.f32 %v6629, %v6643
      %v6652 = vadd.f32 %v6630, %v6643
      %v6653 = vadd.f32 %v6631, %v6643
      %v6654 = vadd.f32 %v6632, %v6643
      %v6655 = vadd.f32 %v6633, %v6643
      %v6656 = vadd.f32 %v6634, %v6643
      %v6657 = vadd.f32 %v6635, %v6643
      %v6658 = vadd.f32 %v6636, %v6643
      %v6659 = vadd.f32 %v6637, %v6643
      %v6660 = vadd.f32 %v6638, %v6643
      %v6661 = vadd.f32 %v6639, %v6643
      %s6662 = scalar_lea.vmem %s12, 16
      %v6663 = vld [vmem:[%s6662] sm:$0xf]
      %v6664 = vld [vmem:[%s6662 + $0x4] sm:$0xf]
      %v6665 = vld [vmem:[%s6662 + $0x8] sm:$0xf]
      %v6666 = vld [vmem:[%s6662 + $0xc] sm:$0xf]
      %v6667 = vpack.c.bf16 %v6645, %v6644
      %v6668 = vpack.c.bf16 %v6647, %v6646
      %v6669 = vpack.c.bf16 %v6649, %v6648
      %v6670 = vpack.c.bf16 %v6651, %v6650
      %v6671 = vpack.c.bf16 %v6653, %v6652
      %v6672 = vpack.c.bf16 %v6655, %v6654
      %v6673 = vpack.c.bf16 %v6657, %v6656
      %v6674 = vpack.c.bf16 %v6659, %v6658
      %v6675 = vpack.c.bf16 %v6661, %v6660
      %s6676 = scalar_lea.vmem %s13, 1
      %v6677 = vld [vmem:[%s6676] sm:$0x1]
      %v6679 = vlaneseq
      %v6680 = vshrl.u32 %v6679, 7
      %v6681 = vsub.s32 0, %v6680
      %v6682 = vrot.slane %v6677, %v6681
      %v6688 = vunpack.c.l.b16 %v6663
      %v6689 = vunpack.c.l.b16 %v6664
      %v6690 = vunpack.c.l.b16 %v6665
      %v6691 = vunpack.c.l.b16 %v6666
      %v6692 = vpack.c.b16 %v6689, %v6688
      %v6693 = vpack.c.b16 %v6691, %v6690
      %v6697 = vsel %vm1249, %v6667, 0
      %v6700 = vsel %vm1249, %v6668, 0
      %v6703 = vsel %vm1249, %v6669, 0
      %v6706 = vsel %vm1249, %v6670, 0
      %v6709 = vsel %vm1249, %v6671, 0
      %v6712 = vsel %vm1249, %v6672, 0
      %v6715 = vsel %vm1249, %v6673, 0
      %v6718 = vsel %vm1249, %v6674, 0
      %v6721 = vsel %vm1249, %v6675, 0
      %6723 = vmatprep.subr.bf16.mxu0 0
      %6724 = vmatpush1.bf16.msra.mxu0 0
      %6725 = vmatprep.subr.bf16.mxu0 0
      %6726 = vmatpush1.bf16.msra.mxu0 0
      %6727 = vmatprep.subr.bf16.mxu0 0
      %6728 = vmatpush1.bf16.msra.mxu0 0
      %6729 = vmatprep.subr.bf16.mxu0 0
      %6730 = vmatpush1.bf16.msra.mxu0 0
      %6731 = vmatprep.subr.bf16.mxu0 0
      %6732 = vmatpush1.bf16.msra.mxu0 0
      %6733 = vmatprep.subr.bf16.mxu0 0
      %6734 = vmatpush1.bf16.msra.mxu0 0
      %6735 = vmatprep.subr.bf16.mxu0 0
      %6736 = vmatpush1.bf16.msra.mxu0 %v6693
      %6737 = vmatprep.subr.bf16.mxu0 0
      %6738 = vmatpush1.bf16.msra.mxu0 %v6692
      %6739 = vmatprep.subr.bf16.mxu0 0
      %6740 = vmatpush2.bf16.msra.mxu0 0
      %6741 = vmatprep.subr.bf16.mxu0 0
      %6742 = vmatpush2.bf16.msra.mxu0 0
      %6743 = vmatprep.subr.bf16.mxu0 0
      %6744 = vmatpush2.bf16.msra.mxu0 0
      %6745 = vmatprep.subr.bf16.mxu0 0
      %6746 = vmatpush2.bf16.msra.mxu0 0
      %6747 = vmatprep.subr.bf16.mxu0 0
      %6748 = vmatpush2.bf16.msra.mxu0 0
      %6749 = vmatprep.subr.bf16.mxu0 0
      %6750 = vmatpush2.bf16.msra.mxu0 0
      %6751 = vmatprep.subr.bf16.mxu0 0
      %6752 = vmatpush2.bf16.msra.mxu0 0
      %6753 = vmatprep.subr.bf16.mxu0 0
      %6754 = vmatpush2.bf16.msra.mxu0 0
      %6755 = vmatprep.mubr.bf16.mxu0 0
      %6756 = vmatmul.mubr.bf16.gmra.mxu0 %v6697
      %v6757 = vpop.f32.mrf.mxu0
      %v6758 = vadd.f32 %v6682, %v6757
      %v6759 = vpop.f32.mrf.mxu0
      %v6760 = vpop.f32.mrf.mxu0
      %v6761 = vadd.f32 %v6682, %v6760
      %v6762 = vpop.f32.mrf.mxu0
      %6763 = vmatprep.mubr.bf16.mxu0 0
      %6764 = vmatmul.mubr.bf16.gmra.mxu0 %v6700
      %v6765 = vpop.f32.mrf.mxu0
      %v6766 = vadd.f32 %v6682, %v6765
      %v6767 = vpop.f32.mrf.mxu0
      %v6768 = vpop.f32.mrf.mxu0
      %v6769 = vadd.f32 %v6682, %v6768
      %v6770 = vpop.f32.mrf.mxu0
      %6771 = vmatprep.mubr.bf16.mxu0 0
      %6772 = vmatmul.mubr.bf16.gmra.mxu0 %v6703
      %v6773 = vpop.f32.mrf.mxu0
      %v6774 = vadd.f32 %v6682, %v6773
      %v6775 = vpop.f32.mrf.mxu0
      %v6776 = vpop.f32.mrf.mxu0
      %v6777 = vadd.f32 %v6682, %v6776
      %v6778 = vpop.f32.mrf.mxu0
      %6779 = vmatprep.mubr.bf16.mxu0 0
      %6780 = vmatmul.mubr.bf16.gmra.mxu0 %v6706
      %v6781 = vpop.f32.mrf.mxu0
      %v6782 = vadd.f32 %v6682, %v6781
      %v6783 = vpop.f32.mrf.mxu0
      %v6784 = vpop.f32.mrf.mxu0
      %v6785 = vadd.f32 %v6682, %v6784
      %v6786 = vpop.f32.mrf.mxu0
      %6787 = vmatprep.mubr.bf16.mxu0 0
      %6788 = vmatmul.mubr.bf16.gmra.mxu0 %v6709
      %v6789 = vpop.f32.mrf.mxu0
      %v6790 = vadd.f32 %v6682, %v6789
      %v6791 = vpop.f32.mrf.mxu0
      %v6792 = vpop.f32.mrf.mxu0
      %v6793 = vadd.f32 %v6682, %v6792
      %v6794 = vpop.f32.mrf.mxu0
      %6795 = vmatprep.mubr.bf16.mxu0 0
      %6796 = vmatmul.mubr.bf16.gmra.mxu0 %v6712
      %v6797 = vpop.f32.mrf.mxu0
      %v6798 = vadd.f32 %v6682, %v6797
      %v6799 = vpop.f32.mrf.mxu0
      %v6800 = vpop.f32.mrf.mxu0
      %v6801 = vadd.f32 %v6682, %v6800
      %v6802 = vpop.f32.mrf.mxu0
      %6803 = vmatprep.mubr.bf16.mxu0 0
      %6804 = vmatmul.mubr.bf16.gmra.mxu0 %v6715
      %v6805 = vpop.f32.mrf.mxu0
      %v6806 = vadd.f32 %v6682, %v6805
      %v6807 = vpop.f32.mrf.mxu0
      %v6808 = vpop.f32.mrf.mxu0
      %v6809 = vadd.f32 %v6682, %v6808
      %v6810 = vpop.f32.mrf.mxu0
      %6811 = vmatprep.mubr.bf16.mxu0 0
      %6812 = vmatmul.mubr.bf16.gmra.mxu0 %v6718
      %v6813 = vpop.f32.mrf.mxu0
      %v6814 = vadd.f32 %v6682, %v6813
      %v6815 = vpop.f32.mrf.mxu0
      %v6816 = vpop.f32.mrf.mxu0
      %v6817 = vadd.f32 %v6682, %v6816
      %v6818 = vpop.f32.mrf.mxu0
      %6819 = vmatprep.mubr.bf16.mxu0 0
      %6820 = vmatmul.mubr.bf16.gmra.mxu0 %v6721
      %v6821 = vpop.f32.mrf.mxu0
      %v6822 = vadd.f32 %v6682, %v6821
      %v6823 = vpop.f32.mrf.mxu0
      %v6824 = vpop.f32.mrf.mxu0
      %v6825 = vadd.f32 %v6682, %v6824
      %v6826 = vpop.f32.mrf.mxu0
      %6827 = vdwg.mxu0
      %v6828 = vmax.f32 %v6758, 0.0
      %v6829 = vmax.f32 %v6761, 0.0
      %v6830 = vmax.f32 %v6766, 0.0
      %v6831 = vmax.f32 %v6769, 0.0
      %v6832 = vmax.f32 %v6774, 0.0
      %v6833 = vmax.f32 %v6777, 0.0
      %v6834 = vmax.f32 %v6782, 0.0
      %v6835 = vmax.f32 %v6785, 0.0
      %v6836 = vmax.f32 %v6790, 0.0
      %v6837 = vmax.f32 %v6793, 0.0
      %v6838 = vmax.f32 %v6798, 0.0
      %v6839 = vmax.f32 %v6801, 0.0
      %v6840 = vmax.f32 %v6806, 0.0
      %v6841 = vmax.f32 %v6809, 0.0
      %v6842 = vmax.f32 %v6814, 0.0
      %v6843 = vmax.f32 %v6817, 0.0
      %v6844 = vmax.f32 %v6822, 0.0
      %v6845 = vmax.f32 %v6825, 0.0
      %s6846 = scalar_lea.vmem %s14, 32
      %v6847 = vld [vmem:[%s6846] sm:$0xf]
      %v6848 = vld [vmem:[%s6846 + $0x4] sm:$0xf]
      %v6849 = vld [vmem:[%s6846 + $0x8] sm:$0xf]
      %v6850 = vld [vmem:[%s6846 + $0xc] sm:$0xf]
      %v6851 = vld [vmem:[%s6846 + $0x10] sm:$0xf]
      %v6852 = vld [vmem:[%s6846 + $0x14] sm:$0xf]
      %v6853 = vld [vmem:[%s6846 + $0x18] sm:$0xf]
      %v6854 = vld [vmem:[%s6846 + $0x1c] sm:$0xf]
      %v6855 = vpack.c.bf16 %v6829, %v6828
      %v6856 = vpack.c.bf16 %v6831, %v6830
      %v6857 = vpack.c.bf16 %v6833, %v6832
      %v6858 = vpack.c.bf16 %v6835, %v6834
      %v6859 = vpack.c.bf16 %v6837, %v6836
      %v6860 = vpack.c.bf16 %v6839, %v6838
      %v6861 = vpack.c.bf16 %v6841, %v6840
      %v6862 = vpack.c.bf16 %v6843, %v6842
      %v6863 = vpack.c.bf16 %v6845, %v6844
      %v6864 = vld [vmem:[%s4487 + $0x3] sm:$0x1]
      %v6865 = vlaneseq
      %v6866 = vshrl.u32 %v6865, 7
      %v6867 = vsub.s32 0, %v6866
      %v6868 = vrot.slane %v6864, %v6867
      %v6877 = vunpack.c.l.b16 %v6847
      %v6878 = vunpack.c.l.b16 %v6848
      %v6879 = vunpack.c.l.b16 %v6849
      %v6880 = vunpack.c.l.b16 %v6850
      %v6881 = vunpack.c.l.b16 %v6851
      %v6882 = vunpack.c.l.b16 %v6852
      %v6883 = vunpack.c.l.b16 %v6853
      %v6884 = vunpack.c.l.b16 %v6854
      %v6885 = vpack.c.b16 %v6878, %v6877
      %v6886 = vpack.c.b16 %v6880, %v6879
      %v6887 = vpack.c.b16 %v6882, %v6881
      %v6888 = vpack.c.b16 %v6884, %v6883
      %v6894 = vsel %vm3890, %v6855, 0
      %v6897 = vsel %vm3890, %v6856, 0
      %v6900 = vsel %vm3890, %v6857, 0
      %v6903 = vsel %vm3890, %v6858, 0
      %v6906 = vsel %vm3890, %v6859, 0
      %v6909 = vsel %vm3890, %v6860, 0
      %v6912 = vsel %vm3890, %v6861, 0
      %v6915 = vsel %vm3890, %v6862, 0
      %v6918 = vsel %vm3890, %v6863, 0
      %6920 = vmatprep.subr.bf16.mxu0 0
      %6921 = vmatpush1.bf16.msra.mxu0 0
      %6922 = vmatprep.subr.bf16.mxu0 0
      %6923 = vmatpush1.bf16.msra.mxu0 0
      %6924 = vmatprep.subr.bf16.mxu0 0
      %6925 = vmatpush1.bf16.msra.mxu0 0
      %6926 = vmatprep.subr.bf16.mxu0 0
      %6927 = vmatpush1.bf16.msra.mxu0 0
      %6928 = vmatprep.subr.bf16.mxu0 0
      %6929 = vmatpush1.bf16.msra.mxu0 %v6888
      %6930 = vmatprep.subr.bf16.mxu0 0
      %6931 = vmatpush1.bf16.msra.mxu0 %v6887
      %6932 = vmatprep.subr.bf16.mxu0 0
      %6933 = vmatpush1.bf16.msra.mxu0 %v6886
      %6934 = vmatprep.subr.bf16.mxu0 0
      %6935 = vmatpush1.bf16.msra.mxu0 %v6885
      %6936 = vmatprep.subr.bf16.mxu0 0
      %6937 = vmatpush2.bf16.msra.mxu0 0
      %6938 = vmatprep.subr.bf16.mxu0 0
      %6939 = vmatpush2.bf16.msra.mxu0 0
      %6940 = vmatprep.subr.bf16.mxu0 0
      %6941 = vmatpush2.bf16.msra.mxu0 0
      %6942 = vmatprep.subr.bf16.mxu0 0
      %6943 = vmatpush2.bf16.msra.mxu0 0
      %6944 = vmatprep.subr.bf16.mxu0 0
      %6945 = vmatpush2.bf16.msra.mxu0 0
      %6946 = vmatprep.subr.bf16.mxu0 0
      %6947 = vmatpush2.bf16.msra.mxu0 0
      %6948 = vmatprep.subr.bf16.mxu0 0
      %6949 = vmatpush2.bf16.msra.mxu0 0
      %6950 = vmatprep.subr.bf16.mxu0 0
      %6951 = vmatpush2.bf16.msra.mxu0 0
      %6952 = vmatprep.mubr.bf16.mxu0 0
      %6953 = vmatmul.mubr.bf16.gmra.mxu0 %v6894
      %v6954 = vpop.f32.mrf.mxu0
      %v6955 = vadd.f32 %v6868, %v6954
      %v6956 = vpop.f32.mrf.mxu0
      %v6957 = vpop.f32.mrf.mxu0
      %v6958 = vadd.f32 %v6868, %v6957
      %v6959 = vpop.f32.mrf.mxu0
      %6960 = vmatprep.mubr.bf16.mxu0 0
      %6961 = vmatmul.mubr.bf16.gmra.mxu0 %v6897
      %v6962 = vpop.f32.mrf.mxu0
      %v6963 = vadd.f32 %v6868, %v6962
      %v6964 = vpop.f32.mrf.mxu0
      %v6965 = vpop.f32.mrf.mxu0
      %v6966 = vadd.f32 %v6868, %v6965
      %v6967 = vpop.f32.mrf.mxu0
      %6968 = vmatprep.mubr.bf16.mxu0 0
      %6969 = vmatmul.mubr.bf16.gmra.mxu0 %v6900
      %v6970 = vpop.f32.mrf.mxu0
      %v6971 = vadd.f32 %v6868, %v6970
      %v6972 = vpop.f32.mrf.mxu0
      %v6973 = vpop.f32.mrf.mxu0
      %v6974 = vadd.f32 %v6868, %v6973
      %v6975 = vpop.f32.mrf.mxu0
      %6976 = vmatprep.mubr.bf16.mxu0 0
      %6977 = vmatmul.mubr.bf16.gmra.mxu0 %v6903
      %v6978 = vpop.f32.mrf.mxu0
      %v6979 = vadd.f32 %v6868, %v6978
      %v6980 = vpop.f32.mrf.mxu0
      %v6981 = vpop.f32.mrf.mxu0
      %v6982 = vadd.f32 %v6868, %v6981
      %v6983 = vpop.f32.mrf.mxu0
      %6984 = vmatprep.mubr.bf16.mxu0 0
      %6985 = vmatmul.mubr.bf16.gmra.mxu0 %v6906
      %v6986 = vpop.f32.mrf.mxu0
      %v6987 = vadd.f32 %v6868, %v6986
      %v6988 = vpop.f32.mrf.mxu0
      %v6989 = vpop.f32.mrf.mxu0
      %v6990 = vadd.f32 %v6868, %v6989
      %v6991 = vpop.f32.mrf.mxu0
      %6992 = vmatprep.mubr.bf16.mxu0 0
      %6993 = vmatmul.mubr.bf16.gmra.mxu0 %v6909
      %v6994 = vpop.f32.mrf.mxu0
      %v6995 = vadd.f32 %v6868, %v6994
      %v6996 = vpop.f32.mrf.mxu0
      %v6997 = vpop.f32.mrf.mxu0
      %v6998 = vadd.f32 %v6868, %v6997
      %v6999 = vpop.f32.mrf.mxu0
      %7000 = vmatprep.mubr.bf16.mxu0 0
      %7001 = vmatmul.mubr.bf16.gmra.mxu0 %v6912
      %v7002 = vpop.f32.mrf.mxu0
      %v7003 = vadd.f32 %v6868, %v7002
      %v7004 = vpop.f32.mrf.mxu0
      %v7005 = vpop.f32.mrf.mxu0
      %v7006 = vadd.f32 %v6868, %v7005
      %v7007 = vpop.f32.mrf.mxu0
      %7008 = vmatprep.mubr.bf16.mxu0 0
      %7009 = vmatmul.mubr.bf16.gmra.mxu0 %v6915
      %v7010 = vpop.f32.mrf.mxu0
      %v7011 = vadd.f32 %v6868, %v7010
      %v7012 = vpop.f32.mrf.mxu0
      %v7013 = vpop.f32.mrf.mxu0
      %v7014 = vadd.f32 %v6868, %v7013
      %v7015 = vpop.f32.mrf.mxu0
      %7016 = vmatprep.mubr.bf16.mxu0 0
      %7017 = vmatmul.mubr.bf16.gmra.mxu0 %v6918
      %v7018 = vpop.f32.mrf.mxu0
      %v7019 = vpop.f32.mrf.mxu0
      %v7020 = vpop.f32.mrf.mxu0
      %v7021 = vpop.f32.mrf.mxu0
      %7022 = vdwg.mxu0
      %v7023 = vadd.f32 %v6955, %v6644
      %v7024 = vadd.f32 %v6958, %v6645
      %v7025 = vadd.f32 %v6963, %v6646
      %v7026 = vadd.f32 %v6966, %v6647
      %v7027 = vadd.f32 %v6971, %v6648
      %v7028 = vadd.f32 %v6974, %v6649
      %v7029 = vadd.f32 %v6979, %v6650
      %v7030 = vadd.f32 %v6982, %v6651
      %v7031 = vadd.f32 %v6987, %v6652
      %v7032 = vadd.f32 %v6990, %v6653
      %v7033 = vadd.f32 %v6995, %v6654
      %v7034 = vadd.f32 %v6998, %v6655
      %v7035 = vadd.f32 %v7003, %v6656
      %v7036 = vadd.f32 %v7006, %v6657
      %v7037 = vadd.f32 %v7011, %v6658
      %v7038 = vadd.f32 %v7014, %v6659
      %v7039 = vld [vmem:[%s4487 + $0x4] sm:$0x1]
      %v7040 = vld [vmem:[%s4487 + $0x5] sm:$0x1]
      %v7041 = vsel %vm1249, %v7023, 0.0
      %7042 = vadd.xlane.f32.xlu0 %v7041
      %v7043 = vpop.xlane.xlu0 %7042
      %v7044 = vsel %vm1249, %v7024, 0.0
      %7045 = vadd.xlane.f32.xlu0 %v7044
      %v7046 = vpop.xlane.xlu0 %7045
      %v7047 = vsel %vm1249, %v7025, 0.0
      %7048 = vadd.xlane.f32.xlu0 %v7047
      %v7049 = vpop.xlane.xlu0 %7048
      %v7050 = vsel %vm1249, %v7026, 0.0
      %7051 = vadd.xlane.f32.xlu0 %v7050
      %v7052 = vpop.xlane.xlu0 %7051
      %v7053 = vsel %vm1249, %v7027, 0.0
      %7054 = vadd.xlane.f32.xlu0 %v7053
      %v7055 = vpop.xlane.xlu0 %7054
      %v7056 = vsel %vm1249, %v7028, 0.0
      %7057 = vadd.xlane.f32.xlu0 %v7056
      %v7058 = vpop.xlane.xlu0 %7057
      %v7059 = vsel %vm1249, %v7029, 0.0
      %7060 = vadd.xlane.f32.xlu0 %v7059
      %v7061 = vpop.xlane.xlu0 %7060
      %v7062 = vsel %vm1249, %v7030, 0.0
      %7063 = vadd.xlane.f32.xlu0 %v7062
      %v7064 = vpop.xlane.xlu0 %7063
      %v7065 = vsel %vm1249, %v7031, 0.0
      %7066 = vadd.xlane.f32.xlu0 %v7065
      %v7067 = vpop.xlane.xlu0 %7066
      %v7068 = vsel %vm1249, %v7032, 0.0
      %7069 = vadd.xlane.f32.xlu0 %v7068
      %v7070 = vpop.xlane.xlu0 %7069
      %v7071 = vsel %vm1249, %v7033, 0.0
      %7072 = vadd.xlane.f32.xlu0 %v7071
      %v7073 = vpop.xlane.xlu0 %7072
      %v7074 = vsel %vm1249, %v7034, 0.0
      %7075 = vadd.xlane.f32.xlu0 %v7074
      %v7076 = vpop.xlane.xlu0 %7075
      %v7077 = vsel %vm1249, %v7035, 0.0
      %7078 = vadd.xlane.f32.xlu0 %v7077
      %v7079 = vpop.xlane.xlu0 %7078
      %v7080 = vsel %vm1249, %v7036, 0.0
      %7081 = vadd.xlane.f32.xlu0 %v7080
      %v7082 = vpop.xlane.xlu0 %7081
      %v7083 = vsel %vm1249, %v7037, 0.0
      %7084 = vadd.xlane.f32.xlu0 %v7083
      %v7085 = vpop.xlane.xlu0 %7084
      %v7086 = vsel %vm1249, %v7038, 0.0
      %7087 = vadd.xlane.f32.xlu0 %v7086
      %v7088 = vpop.xlane.xlu0 %7087
      %v7089 = vmul.f32 %v7043, %v3437
      %v7090 = vmul.f32 %v7046, %v3437
      %v7091 = vmul.f32 %v7049, %v3437
      %v7092 = vmul.f32 %v7052, %v3437
      %v7093 = vmul.f32 %v7055, %v3437
      %v7094 = vmul.f32 %v7058, %v3437
      %v7095 = vmul.f32 %v7061, %v3437
      %v7096 = vmul.f32 %v7064, %v3437
      %v7097 = vmul.f32 %v7067, %v3437
      %v7098 = vmul.f32 %v7070, %v3437
      %v7099 = vmul.f32 %v7073, %v3437
      %v7100 = vmul.f32 %v7076, %v3437
      %v7101 = vmul.f32 %v7079, %v3437
      %v7102 = vmul.f32 %v7082, %v3437
      %v7103 = vmul.f32 %v7085, %v3437
      %v7104 = vmul.f32 %v7088, %v3437
      %v7105 = vsub.f32 %v7023, %v7089
      %v7106 = vsub.f32 %v7024, %v7090
      %v7107 = vsub.f32 %v7025, %v7091
      %v7108 = vsub.f32 %v7026, %v7092
      %v7109 = vsub.f32 %v7027, %v7093
      %v7110 = vsub.f32 %v7028, %v7094
      %v7111 = vsub.f32 %v7029, %v7095
      %v7112 = vsub.f32 %v7030, %v7096
      %v7113 = vsub.f32 %v7031, %v7097
      %v7114 = vsub.f32 %v7032, %v7098
      %v7115 = vsub.f32 %v7033, %v7099
      %v7116 = vsub.f32 %v7034, %v7100
      %v7117 = vsub.f32 %v7035, %v7101
      %v7118 = vsub.f32 %v7036, %v7102
      %v7119 = vsub.f32 %v7037, %v7103
      %v7120 = vsub.f32 %v7038, %v7104
      %v7121 = vmul.f32 %v7105, %v7105
      %v7122 = vmul.f32 %v7106, %v7106
      %v7123 = vmul.f32 %v7107, %v7107
      %v7124 = vmul.f32 %v7108, %v7108
      %v7125 = vmul.f32 %v7109, %v7109
      %v7126 = vmul.f32 %v7110, %v7110
      %v7127 = vmul.f32 %v7111, %v7111
      %v7128 = vmul.f32 %v7112, %v7112
      %v7129 = vmul.f32 %v7113, %v7113
      %v7130 = vmul.f32 %v7114, %v7114
      %v7131 = vmul.f32 %v7115, %v7115
      %v7132 = vmul.f32 %v7116, %v7116
      %v7133 = vmul.f32 %v7117, %v7117
      %v7134 = vmul.f32 %v7118, %v7118
      %v7135 = vmul.f32 %v7119, %v7119
      %v7136 = vmul.f32 %v7120, %v7120
      %v7137 = vsel %vm1249, %v7121, 0.0
      %7138 = vadd.xlane.f32.xlu0 %v7137
      %v7139 = vpop.xlane.xlu0 %7138
      %v7140 = vsel %vm1249, %v7122, 0.0
      %7141 = vadd.xlane.f32.xlu0 %v7140
      %v7142 = vpop.xlane.xlu0 %7141
      %v7143 = vsel %vm1249, %v7123, 0.0
      %7144 = vadd.xlane.f32.xlu0 %v7143
      %v7145 = vpop.xlane.xlu0 %7144
      %v7146 = vsel %vm1249, %v7124, 0.0
      %7147 = vadd.xlane.f32.xlu0 %v7146
      %v7148 = vpop.xlane.xlu0 %7147
      %v7149 = vsel %vm1249, %v7125, 0.0
      %7150 = vadd.xlane.f32.xlu0 %v7149
      %v7151 = vpop.xlane.xlu0 %7150
      %v7152 = vsel %vm1249, %v7126, 0.0
      %7153 = vadd.xlane.f32.xlu0 %v7152
      %v7154 = vpop.xlane.xlu0 %7153
      %v7155 = vsel %vm1249, %v7127, 0.0
      %7156 = vadd.xlane.f32.xlu0 %v7155
      %v7157 = vpop.xlane.xlu0 %7156
      %v7158 = vsel %vm1249, %v7128, 0.0
      %7159 = vadd.xlane.f32.xlu0 %v7158
      %v7160 = vpop.xlane.xlu0 %7159
      %v7161 = vsel %vm1249, %v7129, 0.0
      %7162 = vadd.xlane.f32.xlu0 %v7161
      %v7163 = vpop.xlane.xlu0 %7162
      %v7164 = vsel %vm1249, %v7130, 0.0
      %7165 = vadd.xlane.f32.xlu0 %v7164
      %v7166 = vpop.xlane.xlu0 %7165
      %v7167 = vsel %vm1249, %v7131, 0.0
      %7168 = vadd.xlane.f32.xlu0 %v7167
      %v7169 = vpop.xlane.xlu0 %7168
      %v7170 = vsel %vm1249, %v7132, 0.0
      %7171 = vadd.xlane.f32.xlu0 %v7170
      %v7172 = vpop.xlane.xlu0 %7171
      %v7173 = vsel %vm1249, %v7133, 0.0
      %7174 = vadd.xlane.f32.xlu0 %v7173
      %v7175 = vpop.xlane.xlu0 %7174
      %v7176 = vsel %vm1249, %v7134, 0.0
      %7177 = vadd.xlane.f32.xlu0 %v7176
      %v7178 = vpop.xlane.xlu0 %7177
      %v7179 = vsel %vm1249, %v7135, 0.0
      %7180 = vadd.xlane.f32.xlu0 %v7179
      %v7181 = vpop.xlane.xlu0 %7180
      %v7182 = vsel %vm1249, %v7136, 0.0
      %7183 = vadd.xlane.f32.xlu0 %v7182
      %v7184 = vpop.xlane.xlu0 %7183
      %v7185 = vmul.f32 %v7139, %v3437
      %v7186 = vmul.f32 %v7142, %v3437
      %v7187 = vmul.f32 %v7145, %v3437
      %v7188 = vmul.f32 %v7148, %v3437
      %v7189 = vmul.f32 %v7151, %v3437
      %v7190 = vmul.f32 %v7154, %v3437
      %v7191 = vmul.f32 %v7157, %v3437
      %v7192 = vmul.f32 %v7160, %v3437
      %v7193 = vmul.f32 %v7163, %v3437
      %v7194 = vmul.f32 %v7166, %v3437
      %v7195 = vmul.f32 %v7169, %v3437
      %v7196 = vmul.f32 %v7172, %v3437
      %v7197 = vmul.f32 %v7175, %v3437
      %v7198 = vmul.f32 %v7178, %v3437
      %v7199 = vmul.f32 %v7181, %v3437
      %v7200 = vmul.f32 %v7184, %v3437
      %v7201 = vadd.f32 %v7185, 1e-05
      %v7202 = vadd.f32 %v7186, 1e-05
      %v7203 = vadd.f32 %v7187, 1e-05
      %v7204 = vadd.f32 %v7188, 1e-05
      %v7205 = vadd.f32 %v7189, 1e-05
      %v7206 = vadd.f32 %v7190, 1e-05
      %v7207 = vadd.f32 %v7191, 1e-05
      %v7208 = vadd.f32 %v7192, 1e-05
      %v7209 = vadd.f32 %v7193, 1e-05
      %v7210 = vadd.f32 %v7194, 1e-05
      %v7211 = vadd.f32 %v7195, 1e-05
      %v7212 = vadd.f32 %v7196, 1e-05
      %v7213 = vadd.f32 %v7197, 1e-05
      %v7214 = vadd.f32 %v7198, 1e-05
      %v7215 = vadd.f32 %v7199, 1e-05
      %v7216 = vadd.f32 %v7200, 1e-05
      %v7217 = vrsqrt.pop %v7201
      %v7218 = vrsqrt.pop %v7202
      %v7219 = vrsqrt.pop %v7203
      %v7220 = vrsqrt.pop %v7204
      %v7221 = vrsqrt.pop %v7205
      %v7222 = vrsqrt.pop %v7206
      %v7223 = vrsqrt.pop %v7207
      %v7224 = vrsqrt.pop %v7208
      %v7225 = vrsqrt.pop %v7209
      %v7226 = vrsqrt.pop %v7210
      %v7227 = vrsqrt.pop %v7211
      %v7228 = vrsqrt.pop %v7212
      %v7229 = vrsqrt.pop %v7213
      %v7230 = vrsqrt.pop %v7214
      %v7231 = vrsqrt.pop %v7215
      %v7232 = vrsqrt.pop %v7216
      %v7233 = vmul.f32 %v7105, %v7217
      %v7234 = vmul.f32 %v7106, %v7218
      %v7235 = vmul.f32 %v7107, %v7219
      %v7236 = vmul.f32 %v7108, %v7220
      %v7237 = vmul.f32 %v7109, %v7221
      %v7238 = vmul.f32 %v7110, %v7222
      %v7239 = vmul.f32 %v7111, %v7223
      %v7240 = vmul.f32 %v7112, %v7224
      %v7241 = vmul.f32 %v7113, %v7225
      %v7242 = vmul.f32 %v7114, %v7226
      %v7243 = vmul.f32 %v7115, %v7227
      %v7244 = vmul.f32 %v7116, %v7228
      %v7245 = vmul.f32 %v7117, %v7229
      %v7246 = vmul.f32 %v7118, %v7230
      %v7247 = vmul.f32 %v7119, %v7231
      %v7248 = vmul.f32 %v7120, %v7232
      %v7249 = vlaneseq
      %v7250 = vshrl.u32 %v7249, 7
      %v7251 = vsub.s32 0, %v7250
      %v7252 = vrot.slane %v7039, %v7251
      %v7253 = vmul.f32 %v7233, %v7252
      %v7254 = vmul.f32 %v7234, %v7252
      %v7255 = vmul.f32 %v7235, %v7252
      %v7256 = vmul.f32 %v7236, %v7252
      %v7257 = vmul.f32 %v7237, %v7252
      %v7258 = vmul.f32 %v7238, %v7252
      %v7259 = vmul.f32 %v7239, %v7252
      %v7260 = vmul.f32 %v7240, %v7252
      %v7261 = vmul.f32 %v7241, %v7252
      %v7262 = vmul.f32 %v7242, %v7252
      %v7263 = vmul.f32 %v7243, %v7252
      %v7264 = vmul.f32 %v7244, %v7252
      %v7265 = vmul.f32 %v7245, %v7252
      %v7266 = vmul.f32 %v7246, %v7252
      %v7267 = vmul.f32 %v7247, %v7252
      %v7268 = vmul.f32 %v7248, %v7252
      %v7269 = vlaneseq
      %v7270 = vshrl.u32 %v7269, 7
      %v7271 = vsub.s32 0, %v7270
      %v7272 = vrot.slane %v7040, %v7271
      %v7273 = vadd.f32 %v7253, %v7272
      %v7274 = vadd.f32 %v7254, %v7272
      %v7275 = vadd.f32 %v7255, %v7272
      %v7276 = vadd.f32 %v7256, %v7272
      %v7277 = vadd.f32 %v7257, %v7272
      %v7278 = vadd.f32 %v7258, %v7272
      %v7279 = vadd.f32 %v7259, %v7272
      %v7280 = vadd.f32 %v7260, %v7272
      %v7281 = vadd.f32 %v7261, %v7272
      %v7282 = vadd.f32 %v7262, %v7272
      %v7283 = vadd.f32 %v7263, %v7272
      %v7284 = vadd.f32 %v7264, %v7272
      %v7285 = vadd.f32 %v7265, %v7272
      %v7286 = vadd.f32 %v7266, %v7272
      %v7287 = vadd.f32 %v7267, %v7272
      %v7288 = vadd.f32 %v7268, %v7272
      %v7289 = vld [vmem:[%s16] sm:$0xf]
      %v7290 = vld [vmem:[%s16 + $0x4] sm:$0xf]
      %v7291 = vld [vmem:[%s16 + $0x8] sm:$0xf]
      %v7292 = vld [vmem:[%s16 + $0xc] sm:$0xf]
      %v7293 = vpack.c.bf16 %v7274, %v7273
      %v7294 = vpack.c.bf16 %v7276, %v7275
      %v7295 = vpack.c.bf16 %v7278, %v7277
      %v7296 = vpack.c.bf16 %v7280, %v7279
      %v7297 = vpack.c.bf16 %v7282, %v7281
      %v7298 = vpack.c.bf16 %v7284, %v7283
      %v7299 = vpack.c.bf16 %v7286, %v7285
      %v7300 = vpack.c.bf16 %v7288, %v7287
      %v7301 = vld [vmem:[%s17] sm:$0x1]
      %v7303 = vlaneseq
      %v7304 = vshrl.u32 %v7303, 7
      %v7305 = vsub.s32 0, %v7304
      %v7306 = vrot.slane %v7301, %v7305
      %v7312 = vunpack.c.l.b16 %v7289
      %v7313 = vunpack.c.l.b16 %v7290
      %v7314 = vunpack.c.l.b16 %v7291
      %v7315 = vunpack.c.l.b16 %v7292
      %v7316 = vpack.c.b16 %v7313, %v7312
      %v7317 = vpack.c.b16 %v7315, %v7314
      %v7321 = vsel %vm1249, %v7293, 0
      %v7324 = vsel %vm1249, %v7294, 0
      %v7327 = vsel %vm1249, %v7295, 0
      %v7330 = vsel %vm1249, %v7296, 0
      %v7333 = vsel %vm1249, %v7297, 0
      %v7336 = vsel %vm1249, %v7298, 0
      %v7339 = vsel %vm1249, %v7299, 0
      %v7342 = vsel %vm1249, %v7300, 0
      %7344 = vmatprep.subr.bf16.mxu0 0
      %7345 = vmatpush1.bf16.msra.mxu0 0
      %7346 = vmatprep.subr.bf16.mxu0 0
      %7347 = vmatpush1.bf16.msra.mxu0 0
      %7348 = vmatprep.subr.bf16.mxu0 0
      %7349 = vmatpush1.bf16.msra.mxu0 0
      %7350 = vmatprep.subr.bf16.mxu0 0
      %7351 = vmatpush1.bf16.msra.mxu0 0
      %7352 = vmatprep.subr.bf16.mxu0 0
      %7353 = vmatpush1.bf16.msra.mxu0 0
      %7354 = vmatprep.subr.bf16.mxu0 0
      %7355 = vmatpush1.bf16.msra.mxu0 0
      %7356 = vmatprep.subr.bf16.mxu0 0
      %7357 = vmatpush1.bf16.msra.mxu0 %v7317
      %7358 = vmatprep.subr.bf16.mxu0 0
      %7359 = vmatpush1.bf16.msra.mxu0 %v7316
      %7360 = vmatprep.subr.bf16.mxu0 0
      %7361 = vmatpush2.bf16.msra.mxu0 0
      %7362 = vmatprep.subr.bf16.mxu0 0
      %7363 = vmatpush2.bf16.msra.mxu0 0
      %7364 = vmatprep.subr.bf16.mxu0 0
      %7365 = vmatpush2.bf16.msra.mxu0 0
      %7366 = vmatprep.subr.bf16.mxu0 0
      %7367 = vmatpush2.bf16.msra.mxu0 0
      %7368 = vmatprep.subr.bf16.mxu0 0
      %7369 = vmatpush2.bf16.msra.mxu0 0
      %7370 = vmatprep.subr.bf16.mxu0 0
      %7371 = vmatpush2.bf16.msra.mxu0 0
      %7372 = vmatprep.subr.bf16.mxu0 0
      %7373 = vmatpush2.bf16.msra.mxu0 0
      %7374 = vmatprep.subr.bf16.mxu0 0
      %7375 = vmatpush2.bf16.msra.mxu0 0
      %7376 = vmatprep.mubr.bf16.mxu0 0
      %7377 = vmatmul.mubr.bf16.gmra.mxu0 %v7321
      %v7378 = vpop.f32.mrf.mxu0
      %v7379 = vadd.f32 %v7306, %v7378
      %v7380 = vpop.f32.mrf.mxu0
      %v7381 = vpop.f32.mrf.mxu0
      %v7382 = vadd.f32 %v7306, %v7381
      %v7383 = vpop.f32.mrf.mxu0
      %7384 = vmatprep.mubr.bf16.mxu0 0
      %7385 = vmatmul.mubr.bf16.gmra.mxu0 %v7324
      %v7386 = vpop.f32.mrf.mxu0
      %v7387 = vadd.f32 %v7306, %v7386
      %v7388 = vpop.f32.mrf.mxu0
      %v7389 = vpop.f32.mrf.mxu0
      %v7390 = vadd.f32 %v7306, %v7389
      %v7391 = vpop.f32.mrf.mxu0
      %7392 = vmatprep.mubr.bf16.mxu0 0
      %7393 = vmatmul.mubr.bf16.gmra.mxu0 %v7327
      %v7394 = vpop.f32.mrf.mxu0
      %v7395 = vadd.f32 %v7306, %v7394
      %v7396 = vpop.f32.mrf.mxu0
      %v7397 = vpop.f32.mrf.mxu0
      %v7398 = vadd.f32 %v7306, %v7397
      %v7399 = vpop.f32.mrf.mxu0
      %7400 = vmatprep.mubr.bf16.mxu0 0
      %7401 = vmatmul.mubr.bf16.gmra.mxu0 %v7330
      %v7402 = vpop.f32.mrf.mxu0
      %v7403 = vadd.f32 %v7306, %v7402
      %v7404 = vpop.f32.mrf.mxu0
      %v7405 = vpop.f32.mrf.mxu0
      %v7406 = vadd.f32 %v7306, %v7405
      %v7407 = vpop.f32.mrf.mxu0
      %7408 = vmatprep.mubr.bf16.mxu0 0
      %7409 = vmatmul.mubr.bf16.gmra.mxu0 %v7333
      %v7410 = vpop.f32.mrf.mxu0
      %v7411 = vadd.f32 %v7306, %v7410
      %v7412 = vpop.f32.mrf.mxu0
      %v7413 = vpop.f32.mrf.mxu0
      %v7414 = vadd.f32 %v7306, %v7413
      %v7415 = vpop.f32.mrf.mxu0
      %7416 = vmatprep.mubr.bf16.mxu0 0
      %7417 = vmatmul.mubr.bf16.gmra.mxu0 %v7336
      %v7418 = vpop.f32.mrf.mxu0
      %v7419 = vadd.f32 %v7306, %v7418
      %v7420 = vpop.f32.mrf.mxu0
      %v7421 = vpop.f32.mrf.mxu0
      %v7422 = vadd.f32 %v7306, %v7421
      %v7423 = vpop.f32.mrf.mxu0
      %7424 = vmatprep.mubr.bf16.mxu0 0
      %7425 = vmatmul.mubr.bf16.gmra.mxu0 %v7339
      %v7426 = vpop.f32.mrf.mxu0
      %v7427 = vadd.f32 %v7306, %v7426
      %v7428 = vpop.f32.mrf.mxu0
      %v7429 = vpop.f32.mrf.mxu0
      %v7430 = vadd.f32 %v7306, %v7429
      %v7431 = vpop.f32.mrf.mxu0
      %7432 = vmatprep.mubr.bf16.mxu0 0
      %7433 = vmatmul.mubr.bf16.gmra.mxu0 %v7342
      %v7434 = vpop.f32.mrf.mxu0
      %v7435 = vadd.f32 %v7306, %v7434
      %v7436 = vpop.f32.mrf.mxu0
      %v7437 = vpop.f32.mrf.mxu0
      %v7438 = vadd.f32 %v7306, %v7437
      %v7439 = vpop.f32.mrf.mxu0
      %7440 = vdwg.mxu0
      %v7441 = vsub.f32 %v7379, %v679
      %v7442 = vsub.f32 %v7382, %v680
      %v7443 = vsub.f32 %v7387, %v681
      %v7444 = vsub.f32 %v7390, %v682
      %v7445 = vsub.f32 %v7395, %v683
      %v7446 = vsub.f32 %v7398, %v684
      %v7447 = vsub.f32 %v7403, %v685
      %v7448 = vsub.f32 %v7406, %v686
      %v7449 = vsub.f32 %v7411, %v687
      %v7450 = vsub.f32 %v7414, %v688
      %v7451 = vsub.f32 %v7419, %v689
      %v7452 = vsub.f32 %v7422, %v690
      %v7453 = vsub.f32 %v7427, %v691
      %v7454 = vsub.f32 %v7430, %v692
      %v7455 = vsub.f32 %v7435, %v693
      %v7456 = vsub.f32 %v7438, %v694
      %v7457 = vand.u32 2147483647, %v7441
      %v7458 = vand.u32 2147483647, %v7442
      %v7459 = vand.u32 2147483647, %v7443
      %v7460 = vand.u32 2147483647, %v7444
      %v7461 = vand.u32 2147483647, %v7445
      %v7462 = vand.u32 2147483647, %v7446
      %v7463 = vand.u32 2147483647, %v7447
      %v7464 = vand.u32 2147483647, %v7448
      %v7465 = vand.u32 2147483647, %v7449
      %v7466 = vand.u32 2147483647, %v7450
      %v7467 = vand.u32 2147483647, %v7451
      %v7468 = vand.u32 2147483647, %v7452
      %v7469 = vand.u32 2147483647, %v7453
      %v7470 = vand.u32 2147483647, %v7454
      %v7471 = vand.u32 2147483647, %v7455
      %v7472 = vand.u32 2147483647, %v7456
      %7473 = vset.pattern.permute.xlu0 2
      %7474 = vperm.xlu0 %7473, %v663
      %v7475 = vpop.permute.xlu0 %7474
      %7477 = vset.pattern.permute.xlu0 2
      %7478 = vperm.xlu0 %7477, %v664
      %v7479 = vpop.permute.xlu0 %7478
      %7481 = vset.pattern.permute.xlu0 2
      %7482 = vperm.xlu0 %7481, %v665
      %v7483 = vpop.permute.xlu0 %7482
      %7485 = vset.pattern.permute.xlu0 2
      %7486 = vperm.xlu0 %7485, %v666
      %v7487 = vpop.permute.xlu0 %7486
      %7489 = vset.pattern.permute.xlu0 2
      %7490 = vperm.xlu0 %7489, %v667
      %v7491 = vpop.permute.xlu0 %7490
      %7493 = vset.pattern.permute.xlu0 2
      %7494 = vperm.xlu0 %7493, %v668
      %v7495 = vpop.permute.xlu0 %7494
      %7497 = vset.pattern.permute.xlu0 2
      %7498 = vperm.xlu0 %7497, %v669
      %v7499 = vpop.permute.xlu0 %7498
      %7501 = vset.pattern.permute.xlu0 2
      %7502 = vperm.xlu0 %7501, %v670
      %v7503 = vpop.permute.xlu0 %7502
      %7505 = vset.pattern.permute.xlu0 2
      %7506 = vperm.xlu0 %7505, %v671
      %v7507 = vpop.permute.xlu0 %7506
      %7509 = vset.pattern.permute.xlu0 2
      %7510 = vperm.xlu0 %7509, %v672
      %v7511 = vpop.permute.xlu0 %7510
      %7513 = vset.pattern.permute.xlu0 2
      %7514 = vperm.xlu0 %7513, %v673
      %v7515 = vpop.permute.xlu0 %7514
      %7517 = vset.pattern.permute.xlu0 2
      %7518 = vperm.xlu0 %7517, %v674
      %v7519 = vpop.permute.xlu0 %7518
      %7521 = vset.pattern.permute.xlu0 2
      %7522 = vperm.xlu0 %7521, %v675
      %v7523 = vpop.permute.xlu0 %7522
      %7525 = vset.pattern.permute.xlu0 2
      %7526 = vperm.xlu0 %7525, %v676
      %v7527 = vpop.permute.xlu0 %7526
      %7529 = vset.pattern.permute.xlu0 2
      %7530 = vperm.xlu0 %7529, %v677
      %v7531 = vpop.permute.xlu0 %7530
      %7533 = vset.pattern.permute.xlu0 2
      %7534 = vperm.xlu0 %7533, %v678
      %v7535 = vpop.permute.xlu0 %7534
      %v7537 = vmul.f32 %v7457, %v7475
      %v7538 = vmul.f32 %v7458, %v7479
      %v7539 = vmul.f32 %v7459, %v7483
      %v7540 = vmul.f32 %v7460, %v7487
      %v7541 = vmul.f32 %v7461, %v7491
      %v7542 = vmul.f32 %v7462, %v7495
      %v7543 = vmul.f32 %v7463, %v7499
      %v7544 = vmul.f32 %v7464, %v7503
      %v7545 = vmul.f32 %v7465, %v7507
      %v7546 = vmul.f32 %v7466, %v7511
      %v7547 = vmul.f32 %v7467, %v7515
      %v7548 = vmul.f32 %v7468, %v7519
      %v7549 = vmul.f32 %v7469, %v7523
      %v7550 = vmul.f32 %v7470, %v7527
      %v7551 = vmul.f32 %v7471, %v7531
      %v7552 = vmul.f32 %v7472, %v7535
      %v7553 = vsel %vm945, %v7537, 0.0
      %v7554 = vsel %vm945, %v7538, 0.0
      %v7555 = vadd.f32 %v7553, %v7554
      %v7556 = vsel %vm945, %v7539, 0.0
      %v7557 = vadd.f32 %v7555, %v7556
      %v7558 = vsel %vm945, %v7540, 0.0
      %v7559 = vadd.f32 %v7557, %v7558
      %v7560 = vsel %vm945, %v7541, 0.0
      %v7561 = vadd.f32 %v7559, %v7560
      %v7562 = vsel %vm945, %v7542, 0.0
      %v7563 = vadd.f32 %v7561, %v7562
      %v7564 = vsel %vm945, %v7543, 0.0
      %v7565 = vadd.f32 %v7563, %v7564
      %v7566 = vsel %vm945, %v7544, 0.0
      %v7567 = vadd.f32 %v7565, %v7566
      %v7568 = vsel %vm945, %v7545, 0.0
      %v7569 = vadd.f32 %v7567, %v7568
      %v7570 = vsel %vm945, %v7546, 0.0
      %v7571 = vadd.f32 %v7569, %v7570
      %v7572 = vsel %vm945, %v7547, 0.0
      %v7573 = vadd.f32 %v7571, %v7572
      %v7574 = vsel %vm945, %v7548, 0.0
      %v7575 = vadd.f32 %v7573, %v7574
      %v7576 = vsel %vm945, %v7549, 0.0
      %v7577 = vadd.f32 %v7575, %v7576
      %v7578 = vsel %vm945, %v7550, 0.0
      %v7579 = vadd.f32 %v7577, %v7578
      %v7580 = vsel %vm945, %v7551, 0.0
      %v7581 = vadd.f32 %v7579, %v7580
      %v7582 = vsel %vm945, %v7552, 0.0
      %v7583 = vadd.f32 %v7581, %v7582
      %v7584 = vrot.slane %v7583, 4
      %v7585 = vadd.f32 %v7583, %v7584
      %v7586 = vrot.slane %v7585, 2
      %v7587 = vadd.f32 %v7585, %v7586
      %v7588 = vrot.slane %v7587, 1
      %v7589 = vadd.f32 %v7587, %v7588
      %vm7590 = vcmask 122880
      %7591 = vst.msk [vmem:[%s661] sm:$0x1] %vm7590, %v7589
      %p7592 = scmp.lt.s32.totalorder %s29, 1
      %s7593 = scalar_select %p7592, %s29, 1
      %s7594 = scalar_lea.vmem %s18, %s7593
      // Predicated region
      $region93: #{cond_gaussian_diffusion_forward.1} parent=91 // pred_check
        %p7595 = pneg %p450
      $region94: #{cond_gaussian_diffusion_forward.1} parent=91 // pred_check_branch
        %7597 = sbr.rel (%p7595) target = $region96
      $region95: #{cond_gaussian_diffusion_forward.1} parent=91 // pred_region
        _
      $region96: #{cond_gaussian_diffusion_forward.1} parent=91 // pred_fallthru
        _
    $region92: #{cond_gaussian_diffusion_forward.1} parent=5 // pred_fallthru
      _
    %p7598 = scmp.le.s32.totalorder 2, %s24
    // Predicated region
    $region97: #{cond_gaussian_diffusion_forward.1} parent=5 // pred_check
      %p7599 = pneg %p7598
    $region98: #{cond_gaussian_diffusion_forward.1} parent=5 // pred_check_branch
      %7601 = sbr.rel (%p7599) target = $region100
    $region99: #{cond_gaussian_diffusion_forward.1} parent=5 // pred_region
      %s7602 = ssub.s32 %s24, 2
      // Predicated region
      $region101: #{cond_gaussian_diffusion_forward.1} parent=99 // pred_check
        %p7603 = pneg %p456
      $region102: #{cond_gaussian_diffusion_forward.1} parent=99 // pred_check_branch
        %7605 = sbr.rel (%p7603) target = $region104
      $region103: #{cond_gaussian_diffusion_forward.1} parent=99 // pred_region
        %p7606 = scmp.lt.s32.totalorder %s30, 1
        %s7607 = scalar_select %p7606, %s30, 1
        %s7608 = scalar_lea.vmem %s18, %s7607
      $region104: #{cond_gaussian_diffusion_forward.1} parent=99 // pred_fallthru
        _
    $region100: #{cond_gaussian_diffusion_forward.1} parent=5 // pred_fallthru
      _
  $region6: #{cond_gaussian_diffusion_forward.1} parent=0 // loop_footer
    %s28 = sadd.s32 1, %s24
  $region7: #{cond_gaussian_diffusion_forward.1} parent=0 // loop_footer_branch
    %23 = sbr.rel target = $region3
  $region8: #{cond_gaussian_diffusion_forward.1} parent=0 // loop_exit
    _

</llo_original>
